<compile_context>
chip_gen: v7x
topology: tpu7x:2x2x1
jax: 0.10.0
libtpu: 0.0.40
codegen_flags: <defaults>
</compile_context>

<pallas_src>
import functools

import jax
import jax.numpy as jnp
from jax.experimental import pallas as pl
from jax.experimental.pallas import tpu as pltpu


SEQ_TILE = 16          # sequences per grid step (multiple of 8 so the block sublane dim is aligned)
NEG_MASK = -1e30       # additive attention mask; kept in f32 (never cast to bf16)


# ----------------------------------------------------------------------------- #
# In-kernel helpers
# ----------------------------------------------------------------------------- #
def _layer_norm(v, g, b, eps=1e-5):
    mu = jnp.mean(v, axis=-1, keepdims=True)
    var = jnp.mean(jnp.square(v - mu), axis=-1, keepdims=True)
    return (v - mu) * jax.lax.rsqrt(var + eps) * g + b


def _gelu_tanh(v):
    # tanh-approximate GELU (EUP slot).  |diff| vs. exact erf GELU ~1e-3.
    c = 0.7978845608028654  # sqrt(2/pi)
    return 0.5 * v * (1.0 + jnp.tanh(c * (v + 0.044715 * v * v * v)))


# ----------------------------------------------------------------------------- #
# Pallas kernel: one transformer layer on a tile of SEQ_TILE sequences.
# Block layout: (SEQ_TILE * N, D) rows-major; sequences are contiguous row ranges.
# ----------------------------------------------------------------------------- #
def septr_layer_kernel(x_ref,
                       ln1_g_ref, ln1_b_ref,
                       wqkv_ref, wo_ref, bo_ref,
                       ln2_g_ref, ln2_b_ref,
                       w1_ref, b1_ref, w2_ref, b2_ref,
                       o_ref,
                       hcat_ref,
                       *, heads, dim_head, seq_len, group):
    f32, bf16 = jnp.float32, jnp.bfloat16
    inner = heads * dim_head
    tsn = x_ref.shape[0]
    cn = group * seq_len               # chunk rows; <= 128 so scores stay in one lane tile
    n_chunks = tsn // cn

    # Residual stream in f32 (inter-pass activations are bf16 in HBM; positional
    # embedding was already added by the wrapper, fused into the concat copy).
    x = x_ref[...].astype(f32)

    # ---- PreNorm + chunked block-diagonal multi-head self-attention ------------- #
    xn = _layer_norm(x, ln1_g_ref[...], ln1_b_ref[...])
    # Single (TSN, D) x (D, 3*inner) GEMM; 1/sqrt(dh) folded into the Q columns of W_qkv.
    # Result kept bf16: it is the largest live intermediate -> halves spill traffic.
    qkv = jnp.dot(xn.astype(bf16), wqkv_ref[...],
                  preferred_element_type=f32).astype(bf16)            # (TSN, 3*inner)

    # Block-diagonal additive mask for one chunk of `group` sequences, built in-kernel.
    # f32 iota + floor((i+0.5)/N) avoids vector integer division; exact for i < 2^23.
    ridx = jax.lax.broadcasted_iota(jnp.int32, (cn, 1), 0).astype(f32)
    cidx = jax.lax.broadcasted_iota(jnp.int32, (1, cn), 1).astype(f32)
    rseq = jnp.floor((ridx + 0.5) * (1.0 / seq_len))
    cseq = jnp.floor((cidx + 0.5) * (1.0 / seq_len))
    amask = jnp.where(rseq == cseq, 0.0, NEG_MASK).astype(f32)        # (CN, CN) f32

    for c in range(n_chunks):                                         # static unroll
        qkv_c = qkv[c * cn:(c + 1) * cn, :]                           # (CN, 3*inner) bf16
        for h in range(heads):
            q = qkv_c[:, h * dim_head:(h + 1) * dim_head]
            k = qkv_c[:, inner + h * dim_head: inner + (h + 1) * dim_head]
            v = qkv_c[:, 2 * inner + h * dim_head: 2 * inner + (h + 1) * dim_head]
            s = jax.lax.dot_general(q, k, (((1,), (1,)), ((), ())),
                                    preferred_element_type=f32)       # (CN, CN) f32
            s = s + amask
            s = s - jnp.max(s, axis=-1, keepdims=True)
            p = jnp.exp(s)
            p = p * pl.reciprocal(jnp.sum(p, axis=-1, keepdims=True), approx=True)
            o_h = jnp.dot(p.astype(bf16), v, preferred_element_type=f32)   # (CN, dh) f32
            # Stage per-head outputs so the output projection is one K=inner GEMM.
            hcat_ref[c * cn:(c + 1) * cn, h * dim_head:(h + 1) * dim_head] = o_h

    attn = jnp.dot(hcat_ref[...].astype(bf16), wo_ref[...],
                   preferred_element_type=f32)                        # (TSN, D) f32
    x = x + attn + bo_ref[...]

    # ---- PreNorm + MLP (tanh-GELU) ------------------------------------------------ #
    xn = _layer_norm(x, ln2_g_ref[...], ln2_b_ref[...])
    h1 = jnp.dot(xn.astype(bf16), w1_ref[...], preferred_element_type=f32) + b1_ref[...]
    h1 = _gelu_tanh(h1)
    h2 = jnp.dot(h1.astype(bf16), w2_ref[...], preferred_element_type=f32) + b2_ref[...]
    o_ref[...] = (x + h2).astype(o_ref.dtype)


def _attention_group(seq_tile, n):
    """Largest divisor g of seq_tile with g*n <= 128 (score width stays in one lane tile)."""
    g = 1
    for cand in range(1, seq_tile + 1):
        if seq_tile % cand == 0 and cand * n <= 128:
            g = cand
    return g


def transformer_layer(x, p, *, heads, dim_head, seq_tile=SEQ_TILE):
    """x: (S, N, D) bf16 (pos already added) -> (S, N, D) bf16; one transformer layer."""
    S, N, D = x.shape
    inner = heads * dim_head
    mlp = p["w1"].shape[1]
    group = _attention_group(seq_tile, N)
    tsn = seq_tile * N
    assert tsn % 8 == 0, "seq_tile * (seq_len + 1) must be a multiple of 8"

    # Pad S to a multiple of seq_tile with dummy sequences (results discarded).
    Sp = ((S + seq_tile - 1) // seq_tile) * seq_tile
    if Sp != S:
        x = jnp.concatenate([x, jnp.zeros((Sp - S, N, D), x.dtype)], axis=0)
    x2 = x.reshape(Sp * N, D)                          # contiguous collapse -> free in HBM

    kernel = functools.partial(septr_layer_kernel, heads=heads, dim_head=dim_head,
                               seq_len=N, group=group)

    def const2d(shape):
        # Constant-index weight block: DMA'd once, stays resident across the grid.
        # TODO(synk): pipeline_mode=pl.Buffered(1) would single-buffer these on
        # VMEM-tight v7x configs once that path is universally available.
        return pl.BlockSpec(shape, lambda s: (0, 0))

    grid_spec = pltpu.PrefetchScalarGridSpec(
        num_scalar_prefetch=0,
        grid=(Sp // seq_tile,),
        in_specs=[
            pl.BlockSpec((tsn, D), lambda s: (s, 0)),   # activations: seq_tile sequences
            const2d((1, D)), const2d((1, D)),           # ln1 gamma / beta
            const2d((D, 3 * inner)),                    # W_qkv (bf16, Q pre-scaled)
            const2d((inner, D)),                        # W_out (bf16)
            const2d((1, D)),                            # b_out
            const2d((1, D)), const2d((1, D)),           # ln2 gamma / beta
            const2d((D, mlp)), const2d((1, mlp)),       # W_ff1 / b_ff1
            const2d((mlp, D)), const2d((1, D)),         # W_ff2 / b_ff2
        ],
        out_specs=pl.BlockSpec((tsn, D), lambda s: (s, 0)),
        scratch_shapes=[pltpu.VMEM((tsn, inner), jnp.float32)],   # per-head concat buffer
    )

    y2 = pl.pallas_call(
        kernel,
        out_shape=jax.ShapeDtypeStruct((Sp * N, D), jnp.bfloat16),
        grid_spec=grid_spec,
        compiler_params=pltpu.CompilerParams(dimension_semantics=("parallel",)),
    )(x2, p["ln1_g"], p["ln1_b"], p["wqkv"], p["wo"], p["bo"],
      p["ln2_g"], p["ln2_b"], p["w1"], p["b1"], p["w2"], p["b2"])
    return y2.reshape(Sp, N, D)[:S]


# ----------------------------------------------------------------------------- #
# SepTr block (plain-JAX glue around the Pallas transformer kernel)
# ----------------------------------------------------------------------------- #
def septr_block(x, cls_token, blk, *, heads, dim_head, seq_tile):
    """x: (B, C, H, W) (or (B, dim, H, W) bf16 if project=False); cls_token: (1|B,1,1,dim)."""
    # TODO(synk): AvgPool2d down_sample_input path not implemented (module default is None).
    bf16, f32 = jnp.bfloat16, jnp.float32
    x = jnp.transpose(x, (0, 3, 2, 1))                 # b c h w -> b w h c
    if blk["proj_w"] is not None:
        x = x @ blk["proj_w"] + blk["proj_b"]          # (B, W, H, dim)
    B, W, H, D = x.shape

    # ---- vertical transformer: sequences along H (one per (b, w) time column) ---- #
    tok = jnp.broadcast_to(cls_token, (B, W, 1, D)).astype(x.dtype)
    xv = jnp.concatenate([tok, x], axis=2)                                   # (B, W, H+1, D)
    # Positional-embedding add fuses into the concat copy -> no extra HBM round trip.
    xv = (xv.astype(f32) + blk["pos_v"][:, :, : H + 1, :]).astype(bf16)
    xv = transformer_layer(xv.reshape(B * W, H + 1, D), blk["vert"],
                           heads=heads, dim_head=dim_head, seq_tile=seq_tile)
    xv = xv.reshape(B, W, H + 1, D)
    cls_token = jnp.mean(xv[:, :, 0, :].astype(f32), axis=1).reshape(B, 1, 1, D)
    x = xv[:, :, 1:, :]                                # (B, W, H, D) bf16

    # ---- horizontal transformer: sequences along W (one per (b, h) frequency row) -- #
    # TODO(synk): this transpose + concat is still materialized by XLA (in bf16);
    # an index_map-strided BlockSpec could pull it into the kernel entirely.
    x = jnp.transpose(x, (0, 2, 1, 3))                 # (B, H, W, D)
    tok = jnp.broadcast_to(cls_token, (B, H, 1, D)).astype(x.dtype)
    xh = jnp.concatenate([tok, x], axis=2)                                   # (B, H, W+1, D)
    xh = (xh.astype(f32) + blk["pos_h"][:, :, : W + 1, :]).astype(bf16)
    xh = transformer_layer(xh.reshape(B * H, W + 1, D), blk["horiz"],
                           heads=heads, dim_head=dim_head, seq_tile=seq_tile)
    xh = xh.reshape(B, H, W + 1, D)
    cls_token = jnp.mean(xh[:, :, 0, :].astype(f32), axis=1).reshape(B, 1, 1, D)
    x = xh[:, :, 1:, :]                                # (B, H, W, D) bf16
    x = jnp.transpose(x, (0, 3, 1, 2))                 # b h w c -> b c h w  (c = dim)
    return x, cls_token


def separable_tr_forward(x, params, *, heads, dim_head, seq_tile=SEQ_TILE):
    cls_token = params["cls_token"]                    # (1, 1, 1, dim) f32
    for blk in params["blocks"]:
        x, cls_token = septr_block(x, cls_token, blk,
                                   heads=heads, dim_head=dim_head, seq_tile=seq_tile)
    cls_token = cls_token[:, 0, 0, :]                  # (B, dim) f32
    return cls_token @ params["fc_w"] + params["fc_b"]  # (B, num_classes)


# ----------------------------------------------------------------------------- #
# Deterministic parameter initialization (MXU weights stored bf16, rest f32)
# ----------------------------------------------------------------------------- #
def init_transformer_params(key, dim, heads, dim_head, mlp_dim):
    inner = heads * dim_head
    k = jax.random.split(key, 4)
    f32, bf16 = jnp.float32, jnp.bfloat16
    wqkv = jax.random.normal(k[0], (dim, 3 * inner), f32) * (dim ** -0.5)
    wqkv = wqkv.at[:, :inner].multiply(dim_head ** -0.5)   # fold softmax 1/sqrt(dh) into Q
    return dict(
        ln1_g=jnp.ones((1, dim), f32), ln1_b=jnp.zeros((1, dim), f32),
        wqkv=wqkv.astype(bf16),
        wo=(jax.random.normal(k[1], (inner, dim), f32) * (inner ** -0.5)).astype(bf16),
        bo=jnp.zeros((1, dim), f32),
        ln2_g=jnp.ones((1, dim), f32), ln2_b=jnp.zeros((1, dim), f32),
        w1=(jax.random.normal(k[2], (dim, mlp_dim), f32) * (dim ** -0.5)).astype(bf16),
        b1=jnp.zeros((1, mlp_dim), f32),
        w2=(jax.random.normal(k[3], (mlp_dim, dim), f32) * (mlp_dim ** -0.5)).astype(bf16),
        b2=jnp.zeros((1, dim), f32),
    )


def init_septr_params(key, *, channels, input_size, num_classes, depth,
                      heads, mlp_dim, dim_head, dim):
    H, W = input_size
    keys = jax.random.split(key, 3 + depth)
    f32 = jnp.float32
    blocks = []
    for i in range(depth):
        bk = jax.random.split(keys[3 + i], 5)
        project = (i == 0)
        blk = dict(
            proj_w=(jax.random.normal(bk[0], (channels, dim), f32) * (channels ** -0.5))
            if project else None,
            proj_b=jnp.zeros((dim,), f32) if project else None,
            pos_v=jax.random.normal(bk[1], (1, 1, H + 1, dim), f32),
            pos_h=jax.random.normal(bk[2], (1, 1, W + 1, dim), f32),
            vert=init_transformer_params(bk[3], dim, heads, dim_head, mlp_dim),
            horiz=init_transformer_params(bk[4], dim, heads, dim_head, mlp_dim),
        )
        blocks.append(blk)
    return dict(
        blocks=blocks,
        cls_token=jax.random.normal(keys[0], (1, 1, 1, dim), f32),
        fc_w=(jax.random.normal(keys[1], (dim, num_classes), f32) * (dim ** -0.5)),
        fc_b=jnp.zeros((num_classes,), f32),
    )


# ----------------------------------------------------------------------------- #
if __name__ == "__main__":
    # Small shapes consistent with the module; dim / dim_head / mlp_dim picked so the
    # embedding (lane) axis is a multiple of 128 and MXU contractions are >= 64 deep.
    B, C = 2, 4
    H, W = 16, 16
    DIM, HEADS, DIM_HEAD, MLP_DIM = 128, 4, 64, 256
    NUM_CLASSES, DEPTH = 10, 1

    key = jax.random.PRNGKey(0)
    k_x, k_p = jax.random.split(key)
    x = jax.random.normal(k_x, (B, C, H, W), jnp.float32)      # NCHW input, like PyTorch

    params = init_septr_params(
        k_p, channels=C, input_size=(H, W), num_classes=NUM_CLASSES, depth=DEPTH,
        heads=HEADS, mlp_dim=MLP_DIM, dim_head=DIM_HEAD, dim=DIM)

    fwd = jax.jit(functools.partial(separable_tr_forward,
                                    heads=HEADS, dim_head=DIM_HEAD, seq_tile=SEQ_TILE))
    logits = jax.block_until_ready(fwd(x, params))
    assert logits.shape == (B, NUM_CLASSES)
    assert bool(jnp.all(jnp.isfinite(logits)))
    print("KERNEL_OK")
</pallas_src>

<mosaic_0001>
module attributes {stable_mosaic.version = 11 : i64} {
  func.func @septr_layer_kernel(%arg0: i32, %arg1: memref<272x128xbf16, #tpu.memory_space<vmem>>, %arg2: memref<1x128xf32, #tpu.memory_space<vmem>>, %arg3: memref<1x128xf32, #tpu.memory_space<vmem>>, %arg4: memref<128x768xbf16, #tpu.memory_space<vmem>>, %arg5: memref<256x128xbf16, #tpu.memory_space<vmem>>, %arg6: memref<1x128xf32, #tpu.memory_space<vmem>>, %arg7: memref<1x128xf32, #tpu.memory_space<vmem>>, %arg8: memref<1x128xf32, #tpu.memory_space<vmem>>, %arg9: memref<128x256xbf16, #tpu.memory_space<vmem>>, %arg10: memref<1x256xf32, #tpu.memory_space<vmem>>, %arg11: memref<256x128xbf16, #tpu.memory_space<vmem>>, %arg12: memref<1x128xf32, #tpu.memory_space<vmem>>, %arg13: memref<272x128xbf16, #tpu.memory_space<vmem>>, %arg14: memref<272x256xf32, #tpu.memory_space<vmem>>) attributes {dimension_semantics = [#tpu.dimension_semantics<parallel>], iteration_bounds = array<i64: 2>, scalar_prefetch = 0 : i64, scratch_operands = 1 : i64, tpu.core_type = #tpu.core_type<tc>, window_params = [{transform_indices = @transform_0, window_bounds = array<i64: 272, 128>}, {pipeline_mode = #tpu.pipeline_mode<synchronous>, transform_indices = @transform_1, window_bounds = array<i64: 1, 128>}, {pipeline_mode = #tpu.pipeline_mode<synchronous>, transform_indices = @transform_2, window_bounds = array<i64: 1, 128>}, {pipeline_mode = #tpu.pipeline_mode<synchronous>, transform_indices = @transform_3, window_bounds = array<i64: 128, 768>}, {pipeline_mode = #tpu.pipeline_mode<synchronous>, transform_indices = @transform_4, window_bounds = array<i64: 256, 128>}, {pipeline_mode = #tpu.pipeline_mode<synchronous>, transform_indices = @transform_5, window_bounds = array<i64: 1, 128>}, {pipeline_mode = #tpu.pipeline_mode<synchronous>, transform_indices = @transform_6, window_bounds = array<i64: 1, 128>}, {pipeline_mode = #tpu.pipeline_mode<synchronous>, transform_indices = @transform_7, window_bounds = array<i64: 1, 128>}, {pipeline_mode = #tpu.pipeline_mode<synchronous>, transform_indices = @transform_8, window_bounds = array<i64: 128, 256>}, {pipeline_mode = #tpu.pipeline_mode<synchronous>, transform_indices = @transform_9, window_bounds = array<i64: 1, 256>}, {pipeline_mode = #tpu.pipeline_mode<synchronous>, transform_indices = @transform_10, window_bounds = array<i64: 256, 128>}, {pipeline_mode = #tpu.pipeline_mode<synchronous>, transform_indices = @transform_11, window_bounds = array<i64: 1, 128>}, {transform_indices = @transform_12, window_bounds = array<i64: 272, 128>}]} {
    %c0 = arith.constant 0 : index
    %c0_0 = arith.constant 0 : index
    %0 = vector.load %arg1[%c0, %c0_0] : memref<272x128xbf16, #tpu.memory_space<vmem>>, vector<272x128xbf16>
    %1 = arith.extf %0 : vector<272x128xbf16> to vector<272x128xf32>
    %c0_1 = arith.constant 0 : index
    %c0_2 = arith.constant 0 : index
    %2 = vector.load %arg2[%c0_1, %c0_2] : memref<1x128xf32, #tpu.memory_space<vmem>>, vector<1x128xf32>
    %c0_3 = arith.constant 0 : index
    %c0_4 = arith.constant 0 : index
    %3 = vector.load %arg3[%c0_3, %c0_4] : memref<1x128xf32, #tpu.memory_space<vmem>>, vector<1x128xf32>
    %cst = arith.constant dense<0.000000e+00> : vector<272xf32>
    %4 = vector.multi_reduction <add>, %1, %cst [1] : vector<272x128xf32> to vector<272xf32>
    %5 = vector.shape_cast %4 : vector<272xf32> to vector<272x1xf32>
    %cst_5 = arith.constant 1.280000e+02 : f32
    %6 = vector.broadcast %cst_5 : f32 to vector<272x1xf32>
    %7 = arith.divf %5, %6 : vector<272x1xf32>
    %8 = vector.broadcast %7 : vector<272x1xf32> to vector<272x128xf32>
    %9 = arith.subf %1, %8 : vector<272x128xf32>
    %10 = arith.mulf %9, %9 : vector<272x128xf32>
    %cst_6 = arith.constant dense<0.000000e+00> : vector<272xf32>
    %11 = vector.multi_reduction <add>, %10, %cst_6 [1] : vector<272x128xf32> to vector<272xf32>
    %12 = vector.shape_cast %11 : vector<272xf32> to vector<272x1xf32>
    %cst_7 = arith.constant 1.280000e+02 : f32
    %13 = vector.broadcast %cst_7 : f32 to vector<272x1xf32>
    %14 = arith.divf %12, %13 : vector<272x1xf32>
    %15 = vector.broadcast %7 : vector<272x1xf32> to vector<272x128xf32>
    %16 = arith.subf %1, %15 : vector<272x128xf32>
    %cst_8 = arith.constant 9.99999974E-6 : f32
    %17 = vector.broadcast %cst_8 : f32 to vector<272x1xf32>
    %18 = arith.addf %14, %17 : vector<272x1xf32>
    %19 = math.rsqrt %18 : vector<272x1xf32>
    %20 = vector.broadcast %19 : vector<272x1xf32> to vector<272x128xf32>
    %21 = arith.mulf %16, %20 : vector<272x128xf32>
    %22 = vector.broadcast %2 : vector<1x128xf32> to vector<272x128xf32>
    %23 = arith.mulf %21, %22 : vector<272x128xf32>
    %24 = vector.broadcast %3 : vector<1x128xf32> to vector<272x128xf32>
    %25 = arith.addf %23, %24 : vector<272x128xf32>
    %26 = arith.truncf %25 : vector<272x128xf32> to vector<272x128xbf16>
    %c0_9 = arith.constant 0 : index
    %c0_10 = arith.constant 0 : index
    %27 = vector.load %arg4[%c0_9, %c0_10] : memref<128x768xbf16, #tpu.memory_space<vmem>>, vector<128x768xbf16>
    %cst_11 = arith.constant dense<0.000000e+00> : vector<272x768xf32>
    %28 = tpu.matmul %26, %27, %cst_11 {dimension_numbers = #tpu.dot_dimension_numbers<[1], [0], [0], [1], [0, 0, 1, 1], [], []>} : vector<272x128xbf16>, vector<128x768xbf16>, vector<272x768xf32> -> vector<272x768xf32>
    %29 = arith.truncf %28 : vector<272x768xf32> to vector<272x768xbf16>
    %30 = tpu.iota {dimensions = array<i32: 0>} : vector<68x1xi32>
    %31 = arith.sitofp %30 : vector<68x1xi32> to vector<68x1xf32>
    %32 = tpu.iota {dimensions = array<i32: 1>} : vector<1x68xi32>
    %33 = arith.sitofp %32 : vector<1x68xi32> to vector<1x68xf32>
    %cst_12 = arith.constant 5.000000e-01 : f32
    %34 = vector.broadcast %cst_12 : f32 to vector<68x1xf32>
    %35 = arith.addf %31, %34 : vector<68x1xf32>
    %cst_13 = arith.constant 0.0588235296 : f32
    %36 = vector.broadcast %cst_13 : f32 to vector<68x1xf32>
    %37 = arith.mulf %35, %36 : vector<68x1xf32>
    %38 = math.floor %37 : vector<68x1xf32>
    %cst_14 = arith.constant 5.000000e-01 : f32
    %39 = vector.broadcast %cst_14 : f32 to vector<1x68xf32>
    %40 = arith.addf %33, %39 : vector<1x68xf32>
    %cst_15 = arith.constant 0.0588235296 : f32
    %41 = vector.broadcast %cst_15 : f32 to vector<1x68xf32>
    %42 = arith.mulf %40, %41 : vector<1x68xf32>
    %43 = math.floor %42 : vector<1x68xf32>
    %44 = vector.broadcast %38 : vector<68x1xf32> to vector<68x68xf32>
    %45 = vector.broadcast %43 : vector<1x68xf32> to vector<68x68xf32>
    %46 = arith.cmpf oeq, %44, %45 : vector<68x68xf32>
    %cst_16 = arith.constant 0.000000e+00 : f32
    %cst_17 = arith.constant -1.000000e+30 : f32
    %47 = vector.broadcast %cst_16 : f32 to vector<68x68xf32>
    %48 = vector.broadcast %cst_17 : f32 to vector<68x68xf32>
    %49 = arith.select %46, %47, %48 : vector<68x68xi1>, vector<68x68xf32>
    %50 = vector.extract_strided_slice %29 {offsets = [0, 0], sizes = [68, 768], strides = [1, 1]} : vector<272x768xbf16> to vector<68x768xbf16>
    %51 = vector.extract_strided_slice %50 {offsets = [0, 0], sizes = [68, 64], strides = [1, 1]} : vector<68x768xbf16> to vector<68x64xbf16>
    %52 = vector.extract_strided_slice %50 {offsets = [0, 256], sizes = [68, 64], strides = [1, 1]} : vector<68x768xbf16> to vector<68x64xbf16>
    %53 = vector.extract_strided_slice %50 {offsets = [0, 512], sizes = [68, 64], strides = [1, 1]} : vector<68x768xbf16> to vector<68x64xbf16>
    %cst_18 = arith.constant dense<0.000000e+00> : vector<68x68xf32>
    %54 = tpu.matmul %51, %52, %cst_18 {dimension_numbers = #tpu.dot_dimension_numbers<[1], [1], [0], [0], [0, 0, 1, 0], [], []>} : vector<68x64xbf16>, vector<68x64xbf16>, vector<68x68xf32> -> vector<68x68xf32>
    %55 = arith.addf %54, %49 : vector<68x68xf32>
    %cst_19 = arith.constant dense<0xFF800000> : vector<68xf32>
    %56 = vector.multi_reduction <maximumf>, %55, %cst_19 [1] : vector<68x68xf32> to vector<68xf32>
    %57 = vector.shape_cast %56 : vector<68xf32> to vector<68x1xf32>
    %58 = vector.broadcast %57 : vector<68x1xf32> to vector<68x68xf32>
    %59 = arith.subf %55, %58 : vector<68x68xf32>
    %60 = math.exp %59 : vector<68x68xf32>
    %cst_20 = arith.constant dense<0.000000e+00> : vector<68xf32>
    %61 = vector.multi_reduction <add>, %60, %cst_20 [1] : vector<68x68xf32> to vector<68xf32>
    %62 = vector.shape_cast %61 : vector<68xf32> to vector<68x1xf32>
    %63 = tpu.reciprocal %62 {approx = true} : vector<68x1xf32> -> vector<68x1xf32>
    %64 = vector.broadcast %63 : vector<68x1xf32> to vector<68x68xf32>
    %65 = arith.mulf %60, %64 : vector<68x68xf32>
    %66 = arith.truncf %65 : vector<68x68xf32> to vector<68x68xbf16>
    %cst_21 = arith.constant dense<0.000000e+00> : vector<68x64xf32>
    %67 = tpu.matmul %66, %53, %cst_21 {dimension_numbers = #tpu.dot_dimension_numbers<[1], [0], [0], [1], [0, 0, 1, 1], [], []>} : vector<68x68xbf16>, vector<68x64xbf16>, vector<68x64xf32> -> vector<68x64xf32>
    %c0_22 = arith.constant 0 : index
    %c0_23 = arith.constant 0 : index
    %68 = vector.load %arg14[%c0_22, %c0_23] : memref<272x256xf32, #tpu.memory_space<vmem>>, vector<68x64xf32>
    tpu.vector_store %arg14[%c0_22, %c0_23], %67 {strides = array<i32>} : memref<272x256xf32, #tpu.memory_space<vmem>>, vector<68x64xf32>,
    %69 = vector.extract_strided_slice %50 {offsets = [0, 64], sizes = [68, 64], strides = [1, 1]} : vector<68x768xbf16> to vector<68x64xbf16>
    %70 = vector.extract_strided_slice %50 {offsets = [0, 320], sizes = [68, 64], strides = [1, 1]} : vector<68x768xbf16> to vector<68x64xbf16>
    %71 = vector.extract_strided_slice %50 {offsets = [0, 576], sizes = [68, 64], strides = [1, 1]} : vector<68x768xbf16> to vector<68x64xbf16>
    %cst_24 = arith.constant dense<0.000000e+00> : vector<68x68xf32>
    %72 = tpu.matmul %69, %70, %cst_24 {dimension_numbers = #tpu.dot_dimension_numbers<[1], [1], [0], [0], [0, 0, 1, 0], [], []>} : vector<68x64xbf16>, vector<68x64xbf16>, vector<68x68xf32> -> vector<68x68xf32>
    %73 = arith.addf %72, %49 : vector<68x68xf32>
    %cst_25 = arith.constant dense<0xFF800000> : vector<68xf32>
    %74 = vector.multi_reduction <maximumf>, %73, %cst_25 [1] : vector<68x68xf32> to vector<68xf32>
    %75 = vector.shape_cast %74 : vector<68xf32> to vector<68x1xf32>
    %76 = vector.broadcast %75 : vector<68x1xf32> to vector<68x68xf32>
    %77 = arith.subf %73, %76 : vector<68x68xf32>
    %78 = math.exp %77 : vector<68x68xf32>
    %cst_26 = arith.constant dense<0.000000e+00> : vector<68xf32>
    %79 = vector.multi_reduction <add>, %78, %cst_26 [1] : vector<68x68xf32> to vector<68xf32>
    %80 = vector.shape_cast %79 : vector<68xf32> to vector<68x1xf32>
    %81 = tpu.reciprocal %80 {approx = true} : vector<68x1xf32> -> vector<68x1xf32>
    %82 = vector.broadcast %81 : vector<68x1xf32> to vector<68x68xf32>
    %83 = arith.mulf %78, %82 : vector<68x68xf32>
    %84 = arith.truncf %83 : vector<68x68xf32> to vector<68x68xbf16>
    %cst_27 = arith.constant dense<0.000000e+00> : vector<68x64xf32>
    %85 = tpu.matmul %84, %71, %cst_27 {dimension_numbers = #tpu.dot_dimension_numbers<[1], [0], [0], [1], [0, 0, 1, 1], [], []>} : vector<68x68xbf16>, vector<68x64xbf16>, vector<68x64xf32> -> vector<68x64xf32>
    %c0_28 = arith.constant 0 : index
    %c64 = arith.constant 64 : index
    %86 = vector.load %arg14[%c0_28, %c64] : memref<272x256xf32, #tpu.memory_space<vmem>>, vector<68x64xf32>
    tpu.vector_store %arg14[%c0_28, %c64], %85 {strides = array<i32>} : memref<272x256xf32, #tpu.memory_space<vmem>>, vector<68x64xf32>,
    %87 = vector.extract_strided_slice %50 {offsets = [0, 128], sizes = [68, 64], strides = [1, 1]} : vector<68x768xbf16> to vector<68x64xbf16>
    %88 = vector.extract_strided_slice %50 {offsets = [0, 384], sizes = [68, 64], strides = [1, 1]} : vector<68x768xbf16> to vector<68x64xbf16>
    %89 = vector.extract_strided_slice %50 {offsets = [0, 640], sizes = [68, 64], strides = [1, 1]} : vector<68x768xbf16> to vector<68x64xbf16>
    %cst_29 = arith.constant dense<0.000000e+00> : vector<68x68xf32>
    %90 = tpu.matmul %87, %88, %cst_29 {dimension_numbers = #tpu.dot_dimension_numbers<[1], [1], [0], [0], [0, 0, 1, 0], [], []>} : vector<68x64xbf16>, vector<68x64xbf16>, vector<68x68xf32> -> vector<68x68xf32>
    %91 = arith.addf %90, %49 : vector<68x68xf32>
    %cst_30 = arith.constant dense<0xFF800000> : vector<68xf32>
    %92 = vector.multi_reduction <maximumf>, %91, %cst_30 [1] : vector<68x68xf32> to vector<68xf32>
    %93 = vector.shape_cast %92 : vector<68xf32> to vector<68x1xf32>
    %94 = vector.broadcast %93 : vector<68x1xf32> to vector<68x68xf32>
    %95 = arith.subf %91, %94 : vector<68x68xf32>
    %96 = math.exp %95 : vector<68x68xf32>
    %cst_31 = arith.constant dense<0.000000e+00> : vector<68xf32>
    %97 = vector.multi_reduction <add>, %96, %cst_31 [1] : vector<68x68xf32> to vector<68xf32>
    %98 = vector.shape_cast %97 : vector<68xf32> to vector<68x1xf32>
    %99 = tpu.reciprocal %98 {approx = true} : vector<68x1xf32> -> vector<68x1xf32>
    %100 = vector.broadcast %99 : vector<68x1xf32> to vector<68x68xf32>
    %101 = arith.mulf %96, %100 : vector<68x68xf32>
    %102 = arith.truncf %101 : vector<68x68xf32> to vector<68x68xbf16>
    %cst_32 = arith.constant dense<0.000000e+00> : vector<68x64xf32>
    %103 = tpu.matmul %102, %89, %cst_32 {dimension_numbers = #tpu.dot_dimension_numbers<[1], [0], [0], [1], [0, 0, 1, 1], [], []>} : vector<68x68xbf16>, vector<68x64xbf16>, vector<68x64xf32> -> vector<68x64xf32>
    %c0_33 = arith.constant 0 : index
    %c128 = arith.constant 128 : index
    %104 = vector.load %arg14[%c0_33, %c128] : memref<272x256xf32, #tpu.memory_space<vmem>>, vector<68x64xf32>
    tpu.vector_store %arg14[%c0_33, %c128], %103 {strides = array<i32>} : memref<272x256xf32, #tpu.memory_space<vmem>>, vector<68x64xf32>,
    %105 = vector.extract_strided_slice %50 {offsets = [0, 192], sizes = [68, 64], strides = [1, 1]} : vector<68x768xbf16> to vector<68x64xbf16>
    %106 = vector.extract_strided_slice %50 {offsets = [0, 448], sizes = [68, 64], strides = [1, 1]} : vector<68x768xbf16> to vector<68x64xbf16>
    %107 = vector.extract_strided_slice %50 {offsets = [0, 704], sizes = [68, 64], strides = [1, 1]} : vector<68x768xbf16> to vector<68x64xbf16>
    %cst_34 = arith.constant dense<0.000000e+00> : vector<68x68xf32>
    %108 = tpu.matmul %105, %106, %cst_34 {dimension_numbers = #tpu.dot_dimension_numbers<[1], [1], [0], [0], [0, 0, 1, 0], [], []>} : vector<68x64xbf16>, vector<68x64xbf16>, vector<68x68xf32> -> vector<68x68xf32>
    %109 = arith.addf %108, %49 : vector<68x68xf32>
    %cst_35 = arith.constant dense<0xFF800000> : vector<68xf32>
    %110 = vector.multi_reduction <maximumf>, %109, %cst_35 [1] : vector<68x68xf32> to vector<68xf32>
    %111 = vector.shape_cast %110 : vector<68xf32> to vector<68x1xf32>
    %112 = vector.broadcast %111 : vector<68x1xf32> to vector<68x68xf32>
    %113 = arith.subf %109, %112 : vector<68x68xf32>
    %114 = math.exp %113 : vector<68x68xf32>
    %cst_36 = arith.constant dense<0.000000e+00> : vector<68xf32>
    %115 = vector.multi_reduction <add>, %114, %cst_36 [1] : vector<68x68xf32> to vector<68xf32>
    %116 = vector.shape_cast %115 : vector<68xf32> to vector<68x1xf32>
    %117 = tpu.reciprocal %116 {approx = true} : vector<68x1xf32> -> vector<68x1xf32>
    %118 = vector.broadcast %117 : vector<68x1xf32> to vector<68x68xf32>
    %119 = arith.mulf %114, %118 : vector<68x68xf32>
    %120 = arith.truncf %119 : vector<68x68xf32> to vector<68x68xbf16>
    %cst_37 = arith.constant dense<0.000000e+00> : vector<68x64xf32>
    %121 = tpu.matmul %120, %107, %cst_37 {dimension_numbers = #tpu.dot_dimension_numbers<[1], [0], [0], [1], [0, 0, 1, 1], [], []>} : vector<68x68xbf16>, vector<68x64xbf16>, vector<68x64xf32> -> vector<68x64xf32>
    %c0_38 = arith.constant 0 : index
    %c192 = arith.constant 192 : index
    %122 = vector.load %arg14[%c0_38, %c192] : memref<272x256xf32, #tpu.memory_space<vmem>>, vector<68x64xf32>
    tpu.vector_store %arg14[%c0_38, %c192], %121 {strides = array<i32>} : memref<272x256xf32, #tpu.memory_space<vmem>>, vector<68x64xf32>,
    %123 = vector.extract_strided_slice %29 {offsets = [68, 0], sizes = [68, 768], strides = [1, 1]} : vector<272x768xbf16> to vector<68x768xbf16>
    %124 = vector.extract_strided_slice %123 {offsets = [0, 0], sizes = [68, 64], strides = [1, 1]} : vector<68x768xbf16> to vector<68x64xbf16>
    %125 = vector.extract_strided_slice %123 {offsets = [0, 256], sizes = [68, 64], strides = [1, 1]} : vector<68x768xbf16> to vector<68x64xbf16>
    %126 = vector.extract_strided_slice %123 {offsets = [0, 512], sizes = [68, 64], strides = [1, 1]} : vector<68x768xbf16> to vector<68x64xbf16>
    %cst_39 = arith.constant dense<0.000000e+00> : vector<68x68xf32>
    %127 = tpu.matmul %124, %125, %cst_39 {dimension_numbers = #tpu.dot_dimension_numbers<[1], [1], [0], [0], [0, 0, 1, 0], [], []>} : vector<68x64xbf16>, vector<68x64xbf16>, vector<68x68xf32> -> vector<68x68xf32>
    %128 = arith.addf %127, %49 : vector<68x68xf32>
    %cst_40 = arith.constant dense<0xFF800000> : vector<68xf32>
    %129 = vector.multi_reduction <maximumf>, %128, %cst_40 [1] : vector<68x68xf32> to vector<68xf32>
    %130 = vector.shape_cast %129 : vector<68xf32> to vector<68x1xf32>
    %131 = vector.broadcast %130 : vector<68x1xf32> to vector<68x68xf32>
    %132 = arith.subf %128, %131 : vector<68x68xf32>
    %133 = math.exp %132 : vector<68x68xf32>
    %cst_41 = arith.constant dense<0.000000e+00> : vector<68xf32>
    %134 = vector.multi_reduction <add>, %133, %cst_41 [1] : vector<68x68xf32> to vector<68xf32>
    %135 = vector.shape_cast %134 : vector<68xf32> to vector<68x1xf32>
    %136 = tpu.reciprocal %135 {approx = true} : vector<68x1xf32> -> vector<68x1xf32>
    %137 = vector.broadcast %136 : vector<68x1xf32> to vector<68x68xf32>
    %138 = arith.mulf %133, %137 : vector<68x68xf32>
    %139 = arith.truncf %138 : vector<68x68xf32> to vector<68x68xbf16>
    %cst_42 = arith.constant dense<0.000000e+00> : vector<68x64xf32>
    %140 = tpu.matmul %139, %126, %cst_42 {dimension_numbers = #tpu.dot_dimension_numbers<[1], [0], [0], [1], [0, 0, 1, 1], [], []>} : vector<68x68xbf16>, vector<68x64xbf16>, vector<68x64xf32> -> vector<68x64xf32>
    %c68 = arith.constant 68 : index
    %c0_43 = arith.constant 0 : index
    %141 = vector.load %arg14[%c68, %c0_43] : memref<272x256xf32, #tpu.memory_space<vmem>>, vector<68x64xf32>
    tpu.vector_store %arg14[%c68, %c0_43], %140 {strides = array<i32>} : memref<272x256xf32, #tpu.memory_space<vmem>>, vector<68x64xf32>,
    %142 = vector.extract_strided_slice %123 {offsets = [0, 64], sizes = [68, 64], strides = [1, 1]} : vector<68x768xbf16> to vector<68x64xbf16>
    %143 = vector.extract_strided_slice %123 {offsets = [0, 320], sizes = [68, 64], strides = [1, 1]} : vector<68x768xbf16> to vector<68x64xbf16>
    %144 = vector.extract_strided_slice %123 {offsets = [0, 576], sizes = [68, 64], strides = [1, 1]} : vector<68x768xbf16> to vector<68x64xbf16>
    %cst_44 = arith.constant dense<0.000000e+00> : vector<68x68xf32>
    %145 = tpu.matmul %142, %143, %cst_44 {dimension_numbers = #tpu.dot_dimension_numbers<[1], [1], [0], [0], [0, 0, 1, 0], [], []>} : vector<68x64xbf16>, vector<68x64xbf16>, vector<68x68xf32> -> vector<68x68xf32>
    %146 = arith.addf %145, %49 : vector<68x68xf32>
    %cst_45 = arith.constant dense<0xFF800000> : vector<68xf32>
    %147 = vector.multi_reduction <maximumf>, %146, %cst_45 [1] : vector<68x68xf32> to vector<68xf32>
    %148 = vector.shape_cast %147 : vector<68xf32> to vector<68x1xf32>
    %149 = vector.broadcast %148 : vector<68x1xf32> to vector<68x68xf32>
    %150 = arith.subf %146, %149 : vector<68x68xf32>
    %151 = math.exp %150 : vector<68x68xf32>
    %cst_46 = arith.constant dense<0.000000e+00> : vector<68xf32>
    %152 = vector.multi_reduction <add>, %151, %cst_46 [1] : vector<68x68xf32> to vector<68xf32>
    %153 = vector.shape_cast %152 : vector<68xf32> to vector<68x1xf32>
    %154 = tpu.reciprocal %153 {approx = true} : vector<68x1xf32> -> vector<68x1xf32>
    %155 = vector.broadcast %154 : vector<68x1xf32> to vector<68x68xf32>
    %156 = arith.mulf %151, %155 : vector<68x68xf32>
    %157 = arith.truncf %156 : vector<68x68xf32> to vector<68x68xbf16>
    %cst_47 = arith.constant dense<0.000000e+00> : vector<68x64xf32>
    %158 = tpu.matmul %157, %144, %cst_47 {dimension_numbers = #tpu.dot_dimension_numbers<[1], [0], [0], [1], [0, 0, 1, 1], [], []>} : vector<68x68xbf16>, vector<68x64xbf16>, vector<68x64xf32> -> vector<68x64xf32>
    %c68_48 = arith.constant 68 : index
    %c64_49 = arith.constant 64 : index
    %159 = vector.load %arg14[%c68_48, %c64_49] : memref<272x256xf32, #tpu.memory_space<vmem>>, vector<68x64xf32>
    tpu.vector_store %arg14[%c68_48, %c64_49], %158 {strides = array<i32>} : memref<272x256xf32, #tpu.memory_space<vmem>>, vector<68x64xf32>,
    %160 = vector.extract_strided_slice %123 {offsets = [0, 128], sizes = [68, 64], strides = [1, 1]} : vector<68x768xbf16> to vector<68x64xbf16>
    %161 = vector.extract_strided_slice %123 {offsets = [0, 384], sizes = [68, 64], strides = [1, 1]} : vector<68x768xbf16> to vector<68x64xbf16>
    %162 = vector.extract_strided_slice %123 {offsets = [0, 640], sizes = [68, 64], strides = [1, 1]} : vector<68x768xbf16> to vector<68x64xbf16>
    %cst_50 = arith.constant dense<0.000000e+00> : vector<68x68xf32>
    %163 = tpu.matmul %160, %161, %cst_50 {dimension_numbers = #tpu.dot_dimension_numbers<[1], [1], [0], [0], [0, 0, 1, 0], [], []>} : vector<68x64xbf16>, vector<68x64xbf16>, vector<68x68xf32> -> vector<68x68xf32>
    %164 = arith.addf %163, %49 : vector<68x68xf32>
    %cst_51 = arith.constant dense<0xFF800000> : vector<68xf32>
    %165 = vector.multi_reduction <maximumf>, %164, %cst_51 [1] : vector<68x68xf32> to vector<68xf32>
    %166 = vector.shape_cast %165 : vector<68xf32> to vector<68x1xf32>
    %167 = vector.broadcast %166 : vector<68x1xf32> to vector<68x68xf32>
    %168 = arith.subf %164, %167 : vector<68x68xf32>
    %169 = math.exp %168 : vector<68x68xf32>
    %cst_52 = arith.constant dense<0.000000e+00> : vector<68xf32>
    %170 = vector.multi_reduction <add>, %169, %cst_52 [1] : vector<68x68xf32> to vector<68xf32>
    %171 = vector.shape_cast %170 : vector<68xf32> to vector<68x1xf32>
    %172 = tpu.reciprocal %171 {approx = true} : vector<68x1xf32> -> vector<68x1xf32>
    %173 = vector.broadcast %172 : vector<68x1xf32> to vector<68x68xf32>
    %174 = arith.mulf %169, %173 : vector<68x68xf32>
    %175 = arith.truncf %174 : vector<68x68xf32> to vector<68x68xbf16>
    %cst_53 = arith.constant dense<0.000000e+00> : vector<68x64xf32>
    %176 = tpu.matmul %175, %162, %cst_53 {dimension_numbers = #tpu.dot_dimension_numbers<[1], [0], [0], [1], [0, 0, 1, 1], [], []>} : vector<68x68xbf16>, vector<68x64xbf16>, vector<68x64xf32> -> vector<68x64xf32>
    %c68_54 = arith.constant 68 : index
    %c128_55 = arith.constant 128 : index
    %177 = vector.load %arg14[%c68_54, %c128_55] : memref<272x256xf32, #tpu.memory_space<vmem>>, vector<68x64xf32>
    tpu.vector_store %arg14[%c68_54, %c128_55], %176 {strides = array<i32>} : memref<272x256xf32, #tpu.memory_space<vmem>>, vector<68x64xf32>,
    %178 = vector.extract_strided_slice %123 {offsets = [0, 192], sizes = [68, 64], strides = [1, 1]} : vector<68x768xbf16> to vector<68x64xbf16>
    %179 = vector.extract_strided_slice %123 {offsets = [0, 448], sizes = [68, 64], strides = [1, 1]} : vector<68x768xbf16> to vector<68x64xbf16>
    %180 = vector.extract_strided_slice %123 {offsets = [0, 704], sizes = [68, 64], strides = [1, 1]} : vector<68x768xbf16> to vector<68x64xbf16>
    %cst_56 = arith.constant dense<0.000000e+00> : vector<68x68xf32>
    %181 = tpu.matmul %178, %179, %cst_56 {dimension_numbers = #tpu.dot_dimension_numbers<[1], [1], [0], [0], [0, 0, 1, 0], [], []>} : vector<68x64xbf16>, vector<68x64xbf16>, vector<68x68xf32> -> vector<68x68xf32>
    %182 = arith.addf %181, %49 : vector<68x68xf32>
    %cst_57 = arith.constant dense<0xFF800000> : vector<68xf32>
    %183 = vector.multi_reduction <maximumf>, %182, %cst_57 [1] : vector<68x68xf32> to vector<68xf32>
    %184 = vector.shape_cast %183 : vector<68xf32> to vector<68x1xf32>
    %185 = vector.broadcast %184 : vector<68x1xf32> to vector<68x68xf32>
    %186 = arith.subf %182, %185 : vector<68x68xf32>
    %187 = math.exp %186 : vector<68x68xf32>
    %cst_58 = arith.constant dense<0.000000e+00> : vector<68xf32>
    %188 = vector.multi_reduction <add>, %187, %cst_58 [1] : vector<68x68xf32> to vector<68xf32>
    %189 = vector.shape_cast %188 : vector<68xf32> to vector<68x1xf32>
    %190 = tpu.reciprocal %189 {approx = true} : vector<68x1xf32> -> vector<68x1xf32>
    %191 = vector.broadcast %190 : vector<68x1xf32> to vector<68x68xf32>
    %192 = arith.mulf %187, %191 : vector<68x68xf32>
    %193 = arith.truncf %192 : vector<68x68xf32> to vector<68x68xbf16>
    %cst_59 = arith.constant dense<0.000000e+00> : vector<68x64xf32>
    %194 = tpu.matmul %193, %180, %cst_59 {dimension_numbers = #tpu.dot_dimension_numbers<[1], [0], [0], [1], [0, 0, 1, 1], [], []>} : vector<68x68xbf16>, vector<68x64xbf16>, vector<68x64xf32> -> vector<68x64xf32>
    %c68_60 = arith.constant 68 : index
    %c192_61 = arith.constant 192 : index
    %195 = vector.load %arg14[%c68_60, %c192_61] : memref<272x256xf32, #tpu.memory_space<vmem>>, vector<68x64xf32>
    tpu.vector_store %arg14[%c68_60, %c192_61], %194 {strides = array<i32>} : memref<272x256xf32, #tpu.memory_space<vmem>>, vector<68x64xf32>,
    %196 = vector.extract_strided_slice %29 {offsets = [136, 0], sizes = [68, 768], strides = [1, 1]} : vector<272x768xbf16> to vector<68x768xbf16>
    %197 = vector.extract_strided_slice %196 {offsets = [0, 0], sizes = [68, 64], strides = [1, 1]} : vector<68x768xbf16> to vector<68x64xbf16>
    %198 = vector.extract_strided_slice %196 {offsets = [0, 256], sizes = [68, 64], strides = [1, 1]} : vector<68x768xbf16> to vector<68x64xbf16>
    %199 = vector.extract_strided_slice %196 {offsets = [0, 512], sizes = [68, 64], strides = [1, 1]} : vector<68x768xbf16> to vector<68x64xbf16>
    %cst_62 = arith.constant dense<0.000000e+00> : vector<68x68xf32>
    %200 = tpu.matmul %197, %198, %cst_62 {dimension_numbers = #tpu.dot_dimension_numbers<[1], [1], [0], [0], [0, 0, 1, 0], [], []>} : vector<68x64xbf16>, vector<68x64xbf16>, vector<68x68xf32> -> vector<68x68xf32>
    %201 = arith.addf %200, %49 : vector<68x68xf32>
    %cst_63 = arith.constant dense<0xFF800000> : vector<68xf32>
    %202 = vector.multi_reduction <maximumf>, %201, %cst_63 [1] : vector<68x68xf32> to vector<68xf32>
    %203 = vector.shape_cast %202 : vector<68xf32> to vector<68x1xf32>
    %204 = vector.broadcast %203 : vector<68x1xf32> to vector<68x68xf32>
    %205 = arith.subf %201, %204 : vector<68x68xf32>
    %206 = math.exp %205 : vector<68x68xf32>
    %cst_64 = arith.constant dense<0.000000e+00> : vector<68xf32>
    %207 = vector.multi_reduction <add>, %206, %cst_64 [1] : vector<68x68xf32> to vector<68xf32>
    %208 = vector.shape_cast %207 : vector<68xf32> to vector<68x1xf32>
    %209 = tpu.reciprocal %208 {approx = true} : vector<68x1xf32> -> vector<68x1xf32>
    %210 = vector.broadcast %209 : vector<68x1xf32> to vector<68x68xf32>
    %211 = arith.mulf %206, %210 : vector<68x68xf32>
    %212 = arith.truncf %211 : vector<68x68xf32> to vector<68x68xbf16>
    %cst_65 = arith.constant dense<0.000000e+00> : vector<68x64xf32>
    %213 = tpu.matmul %212, %199, %cst_65 {dimension_numbers = #tpu.dot_dimension_numbers<[1], [0], [0], [1], [0, 0, 1, 1], [], []>} : vector<68x68xbf16>, vector<68x64xbf16>, vector<68x64xf32> -> vector<68x64xf32>
    %c136 = arith.constant 136 : index
    %c0_66 = arith.constant 0 : index
    %214 = vector.load %arg14[%c136, %c0_66] : memref<272x256xf32, #tpu.memory_space<vmem>>, vector<68x64xf32>
    tpu.vector_store %arg14[%c136, %c0_66], %213 {strides = array<i32>} : memref<272x256xf32, #tpu.memory_space<vmem>>, vector<68x64xf32>,
    %215 = vector.extract_strided_slice %196 {offsets = [0, 64], sizes = [68, 64], strides = [1, 1]} : vector<68x768xbf16> to vector<68x64xbf16>
    %216 = vector.extract_strided_slice %196 {offsets = [0, 320], sizes = [68, 64], strides = [1, 1]} : vector<68x768xbf16> to vector<68x64xbf16>
    %217 = vector.extract_strided_slice %196 {offsets = [0, 576], sizes = [68, 64], strides = [1, 1]} : vector<68x768xbf16> to vector<68x64xbf16>
    %cst_67 = arith.constant dense<0.000000e+00> : vector<68x68xf32>
    %218 = tpu.matmul %215, %216, %cst_67 {dimension_numbers = #tpu.dot_dimension_numbers<[1], [1], [0], [0], [0, 0, 1, 0], [], []>} : vector<68x64xbf16>, vector<68x64xbf16>, vector<68x68xf32> -> vector<68x68xf32>
    %219 = arith.addf %218, %49 : vector<68x68xf32>
    %cst_68 = arith.constant dense<0xFF800000> : vector<68xf32>
    %220 = vector.multi_reduction <maximumf>, %219, %cst_68 [1] : vector<68x68xf32> to vector<68xf32>
    %221 = vector.shape_cast %220 : vector<68xf32> to vector<68x1xf32>
    %222 = vector.broadcast %221 : vector<68x1xf32> to vector<68x68xf32>
    %223 = arith.subf %219, %222 : vector<68x68xf32>
    %224 = math.exp %223 : vector<68x68xf32>
    %cst_69 = arith.constant dense<0.000000e+00> : vector<68xf32>
    %225 = vector.multi_reduction <add>, %224, %cst_69 [1] : vector<68x68xf32> to vector<68xf32>
    %226 = vector.shape_cast %225 : vector<68xf32> to vector<68x1xf32>
    %227 = tpu.reciprocal %226 {approx = true} : vector<68x1xf32> -> vector<68x1xf32>
    %228 = vector.broadcast %227 : vector<68x1xf32> to vector<68x68xf32>
    %229 = arith.mulf %224, %228 : vector<68x68xf32>
    %230 = arith.truncf %229 : vector<68x68xf32> to vector<68x68xbf16>
    %cst_70 = arith.constant dense<0.000000e+00> : vector<68x64xf32>
    %231 = tpu.matmul %230, %217, %cst_70 {dimension_numbers = #tpu.dot_dimension_numbers<[1], [0], [0], [1], [0, 0, 1, 1], [], []>} : vector<68x68xbf16>, vector<68x64xbf16>, vector<68x64xf32> -> vector<68x64xf32>
    %c136_71 = arith.constant 136 : index
    %c64_72 = arith.constant 64 : index
    %232 = vector.load %arg14[%c136_71, %c64_72] : memref<272x256xf32, #tpu.memory_space<vmem>>, vector<68x64xf32>
    tpu.vector_store %arg14[%c136_71, %c64_72], %231 {strides = array<i32>} : memref<272x256xf32, #tpu.memory_space<vmem>>, vector<68x64xf32>,
    %233 = vector.extract_strided_slice %196 {offsets = [0, 128], sizes = [68, 64], strides = [1, 1]} : vector<68x768xbf16> to vector<68x64xbf16>
    %234 = vector.extract_strided_slice %196 {offsets = [0, 384], sizes = [68, 64], strides = [1, 1]} : vector<68x768xbf16> to vector<68x64xbf16>
    %235 = vector.extract_strided_slice %196 {offsets = [0, 640], sizes = [68, 64], strides = [1, 1]} : vector<68x768xbf16> to vector<68x64xbf16>
    %cst_73 = arith.constant dense<0.000000e+00> : vector<68x68xf32>
    %236 = tpu.matmul %233, %234, %cst_73 {dimension_numbers = #tpu.dot_dimension_numbers<[1], [1], [0], [0], [0, 0, 1, 0], [], []>} : vector<68x64xbf16>, vector<68x64xbf16>, vector<68x68xf32> -> vector<68x68xf32>
    %237 = arith.addf %236, %49 : vector<68x68xf32>
    %cst_74 = arith.constant dense<0xFF800000> : vector<68xf32>
    %238 = vector.multi_reduction <maximumf>, %237, %cst_74 [1] : vector<68x68xf32> to vector<68xf32>
    %239 = vector.shape_cast %238 : vector<68xf32> to vector<68x1xf32>
    %240 = vector.broadcast %239 : vector<68x1xf32> to vector<68x68xf32>
    %241 = arith.subf %237, %240 : vector<68x68xf32>
    %242 = math.exp %241 : vector<68x68xf32>
    %cst_75 = arith.constant dense<0.000000e+00> : vector<68xf32>
    %243 = vector.multi_reduction <add>, %242, %cst_75 [1] : vector<68x68xf32> to vector<68xf32>
    %244 = vector.shape_cast %243 : vector<68xf32> to vector<68x1xf32>
    %245 = tpu.reciprocal %244 {approx = true} : vector<68x1xf32> -> vector<68x1xf32>
    %246 = vector.broadcast %245 : vector<68x1xf32> to vector<68x68xf32>
    %247 = arith.mulf %242, %246 : vector<68x68xf32>
    %248 = arith.truncf %247 : vector<68x68xf32> to vector<68x68xbf16>
    %cst_76 = arith.constant dense<0.000000e+00> : vector<68x64xf32>
    %249 = tpu.matmul %248, %235, %cst_76 {dimension_numbers = #tpu.dot_dimension_numbers<[1], [0], [0], [1], [0, 0, 1, 1], [], []>} : vector<68x68xbf16>, vector<68x64xbf16>, vector<68x64xf32> -> vector<68x64xf32>
    %c136_77 = arith.constant 136 : index
    %c128_78 = arith.constant 128 : index
    %250 = vector.load %arg14[%c136_77, %c128_78] : memref<272x256xf32, #tpu.memory_space<vmem>>, vector<68x64xf32>
    tpu.vector_store %arg14[%c136_77, %c128_78], %249 {strides = array<i32>} : memref<272x256xf32, #tpu.memory_space<vmem>>, vector<68x64xf32>,
    %251 = vector.extract_strided_slice %196 {offsets = [0, 192], sizes = [68, 64], strides = [1, 1]} : vector<68x768xbf16> to vector<68x64xbf16>
    %252 = vector.extract_strided_slice %196 {offsets = [0, 448], sizes = [68, 64], strides = [1, 1]} : vector<68x768xbf16> to vector<68x64xbf16>
    %253 = vector.extract_strided_slice %196 {offsets = [0, 704], sizes = [68, 64], strides = [1, 1]} : vector<68x768xbf16> to vector<68x64xbf16>
    %cst_79 = arith.constant dense<0.000000e+00> : vector<68x68xf32>
    %254 = tpu.matmul %251, %252, %cst_79 {dimension_numbers = #tpu.dot_dimension_numbers<[1], [1], [0], [0], [0, 0, 1, 0], [], []>} : vector<68x64xbf16>, vector<68x64xbf16>, vector<68x68xf32> -> vector<68x68xf32>
    %255 = arith.addf %254, %49 : vector<68x68xf32>
    %cst_80 = arith.constant dense<0xFF800000> : vector<68xf32>
    %256 = vector.multi_reduction <maximumf>, %255, %cst_80 [1] : vector<68x68xf32> to vector<68xf32>
    %257 = vector.shape_cast %256 : vector<68xf32> to vector<68x1xf32>
    %258 = vector.broadcast %257 : vector<68x1xf32> to vector<68x68xf32>
    %259 = arith.subf %255, %258 : vector<68x68xf32>
    %260 = math.exp %259 : vector<68x68xf32>
    %cst_81 = arith.constant dense<0.000000e+00> : vector<68xf32>
    %261 = vector.multi_reduction <add>, %260, %cst_81 [1] : vector<68x68xf32> to vector<68xf32>
    %262 = vector.shape_cast %261 : vector<68xf32> to vector<68x1xf32>
    %263 = tpu.reciprocal %262 {approx = true} : vector<68x1xf32> -> vector<68x1xf32>
    %264 = vector.broadcast %263 : vector<68x1xf32> to vector<68x68xf32>
    %265 = arith.mulf %260, %264 : vector<68x68xf32>
    %266 = arith.truncf %265 : vector<68x68xf32> to vector<68x68xbf16>
    %cst_82 = arith.constant dense<0.000000e+00> : vector<68x64xf32>
    %267 = tpu.matmul %266, %253, %cst_82 {dimension_numbers = #tpu.dot_dimension_numbers<[1], [0], [0], [1], [0, 0, 1, 1], [], []>} : vector<68x68xbf16>, vector<68x64xbf16>, vector<68x64xf32> -> vector<68x64xf32>
    %c136_83 = arith.constant 136 : index
    %c192_84 = arith.constant 192 : index
    %268 = vector.load %arg14[%c136_83, %c192_84] : memref<272x256xf32, #tpu.memory_space<vmem>>, vector<68x64xf32>
    tpu.vector_store %arg14[%c136_83, %c192_84], %267 {strides = array<i32>} : memref<272x256xf32, #tpu.memory_space<vmem>>, vector<68x64xf32>,
    %269 = vector.extract_strided_slice %29 {offsets = [204, 0], sizes = [68, 768], strides = [1, 1]} : vector<272x768xbf16> to vector<68x768xbf16>
    %270 = vector.extract_strided_slice %269 {offsets = [0, 0], sizes = [68, 64], strides = [1, 1]} : vector<68x768xbf16> to vector<68x64xbf16>
    %271 = vector.extract_strided_slice %269 {offsets = [0, 256], sizes = [68, 64], strides = [1, 1]} : vector<68x768xbf16> to vector<68x64xbf16>
    %272 = vector.extract_strided_slice %269 {offsets = [0, 512], sizes = [68, 64], strides = [1, 1]} : vector<68x768xbf16> to vector<68x64xbf16>
    %cst_85 = arith.constant dense<0.000000e+00> : vector<68x68xf32>
    %273 = tpu.matmul %270, %271, %cst_85 {dimension_numbers = #tpu.dot_dimension_numbers<[1], [1], [0], [0], [0, 0, 1, 0], [], []>} : vector<68x64xbf16>, vector<68x64xbf16>, vector<68x68xf32> -> vector<68x68xf32>
    %274 = arith.addf %273, %49 : vector<68x68xf32>
    %cst_86 = arith.constant dense<0xFF800000> : vector<68xf32>
    %275 = vector.multi_reduction <maximumf>, %274, %cst_86 [1] : vector<68x68xf32> to vector<68xf32>
    %276 = vector.shape_cast %275 : vector<68xf32> to vector<68x1xf32>
    %277 = vector.broadcast %276 : vector<68x1xf32> to vector<68x68xf32>
    %278 = arith.subf %274, %277 : vector<68x68xf32>
    %279 = math.exp %278 : vector<68x68xf32>
    %cst_87 = arith.constant dense<0.000000e+00> : vector<68xf32>
    %280 = vector.multi_reduction <add>, %279, %cst_87 [1] : vector<68x68xf32> to vector<68xf32>
    %281 = vector.shape_cast %280 : vector<68xf32> to vector<68x1xf32>
    %282 = tpu.reciprocal %281 {approx = true} : vector<68x1xf32> -> vector<68x1xf32>
    %283 = vector.broadcast %282 : vector<68x1xf32> to vector<68x68xf32>
    %284 = arith.mulf %279, %283 : vector<68x68xf32>
    %285 = arith.truncf %284 : vector<68x68xf32> to vector<68x68xbf16>
    %cst_88 = arith.constant dense<0.000000e+00> : vector<68x64xf32>
    %286 = tpu.matmul %285, %272, %cst_88 {dimension_numbers = #tpu.dot_dimension_numbers<[1], [0], [0], [1], [0, 0, 1, 1], [], []>} : vector<68x68xbf16>, vector<68x64xbf16>, vector<68x64xf32> -> vector<68x64xf32>
    %c204 = arith.constant 204 : index
    %c0_89 = arith.constant 0 : index
    %287 = vector.load %arg14[%c204, %c0_89] : memref<272x256xf32, #tpu.memory_space<vmem>>, vector<68x64xf32>
    tpu.vector_store %arg14[%c204, %c0_89], %286 {strides = array<i32>} : memref<272x256xf32, #tpu.memory_space<vmem>>, vector<68x64xf32>,
    %288 = vector.extract_strided_slice %269 {offsets = [0, 64], sizes = [68, 64], strides = [1, 1]} : vector<68x768xbf16> to vector<68x64xbf16>
    %289 = vector.extract_strided_slice %269 {offsets = [0, 320], sizes = [68, 64], strides = [1, 1]} : vector<68x768xbf16> to vector<68x64xbf16>
    %290 = vector.extract_strided_slice %269 {offsets = [0, 576], sizes = [68, 64], strides = [1, 1]} : vector<68x768xbf16> to vector<68x64xbf16>
    %cst_90 = arith.constant dense<0.000000e+00> : vector<68x68xf32>
    %291 = tpu.matmul %288, %289, %cst_90 {dimension_numbers = #tpu.dot_dimension_numbers<[1], [1], [0], [0], [0, 0, 1, 0], [], []>} : vector<68x64xbf16>, vector<68x64xbf16>, vector<68x68xf32> -> vector<68x68xf32>
    %292 = arith.addf %291, %49 : vector<68x68xf32>
    %cst_91 = arith.constant dense<0xFF800000> : vector<68xf32>
    %293 = vector.multi_reduction <maximumf>, %292, %cst_91 [1] : vector<68x68xf32> to vector<68xf32>
    %294 = vector.shape_cast %293 : vector<68xf32> to vector<68x1xf32>
    %295 = vector.broadcast %294 : vector<68x1xf32> to vector<68x68xf32>
    %296 = arith.subf %292, %295 : vector<68x68xf32>
    %297 = math.exp %296 : vector<68x68xf32>
    %cst_92 = arith.constant dense<0.000000e+00> : vector<68xf32>
    %298 = vector.multi_reduction <add>, %297, %cst_92 [1] : vector<68x68xf32> to vector<68xf32>
    %299 = vector.shape_cast %298 : vector<68xf32> to vector<68x1xf32>
    %300 = tpu.reciprocal %299 {approx = true} : vector<68x1xf32> -> vector<68x1xf32>
    %301 = vector.broadcast %300 : vector<68x1xf32> to vector<68x68xf32>
    %302 = arith.mulf %297, %301 : vector<68x68xf32>
    %303 = arith.truncf %302 : vector<68x68xf32> to vector<68x68xbf16>
    %cst_93 = arith.constant dense<0.000000e+00> : vector<68x64xf32>
    %304 = tpu.matmul %303, %290, %cst_93 {dimension_numbers = #tpu.dot_dimension_numbers<[1], [0], [0], [1], [0, 0, 1, 1], [], []>} : vector<68x68xbf16>, vector<68x64xbf16>, vector<68x64xf32> -> vector<68x64xf32>
    %c204_94 = arith.constant 204 : index
    %c64_95 = arith.constant 64 : index
    %305 = vector.load %arg14[%c204_94, %c64_95] : memref<272x256xf32, #tpu.memory_space<vmem>>, vector<68x64xf32>
    tpu.vector_store %arg14[%c204_94, %c64_95], %304 {strides = array<i32>} : memref<272x256xf32, #tpu.memory_space<vmem>>, vector<68x64xf32>,
    %306 = vector.extract_strided_slice %269 {offsets = [0, 128], sizes = [68, 64], strides = [1, 1]} : vector<68x768xbf16> to vector<68x64xbf16>
    %307 = vector.extract_strided_slice %269 {offsets = [0, 384], sizes = [68, 64], strides = [1, 1]} : vector<68x768xbf16> to vector<68x64xbf16>
    %308 = vector.extract_strided_slice %269 {offsets = [0, 640], sizes = [68, 64], strides = [1, 1]} : vector<68x768xbf16> to vector<68x64xbf16>
    %cst_96 = arith.constant dense<0.000000e+00> : vector<68x68xf32>
    %309 = tpu.matmul %306, %307, %cst_96 {dimension_numbers = #tpu.dot_dimension_numbers<[1], [1], [0], [0], [0, 0, 1, 0], [], []>} : vector<68x64xbf16>, vector<68x64xbf16>, vector<68x68xf32> -> vector<68x68xf32>
    %310 = arith.addf %309, %49 : vector<68x68xf32>
    %cst_97 = arith.constant dense<0xFF800000> : vector<68xf32>
    %311 = vector.multi_reduction <maximumf>, %310, %cst_97 [1] : vector<68x68xf32> to vector<68xf32>
    %312 = vector.shape_cast %311 : vector<68xf32> to vector<68x1xf32>
    %313 = vector.broadcast %312 : vector<68x1xf32> to vector<68x68xf32>
    %314 = arith.subf %310, %313 : vector<68x68xf32>
    %315 = math.exp %314 : vector<68x68xf32>
    %cst_98 = arith.constant dense<0.000000e+00> : vector<68xf32>
    %316 = vector.multi_reduction <add>, %315, %cst_98 [1] : vector<68x68xf32> to vector<68xf32>
    %317 = vector.shape_cast %316 : vector<68xf32> to vector<68x1xf32>
    %318 = tpu.reciprocal %317 {approx = true} : vector<68x1xf32> -> vector<68x1xf32>
    %319 = vector.broadcast %318 : vector<68x1xf32> to vector<68x68xf32>
    %320 = arith.mulf %315, %319 : vector<68x68xf32>
    %321 = arith.truncf %320 : vector<68x68xf32> to vector<68x68xbf16>
    %cst_99 = arith.constant dense<0.000000e+00> : vector<68x64xf32>
    %322 = tpu.matmul %321, %308, %cst_99 {dimension_numbers = #tpu.dot_dimension_numbers<[1], [0], [0], [1], [0, 0, 1, 1], [], []>} : vector<68x68xbf16>, vector<68x64xbf16>, vector<68x64xf32> -> vector<68x64xf32>
    %c204_100 = arith.constant 204 : index
    %c128_101 = arith.constant 128 : index
    %323 = vector.load %arg14[%c204_100, %c128_101] : memref<272x256xf32, #tpu.memory_space<vmem>>, vector<68x64xf32>
    tpu.vector_store %arg14[%c204_100, %c128_101], %322 {strides = array<i32>} : memref<272x256xf32, #tpu.memory_space<vmem>>, vector<68x64xf32>,
    %324 = vector.extract_strided_slice %269 {offsets = [0, 192], sizes = [68, 64], strides = [1, 1]} : vector<68x768xbf16> to vector<68x64xbf16>
    %325 = vector.extract_strided_slice %269 {offsets = [0, 448], sizes = [68, 64], strides = [1, 1]} : vector<68x768xbf16> to vector<68x64xbf16>
    %326 = vector.extract_strided_slice %269 {offsets = [0, 704], sizes = [68, 64], strides = [1, 1]} : vector<68x768xbf16> to vector<68x64xbf16>
    %cst_102 = arith.constant dense<0.000000e+00> : vector<68x68xf32>
    %327 = tpu.matmul %324, %325, %cst_102 {dimension_numbers = #tpu.dot_dimension_numbers<[1], [1], [0], [0], [0, 0, 1, 0], [], []>} : vector<68x64xbf16>, vector<68x64xbf16>, vector<68x68xf32> -> vector<68x68xf32>
    %328 = arith.addf %327, %49 : vector<68x68xf32>
    %cst_103 = arith.constant dense<0xFF800000> : vector<68xf32>
    %329 = vector.multi_reduction <maximumf>, %328, %cst_103 [1] : vector<68x68xf32> to vector<68xf32>
    %330 = vector.shape_cast %329 : vector<68xf32> to vector<68x1xf32>
    %331 = vector.broadcast %330 : vector<68x1xf32> to vector<68x68xf32>
    %332 = arith.subf %328, %331 : vector<68x68xf32>
    %333 = math.exp %332 : vector<68x68xf32>
    %cst_104 = arith.constant dense<0.000000e+00> : vector<68xf32>
    %334 = vector.multi_reduction <add>, %333, %cst_104 [1] : vector<68x68xf32> to vector<68xf32>
    %335 = vector.shape_cast %334 : vector<68xf32> to vector<68x1xf32>
    %336 = tpu.reciprocal %335 {approx = true} : vector<68x1xf32> -> vector<68x1xf32>
    %337 = vector.broadcast %336 : vector<68x1xf32> to vector<68x68xf32>
    %338 = arith.mulf %333, %337 : vector<68x68xf32>
    %339 = arith.truncf %338 : vector<68x68xf32> to vector<68x68xbf16>
    %cst_105 = arith.constant dense<0.000000e+00> : vector<68x64xf32>
    %340 = tpu.matmul %339, %326, %cst_105 {dimension_numbers = #tpu.dot_dimension_numbers<[1], [0], [0], [1], [0, 0, 1, 1], [], []>} : vector<68x68xbf16>, vector<68x64xbf16>, vector<68x64xf32> -> vector<68x64xf32>
    %c204_106 = arith.constant 204 : index
    %c192_107 = arith.constant 192 : index
    %341 = vector.load %arg14[%c204_106, %c192_107] : memref<272x256xf32, #tpu.memory_space<vmem>>, vector<68x64xf32>
    tpu.vector_store %arg14[%c204_106, %c192_107], %340 {strides = array<i32>} : memref<272x256xf32, #tpu.memory_space<vmem>>, vector<68x64xf32>,
    %c0_108 = arith.constant 0 : index
    %c0_109 = arith.constant 0 : index
    %342 = vector.load %arg14[%c0_108, %c0_109] : memref<272x256xf32, #tpu.memory_space<vmem>>, vector<272x256xf32>
    %343 = arith.truncf %342 : vector<272x256xf32> to vector<272x256xbf16>
    %c0_110 = arith.constant 0 : index
    %c0_111 = arith.constant 0 : index
    %344 = vector.load %arg5[%c0_110, %c0_111] : memref<256x128xbf16, #tpu.memory_space<vmem>>, vector<256x128xbf16>
    %cst_112 = arith.constant dense<0.000000e+00> : vector<272x128xf32>
    %345 = tpu.matmul %343, %344, %cst_112 {dimension_numbers = #tpu.dot_dimension_numbers<[1], [0], [0], [1], [0, 0, 1, 1], [], []>} : vector<272x256xbf16>, vector<256x128xbf16>, vector<272x128xf32> -> vector<272x128xf32>
    %346 = arith.addf %1, %345 : vector<272x128xf32>
    %c0_113 = arith.constant 0 : index
    %c0_114 = arith.constant 0 : index
    %347 = vector.load %arg6[%c0_113, %c0_114] : memref<1x128xf32, #tpu.memory_space<vmem>>, vector<1x128xf32>
    %348 = vector.broadcast %347 : vector<1x128xf32> to vector<272x128xf32>
    %349 = arith.addf %346, %348 : vector<272x128xf32>
    %c0_115 = arith.constant 0 : index
    %c0_116 = arith.constant 0 : index
    %350 = vector.load %arg7[%c0_115, %c0_116] : memref<1x128xf32, #tpu.memory_space<vmem>>, vector<1x128xf32>
    %c0_117 = arith.constant 0 : index
    %c0_118 = arith.constant 0 : index
    %351 = vector.load %arg8[%c0_117, %c0_118] : memref<1x128xf32, #tpu.memory_space<vmem>>, vector<1x128xf32>
    %cst_119 = arith.constant dense<0.000000e+00> : vector<272xf32>
    %352 = vector.multi_reduction <add>, %349, %cst_119 [1] : vector<272x128xf32> to vector<272xf32>
    %353 = vector.shape_cast %352 : vector<272xf32> to vector<272x1xf32>
    %cst_120 = arith.constant 1.280000e+02 : f32
    %354 = vector.broadcast %cst_120 : f32 to vector<272x1xf32>
    %355 = arith.divf %353, %354 : vector<272x1xf32>
    %356 = vector.broadcast %355 : vector<272x1xf32> to vector<272x128xf32>
    %357 = arith.subf %349, %356 : vector<272x128xf32>
    %358 = arith.mulf %357, %357 : vector<272x128xf32>
    %cst_121 = arith.constant dense<0.000000e+00> : vector<272xf32>
    %359 = vector.multi_reduction <add>, %358, %cst_121 [1] : vector<272x128xf32> to vector<272xf32>
    %360 = vector.shape_cast %359 : vector<272xf32> to vector<272x1xf32>
    %cst_122 = arith.constant 1.280000e+02 : f32
    %361 = vector.broadcast %cst_122 : f32 to vector<272x1xf32>
    %362 = arith.divf %360, %361 : vector<272x1xf32>
    %363 = vector.broadcast %355 : vector<272x1xf32> to vector<272x128xf32>
    %364 = arith.subf %349, %363 : vector<272x128xf32>
    %cst_123 = arith.constant 9.99999974E-6 : f32
    %365 = vector.broadcast %cst_123 : f32 to vector<272x1xf32>
    %366 = arith.addf %362, %365 : vector<272x1xf32>
    %367 = math.rsqrt %366 : vector<272x1xf32>
    %368 = vector.broadcast %367 : vector<272x1xf32> to vector<272x128xf32>
    %369 = arith.mulf %364, %368 : vector<272x128xf32>
    %370 = vector.broadcast %350 : vector<1x128xf32> to vector<272x128xf32>
    %371 = arith.mulf %369, %370 : vector<272x128xf32>
    %372 = vector.broadcast %351 : vector<1x128xf32> to vector<272x128xf32>
    %373 = arith.addf %371, %372 : vector<272x128xf32>
    %374 = arith.truncf %373 : vector<272x128xf32> to vector<272x128xbf16>
    %c0_124 = arith.constant 0 : index
    %c0_125 = arith.constant 0 : index
    %375 = vector.load %arg9[%c0_124, %c0_125] : memref<128x256xbf16, #tpu.memory_space<vmem>>, vector<128x256xbf16>
    %cst_126 = arith.constant dense<0.000000e+00> : vector<272x256xf32>
    %376 = tpu.matmul %374, %375, %cst_126 {dimension_numbers = #tpu.dot_dimension_numbers<[1], [0], [0], [1], [0, 0, 1, 1], [], []>} : vector<272x128xbf16>, vector<128x256xbf16>, vector<272x256xf32> -> vector<272x256xf32>
    %c0_127 = arith.constant 0 : index
    %c0_128 = arith.constant 0 : index
    %377 = vector.load %arg10[%c0_127, %c0_128] : memref<1x256xf32, #tpu.memory_space<vmem>>, vector<1x256xf32>
    %378 = vector.broadcast %377 : vector<1x256xf32> to vector<272x256xf32>
    %379 = arith.addf %376, %378 : vector<272x256xf32>
    %cst_129 = arith.constant 5.000000e-01 : f32
    %380 = vector.broadcast %cst_129 : f32 to vector<272x256xf32>
    %381 = arith.mulf %380, %379 : vector<272x256xf32>
    %cst_130 = arith.constant 4.471500e-02 : f32
    %382 = vector.broadcast %cst_130 : f32 to vector<272x256xf32>
    %383 = arith.mulf %382, %379 : vector<272x256xf32>
    %384 = arith.mulf %383, %379 : vector<272x256xf32>
    %385 = arith.mulf %384, %379 : vector<272x256xf32>
    %386 = arith.addf %379, %385 : vector<272x256xf32>
    %cst_131 = arith.constant 0.797884583 : f32
    %387 = vector.broadcast %cst_131 : f32 to vector<272x256xf32>
    %388 = arith.mulf %387, %386 : vector<272x256xf32>
    %389 = math.tanh %388 : vector<272x256xf32>
    %cst_132 = arith.constant 1.000000e+00 : f32
    %390 = vector.broadcast %cst_132 : f32 to vector<272x256xf32>
    %391 = arith.addf %390, %389 : vector<272x256xf32>
    %392 = arith.mulf %381, %391 : vector<272x256xf32>
    %393 = arith.truncf %392 : vector<272x256xf32> to vector<272x256xbf16>
    %c0_133 = arith.constant 0 : index
    %c0_134 = arith.constant 0 : index
    %394 = vector.load %arg11[%c0_133, %c0_134] : memref<256x128xbf16, #tpu.memory_space<vmem>>, vector<256x128xbf16>
    %cst_135 = arith.constant dense<0.000000e+00> : vector<272x128xf32>
    %395 = tpu.matmul %393, %394, %cst_135 {dimension_numbers = #tpu.dot_dimension_numbers<[1], [0], [0], [1], [0, 0, 1, 1], [], []>} : vector<272x256xbf16>, vector<256x128xbf16>, vector<272x128xf32> -> vector<272x128xf32>
    %c0_136 = arith.constant 0 : index
    %c0_137 = arith.constant 0 : index
    %396 = vector.load %arg12[%c0_136, %c0_137] : memref<1x128xf32, #tpu.memory_space<vmem>>, vector<1x128xf32>
    %397 = vector.broadcast %396 : vector<1x128xf32> to vector<272x128xf32>
    %398 = arith.addf %395, %397 : vector<272x128xf32>
    %399 = arith.addf %349, %398 : vector<272x128xf32>
    %400 = arith.truncf %399 : vector<272x128xf32> to vector<272x128xbf16>
    %c0_138 = arith.constant 0 : index
    %c0_139 = arith.constant 0 : index
    %401 = vector.load %arg13[%c0_138, %c0_139] : memref<272x128xbf16, #tpu.memory_space<vmem>>, vector<272x128xbf16>
    tpu.vector_store %arg13[%c0_138, %c0_139], %400 {strides = array<i32>} : memref<272x128xbf16, #tpu.memory_space<vmem>>, vector<272x128xbf16>,
    return
  }
  func.func @transform_0(%arg0: i32) -> (i32, i32) {
    %c0_i32 = arith.constant 0 : i32
    %c0_i32_0 = arith.constant 0 : i32
    return %arg0, %c0_i32 : i32, i32
  }
  func.func @transform_1(%arg0: i32) -> (i32, i32) {
    %c0_i32 = arith.constant 0 : i32
    %c0_i32_0 = arith.constant 0 : i32
    %c0_i32_1 = arith.constant 0 : i32
    return %c0_i32, %c0_i32_0 : i32, i32
  }
  func.func @transform_2(%arg0: i32) -> (i32, i32) {
    %c0_i32 = arith.constant 0 : i32
    %c0_i32_0 = arith.constant 0 : i32
    %c0_i32_1 = arith.constant 0 : i32
    return %c0_i32, %c0_i32_0 : i32, i32
  }
  func.func @transform_3(%arg0: i32) -> (i32, i32) {
    %c0_i32 = arith.constant 0 : i32
    %c0_i32_0 = arith.constant 0 : i32
    %c0_i32_1 = arith.constant 0 : i32
    return %c0_i32, %c0_i32_0 : i32, i32
  }
  func.func @transform_4(%arg0: i32) -> (i32, i32) {
    %c0_i32 = arith.constant 0 : i32
    %c0_i32_0 = arith.constant 0 : i32
    %c0_i32_1 = arith.constant 0 : i32
    return %c0_i32, %c0_i32_0 : i32, i32
  }
  func.func @transform_5(%arg0: i32) -> (i32, i32) {
    %c0_i32 = arith.constant 0 : i32
    %c0_i32_0 = arith.constant 0 : i32
    %c0_i32_1 = arith.constant 0 : i32
    return %c0_i32, %c0_i32_0 : i32, i32
  }
  func.func @transform_6(%arg0: i32) -> (i32, i32) {
    %c0_i32 = arith.constant 0 : i32
    %c0_i32_0 = arith.constant 0 : i32
    %c0_i32_1 = arith.constant 0 : i32
    return %c0_i32, %c0_i32_0 : i32, i32
  }
  func.func @transform_7(%arg0: i32) -> (i32, i32) {
    %c0_i32 = arith.constant 0 : i32
    %c0_i32_0 = arith.constant 0 : i32
    %c0_i32_1 = arith.constant 0 : i32
    return %c0_i32, %c0_i32_0 : i32, i32
  }
  func.func @transform_8(%arg0: i32) -> (i32, i32) {
    %c0_i32 = arith.constant 0 : i32
    %c0_i32_0 = arith.constant 0 : i32
    %c0_i32_1 = arith.constant 0 : i32
    return %c0_i32, %c0_i32_0 : i32, i32
  }
  func.func @transform_9(%arg0: i32) -> (i32, i32) {
    %c0_i32 = arith.constant 0 : i32
    %c0_i32_0 = arith.constant 0 : i32
    %c0_i32_1 = arith.constant 0 : i32
    return %c0_i32, %c0_i32_0 : i32, i32
  }
  func.func @transform_10(%arg0: i32) -> (i32, i32) {
    %c0_i32 = arith.constant 0 : i32
    %c0_i32_0 = arith.constant 0 : i32
    %c0_i32_1 = arith.constant 0 : i32
    return %c0_i32, %c0_i32_0 : i32, i32
  }
  func.func @transform_11(%arg0: i32) -> (i32, i32) {
    %c0_i32 = arith.constant 0 : i32
    %c0_i32_0 = arith.constant 0 : i32
    %c0_i32_1 = arith.constant 0 : i32
    return %c0_i32, %c0_i32_0 : i32, i32
  }
  func.func @transform_12(%arg0: i32) -> (i32, i32) {
    %c0_i32 = arith.constant 0 : i32
    %c0_i32_0 = arith.constant 0 : i32
    return %arg0, %c0_i32 : i32, i32
  }
}

</mosaic_0001>

<llo_original>
// kernel: separable_tr_forward.2
$region0: #{separable_tr_forward.2}
  #allocation0 [shape = 'u32[]', space=smem, size = 0x4, offset = 0x4, fixed_abs, tag = 'smem constant byte address 0x4 - core index']
  #allocation1 [shape = 'u32[144,128]{1,0:T(1,128)}', space=vmem, size = 0x12000, scoped, tag = 'internal scratch']
  #allocation2 [shape = 'f32[272,256]{1,0:T(8,128)}', space=vmem, size = 0x44000, scoped, tag = 'scratch operand']
  %s0 = inlined_call_operand.vmem [shape: bf16[544,128], index: 0, kind: input, shape index: {}]
  %s1 = inlined_call_operand.vmem [shape: f32[1,128], index: 1, kind: input, shape index: {}]
  %s2 = inlined_call_operand.vmem [shape: f32[1,128], index: 2, kind: input, shape index: {}]
  %s3 = inlined_call_operand.vmem [shape: bf16[128,768], index: 3, kind: input, shape index: {}]
  %s4 = inlined_call_operand.vmem [shape: bf16[256,128], index: 4, kind: input, shape index: {}]
  %s5 = inlined_call_operand.vmem [shape: f32[1,128], index: 5, kind: input, shape index: {}]
  %s6 = inlined_call_operand.vmem [shape: f32[1,128], index: 6, kind: input, shape index: {}]
  %s7 = inlined_call_operand.vmem [shape: f32[1,128], index: 7, kind: input, shape index: {}]
  %s8 = inlined_call_operand.vmem [shape: bf16[128,256], index: 8, kind: input, shape index: {}]
  %s9 = inlined_call_operand.vmem [shape: f32[1,256], index: 9, kind: input, shape index: {}]
  %s10 = inlined_call_operand.vmem [shape: bf16[256,128], index: 10, kind: input, shape index: {}]
  %s11 = inlined_call_operand.vmem [shape: f32[1,128], index: 11, kind: input, shape index: {}]
  %s12 = inlined_call_operand.vmem [shape: bf16[544,128], index: 12, kind: output, shape index: {}]
  %s13 = sld [smem:[#allocation0]]
  $region81: #{separable_tr_forward.2} parent=0
    _
  %s15 = ssub.s32 1, %s13
  %s16 = scalar_select 0, %s15, %s13
  loop: start=0, step=1, limit=4
  $region2: #{separable_tr_forward.2} parent=0 // loop_pre_header
    _
  $region3: #{separable_tr_forward.2} parent=0 // loop_header
    %s18 = sphi 0, %s22
    %p19 = scmp.ge.s32.totalorder %s18, 4
    %s28 = sphi 0, %s30
    %s31 = sphi 0, %s28
    %s32 = sphi 0, %s31
    %s48 = sphi 0, %s32
    %s52 = sphi 0, %s52
    %s54 = sphi 0, %s52
    %s55 = sphi 0, %s54
    %s69 = sphi 0, %s55
    %s73 = sphi 0, %s73
    %s75 = sphi 0, %s73
    %s76 = sphi 0, %s75
    %s90 = sphi 0, %s76
    %s94 = sphi 0, %s94
    %s96 = sphi 0, %s94
    %s97 = sphi 0, %s96
    %s111 = sphi 0, %s97
    %s115 = sphi 0, %s115
    %s117 = sphi 0, %s115
    %s118 = sphi 0, %s117
    %s132 = sphi 0, %s118
    %s136 = sphi 0, %s136
    %s138 = sphi 0, %s136
    %s139 = sphi 0, %s138
    %s153 = sphi 0, %s139
    %s157 = sphi 0, %s157
    %s159 = sphi 0, %s157
    %s160 = sphi 0, %s159
    %s174 = sphi 0, %s160
    %s178 = sphi 0, %s178
    %s180 = sphi 0, %s178
    %s181 = sphi 0, %s180
    %s195 = sphi 0, %s181
    %s199 = sphi 0, %s199
    %s201 = sphi 0, %s199
    %s202 = sphi 0, %s201
    %s216 = sphi 0, %s202
    %s220 = sphi 0, %s220
    %s222 = sphi 0, %s220
    %s223 = sphi 0, %s222
    %s237 = sphi 0, %s223
    %s241 = sphi 0, %s241
    %s243 = sphi 0, %s241
    %s244 = sphi 0, %s243
    %s258 = sphi 0, %s244
    %s262 = sphi 0, %s262
    %s264 = sphi 0, %s262
    %s265 = sphi 0, %s264
    %s279 = sphi 0, %s265
    %s285 = sphi 0, %s287
    %s288 = sphi 0, %s285
    %s289 = sphi 0, %s288
    %s305 = sphi 0, %s289
  $region4: #{separable_tr_forward.2} parent=0 // loop_header_branch
    %21 = sbr.rel (%p19) target = $region8
  $region5: #{separable_tr_forward.2} parent=0 // loop_body
    %s23 = ssub.s32 %s18, 1
    %s24 = ssub.s32 %s18, 2
    %s25 = sadd.s32 %s18, 1
    %s26 = ssub.s32 %s18, %s25
    %p27 = scmp.eq.s32.totalorder %s26, 0
    %s29 = sadd.s32 %s28, 1
    %s30 = scalar_select %p27, %s28, %s29
    %p33 = pneg %p27
    %p34 = scmp.eq.s32.totalorder %s18, 1
    %p35 = por %p33, %p34
    %p36 = scmp.ne.s32.totalorder %s28, %s31
    %p37 = scmp.eq.s32.totalorder %s18, 0
    %p38 = por %p36, %p37
    %p39 = scmp.ne.s32.totalorder %s28, %s31
    %p40 = scmp.eq.s32.totalorder %s23, 1
    %p41 = por %p39, %p40
    %p42 = scmp.ne.s32.totalorder %s31, %s32
    %p43 = scmp.eq.s32.totalorder %s23, 0
    %p44 = por %p42, %p43
    %p45 = scmp.ne.s32.totalorder %s31, %s32
    %p46 = scmp.eq.s32.totalorder %s24, 1
    %p47 = por %p45, %p46
    %p49 = scmp.ne.s32.totalorder %s32, %s48
    %p50 = scmp.eq.s32.totalorder %s24, 0
    %p51 = por %p49, %p50
    %s53 = sadd.s32 %s52, 1
    %p56 = scmp.eq.s32.totalorder %s18, 1
    %p57 = scmp.ne.s32.totalorder %s52, %s54
    %p58 = scmp.eq.s32.totalorder %s18, 0
    %p59 = por %p57, %p58
    %p60 = scmp.ne.s32.totalorder %s52, %s54
    %p61 = scmp.eq.s32.totalorder %s23, 1
    %p62 = por %p60, %p61
    %p63 = scmp.ne.s32.totalorder %s54, %s55
    %p64 = scmp.eq.s32.totalorder %s23, 0
    %p65 = por %p63, %p64
    %p66 = scmp.ne.s32.totalorder %s54, %s55
    %p67 = scmp.eq.s32.totalorder %s24, 1
    %p68 = por %p66, %p67
    %p70 = scmp.ne.s32.totalorder %s55, %s69
    %p71 = scmp.eq.s32.totalorder %s24, 0
    %p72 = por %p70, %p71
    %s74 = sadd.s32 %s73, 1
    %p77 = scmp.eq.s32.totalorder %s18, 1
    %p78 = scmp.ne.s32.totalorder %s73, %s75
    %p79 = scmp.eq.s32.totalorder %s18, 0
    %p80 = por %p78, %p79
    %p81 = scmp.ne.s32.totalorder %s73, %s75
    %p82 = scmp.eq.s32.totalorder %s23, 1
    %p83 = por %p81, %p82
    %p84 = scmp.ne.s32.totalorder %s75, %s76
    %p85 = scmp.eq.s32.totalorder %s23, 0
    %p86 = por %p84, %p85
    %p87 = scmp.ne.s32.totalorder %s75, %s76
    %p88 = scmp.eq.s32.totalorder %s24, 1
    %p89 = por %p87, %p88
    %p91 = scmp.ne.s32.totalorder %s76, %s90
    %p92 = scmp.eq.s32.totalorder %s24, 0
    %p93 = por %p91, %p92
    %s95 = sadd.s32 %s94, 1
    %p98 = scmp.eq.s32.totalorder %s18, 1
    %p99 = scmp.ne.s32.totalorder %s94, %s96
    %p100 = scmp.eq.s32.totalorder %s18, 0
    %p101 = por %p99, %p100
    %p102 = scmp.ne.s32.totalorder %s94, %s96
    %p103 = scmp.eq.s32.totalorder %s23, 1
    %p104 = por %p102, %p103
    %p105 = scmp.ne.s32.totalorder %s96, %s97
    %p106 = scmp.eq.s32.totalorder %s23, 0
    %p107 = por %p105, %p106
    %p108 = scmp.ne.s32.totalorder %s96, %s97
    %p109 = scmp.eq.s32.totalorder %s24, 1
    %p110 = por %p108, %p109
    %p112 = scmp.ne.s32.totalorder %s97, %s111
    %p113 = scmp.eq.s32.totalorder %s24, 0
    %p114 = por %p112, %p113
    %s116 = sadd.s32 %s115, 1
    %p119 = scmp.eq.s32.totalorder %s18, 1
    %p120 = scmp.ne.s32.totalorder %s115, %s117
    %p121 = scmp.eq.s32.totalorder %s18, 0
    %p122 = por %p120, %p121
    %p123 = scmp.ne.s32.totalorder %s115, %s117
    %p124 = scmp.eq.s32.totalorder %s23, 1
    %p125 = por %p123, %p124
    %p126 = scmp.ne.s32.totalorder %s117, %s118
    %p127 = scmp.eq.s32.totalorder %s23, 0
    %p128 = por %p126, %p127
    %p129 = scmp.ne.s32.totalorder %s117, %s118
    %p130 = scmp.eq.s32.totalorder %s24, 1
    %p131 = por %p129, %p130
    %p133 = scmp.ne.s32.totalorder %s118, %s132
    %p134 = scmp.eq.s32.totalorder %s24, 0
    %p135 = por %p133, %p134
    %s137 = sadd.s32 %s136, 1
    %p140 = scmp.eq.s32.totalorder %s18, 1
    %p141 = scmp.ne.s32.totalorder %s136, %s138
    %p142 = scmp.eq.s32.totalorder %s18, 0
    %p143 = por %p141, %p142
    %p144 = scmp.ne.s32.totalorder %s136, %s138
    %p145 = scmp.eq.s32.totalorder %s23, 1
    %p146 = por %p144, %p145
    %p147 = scmp.ne.s32.totalorder %s138, %s139
    %p148 = scmp.eq.s32.totalorder %s23, 0
    %p149 = por %p147, %p148
    %p150 = scmp.ne.s32.totalorder %s138, %s139
    %p151 = scmp.eq.s32.totalorder %s24, 1
    %p152 = por %p150, %p151
    %p154 = scmp.ne.s32.totalorder %s139, %s153
    %p155 = scmp.eq.s32.totalorder %s24, 0
    %p156 = por %p154, %p155
    %s158 = sadd.s32 %s157, 1
    %p161 = scmp.eq.s32.totalorder %s18, 1
    %p162 = scmp.ne.s32.totalorder %s157, %s159
    %p163 = scmp.eq.s32.totalorder %s18, 0
    %p164 = por %p162, %p163
    %p165 = scmp.ne.s32.totalorder %s157, %s159
    %p166 = scmp.eq.s32.totalorder %s23, 1
    %p167 = por %p165, %p166
    %p168 = scmp.ne.s32.totalorder %s159, %s160
    %p169 = scmp.eq.s32.totalorder %s23, 0
    %p170 = por %p168, %p169
    %p171 = scmp.ne.s32.totalorder %s159, %s160
    %p172 = scmp.eq.s32.totalorder %s24, 1
    %p173 = por %p171, %p172
    %p175 = scmp.ne.s32.totalorder %s160, %s174
    %p176 = scmp.eq.s32.totalorder %s24, 0
    %p177 = por %p175, %p176
    %s179 = sadd.s32 %s178, 1
    %p182 = scmp.eq.s32.totalorder %s18, 1
    %p183 = scmp.ne.s32.totalorder %s178, %s180
    %p184 = scmp.eq.s32.totalorder %s18, 0
    %p185 = por %p183, %p184
    %p186 = scmp.ne.s32.totalorder %s178, %s180
    %p187 = scmp.eq.s32.totalorder %s23, 1
    %p188 = por %p186, %p187
    %p189 = scmp.ne.s32.totalorder %s180, %s181
    %p190 = scmp.eq.s32.totalorder %s23, 0
    %p191 = por %p189, %p190
    %p192 = scmp.ne.s32.totalorder %s180, %s181
    %p193 = scmp.eq.s32.totalorder %s24, 1
    %p194 = por %p192, %p193
    %p196 = scmp.ne.s32.totalorder %s181, %s195
    %p197 = scmp.eq.s32.totalorder %s24, 0
    %p198 = por %p196, %p197
    %s200 = sadd.s32 %s199, 1
    %p203 = scmp.eq.s32.totalorder %s18, 1
    %p204 = scmp.ne.s32.totalorder %s199, %s201
    %p205 = scmp.eq.s32.totalorder %s18, 0
    %p206 = por %p204, %p205
    %p207 = scmp.ne.s32.totalorder %s199, %s201
    %p208 = scmp.eq.s32.totalorder %s23, 1
    %p209 = por %p207, %p208
    %p210 = scmp.ne.s32.totalorder %s201, %s202
    %p211 = scmp.eq.s32.totalorder %s23, 0
    %p212 = por %p210, %p211
    %p213 = scmp.ne.s32.totalorder %s201, %s202
    %p214 = scmp.eq.s32.totalorder %s24, 1
    %p215 = por %p213, %p214
    %p217 = scmp.ne.s32.totalorder %s202, %s216
    %p218 = scmp.eq.s32.totalorder %s24, 0
    %p219 = por %p217, %p218
    %s221 = sadd.s32 %s220, 1
    %p224 = scmp.eq.s32.totalorder %s18, 1
    %p225 = scmp.ne.s32.totalorder %s220, %s222
    %p226 = scmp.eq.s32.totalorder %s18, 0
    %p227 = por %p225, %p226
    %p228 = scmp.ne.s32.totalorder %s220, %s222
    %p229 = scmp.eq.s32.totalorder %s23, 1
    %p230 = por %p228, %p229
    %p231 = scmp.ne.s32.totalorder %s222, %s223
    %p232 = scmp.eq.s32.totalorder %s23, 0
    %p233 = por %p231, %p232
    %p234 = scmp.ne.s32.totalorder %s222, %s223
    %p235 = scmp.eq.s32.totalorder %s24, 1
    %p236 = por %p234, %p235
    %p238 = scmp.ne.s32.totalorder %s223, %s237
    %p239 = scmp.eq.s32.totalorder %s24, 0
    %p240 = por %p238, %p239
    %s242 = sadd.s32 %s241, 1
    %p245 = scmp.eq.s32.totalorder %s18, 1
    %p246 = scmp.ne.s32.totalorder %s241, %s243
    %p247 = scmp.eq.s32.totalorder %s18, 0
    %p248 = por %p246, %p247
    %p249 = scmp.ne.s32.totalorder %s241, %s243
    %p250 = scmp.eq.s32.totalorder %s23, 1
    %p251 = por %p249, %p250
    %p252 = scmp.ne.s32.totalorder %s243, %s244
    %p253 = scmp.eq.s32.totalorder %s23, 0
    %p254 = por %p252, %p253
    %p255 = scmp.ne.s32.totalorder %s243, %s244
    %p256 = scmp.eq.s32.totalorder %s24, 1
    %p257 = por %p255, %p256
    %p259 = scmp.ne.s32.totalorder %s244, %s258
    %p260 = scmp.eq.s32.totalorder %s24, 0
    %p261 = por %p259, %p260
    %s263 = sadd.s32 %s262, 1
    %p266 = scmp.eq.s32.totalorder %s18, 1
    %p267 = scmp.ne.s32.totalorder %s262, %s264
    %p268 = scmp.eq.s32.totalorder %s18, 0
    %p269 = por %p267, %p268
    %p270 = scmp.ne.s32.totalorder %s262, %s264
    %p271 = scmp.eq.s32.totalorder %s23, 1
    %p272 = por %p270, %p271
    %p273 = scmp.ne.s32.totalorder %s264, %s265
    %p274 = scmp.eq.s32.totalorder %s23, 0
    %p275 = por %p273, %p274
    %p276 = scmp.ne.s32.totalorder %s264, %s265
    %p277 = scmp.eq.s32.totalorder %s24, 1
    %p278 = por %p276, %p277
    %p280 = scmp.ne.s32.totalorder %s265, %s279
    %p281 = scmp.eq.s32.totalorder %s24, 0
    %p282 = por %p280, %p281
    %s283 = ssub.s32 %s18, %s25
    %p284 = scmp.eq.s32.totalorder %s283, 0
    %s286 = sadd.s32 %s285, 1
    %s287 = scalar_select %p284, %s285, %s286
    %p290 = pneg %p284
    %p291 = scmp.eq.s32.totalorder %s18, 1
    %p292 = por %p290, %p291
    %p293 = scmp.ne.s32.totalorder %s285, %s288
    %p294 = scmp.eq.s32.totalorder %s18, 0
    %p295 = por %p293, %p294
    %p296 = scmp.ne.s32.totalorder %s285, %s288
    %p297 = scmp.eq.s32.totalorder %s23, 1
    %p298 = por %p296, %p297
    %p299 = scmp.ne.s32.totalorder %s288, %s289
    %p300 = scmp.eq.s32.totalorder %s23, 0
    %p301 = por %p299, %p300
    %p302 = scmp.ne.s32.totalorder %s288, %s289
    %p303 = scmp.eq.s32.totalorder %s24, 1
    %p304 = por %p302, %p303
    %p306 = scmp.ne.s32.totalorder %s289, %s305
    %p307 = scmp.eq.s32.totalorder %s24, 0
    %p308 = por %p306, %p307
    %p309 = scmp.le.s32.totalorder 1, %s18
    %p310 = scmp.lt.s32.totalorder %s18, 3
    %p311 = pnand %p309, %p310
    %p312 = pneg %p311
    // Predicated region
    $region9: #{separable_tr_forward.2} parent=5 // pred_check
      _
    $region10: #{separable_tr_forward.2} parent=5 // pred_check_branch
      %314 = sbr.rel (%p311) target = $region12
    $region11: #{separable_tr_forward.2} parent=5 // pred_region
      %s315 = ssub.s32 %s18, 1
      // Predicated region
      $region13: #{separable_tr_forward.2} parent=11 // pred_check
        %p316 = pneg %p65
      $region14: #{separable_tr_forward.2} parent=11 // pred_check_branch
        %318 = sbr.rel (%p316) target = $region16
      $region15: #{separable_tr_forward.2} parent=11 // pred_region
        _
      $region16: #{separable_tr_forward.2} parent=11 // pred_fallthru
        _
      // Predicated region
      $region17: #{separable_tr_forward.2} parent=11 // pred_check
        %p319 = pneg %p86
      $region18: #{separable_tr_forward.2} parent=11 // pred_check_branch
        %321 = sbr.rel (%p319) target = $region20
      $region19: #{separable_tr_forward.2} parent=11 // pred_region
        _
      $region20: #{separable_tr_forward.2} parent=11 // pred_fallthru
        _
      // Predicated region
      $region21: #{separable_tr_forward.2} parent=11 // pred_check
        %p322 = pneg %p107
      $region22: #{separable_tr_forward.2} parent=11 // pred_check_branch
        %324 = sbr.rel (%p322) target = $region24
      $region23: #{separable_tr_forward.2} parent=11 // pred_region
        _
      $region24: #{separable_tr_forward.2} parent=11 // pred_fallthru
        _
      // Predicated region
      $region25: #{separable_tr_forward.2} parent=11 // pred_check
        %p325 = pneg %p128
      $region26: #{separable_tr_forward.2} parent=11 // pred_check_branch
        %327 = sbr.rel (%p325) target = $region28
      $region27: #{separable_tr_forward.2} parent=11 // pred_region
        _
      $region28: #{separable_tr_forward.2} parent=11 // pred_fallthru
        _
      // Predicated region
      $region29: #{separable_tr_forward.2} parent=11 // pred_check
        %p328 = pneg %p149
      $region30: #{separable_tr_forward.2} parent=11 // pred_check_branch
        %330 = sbr.rel (%p328) target = $region32
      $region31: #{separable_tr_forward.2} parent=11 // pred_region
        _
      $region32: #{separable_tr_forward.2} parent=11 // pred_fallthru
        _
      // Predicated region
      $region33: #{separable_tr_forward.2} parent=11 // pred_check
        %p331 = pneg %p170
      $region34: #{separable_tr_forward.2} parent=11 // pred_check_branch
        %333 = sbr.rel (%p331) target = $region36
      $region35: #{separable_tr_forward.2} parent=11 // pred_region
        _
      $region36: #{separable_tr_forward.2} parent=11 // pred_fallthru
        _
      // Predicated region
      $region37: #{separable_tr_forward.2} parent=11 // pred_check
        %p334 = pneg %p191
      $region38: #{separable_tr_forward.2} parent=11 // pred_check_branch
        %336 = sbr.rel (%p334) target = $region40
      $region39: #{separable_tr_forward.2} parent=11 // pred_region
        _
      $region40: #{separable_tr_forward.2} parent=11 // pred_fallthru
        _
      // Predicated region
      $region41: #{separable_tr_forward.2} parent=11 // pred_check
        %p337 = pneg %p212
      $region42: #{separable_tr_forward.2} parent=11 // pred_check_branch
        %339 = sbr.rel (%p337) target = $region44
      $region43: #{separable_tr_forward.2} parent=11 // pred_region
        _
      $region44: #{separable_tr_forward.2} parent=11 // pred_fallthru
        _
      // Predicated region
      $region45: #{separable_tr_forward.2} parent=11 // pred_check
        %p340 = pneg %p233
      $region46: #{separable_tr_forward.2} parent=11 // pred_check_branch
        %342 = sbr.rel (%p340) target = $region48
      $region47: #{separable_tr_forward.2} parent=11 // pred_region
        _
      $region48: #{separable_tr_forward.2} parent=11 // pred_fallthru
        _
      // Predicated region
      $region49: #{separable_tr_forward.2} parent=11 // pred_check
        %p343 = pneg %p254
      $region50: #{separable_tr_forward.2} parent=11 // pred_check_branch
        %345 = sbr.rel (%p343) target = $region52
      $region51: #{separable_tr_forward.2} parent=11 // pred_region
        _
      $region52: #{separable_tr_forward.2} parent=11 // pred_fallthru
        _
      // Predicated region
      $region53: #{separable_tr_forward.2} parent=11 // pred_check
        %p346 = pneg %p275
      $region54: #{separable_tr_forward.2} parent=11 // pred_check_branch
        %348 = sbr.rel (%p346) target = $region56
      $region55: #{separable_tr_forward.2} parent=11 // pred_region
        _
      $region56: #{separable_tr_forward.2} parent=11 // pred_fallthru
        _
    $region12: #{separable_tr_forward.2} parent=5 // pred_fallthru
      _
    %p349 = scmp.lt.s32.totalorder %s18, 2
    // Predicated region
    $region57: #{separable_tr_forward.2} parent=5 // pred_check
      %p350 = pneg %p349
    $region58: #{separable_tr_forward.2} parent=5 // pred_check_branch
      %352 = sbr.rel (%p350) target = $region60
    $region59: #{separable_tr_forward.2} parent=5 // pred_region
      // Predicated region
      $region61: #{separable_tr_forward.2} parent=59 // pred_check
        %p353 = pneg %p38
      $region62: #{separable_tr_forward.2} parent=59 // pred_check_branch
        %355 = sbr.rel (%p353) target = $region64
      $region63: #{separable_tr_forward.2} parent=59 // pred_region
        %s356 = smul.u32 34, %s18
        %p357 = scmp.lt.s32.totalorder %s356, 67
        %s358 = scalar_select %p357, %s356, 67
        %s359 = smul.addr %s358, 4
        %s360 = scalar_lea.vmem %s0, %s359
        %s361 = smul.u32 34, %s18
      $region64: #{separable_tr_forward.2} parent=59 // pred_fallthru
        _
    $region60: #{separable_tr_forward.2} parent=5 // pred_fallthru
      _
    %p362 = scmp.le.s32.totalorder 1, %s18
    %p363 = scmp.lt.s32.totalorder %s18, 3
    %p364 = pnand %p362, %p363
    %p365 = pneg %p364
    // Predicated region
    $region65: #{separable_tr_forward.2} parent=5 // pred_check
      _
    $region66: #{separable_tr_forward.2} parent=5 // pred_check_branch
      %367 = sbr.rel (%p364) target = $region68
    $region67: #{separable_tr_forward.2} parent=5 // pred_region
      %s368 = ssub.s32 %s18, 1
      %s369 = smul.u32 34, %s23
      %p370 = scmp.lt.s32.totalorder %s369, 67
      %s371 = scalar_select %p370, %s369, 67
      %s372 = smul.addr %s371, 4
      %s373 = scalar_lea.vmem %s0, %s372
      %p374 = pneg %p44
      %p375 = pneg %p41
      %p376 = pneg %p65
      %p377 = pneg %p62
      %p378 = pneg %p86
      %p379 = pneg %p83
      %p380 = pneg %p107
      %p381 = pneg %p104
      %p382 = pneg %p128
      %p383 = pneg %p125
      %p384 = pneg %p149
      %p385 = pneg %p146
      %p386 = pneg %p170
      %p387 = pneg %p167
      %p388 = pneg %p191
      %p389 = pneg %p188
      %p390 = pneg %p212
      %p391 = pneg %p209
      %p392 = pneg %p233
      %p393 = pneg %p230
      %p394 = pneg %p254
      %p395 = pneg %p251
      %p396 = pneg %p275
      %p397 = pneg %p272
      %p398 = pneg %p301
      %p399 = pneg %p298
      %s400 = smul.u32 34, %s23
      %p401 = scmp.lt.s32.totalorder %s400, 67
      %s402 = scalar_select %p401, %s400, 67
      %s403 = smul.addr %s402, 4
      %s404 = scalar_lea.vmem %s12, %s403
      %s405 = smul.u32 34, %s23
      %p406 = scmp.lt.s32.totalorder %s405, 67
      %s407 = scalar_select %p406, %s405, 67
      %s408 = smul.addr %s407, 4
      %s409 = scalar_lea.vmem %s0, %s408
      %s410 = smul.u32 34, %s23
      %s411 = smul.u32 34, %s23
      %p412 = scmp.lt.s32.totalorder %s411, 67
      %s413 = scalar_select %p412, %s411, 67
      %s414 = smul.addr %s413, 4
      %s415 = scalar_lea.vmem %s12, %s414
      %s416 = smul.u32 34, %s23
      %v418 = vld [vmem:[%s409] sm:$0xf]
      %v419 = vld [vmem:[%s409 + $0x4] sm:$0xf]
      %v420 = vld [vmem:[%s409 + $0x8] sm:$0xf]
      %v421 = vld [vmem:[%s409 + $0xc] sm:$0xf]
      %v422 = vld [vmem:[%s409 + $0x10] sm:$0xf]
      %v423 = vld [vmem:[%s409 + $0x14] sm:$0xf]
      %v424 = vld [vmem:[%s409 + $0x18] sm:$0xf]
      %v425 = vld [vmem:[%s409 + $0x1c] sm:$0xf]
      %v426 = vld [vmem:[%s409 + $0x20] sm:$0xf]
      %v427 = vld [vmem:[%s409 + $0x24] sm:$0xf]
      %v428 = vld [vmem:[%s409 + $0x28] sm:$0xf]
      %v429 = vld [vmem:[%s409 + $0x2c] sm:$0xf]
      %v430 = vld [vmem:[%s409 + $0x30] sm:$0xf]
      %v431 = vld [vmem:[%s409 + $0x34] sm:$0xf]
      %v432 = vld [vmem:[%s409 + $0x38] sm:$0xf]
      %v433 = vld [vmem:[%s409 + $0x3c] sm:$0xf]
      %v434 = vld [vmem:[%s409 + $0x40] sm:$0xf]
      %v435 = vld [vmem:[%s409 + $0x44] sm:$0xf]
      %v436 = vld [vmem:[%s409 + $0x48] sm:$0xf]
      %v437 = vld [vmem:[%s409 + $0x4c] sm:$0xf]
      %v438 = vld [vmem:[%s409 + $0x50] sm:$0xf]
      %v439 = vld [vmem:[%s409 + $0x54] sm:$0xf]
      %v440 = vld [vmem:[%s409 + $0x58] sm:$0xf]
      %v441 = vld [vmem:[%s409 + $0x5c] sm:$0xf]
      %v442 = vld [vmem:[%s409 + $0x60] sm:$0xf]
      %v443 = vld [vmem:[%s409 + $0x64] sm:$0xf]
      %v444 = vld [vmem:[%s409 + $0x68] sm:$0xf]
      %v445 = vld [vmem:[%s409 + $0x6c] sm:$0xf]
      %v446 = vld [vmem:[%s409 + $0x70] sm:$0xf]
      %v447 = vld [vmem:[%s409 + $0x74] sm:$0xf]
      %v448 = vld [vmem:[%s409 + $0x78] sm:$0xf]
      %v449 = vld [vmem:[%s409 + $0x7c] sm:$0xf]
      %v450 = vld [vmem:[%s409 + $0x80] sm:$0xf]
      %v451 = vld [vmem:[%s409 + $0x84] sm:$0xf]
      %v452 = vunpack.c.l.bf16 %v418
      %v453 = vunpack.c.l.bf16 %v419
      %v454 = vunpack.c.l.bf16 %v420
      %v455 = vunpack.c.l.bf16 %v421
      %v456 = vunpack.c.l.bf16 %v422
      %v457 = vunpack.c.l.bf16 %v423
      %v458 = vunpack.c.l.bf16 %v424
      %v459 = vunpack.c.l.bf16 %v425
      %v460 = vunpack.c.l.bf16 %v426
      %v461 = vunpack.c.l.bf16 %v427
      %v462 = vunpack.c.l.bf16 %v428
      %v463 = vunpack.c.l.bf16 %v429
      %v464 = vunpack.c.l.bf16 %v430
      %v465 = vunpack.c.l.bf16 %v431
      %v466 = vunpack.c.l.bf16 %v432
      %v467 = vunpack.c.l.bf16 %v433
      %v468 = vunpack.c.l.bf16 %v434
      %v469 = vunpack.c.l.bf16 %v435
      %v470 = vunpack.c.l.bf16 %v436
      %v471 = vunpack.c.l.bf16 %v437
      %v472 = vunpack.c.l.bf16 %v438
      %v473 = vunpack.c.l.bf16 %v439
      %v474 = vunpack.c.l.bf16 %v440
      %v475 = vunpack.c.l.bf16 %v441
      %v476 = vunpack.c.l.bf16 %v442
      %v477 = vunpack.c.l.bf16 %v443
      %v478 = vunpack.c.l.bf16 %v444
      %v479 = vunpack.c.l.bf16 %v445
      %v480 = vunpack.c.l.bf16 %v446
      %v481 = vunpack.c.l.bf16 %v447
      %v482 = vunpack.c.l.bf16 %v448
      %v483 = vunpack.c.l.bf16 %v449
      %v484 = vunpack.c.l.bf16 %v450
      %v485 = vunpack.c.l.bf16 %v451
      %v486 = vld [vmem:[%s1] sm:$0x1]
      %v487 = vld [vmem:[%s2] sm:$0x1]
      %488 = vadd.xlane.f32.xlu0 %v452
      %v489 = vpop.xlane.xlu0 %488
      %490 = vadd.xlane.f32.xlu0 %v453
      %v491 = vpop.xlane.xlu0 %490
      %492 = vadd.xlane.f32.xlu0 %v454
      %v493 = vpop.xlane.xlu0 %492
      %494 = vadd.xlane.f32.xlu0 %v455
      %v495 = vpop.xlane.xlu0 %494
      %496 = vadd.xlane.f32.xlu0 %v456
      %v497 = vpop.xlane.xlu0 %496
      %498 = vadd.xlane.f32.xlu0 %v457
      %v499 = vpop.xlane.xlu0 %498
      %500 = vadd.xlane.f32.xlu0 %v458
      %v501 = vpop.xlane.xlu0 %500
      %502 = vadd.xlane.f32.xlu0 %v459
      %v503 = vpop.xlane.xlu0 %502
      %504 = vadd.xlane.f32.xlu0 %v460
      %v505 = vpop.xlane.xlu0 %504
      %506 = vadd.xlane.f32.xlu0 %v461
      %v507 = vpop.xlane.xlu0 %506
      %508 = vadd.xlane.f32.xlu0 %v462
      %v509 = vpop.xlane.xlu0 %508
      %510 = vadd.xlane.f32.xlu0 %v463
      %v511 = vpop.xlane.xlu0 %510
      %512 = vadd.xlane.f32.xlu0 %v464
      %v513 = vpop.xlane.xlu0 %512
      %514 = vadd.xlane.f32.xlu0 %v465
      %v515 = vpop.xlane.xlu0 %514
      %516 = vadd.xlane.f32.xlu0 %v466
      %v517 = vpop.xlane.xlu0 %516
      %518 = vadd.xlane.f32.xlu0 %v467
      %v519 = vpop.xlane.xlu0 %518
      %520 = vadd.xlane.f32.xlu0 %v468
      %v521 = vpop.xlane.xlu0 %520
      %522 = vadd.xlane.f32.xlu0 %v469
      %v523 = vpop.xlane.xlu0 %522
      %524 = vadd.xlane.f32.xlu0 %v470
      %v525 = vpop.xlane.xlu0 %524
      %526 = vadd.xlane.f32.xlu0 %v471
      %v527 = vpop.xlane.xlu0 %526
      %528 = vadd.xlane.f32.xlu0 %v472
      %v529 = vpop.xlane.xlu0 %528
      %530 = vadd.xlane.f32.xlu0 %v473
      %v531 = vpop.xlane.xlu0 %530
      %532 = vadd.xlane.f32.xlu0 %v474
      %v533 = vpop.xlane.xlu0 %532
      %534 = vadd.xlane.f32.xlu0 %v475
      %v535 = vpop.xlane.xlu0 %534
      %536 = vadd.xlane.f32.xlu0 %v476
      %v537 = vpop.xlane.xlu0 %536
      %538 = vadd.xlane.f32.xlu0 %v477
      %v539 = vpop.xlane.xlu0 %538
      %540 = vadd.xlane.f32.xlu0 %v478
      %v541 = vpop.xlane.xlu0 %540
      %542 = vadd.xlane.f32.xlu0 %v479
      %v543 = vpop.xlane.xlu0 %542
      %544 = vadd.xlane.f32.xlu0 %v480
      %v545 = vpop.xlane.xlu0 %544
      %546 = vadd.xlane.f32.xlu0 %v481
      %v547 = vpop.xlane.xlu0 %546
      %548 = vadd.xlane.f32.xlu0 %v482
      %v549 = vpop.xlane.xlu0 %548
      %550 = vadd.xlane.f32.xlu0 %v483
      %v551 = vpop.xlane.xlu0 %550
      %552 = vadd.xlane.f32.xlu0 %v484
      %v553 = vpop.xlane.xlu0 %552
      %554 = vadd.xlane.f32.xlu0 %v485
      %v555 = vpop.xlane.xlu0 %554
      %v556 = vrcp.pop 128.0
      %v557 = vmul.f32 %v489, %v556
      %v558 = vmul.f32 %v491, %v556
      %v559 = vmul.f32 %v493, %v556
      %v560 = vmul.f32 %v495, %v556
      %v561 = vmul.f32 %v497, %v556
      %v562 = vmul.f32 %v499, %v556
      %v563 = vmul.f32 %v501, %v556
      %v564 = vmul.f32 %v503, %v556
      %v565 = vmul.f32 %v505, %v556
      %v566 = vmul.f32 %v507, %v556
      %v567 = vmul.f32 %v509, %v556
      %v568 = vmul.f32 %v511, %v556
      %v569 = vmul.f32 %v513, %v556
      %v570 = vmul.f32 %v515, %v556
      %v571 = vmul.f32 %v517, %v556
      %v572 = vmul.f32 %v519, %v556
      %v573 = vmul.f32 %v521, %v556
      %v574 = vmul.f32 %v523, %v556
      %v575 = vmul.f32 %v525, %v556
      %v576 = vmul.f32 %v527, %v556
      %v577 = vmul.f32 %v529, %v556
      %v578 = vmul.f32 %v531, %v556
      %v579 = vmul.f32 %v533, %v556
      %v580 = vmul.f32 %v535, %v556
      %v581 = vmul.f32 %v537, %v556
      %v582 = vmul.f32 %v539, %v556
      %v583 = vmul.f32 %v541, %v556
      %v584 = vmul.f32 %v543, %v556
      %v585 = vmul.f32 %v545, %v556
      %v586 = vmul.f32 %v547, %v556
      %v587 = vmul.f32 %v549, %v556
      %v588 = vmul.f32 %v551, %v556
      %v589 = vmul.f32 %v553, %v556
      %v590 = vmul.f32 %v555, %v556
      %v591 = vsub.f32 %v452, %v557
      %v592 = vsub.f32 %v453, %v558
      %v593 = vsub.f32 %v454, %v559
      %v594 = vsub.f32 %v455, %v560
      %v595 = vsub.f32 %v456, %v561
      %v596 = vsub.f32 %v457, %v562
      %v597 = vsub.f32 %v458, %v563
      %v598 = vsub.f32 %v459, %v564
      %v599 = vsub.f32 %v460, %v565
      %v600 = vsub.f32 %v461, %v566
      %v601 = vsub.f32 %v462, %v567
      %v602 = vsub.f32 %v463, %v568
      %v603 = vsub.f32 %v464, %v569
      %v604 = vsub.f32 %v465, %v570
      %v605 = vsub.f32 %v466, %v571
      %v606 = vsub.f32 %v467, %v572
      %v607 = vsub.f32 %v468, %v573
      %v608 = vsub.f32 %v469, %v574
      %v609 = vsub.f32 %v470, %v575
      %v610 = vsub.f32 %v471, %v576
      %v611 = vsub.f32 %v472, %v577
      %v612 = vsub.f32 %v473, %v578
      %v613 = vsub.f32 %v474, %v579
      %v614 = vsub.f32 %v475, %v580
      %v615 = vsub.f32 %v476, %v581
      %v616 = vsub.f32 %v477, %v582
      %v617 = vsub.f32 %v478, %v583
      %v618 = vsub.f32 %v479, %v584
      %v619 = vsub.f32 %v480, %v585
      %v620 = vsub.f32 %v481, %v586
      %v621 = vsub.f32 %v482, %v587
      %v622 = vsub.f32 %v483, %v588
      %v623 = vsub.f32 %v484, %v589
      %v624 = vsub.f32 %v485, %v590
      %v625 = vmul.f32 %v591, %v591
      %v626 = vmul.f32 %v592, %v592
      %v627 = vmul.f32 %v593, %v593
      %v628 = vmul.f32 %v594, %v594
      %v629 = vmul.f32 %v595, %v595
      %v630 = vmul.f32 %v596, %v596
      %v631 = vmul.f32 %v597, %v597
      %v632 = vmul.f32 %v598, %v598
      %v633 = vmul.f32 %v599, %v599
      %v634 = vmul.f32 %v600, %v600
      %v635 = vmul.f32 %v601, %v601
      %v636 = vmul.f32 %v602, %v602
      %v637 = vmul.f32 %v603, %v603
      %v638 = vmul.f32 %v604, %v604
      %v639 = vmul.f32 %v605, %v605
      %v640 = vmul.f32 %v606, %v606
      %v641 = vmul.f32 %v607, %v607
      %v642 = vmul.f32 %v608, %v608
      %v643 = vmul.f32 %v609, %v609
      %v644 = vmul.f32 %v610, %v610
      %v645 = vmul.f32 %v611, %v611
      %v646 = vmul.f32 %v612, %v612
      %v647 = vmul.f32 %v613, %v613
      %v648 = vmul.f32 %v614, %v614
      %v649 = vmul.f32 %v615, %v615
      %v650 = vmul.f32 %v616, %v616
      %v651 = vmul.f32 %v617, %v617
      %v652 = vmul.f32 %v618, %v618
      %v653 = vmul.f32 %v619, %v619
      %v654 = vmul.f32 %v620, %v620
      %v655 = vmul.f32 %v621, %v621
      %v656 = vmul.f32 %v622, %v622
      %v657 = vmul.f32 %v623, %v623
      %v658 = vmul.f32 %v624, %v624
      %659 = vadd.xlane.f32.xlu0 %v625
      %v660 = vpop.xlane.xlu0 %659
      %661 = vadd.xlane.f32.xlu0 %v626
      %v662 = vpop.xlane.xlu0 %661
      %663 = vadd.xlane.f32.xlu0 %v627
      %v664 = vpop.xlane.xlu0 %663
      %665 = vadd.xlane.f32.xlu0 %v628
      %v666 = vpop.xlane.xlu0 %665
      %667 = vadd.xlane.f32.xlu0 %v629
      %v668 = vpop.xlane.xlu0 %667
      %669 = vadd.xlane.f32.xlu0 %v630
      %v670 = vpop.xlane.xlu0 %669
      %671 = vadd.xlane.f32.xlu0 %v631
      %v672 = vpop.xlane.xlu0 %671
      %673 = vadd.xlane.f32.xlu0 %v632
      %v674 = vpop.xlane.xlu0 %673
      %675 = vadd.xlane.f32.xlu0 %v633
      %v676 = vpop.xlane.xlu0 %675
      %677 = vadd.xlane.f32.xlu0 %v634
      %v678 = vpop.xlane.xlu0 %677
      %679 = vadd.xlane.f32.xlu0 %v635
      %v680 = vpop.xlane.xlu0 %679
      %681 = vadd.xlane.f32.xlu0 %v636
      %v682 = vpop.xlane.xlu0 %681
      %683 = vadd.xlane.f32.xlu0 %v637
      %v684 = vpop.xlane.xlu0 %683
      %685 = vadd.xlane.f32.xlu0 %v638
      %v686 = vpop.xlane.xlu0 %685
      %687 = vadd.xlane.f32.xlu0 %v639
      %v688 = vpop.xlane.xlu0 %687
      %689 = vadd.xlane.f32.xlu0 %v640
      %v690 = vpop.xlane.xlu0 %689
      %691 = vadd.xlane.f32.xlu0 %v641
      %v692 = vpop.xlane.xlu0 %691
      %693 = vadd.xlane.f32.xlu0 %v642
      %v694 = vpop.xlane.xlu0 %693
      %695 = vadd.xlane.f32.xlu0 %v643
      %v696 = vpop.xlane.xlu0 %695
      %697 = vadd.xlane.f32.xlu0 %v644
      %v698 = vpop.xlane.xlu0 %697
      %699 = vadd.xlane.f32.xlu0 %v645
      %v700 = vpop.xlane.xlu0 %699
      %701 = vadd.xlane.f32.xlu0 %v646
      %v702 = vpop.xlane.xlu0 %701
      %703 = vadd.xlane.f32.xlu0 %v647
      %v704 = vpop.xlane.xlu0 %703
      %705 = vadd.xlane.f32.xlu0 %v648
      %v706 = vpop.xlane.xlu0 %705
      %707 = vadd.xlane.f32.xlu0 %v649
      %v708 = vpop.xlane.xlu0 %707
      %709 = vadd.xlane.f32.xlu0 %v650
      %v710 = vpop.xlane.xlu0 %709
      %711 = vadd.xlane.f32.xlu0 %v651
      %v712 = vpop.xlane.xlu0 %711
      %713 = vadd.xlane.f32.xlu0 %v652
      %v714 = vpop.xlane.xlu0 %713
      %715 = vadd.xlane.f32.xlu0 %v653
      %v716 = vpop.xlane.xlu0 %715
      %717 = vadd.xlane.f32.xlu0 %v654
      %v718 = vpop.xlane.xlu0 %717
      %719 = vadd.xlane.f32.xlu0 %v655
      %v720 = vpop.xlane.xlu0 %719
      %721 = vadd.xlane.f32.xlu0 %v656
      %v722 = vpop.xlane.xlu0 %721
      %723 = vadd.xlane.f32.xlu0 %v657
      %v724 = vpop.xlane.xlu0 %723
      %725 = vadd.xlane.f32.xlu0 %v658
      %v726 = vpop.xlane.xlu0 %725
      %v727 = vmul.f32 %v660, %v556
      %v728 = vmul.f32 %v662, %v556
      %v729 = vmul.f32 %v664, %v556
      %v730 = vmul.f32 %v666, %v556
      %v731 = vmul.f32 %v668, %v556
      %v732 = vmul.f32 %v670, %v556
      %v733 = vmul.f32 %v672, %v556
      %v734 = vmul.f32 %v674, %v556
      %v735 = vmul.f32 %v676, %v556
      %v736 = vmul.f32 %v678, %v556
      %v737 = vmul.f32 %v680, %v556
      %v738 = vmul.f32 %v682, %v556
      %v739 = vmul.f32 %v684, %v556
      %v740 = vmul.f32 %v686, %v556
      %v741 = vmul.f32 %v688, %v556
      %v742 = vmul.f32 %v690, %v556
      %v743 = vmul.f32 %v692, %v556
      %v744 = vmul.f32 %v694, %v556
      %v745 = vmul.f32 %v696, %v556
      %v746 = vmul.f32 %v698, %v556
      %v747 = vmul.f32 %v700, %v556
      %v748 = vmul.f32 %v702, %v556
      %v749 = vmul.f32 %v704, %v556
      %v750 = vmul.f32 %v706, %v556
      %v751 = vmul.f32 %v708, %v556
      %v752 = vmul.f32 %v710, %v556
      %v753 = vmul.f32 %v712, %v556
      %v754 = vmul.f32 %v714, %v556
      %v755 = vmul.f32 %v716, %v556
      %v756 = vmul.f32 %v718, %v556
      %v757 = vmul.f32 %v720, %v556
      %v758 = vmul.f32 %v722, %v556
      %v759 = vmul.f32 %v724, %v556
      %v760 = vmul.f32 %v726, %v556
      %v761 = vadd.f32 %v727, 1e-05
      %v762 = vadd.f32 %v728, 1e-05
      %v763 = vadd.f32 %v729, 1e-05
      %v764 = vadd.f32 %v730, 1e-05
      %v765 = vadd.f32 %v731, 1e-05
      %v766 = vadd.f32 %v732, 1e-05
      %v767 = vadd.f32 %v733, 1e-05
      %v768 = vadd.f32 %v734, 1e-05
      %v769 = vadd.f32 %v735, 1e-05
      %v770 = vadd.f32 %v736, 1e-05
      %v771 = vadd.f32 %v737, 1e-05
      %v772 = vadd.f32 %v738, 1e-05
      %v773 = vadd.f32 %v739, 1e-05
      %v774 = vadd.f32 %v740, 1e-05
      %v775 = vadd.f32 %v741, 1e-05
      %v776 = vadd.f32 %v742, 1e-05
      %v777 = vadd.f32 %v743, 1e-05
      %v778 = vadd.f32 %v744, 1e-05
      %v779 = vadd.f32 %v745, 1e-05
      %v780 = vadd.f32 %v746, 1e-05
      %v781 = vadd.f32 %v747, 1e-05
      %v782 = vadd.f32 %v748, 1e-05
      %v783 = vadd.f32 %v749, 1e-05
      %v784 = vadd.f32 %v750, 1e-05
      %v785 = vadd.f32 %v751, 1e-05
      %v786 = vadd.f32 %v752, 1e-05
      %v787 = vadd.f32 %v753, 1e-05
      %v788 = vadd.f32 %v754, 1e-05
      %v789 = vadd.f32 %v755, 1e-05
      %v790 = vadd.f32 %v756, 1e-05
      %v791 = vadd.f32 %v757, 1e-05
      %v792 = vadd.f32 %v758, 1e-05
      %v793 = vadd.f32 %v759, 1e-05
      %v794 = vadd.f32 %v760, 1e-05
      %v795 = vrsqrt.pop %v761
      %v796 = vrsqrt.pop %v762
      %v797 = vrsqrt.pop %v763
      %v798 = vrsqrt.pop %v764
      %v799 = vrsqrt.pop %v765
      %v800 = vrsqrt.pop %v766
      %v801 = vrsqrt.pop %v767
      %v802 = vrsqrt.pop %v768
      %v803 = vrsqrt.pop %v769
      %v804 = vrsqrt.pop %v770
      %v805 = vrsqrt.pop %v771
      %v806 = vrsqrt.pop %v772
      %v807 = vrsqrt.pop %v773
      %v808 = vrsqrt.pop %v774
      %v809 = vrsqrt.pop %v775
      %v810 = vrsqrt.pop %v776
      %v811 = vrsqrt.pop %v777
      %v812 = vrsqrt.pop %v778
      %v813 = vrsqrt.pop %v779
      %v814 = vrsqrt.pop %v780
      %v815 = vrsqrt.pop %v781
      %v816 = vrsqrt.pop %v782
      %v817 = vrsqrt.pop %v783
      %v818 = vrsqrt.pop %v784
      %v819 = vrsqrt.pop %v785
      %v820 = vrsqrt.pop %v786
      %v821 = vrsqrt.pop %v787
      %v822 = vrsqrt.pop %v788
      %v823 = vrsqrt.pop %v789
      %v824 = vrsqrt.pop %v790
      %v825 = vrsqrt.pop %v791
      %v826 = vrsqrt.pop %v792
      %v827 = vrsqrt.pop %v793
      %v828 = vrsqrt.pop %v794
      %v829 = vmul.f32 %v591, %v795
      %v830 = vmul.f32 %v592, %v796
      %v831 = vmul.f32 %v593, %v797
      %v832 = vmul.f32 %v594, %v798
      %v833 = vmul.f32 %v595, %v799
      %v834 = vmul.f32 %v596, %v800
      %v835 = vmul.f32 %v597, %v801
      %v836 = vmul.f32 %v598, %v802
      %v837 = vmul.f32 %v599, %v803
      %v838 = vmul.f32 %v600, %v804
      %v839 = vmul.f32 %v601, %v805
      %v840 = vmul.f32 %v602, %v806
      %v841 = vmul.f32 %v603, %v807
      %v842 = vmul.f32 %v604, %v808
      %v843 = vmul.f32 %v605, %v809
      %v844 = vmul.f32 %v606, %v810
      %v845 = vmul.f32 %v607, %v811
      %v846 = vmul.f32 %v608, %v812
      %v847 = vmul.f32 %v609, %v813
      %v848 = vmul.f32 %v610, %v814
      %v849 = vmul.f32 %v611, %v815
      %v850 = vmul.f32 %v612, %v816
      %v851 = vmul.f32 %v613, %v817
      %v852 = vmul.f32 %v614, %v818
      %v853 = vmul.f32 %v615, %v819
      %v854 = vmul.f32 %v616, %v820
      %v855 = vmul.f32 %v617, %v821
      %v856 = vmul.f32 %v618, %v822
      %v857 = vmul.f32 %v619, %v823
      %v858 = vmul.f32 %v620, %v824
      %v859 = vmul.f32 %v621, %v825
      %v860 = vmul.f32 %v622, %v826
      %v861 = vmul.f32 %v623, %v827
      %v862 = vmul.f32 %v624, %v828
      %v864 = vlaneseq
      %v865 = vshrl.u32 %v864, 7
      %v866 = vsub.s32 0, %v865
      %v867 = vrot.slane %v486, %v866
      %v869 = vmul.f32 %v829, %v867
      %v870 = vmul.f32 %v830, %v867
      %v871 = vmul.f32 %v831, %v867
      %v872 = vmul.f32 %v832, %v867
      %v873 = vmul.f32 %v833, %v867
      %v874 = vmul.f32 %v834, %v867
      %v875 = vmul.f32 %v835, %v867
      %v876 = vmul.f32 %v836, %v867
      %v877 = vmul.f32 %v837, %v867
      %v878 = vmul.f32 %v838, %v867
      %v879 = vmul.f32 %v839, %v867
      %v880 = vmul.f32 %v840, %v867
      %v881 = vmul.f32 %v841, %v867
      %v882 = vmul.f32 %v842, %v867
      %v883 = vmul.f32 %v843, %v867
      %v884 = vmul.f32 %v844, %v867
      %v885 = vmul.f32 %v845, %v867
      %v886 = vmul.f32 %v846, %v867
      %v887 = vmul.f32 %v847, %v867
      %v888 = vmul.f32 %v848, %v867
      %v889 = vmul.f32 %v849, %v867
      %v890 = vmul.f32 %v850, %v867
      %v891 = vmul.f32 %v851, %v867
      %v892 = vmul.f32 %v852, %v867
      %v893 = vmul.f32 %v853, %v867
      %v894 = vmul.f32 %v854, %v867
      %v895 = vmul.f32 %v855, %v867
      %v896 = vmul.f32 %v856, %v867
      %v897 = vmul.f32 %v857, %v867
      %v898 = vmul.f32 %v858, %v867
      %v899 = vmul.f32 %v859, %v867
      %v900 = vmul.f32 %v860, %v867
      %v901 = vmul.f32 %v861, %v867
      %v902 = vmul.f32 %v862, %v867
      %v904 = vlaneseq
      %v905 = vshrl.u32 %v904, 7
      %v906 = vsub.s32 0, %v905
      %v907 = vrot.slane %v487, %v906
      %v909 = vadd.f32 %v869, %v907
      %v910 = vadd.f32 %v870, %v907
      %v911 = vadd.f32 %v871, %v907
      %v912 = vadd.f32 %v872, %v907
      %v913 = vadd.f32 %v873, %v907
      %v914 = vadd.f32 %v874, %v907
      %v915 = vadd.f32 %v875, %v907
      %v916 = vadd.f32 %v876, %v907
      %v917 = vadd.f32 %v877, %v907
      %v918 = vadd.f32 %v878, %v907
      %v919 = vadd.f32 %v879, %v907
      %v920 = vadd.f32 %v880, %v907
      %v921 = vadd.f32 %v881, %v907
      %v922 = vadd.f32 %v882, %v907
      %v923 = vadd.f32 %v883, %v907
      %v924 = vadd.f32 %v884, %v907
      %v925 = vadd.f32 %v885, %v907
      %v926 = vadd.f32 %v886, %v907
      %v927 = vadd.f32 %v887, %v907
      %v928 = vadd.f32 %v888, %v907
      %v929 = vadd.f32 %v889, %v907
      %v930 = vadd.f32 %v890, %v907
      %v931 = vadd.f32 %v891, %v907
      %v932 = vadd.f32 %v892, %v907
      %v933 = vadd.f32 %v893, %v907
      %v934 = vadd.f32 %v894, %v907
      %v935 = vadd.f32 %v895, %v907
      %v936 = vadd.f32 %v896, %v907
      %v937 = vadd.f32 %v897, %v907
      %v938 = vadd.f32 %v898, %v907
      %v939 = vadd.f32 %v899, %v907
      %v940 = vadd.f32 %v900, %v907
      %v941 = vadd.f32 %v901, %v907
      %v942 = vadd.f32 %v902, %v907
      %v943 = vpack.c.bf16 %v910, %v909
      %v944 = vpack.c.bf16 %v912, %v911
      %v945 = vpack.c.bf16 %v914, %v913
      %v946 = vpack.c.bf16 %v916, %v915
      %v947 = vpack.c.bf16 %v918, %v917
      %v948 = vpack.c.bf16 %v920, %v919
      %v949 = vpack.c.bf16 %v922, %v921
      %v950 = vpack.c.bf16 %v924, %v923
      %v951 = vpack.c.bf16 %v926, %v925
      %v952 = vpack.c.bf16 %v928, %v927
      %v953 = vpack.c.bf16 %v930, %v929
      %v954 = vpack.c.bf16 %v932, %v931
      %v955 = vpack.c.bf16 %v934, %v933
      %v956 = vpack.c.bf16 %v936, %v935
      %v957 = vpack.c.bf16 %v938, %v937
      %v958 = vpack.c.bf16 %v940, %v939
      %v959 = vpack.c.bf16 %v942, %v941
      %v960 = vld [vmem:[%s3] sm:$0xff]
      %v961 = vld [vmem:[%s3 + $0x8] sm:$0xff]
      %v962 = vld [vmem:[%s3 + $0x10] sm:$0xff]
      %v963 = vld [vmem:[%s3 + $0x18] sm:$0xff]
      %v964 = vld [vmem:[%s3 + $0x20] sm:$0xff]
      %v965 = vld [vmem:[%s3 + $0x28] sm:$0xff]
      %v966 = vld [vmem:[%s3 + $0x30] sm:$0xff]
      %v967 = vld [vmem:[%s3 + $0x38] sm:$0xff]
      %v968 = vld [vmem:[%s3 + $0x40] sm:$0xff]
      %v969 = vld [vmem:[%s3 + $0x48] sm:$0xff]
      %v970 = vld [vmem:[%s3 + $0x50] sm:$0xff]
      %v971 = vld [vmem:[%s3 + $0x58] sm:$0xff]
      %v972 = vld [vmem:[%s3 + $0x60] sm:$0xff]
      %v973 = vld [vmem:[%s3 + $0x68] sm:$0xff]
      %v974 = vld [vmem:[%s3 + $0x70] sm:$0xff]
      %v975 = vld [vmem:[%s3 + $0x78] sm:$0xff]
      %v976 = vld [vmem:[%s3 + $0x80] sm:$0xff]
      %v977 = vld [vmem:[%s3 + $0x88] sm:$0xff]
      %v978 = vld [vmem:[%s3 + $0x90] sm:$0xff]
      %v979 = vld [vmem:[%s3 + $0x98] sm:$0xff]
      %v980 = vld [vmem:[%s3 + $0xa0] sm:$0xff]
      %v981 = vld [vmem:[%s3 + $0xa8] sm:$0xff]
      %v982 = vld [vmem:[%s3 + $0xb0] sm:$0xff]
      %v983 = vld [vmem:[%s3 + $0xb8] sm:$0xff]
      %v984 = vld [vmem:[%s3 + $0xc0] sm:$0xff]
      %v985 = vld [vmem:[%s3 + $0xc8] sm:$0xff]
      %v986 = vld [vmem:[%s3 + $0xd0] sm:$0xff]
      %v987 = vld [vmem:[%s3 + $0xd8] sm:$0xff]
      %v988 = vld [vmem:[%s3 + $0xe0] sm:$0xff]
      %v989 = vld [vmem:[%s3 + $0xe8] sm:$0xff]
      %v990 = vld [vmem:[%s3 + $0xf0] sm:$0xff]
      %v991 = vld [vmem:[%s3 + $0xf8] sm:$0xff]
      %v992 = vld [vmem:[%s3 + $0x100] sm:$0xff]
      %v993 = vld [vmem:[%s3 + $0x108] sm:$0xff]
      %v994 = vld [vmem:[%s3 + $0x110] sm:$0xff]
      %v995 = vld [vmem:[%s3 + $0x118] sm:$0xff]
      %v996 = vld [vmem:[%s3 + $0x120] sm:$0xff]
      %v997 = vld [vmem:[%s3 + $0x128] sm:$0xff]
      %v998 = vld [vmem:[%s3 + $0x130] sm:$0xff]
      %v999 = vld [vmem:[%s3 + $0x138] sm:$0xff]
      %v1000 = vld [vmem:[%s3 + $0x140] sm:$0xff]
      %v1001 = vld [vmem:[%s3 + $0x148] sm:$0xff]
      %v1002 = vld [vmem:[%s3 + $0x150] sm:$0xff]
      %v1003 = vld [vmem:[%s3 + $0x158] sm:$0xff]
      %v1004 = vld [vmem:[%s3 + $0x160] sm:$0xff]
      %v1005 = vld [vmem:[%s3 + $0x168] sm:$0xff]
      %v1006 = vld [vmem:[%s3 + $0x170] sm:$0xff]
      %v1007 = vld [vmem:[%s3 + $0x178] sm:$0xff]
      %v1056 = vunpack.c.l.b16 %v960
      %v1057 = vunpack.c.h.b16 %v960
      %v1058 = vunpack.c.l.b16 %v961
      %v1059 = vunpack.c.h.b16 %v961
      %v1060 = vunpack.c.l.b16 %v962
      %v1061 = vunpack.c.h.b16 %v962
      %v1062 = vunpack.c.l.b16 %v963
      %v1063 = vunpack.c.h.b16 %v963
      %v1064 = vunpack.c.l.b16 %v964
      %v1065 = vunpack.c.h.b16 %v964
      %v1066 = vunpack.c.l.b16 %v965
      %v1067 = vunpack.c.h.b16 %v965
      %v1068 = vunpack.c.l.b16 %v966
      %v1069 = vunpack.c.h.b16 %v966
      %v1070 = vunpack.c.l.b16 %v967
      %v1071 = vunpack.c.h.b16 %v967
      %v1072 = vunpack.c.l.b16 %v968
      %v1073 = vunpack.c.h.b16 %v968
      %v1074 = vunpack.c.l.b16 %v969
      %v1075 = vunpack.c.h.b16 %v969
      %v1076 = vunpack.c.l.b16 %v970
      %v1077 = vunpack.c.h.b16 %v970
      %v1078 = vunpack.c.l.b16 %v971
      %v1079 = vunpack.c.h.b16 %v971
      %v1080 = vunpack.c.l.b16 %v972
      %v1081 = vunpack.c.h.b16 %v972
      %v1082 = vunpack.c.l.b16 %v973
      %v1083 = vunpack.c.h.b16 %v973
      %v1084 = vunpack.c.l.b16 %v974
      %v1085 = vunpack.c.h.b16 %v974
      %v1086 = vunpack.c.l.b16 %v975
      %v1087 = vunpack.c.h.b16 %v975
      %v1088 = vunpack.c.l.b16 %v976
      %v1089 = vunpack.c.h.b16 %v976
      %v1090 = vunpack.c.l.b16 %v977
      %v1091 = vunpack.c.h.b16 %v977
      %v1092 = vunpack.c.l.b16 %v978
      %v1093 = vunpack.c.h.b16 %v978
      %v1094 = vunpack.c.l.b16 %v979
      %v1095 = vunpack.c.h.b16 %v979
      %v1096 = vunpack.c.l.b16 %v980
      %v1097 = vunpack.c.h.b16 %v980
      %v1098 = vunpack.c.l.b16 %v981
      %v1099 = vunpack.c.h.b16 %v981
      %v1100 = vunpack.c.l.b16 %v982
      %v1101 = vunpack.c.h.b16 %v982
      %v1102 = vunpack.c.l.b16 %v983
      %v1103 = vunpack.c.h.b16 %v983
      %v1104 = vunpack.c.l.b16 %v984
      %v1105 = vunpack.c.h.b16 %v984
      %v1106 = vunpack.c.l.b16 %v985
      %v1107 = vunpack.c.h.b16 %v985
      %v1108 = vunpack.c.l.b16 %v986
      %v1109 = vunpack.c.h.b16 %v986
      %v1110 = vunpack.c.l.b16 %v987
      %v1111 = vunpack.c.h.b16 %v987
      %v1112 = vunpack.c.l.b16 %v988
      %v1113 = vunpack.c.h.b16 %v988
      %v1114 = vunpack.c.l.b16 %v989
      %v1115 = vunpack.c.h.b16 %v989
      %v1116 = vunpack.c.l.b16 %v990
      %v1117 = vunpack.c.h.b16 %v990
      %v1118 = vunpack.c.l.b16 %v991
      %v1119 = vunpack.c.h.b16 %v991
      %v1120 = vunpack.c.l.b16 %v992
      %v1121 = vunpack.c.h.b16 %v992
      %v1122 = vunpack.c.l.b16 %v993
      %v1123 = vunpack.c.h.b16 %v993
      %v1124 = vunpack.c.l.b16 %v994
      %v1125 = vunpack.c.h.b16 %v994
      %v1126 = vunpack.c.l.b16 %v995
      %v1127 = vunpack.c.h.b16 %v995
      %v1128 = vunpack.c.l.b16 %v996
      %v1129 = vunpack.c.h.b16 %v996
      %v1130 = vunpack.c.l.b16 %v997
      %v1131 = vunpack.c.h.b16 %v997
      %v1132 = vunpack.c.l.b16 %v998
      %v1133 = vunpack.c.h.b16 %v998
      %v1134 = vunpack.c.l.b16 %v999
      %v1135 = vunpack.c.h.b16 %v999
      %v1136 = vunpack.c.l.b16 %v1000
      %v1137 = vunpack.c.h.b16 %v1000
      %v1138 = vunpack.c.l.b16 %v1001
      %v1139 = vunpack.c.h.b16 %v1001
      %v1140 = vunpack.c.l.b16 %v1002
      %v1141 = vunpack.c.h.b16 %v1002
      %v1142 = vunpack.c.l.b16 %v1003
      %v1143 = vunpack.c.h.b16 %v1003
      %v1144 = vunpack.c.l.b16 %v1004
      %v1145 = vunpack.c.h.b16 %v1004
      %v1146 = vunpack.c.l.b16 %v1005
      %v1147 = vunpack.c.h.b16 %v1005
      %v1148 = vunpack.c.l.b16 %v1006
      %v1149 = vunpack.c.h.b16 %v1006
      %v1150 = vunpack.c.l.b16 %v1007
      %v1151 = vunpack.c.h.b16 %v1007
      %v1152 = vpack.c.b16 %v1062, %v1056
      %v1153 = vpack.c.b16 %v1063, %v1057
      %v1154 = vpack.c.b16 %v1064, %v1058
      %v1155 = vpack.c.b16 %v1065, %v1059
      %v1156 = vpack.c.b16 %v1066, %v1060
      %v1157 = vpack.c.b16 %v1067, %v1061
      %v1158 = vpack.c.b16 %v1074, %v1068
      %v1159 = vpack.c.b16 %v1075, %v1069
      %v1160 = vpack.c.b16 %v1076, %v1070
      %v1161 = vpack.c.b16 %v1077, %v1071
      %v1162 = vpack.c.b16 %v1078, %v1072
      %v1163 = vpack.c.b16 %v1079, %v1073
      %v1164 = vpack.c.b16 %v1086, %v1080
      %v1165 = vpack.c.b16 %v1087, %v1081
      %v1166 = vpack.c.b16 %v1088, %v1082
      %v1167 = vpack.c.b16 %v1089, %v1083
      %v1168 = vpack.c.b16 %v1090, %v1084
      %v1169 = vpack.c.b16 %v1091, %v1085
      %v1170 = vpack.c.b16 %v1098, %v1092
      %v1171 = vpack.c.b16 %v1099, %v1093
      %v1172 = vpack.c.b16 %v1100, %v1094
      %v1173 = vpack.c.b16 %v1101, %v1095
      %v1174 = vpack.c.b16 %v1102, %v1096
      %v1175 = vpack.c.b16 %v1103, %v1097
      %v1176 = vpack.c.b16 %v1110, %v1104
      %v1177 = vpack.c.b16 %v1111, %v1105
      %v1178 = vpack.c.b16 %v1112, %v1106
      %v1179 = vpack.c.b16 %v1113, %v1107
      %v1180 = vpack.c.b16 %v1114, %v1108
      %v1181 = vpack.c.b16 %v1115, %v1109
      %v1182 = vpack.c.b16 %v1122, %v1116
      %v1183 = vpack.c.b16 %v1123, %v1117
      %v1184 = vpack.c.b16 %v1124, %v1118
      %v1185 = vpack.c.b16 %v1125, %v1119
      %v1186 = vpack.c.b16 %v1126, %v1120
      %v1187 = vpack.c.b16 %v1127, %v1121
      %v1188 = vpack.c.b16 %v1134, %v1128
      %v1189 = vpack.c.b16 %v1135, %v1129
      %v1190 = vpack.c.b16 %v1136, %v1130
      %v1191 = vpack.c.b16 %v1137, %v1131
      %v1192 = vpack.c.b16 %v1138, %v1132
      %v1193 = vpack.c.b16 %v1139, %v1133
      %v1194 = vpack.c.b16 %v1146, %v1140
      %v1195 = vpack.c.b16 %v1147, %v1141
      %v1196 = vpack.c.b16 %v1148, %v1142
      %v1197 = vpack.c.b16 %v1149, %v1143
      %v1198 = vpack.c.b16 %v1150, %v1144
      %v1199 = vpack.c.b16 %v1151, %v1145
      %1248 = vmatprep.subr.bf16.mxu0 %v1153
      %1249 = vmatpush1.bf16.msra.mxu0 %v1152
      %1250 = vmatprep.subr.bf16.mxu0 %v1159
      %1251 = vmatpush1.bf16.msra.mxu0 %v1158
      %1252 = vmatprep.subr.bf16.mxu0 %v1165
      %1253 = vmatpush1.bf16.msra.mxu0 %v1164
      %1254 = vmatprep.subr.bf16.mxu0 %v1171
      %1255 = vmatpush1.bf16.msra.mxu0 %v1170
      %1256 = vmatprep.subr.bf16.mxu0 %v1177
      %1257 = vmatpush1.bf16.msra.mxu0 %v1176
      %1258 = vmatprep.subr.bf16.mxu0 %v1183
      %1259 = vmatpush1.bf16.msra.mxu0 %v1182
      %1260 = vmatprep.subr.bf16.mxu0 %v1189
      %1261 = vmatpush1.bf16.msra.mxu0 %v1188
      %1262 = vmatprep.subr.bf16.mxu0 %v1195
      %1263 = vmatpush1.bf16.msra.mxu0 %v1194
      %1264 = vmatprep.subr.bf16.mxu0 0
      %1265 = vmatpush1.bf16.msra.mxu0 0
      %1266 = vmatprep.subr.bf16.mxu0 0
      %1267 = vmatpush1.bf16.msra.mxu0 0
      %1268 = vmatprep.subr.bf16.mxu0 0
      %1269 = vmatpush1.bf16.msra.mxu0 0
      %1270 = vmatprep.subr.bf16.mxu0 0
      %1271 = vmatpush1.bf16.msra.mxu0 0
      %1272 = vmatprep.subr.bf16.mxu0 0
      %1273 = vmatpush1.bf16.msra.mxu0 0
      %1274 = vmatprep.subr.bf16.mxu0 0
      %1275 = vmatpush1.bf16.msra.mxu0 0
      %1276 = vmatprep.subr.bf16.mxu0 0
      %1277 = vmatpush1.bf16.msra.mxu0 0
      %1278 = vmatprep.subr.bf16.mxu0 0
      %1279 = vmatpush1.bf16.msra.mxu0 0
      %1280 = vmatprep.mubr.bf16.mxu0 0
      %1281 = vmatmul.mubr.bf16.gmra.mrb[0].mxu0 %v943
      %v1282 = vpop.f32.mrb[0].mxu0
      %v1283 = vadd.f32 0.0, %v1282
      %v1284 = vpop.f32.mrb[0].mxu0
      %v1285 = vadd.f32 0.0, %v1284
      %v1286 = vpop.f32.mrb[0].mxu0
      %v1287 = vadd.f32 0.0, %v1286
      %v1288 = vpop.f32.mrb[0].mxu0
      %v1289 = vadd.f32 0.0, %v1288
      %1290 = vmatprep.mubr.bf16.mxu0 0
      %1291 = vmatmul.mubr.bf16.gmra.mrb[0].mxu0 %v944
      %v1292 = vpop.f32.mrb[0].mxu0
      %v1293 = vadd.f32 0.0, %v1292
      %v1294 = vpop.f32.mrb[0].mxu0
      %v1295 = vadd.f32 0.0, %v1294
      %v1296 = vpop.f32.mrb[0].mxu0
      %v1297 = vadd.f32 0.0, %v1296
      %v1298 = vpop.f32.mrb[0].mxu0
      %v1299 = vadd.f32 0.0, %v1298
      %1300 = vmatprep.mubr.bf16.mxu0 0
      %1301 = vmatmul.mubr.bf16.gmra.mrb[0].mxu0 %v945
      %v1302 = vpop.f32.mrb[0].mxu0
      %v1303 = vadd.f32 0.0, %v1302
      %v1304 = vpop.f32.mrb[0].mxu0
      %v1305 = vadd.f32 0.0, %v1304
      %v1306 = vpop.f32.mrb[0].mxu0
      %v1307 = vadd.f32 0.0, %v1306
      %v1308 = vpop.f32.mrb[0].mxu0
      %v1309 = vadd.f32 0.0, %v1308
      %1310 = vmatprep.mubr.bf16.mxu0 0
      %1311 = vmatmul.mubr.bf16.gmra.mrb[0].mxu0 %v946
      %v1312 = vpop.f32.mrb[0].mxu0
      %v1313 = vadd.f32 0.0, %v1312
      %v1314 = vpop.f32.mrb[0].mxu0
      %v1315 = vadd.f32 0.0, %v1314
      %v1316 = vpop.f32.mrb[0].mxu0
      %v1317 = vadd.f32 0.0, %v1316
      %v1318 = vpop.f32.mrb[0].mxu0
      %v1319 = vadd.f32 0.0, %v1318
      %1320 = vmatprep.mubr.bf16.mxu0 0
      %1321 = vmatmul.mubr.bf16.gmra.mrb[0].mxu0 %v947
      %v1322 = vpop.f32.mrb[0].mxu0
      %v1323 = vadd.f32 0.0, %v1322
      %v1324 = vpop.f32.mrb[0].mxu0
      %v1325 = vadd.f32 0.0, %v1324
      %v1326 = vpop.f32.mrb[0].mxu0
      %v1327 = vadd.f32 0.0, %v1326
      %v1328 = vpop.f32.mrb[0].mxu0
      %v1329 = vadd.f32 0.0, %v1328
      %1330 = vmatprep.mubr.bf16.mxu0 0
      %1331 = vmatmul.mubr.bf16.gmra.mrb[0].mxu0 %v948
      %v1332 = vpop.f32.mrb[0].mxu0
      %v1333 = vadd.f32 0.0, %v1332
      %v1334 = vpop.f32.mrb[0].mxu0
      %v1335 = vadd.f32 0.0, %v1334
      %v1336 = vpop.f32.mrb[0].mxu0
      %v1337 = vadd.f32 0.0, %v1336
      %v1338 = vpop.f32.mrb[0].mxu0
      %v1339 = vadd.f32 0.0, %v1338
      %1340 = vmatprep.mubr.bf16.mxu0 0
      %1341 = vmatmul.mubr.bf16.gmra.mrb[0].mxu0 %v949
      %v1342 = vpop.f32.mrb[0].mxu0
      %v1343 = vadd.f32 0.0, %v1342
      %v1344 = vpop.f32.mrb[0].mxu0
      %v1345 = vadd.f32 0.0, %v1344
      %v1346 = vpop.f32.mrb[0].mxu0
      %v1347 = vadd.f32 0.0, %v1346
      %v1348 = vpop.f32.mrb[0].mxu0
      %v1349 = vadd.f32 0.0, %v1348
      %1350 = vmatprep.mubr.bf16.mxu0 0
      %1351 = vmatmul.mubr.bf16.gmra.mrb[0].mxu0 %v950
      %v1352 = vpop.f32.mrb[0].mxu0
      %v1353 = vadd.f32 0.0, %v1352
      %v1354 = vpop.f32.mrb[0].mxu0
      %v1355 = vadd.f32 0.0, %v1354
      %v1356 = vpop.f32.mrb[0].mxu0
      %v1357 = vadd.f32 0.0, %v1356
      %v1358 = vpop.f32.mrb[0].mxu0
      %v1359 = vadd.f32 0.0, %v1358
      %1360 = vmatprep.mubr.bf16.mxu0 0
      %1361 = vmatmul.mubr.bf16.gmra.mrb[0].mxu0 %v951
      %v1362 = vpop.f32.mrb[0].mxu0
      %v1363 = vadd.f32 0.0, %v1362
      %v1364 = vpop.f32.mrb[0].mxu0
      %v1365 = vadd.f32 0.0, %v1364
      %v1366 = vpop.f32.mrb[0].mxu0
      %v1367 = vadd.f32 0.0, %v1366
      %v1368 = vpop.f32.mrb[0].mxu0
      %v1369 = vadd.f32 0.0, %v1368
      %1370 = vmatprep.mubr.bf16.mxu0 0
      %1371 = vmatmul.mubr.bf16.gmra.mrb[0].mxu0 %v952
      %v1372 = vpop.f32.mrb[0].mxu0
      %v1373 = vadd.f32 0.0, %v1372
      %v1374 = vpop.f32.mrb[0].mxu0
      %v1375 = vadd.f32 0.0, %v1374
      %v1376 = vpop.f32.mrb[0].mxu0
      %v1377 = vadd.f32 0.0, %v1376
      %v1378 = vpop.f32.mrb[0].mxu0
      %v1379 = vadd.f32 0.0, %v1378
      %1380 = vmatprep.mubr.bf16.mxu0 0
      %1381 = vmatmul.mubr.bf16.gmra.mrb[0].mxu0 %v953
      %v1382 = vpop.f32.mrb[0].mxu0
      %v1383 = vadd.f32 0.0, %v1382
      %v1384 = vpop.f32.mrb[0].mxu0
      %v1385 = vadd.f32 0.0, %v1384
      %v1386 = vpop.f32.mrb[0].mxu0
      %v1387 = vadd.f32 0.0, %v1386
      %v1388 = vpop.f32.mrb[0].mxu0
      %v1389 = vadd.f32 0.0, %v1388
      %1390 = vmatprep.mubr.bf16.mxu0 0
      %1391 = vmatmul.mubr.bf16.gmra.mrb[0].mxu0 %v954
      %v1392 = vpop.f32.mrb[0].mxu0
      %v1393 = vadd.f32 0.0, %v1392
      %v1394 = vpop.f32.mrb[0].mxu0
      %v1395 = vadd.f32 0.0, %v1394
      %v1396 = vpop.f32.mrb[0].mxu0
      %v1397 = vadd.f32 0.0, %v1396
      %v1398 = vpop.f32.mrb[0].mxu0
      %v1399 = vadd.f32 0.0, %v1398
      %1400 = vmatprep.mubr.bf16.mxu0 0
      %1401 = vmatmul.mubr.bf16.gmra.mrb[0].mxu0 %v955
      %v1402 = vpop.f32.mrb[0].mxu0
      %v1403 = vadd.f32 0.0, %v1402
      %v1404 = vpop.f32.mrb[0].mxu0
      %v1405 = vadd.f32 0.0, %v1404
      %v1406 = vpop.f32.mrb[0].mxu0
      %v1407 = vadd.f32 0.0, %v1406
      %v1408 = vpop.f32.mrb[0].mxu0
      %v1409 = vadd.f32 0.0, %v1408
      %1410 = vmatprep.mubr.bf16.mxu0 0
      %1411 = vmatmul.mubr.bf16.gmra.mrb[0].mxu0 %v956
      %v1412 = vpop.f32.mrb[0].mxu0
      %v1413 = vadd.f32 0.0, %v1412
      %v1414 = vpop.f32.mrb[0].mxu0
      %v1415 = vadd.f32 0.0, %v1414
      %v1416 = vpop.f32.mrb[0].mxu0
      %v1417 = vadd.f32 0.0, %v1416
      %v1418 = vpop.f32.mrb[0].mxu0
      %v1419 = vadd.f32 0.0, %v1418
      %1420 = vmatprep.mubr.bf16.mxu0 0
      %1421 = vmatmul.mubr.bf16.gmra.mrb[0].mxu0 %v957
      %v1422 = vpop.f32.mrb[0].mxu0
      %v1423 = vadd.f32 0.0, %v1422
      %v1424 = vpop.f32.mrb[0].mxu0
      %v1425 = vadd.f32 0.0, %v1424
      %v1426 = vpop.f32.mrb[0].mxu0
      %v1427 = vadd.f32 0.0, %v1426
      %v1428 = vpop.f32.mrb[0].mxu0
      %v1429 = vadd.f32 0.0, %v1428
      %1430 = vmatprep.mubr.bf16.mxu0 0
      %1431 = vmatmul.mubr.bf16.gmra.mrb[0].mxu0 %v958
      %v1432 = vpop.f32.mrb[0].mxu0
      %v1433 = vadd.f32 0.0, %v1432
      %v1434 = vpop.f32.mrb[0].mxu0
      %v1435 = vadd.f32 0.0, %v1434
      %v1436 = vpop.f32.mrb[0].mxu0
      %v1437 = vadd.f32 0.0, %v1436
      %v1438 = vpop.f32.mrb[0].mxu0
      %v1439 = vadd.f32 0.0, %v1438
      %1440 = vmatprep.mubr.bf16.mxu0 0
      %1441 = vmatmul.mubr.bf16.gmra.mrb[0].mxu0 %v959
      %v1442 = vpop.f32.mrb[0].mxu0
      %v1443 = vadd.f32 0.0, %v1442
      %v1444 = vpop.f32.mrb[0].mxu0
      %v1445 = vadd.f32 0.0, %v1444
      %v1446 = vpop.f32.mrb[0].mxu0
      %v1447 = vadd.f32 0.0, %v1446
      %v1448 = vpop.f32.mrb[0].mxu0
      %v1449 = vadd.f32 0.0, %v1448
      %1450 = vdwg.mxu0
      %1451 = vmatprep.subr.bf16.mxu0 %v1155
      %1452 = vmatpush1.bf16.msra.mxu0 %v1154
      %1453 = vmatprep.subr.bf16.mxu0 %v1161
      %1454 = vmatpush1.bf16.msra.mxu0 %v1160
      %1455 = vmatprep.subr.bf16.mxu0 %v1167
      %1456 = vmatpush1.bf16.msra.mxu0 %v1166
      %1457 = vmatprep.subr.bf16.mxu0 %v1173
      %1458 = vmatpush1.bf16.msra.mxu0 %v1172
      %1459 = vmatprep.subr.bf16.mxu0 %v1179
      %1460 = vmatpush1.bf16.msra.mxu0 %v1178
      %1461 = vmatprep.subr.bf16.mxu0 %v1185
      %1462 = vmatpush1.bf16.msra.mxu0 %v1184
      %1463 = vmatprep.subr.bf16.mxu0 %v1191
      %1464 = vmatpush1.bf16.msra.mxu0 %v1190
      %1465 = vmatprep.subr.bf16.mxu0 %v1197
      %1466 = vmatpush1.bf16.msra.mxu0 %v1196
      %1467 = vmatprep.subr.bf16.mxu0 0
      %1468 = vmatpush1.bf16.msra.mxu0 0
      %1469 = vmatprep.subr.bf16.mxu0 0
      %1470 = vmatpush1.bf16.msra.mxu0 0
      %1471 = vmatprep.subr.bf16.mxu0 0
      %1472 = vmatpush1.bf16.msra.mxu0 0
      %1473 = vmatprep.subr.bf16.mxu0 0
      %1474 = vmatpush1.bf16.msra.mxu0 0
      %1475 = vmatprep.subr.bf16.mxu0 0
      %1476 = vmatpush1.bf16.msra.mxu0 0
      %1477 = vmatprep.subr.bf16.mxu0 0
      %1478 = vmatpush1.bf16.msra.mxu0 0
      %1479 = vmatprep.subr.bf16.mxu0 0
      %1480 = vmatpush1.bf16.msra.mxu0 0
      %1481 = vmatprep.subr.bf16.mxu0 0
      %1482 = vmatpush1.bf16.msra.mxu0 0
      %1483 = vmatprep.mubr.bf16.mxu0 0
      %1484 = vmatmul.mubr.bf16.gmra.mrb[0].mxu0 %v943
      %v1485 = vpop.f32.mrb[0].mxu0
      %v1486 = vadd.f32 0.0, %v1485
      %v1487 = vpop.f32.mrb[0].mxu0
      %v1488 = vadd.f32 0.0, %v1487
      %v1489 = vpop.f32.mrb[0].mxu0
      %v1490 = vadd.f32 0.0, %v1489
      %v1491 = vpop.f32.mrb[0].mxu0
      %v1492 = vadd.f32 0.0, %v1491
      %1493 = vmatprep.mubr.bf16.mxu0 0
      %1494 = vmatmul.mubr.bf16.gmra.mrb[0].mxu0 %v944
      %v1495 = vpop.f32.mrb[0].mxu0
      %v1496 = vadd.f32 0.0, %v1495
      %v1497 = vpop.f32.mrb[0].mxu0
      %v1498 = vadd.f32 0.0, %v1497
      %v1499 = vpop.f32.mrb[0].mxu0
      %v1500 = vadd.f32 0.0, %v1499
      %v1501 = vpop.f32.mrb[0].mxu0
      %v1502 = vadd.f32 0.0, %v1501
      %1503 = vmatprep.mubr.bf16.mxu0 0
      %1504 = vmatmul.mubr.bf16.gmra.mrb[0].mxu0 %v945
      %v1505 = vpop.f32.mrb[0].mxu0
      %v1506 = vadd.f32 0.0, %v1505
      %v1507 = vpop.f32.mrb[0].mxu0
      %v1508 = vadd.f32 0.0, %v1507
      %v1509 = vpop.f32.mrb[0].mxu0
      %v1510 = vadd.f32 0.0, %v1509
      %v1511 = vpop.f32.mrb[0].mxu0
      %v1512 = vadd.f32 0.0, %v1511
      %1513 = vmatprep.mubr.bf16.mxu0 0
      %1514 = vmatmul.mubr.bf16.gmra.mrb[0].mxu0 %v946
      %v1515 = vpop.f32.mrb[0].mxu0
      %v1516 = vadd.f32 0.0, %v1515
      %v1517 = vpop.f32.mrb[0].mxu0
      %v1518 = vadd.f32 0.0, %v1517
      %v1519 = vpop.f32.mrb[0].mxu0
      %v1520 = vadd.f32 0.0, %v1519
      %v1521 = vpop.f32.mrb[0].mxu0
      %v1522 = vadd.f32 0.0, %v1521
      %1523 = vmatprep.mubr.bf16.mxu0 0
      %1524 = vmatmul.mubr.bf16.gmra.mrb[0].mxu0 %v947
      %v1525 = vpop.f32.mrb[0].mxu0
      %v1526 = vadd.f32 0.0, %v1525
      %v1527 = vpop.f32.mrb[0].mxu0
      %v1528 = vadd.f32 0.0, %v1527
      %v1529 = vpop.f32.mrb[0].mxu0
      %v1530 = vadd.f32 0.0, %v1529
      %v1531 = vpop.f32.mrb[0].mxu0
      %v1532 = vadd.f32 0.0, %v1531
      %1533 = vmatprep.mubr.bf16.mxu0 0
      %1534 = vmatmul.mubr.bf16.gmra.mrb[0].mxu0 %v948
      %v1535 = vpop.f32.mrb[0].mxu0
      %v1536 = vadd.f32 0.0, %v1535
      %v1537 = vpop.f32.mrb[0].mxu0
      %v1538 = vadd.f32 0.0, %v1537
      %v1539 = vpop.f32.mrb[0].mxu0
      %v1540 = vadd.f32 0.0, %v1539
      %v1541 = vpop.f32.mrb[0].mxu0
      %v1542 = vadd.f32 0.0, %v1541
      %1543 = vmatprep.mubr.bf16.mxu0 0
      %1544 = vmatmul.mubr.bf16.gmra.mrb[0].mxu0 %v949
      %v1545 = vpop.f32.mrb[0].mxu0
      %v1546 = vadd.f32 0.0, %v1545
      %v1547 = vpop.f32.mrb[0].mxu0
      %v1548 = vadd.f32 0.0, %v1547
      %v1549 = vpop.f32.mrb[0].mxu0
      %v1550 = vadd.f32 0.0, %v1549
      %v1551 = vpop.f32.mrb[0].mxu0
      %v1552 = vadd.f32 0.0, %v1551
      %1553 = vmatprep.mubr.bf16.mxu0 0
      %1554 = vmatmul.mubr.bf16.gmra.mrb[0].mxu0 %v950
      %v1555 = vpop.f32.mrb[0].mxu0
      %v1556 = vadd.f32 0.0, %v1555
      %v1557 = vpop.f32.mrb[0].mxu0
      %v1558 = vadd.f32 0.0, %v1557
      %v1559 = vpop.f32.mrb[0].mxu0
      %v1560 = vadd.f32 0.0, %v1559
      %v1561 = vpop.f32.mrb[0].mxu0
      %v1562 = vadd.f32 0.0, %v1561
      %1563 = vmatprep.mubr.bf16.mxu0 0
      %1564 = vmatmul.mubr.bf16.gmra.mrb[0].mxu0 %v951
      %v1565 = vpop.f32.mrb[0].mxu0
      %v1566 = vadd.f32 0.0, %v1565
      %v1567 = vpop.f32.mrb[0].mxu0
      %v1568 = vadd.f32 0.0, %v1567
      %v1569 = vpop.f32.mrb[0].mxu0
      %v1570 = vadd.f32 0.0, %v1569
      %v1571 = vpop.f32.mrb[0].mxu0
      %v1572 = vadd.f32 0.0, %v1571
      %1573 = vmatprep.mubr.bf16.mxu0 0
      %1574 = vmatmul.mubr.bf16.gmra.mrb[0].mxu0 %v952
      %v1575 = vpop.f32.mrb[0].mxu0
      %v1576 = vadd.f32 0.0, %v1575
      %v1577 = vpop.f32.mrb[0].mxu0
      %v1578 = vadd.f32 0.0, %v1577
      %v1579 = vpop.f32.mrb[0].mxu0
      %v1580 = vadd.f32 0.0, %v1579
      %v1581 = vpop.f32.mrb[0].mxu0
      %v1582 = vadd.f32 0.0, %v1581
      %1583 = vmatprep.mubr.bf16.mxu0 0
      %1584 = vmatmul.mubr.bf16.gmra.mrb[0].mxu0 %v953
      %v1585 = vpop.f32.mrb[0].mxu0
      %v1586 = vadd.f32 0.0, %v1585
      %v1587 = vpop.f32.mrb[0].mxu0
      %v1588 = vadd.f32 0.0, %v1587
      %v1589 = vpop.f32.mrb[0].mxu0
      %v1590 = vadd.f32 0.0, %v1589
      %v1591 = vpop.f32.mrb[0].mxu0
      %v1592 = vadd.f32 0.0, %v1591
      %1593 = vmatprep.mubr.bf16.mxu0 0
      %1594 = vmatmul.mubr.bf16.gmra.mrb[0].mxu0 %v954
      %v1595 = vpop.f32.mrb[0].mxu0
      %v1596 = vadd.f32 0.0, %v1595
      %v1597 = vpop.f32.mrb[0].mxu0
      %v1598 = vadd.f32 0.0, %v1597
      %v1599 = vpop.f32.mrb[0].mxu0
      %v1600 = vadd.f32 0.0, %v1599
      %v1601 = vpop.f32.mrb[0].mxu0
      %v1602 = vadd.f32 0.0, %v1601
      %1603 = vmatprep.mubr.bf16.mxu0 0
      %1604 = vmatmul.mubr.bf16.gmra.mrb[0].mxu0 %v955
      %v1605 = vpop.f32.mrb[0].mxu0
      %v1606 = vadd.f32 0.0, %v1605
      %v1607 = vpop.f32.mrb[0].mxu0
      %v1608 = vadd.f32 0.0, %v1607
      %v1609 = vpop.f32.mrb[0].mxu0
      %v1610 = vadd.f32 0.0, %v1609
      %v1611 = vpop.f32.mrb[0].mxu0
      %v1612 = vadd.f32 0.0, %v1611
      %1613 = vmatprep.mubr.bf16.mxu0 0
      %1614 = vmatmul.mubr.bf16.gmra.mrb[0].mxu0 %v956
      %v1615 = vpop.f32.mrb[0].mxu0
      %v1616 = vadd.f32 0.0, %v1615
      %v1617 = vpop.f32.mrb[0].mxu0
      %v1618 = vadd.f32 0.0, %v1617
      %v1619 = vpop.f32.mrb[0].mxu0
      %v1620 = vadd.f32 0.0, %v1619
      %v1621 = vpop.f32.mrb[0].mxu0
      %v1622 = vadd.f32 0.0, %v1621
      %1623 = vmatprep.mubr.bf16.mxu0 0
      %1624 = vmatmul.mubr.bf16.gmra.mrb[0].mxu0 %v957
      %v1625 = vpop.f32.mrb[0].mxu0
      %v1626 = vadd.f32 0.0, %v1625
      %v1627 = vpop.f32.mrb[0].mxu0
      %v1628 = vadd.f32 0.0, %v1627
      %v1629 = vpop.f32.mrb[0].mxu0
      %v1630 = vadd.f32 0.0, %v1629
      %v1631 = vpop.f32.mrb[0].mxu0
      %v1632 = vadd.f32 0.0, %v1631
      %1633 = vmatprep.mubr.bf16.mxu0 0
      %1634 = vmatmul.mubr.bf16.gmra.mrb[0].mxu0 %v958
      %v1635 = vpop.f32.mrb[0].mxu0
      %v1636 = vadd.f32 0.0, %v1635
      %v1637 = vpop.f32.mrb[0].mxu0
      %v1638 = vadd.f32 0.0, %v1637
      %v1639 = vpop.f32.mrb[0].mxu0
      %v1640 = vadd.f32 0.0, %v1639
      %v1641 = vpop.f32.mrb[0].mxu0
      %v1642 = vadd.f32 0.0, %v1641
      %1643 = vmatprep.mubr.bf16.mxu0 0
      %1644 = vmatmul.mubr.bf16.gmra.mrb[0].mxu0 %v959
      %v1645 = vpop.f32.mrb[0].mxu0
      %v1646 = vadd.f32 0.0, %v1645
      %v1647 = vpop.f32.mrb[0].mxu0
      %v1648 = vadd.f32 0.0, %v1647
      %v1649 = vpop.f32.mrb[0].mxu0
      %v1650 = vadd.f32 0.0, %v1649
      %v1651 = vpop.f32.mrb[0].mxu0
      %v1652 = vadd.f32 0.0, %v1651
      %1653 = vdwg.mxu0
      %1654 = vmatprep.subr.bf16.mxu0 %v1157
      %1655 = vmatpush1.bf16.msra.mxu0 %v1156
      %1656 = vmatprep.subr.bf16.mxu0 %v1163
      %1657 = vmatpush1.bf16.msra.mxu0 %v1162
      %1658 = vmatprep.subr.bf16.mxu0 %v1169
      %1659 = vmatpush1.bf16.msra.mxu0 %v1168
      %1660 = vmatprep.subr.bf16.mxu0 %v1175
      %1661 = vmatpush1.bf16.msra.mxu0 %v1174
      %1662 = vmatprep.subr.bf16.mxu0 %v1181
      %1663 = vmatpush1.bf16.msra.mxu0 %v1180
      %1664 = vmatprep.subr.bf16.mxu0 %v1187
      %1665 = vmatpush1.bf16.msra.mxu0 %v1186
      %1666 = vmatprep.subr.bf16.mxu0 %v1193
      %1667 = vmatpush1.bf16.msra.mxu0 %v1192
      %1668 = vmatprep.subr.bf16.mxu0 %v1199
      %1669 = vmatpush1.bf16.msra.mxu0 %v1198
      %1670 = vmatprep.subr.bf16.mxu0 0
      %1671 = vmatpush1.bf16.msra.mxu0 0
      %1672 = vmatprep.subr.bf16.mxu0 0
      %1673 = vmatpush1.bf16.msra.mxu0 0
      %1674 = vmatprep.subr.bf16.mxu0 0
      %1675 = vmatpush1.bf16.msra.mxu0 0
      %1676 = vmatprep.subr.bf16.mxu0 0
      %1677 = vmatpush1.bf16.msra.mxu0 0
      %1678 = vmatprep.subr.bf16.mxu0 0
      %1679 = vmatpush1.bf16.msra.mxu0 0
      %1680 = vmatprep.subr.bf16.mxu0 0
      %1681 = vmatpush1.bf16.msra.mxu0 0
      %1682 = vmatprep.subr.bf16.mxu0 0
      %1683 = vmatpush1.bf16.msra.mxu0 0
      %1684 = vmatprep.subr.bf16.mxu0 0
      %1685 = vmatpush1.bf16.msra.mxu0 0
      %1686 = vmatprep.mubr.bf16.mxu0 0
      %1687 = vmatmul.mubr.bf16.gmra.mrb[0].mxu0 %v943
      %v1688 = vpop.f32.mrb[0].mxu0
      %v1689 = vadd.f32 0.0, %v1688
      %v1690 = vpop.f32.mrb[0].mxu0
      %v1691 = vadd.f32 0.0, %v1690
      %v1692 = vpop.f32.mrb[0].mxu0
      %v1693 = vadd.f32 0.0, %v1692
      %v1694 = vpop.f32.mrb[0].mxu0
      %v1695 = vadd.f32 0.0, %v1694
      %1696 = vmatprep.mubr.bf16.mxu0 0
      %1697 = vmatmul.mubr.bf16.gmra.mrb[0].mxu0 %v944
      %v1698 = vpop.f32.mrb[0].mxu0
      %v1699 = vadd.f32 0.0, %v1698
      %v1700 = vpop.f32.mrb[0].mxu0
      %v1701 = vadd.f32 0.0, %v1700
      %v1702 = vpop.f32.mrb[0].mxu0
      %v1703 = vadd.f32 0.0, %v1702
      %v1704 = vpop.f32.mrb[0].mxu0
      %v1705 = vadd.f32 0.0, %v1704
      %1706 = vmatprep.mubr.bf16.mxu0 0
      %1707 = vmatmul.mubr.bf16.gmra.mrb[0].mxu0 %v945
      %v1708 = vpop.f32.mrb[0].mxu0
      %v1709 = vadd.f32 0.0, %v1708
      %v1710 = vpop.f32.mrb[0].mxu0
      %v1711 = vadd.f32 0.0, %v1710
      %v1712 = vpop.f32.mrb[0].mxu0
      %v1713 = vadd.f32 0.0, %v1712
      %v1714 = vpop.f32.mrb[0].mxu0
      %v1715 = vadd.f32 0.0, %v1714
      %1716 = vmatprep.mubr.bf16.mxu0 0
      %1717 = vmatmul.mubr.bf16.gmra.mrb[0].mxu0 %v946
      %v1718 = vpop.f32.mrb[0].mxu0
      %v1719 = vadd.f32 0.0, %v1718
      %v1720 = vpop.f32.mrb[0].mxu0
      %v1721 = vadd.f32 0.0, %v1720
      %v1722 = vpop.f32.mrb[0].mxu0
      %v1723 = vadd.f32 0.0, %v1722
      %v1724 = vpop.f32.mrb[0].mxu0
      %v1725 = vadd.f32 0.0, %v1724
      %1726 = vmatprep.mubr.bf16.mxu0 0
      %1727 = vmatmul.mubr.bf16.gmra.mrb[0].mxu0 %v947
      %v1728 = vpop.f32.mrb[0].mxu0
      %v1729 = vadd.f32 0.0, %v1728
      %v1730 = vpop.f32.mrb[0].mxu0
      %v1731 = vadd.f32 0.0, %v1730
      %v1732 = vpop.f32.mrb[0].mxu0
      %v1733 = vadd.f32 0.0, %v1732
      %v1734 = vpop.f32.mrb[0].mxu0
      %v1735 = vadd.f32 0.0, %v1734
      %1736 = vmatprep.mubr.bf16.mxu0 0
      %1737 = vmatmul.mubr.bf16.gmra.mrb[0].mxu0 %v948
      %v1738 = vpop.f32.mrb[0].mxu0
      %v1739 = vadd.f32 0.0, %v1738
      %v1740 = vpop.f32.mrb[0].mxu0
      %v1741 = vadd.f32 0.0, %v1740
      %v1742 = vpop.f32.mrb[0].mxu0
      %v1743 = vadd.f32 0.0, %v1742
      %v1744 = vpop.f32.mrb[0].mxu0
      %v1745 = vadd.f32 0.0, %v1744
      %1746 = vmatprep.mubr.bf16.mxu0 0
      %1747 = vmatmul.mubr.bf16.gmra.mrb[0].mxu0 %v949
      %v1748 = vpop.f32.mrb[0].mxu0
      %v1749 = vadd.f32 0.0, %v1748
      %v1750 = vpop.f32.mrb[0].mxu0
      %v1751 = vadd.f32 0.0, %v1750
      %v1752 = vpop.f32.mrb[0].mxu0
      %v1753 = vadd.f32 0.0, %v1752
      %v1754 = vpop.f32.mrb[0].mxu0
      %v1755 = vadd.f32 0.0, %v1754
      %1756 = vmatprep.mubr.bf16.mxu0 0
      %1757 = vmatmul.mubr.bf16.gmra.mrb[0].mxu0 %v950
      %v1758 = vpop.f32.mrb[0].mxu0
      %v1759 = vadd.f32 0.0, %v1758
      %v1760 = vpop.f32.mrb[0].mxu0
      %v1761 = vadd.f32 0.0, %v1760
      %v1762 = vpop.f32.mrb[0].mxu0
      %v1763 = vadd.f32 0.0, %v1762
      %v1764 = vpop.f32.mrb[0].mxu0
      %v1765 = vadd.f32 0.0, %v1764
      %1766 = vmatprep.mubr.bf16.mxu0 0
      %1767 = vmatmul.mubr.bf16.gmra.mrb[0].mxu0 %v951
      %v1768 = vpop.f32.mrb[0].mxu0
      %v1769 = vadd.f32 0.0, %v1768
      %v1770 = vpop.f32.mrb[0].mxu0
      %v1771 = vadd.f32 0.0, %v1770
      %v1772 = vpop.f32.mrb[0].mxu0
      %v1773 = vadd.f32 0.0, %v1772
      %v1774 = vpop.f32.mrb[0].mxu0
      %v1775 = vadd.f32 0.0, %v1774
      %1776 = vmatprep.mubr.bf16.mxu0 0
      %1777 = vmatmul.mubr.bf16.gmra.mrb[0].mxu0 %v952
      %v1778 = vpop.f32.mrb[0].mxu0
      %v1779 = vadd.f32 0.0, %v1778
      %v1780 = vpop.f32.mrb[0].mxu0
      %v1781 = vadd.f32 0.0, %v1780
      %v1782 = vpop.f32.mrb[0].mxu0
      %v1783 = vadd.f32 0.0, %v1782
      %v1784 = vpop.f32.mrb[0].mxu0
      %v1785 = vadd.f32 0.0, %v1784
      %1786 = vmatprep.mubr.bf16.mxu0 0
      %1787 = vmatmul.mubr.bf16.gmra.mrb[0].mxu0 %v953
      %v1788 = vpop.f32.mrb[0].mxu0
      %v1789 = vadd.f32 0.0, %v1788
      %v1790 = vpop.f32.mrb[0].mxu0
      %v1791 = vadd.f32 0.0, %v1790
      %v1792 = vpop.f32.mrb[0].mxu0
      %v1793 = vadd.f32 0.0, %v1792
      %v1794 = vpop.f32.mrb[0].mxu0
      %v1795 = vadd.f32 0.0, %v1794
      %1796 = vmatprep.mubr.bf16.mxu0 0
      %1797 = vmatmul.mubr.bf16.gmra.mrb[0].mxu0 %v954
      %v1798 = vpop.f32.mrb[0].mxu0
      %v1799 = vadd.f32 0.0, %v1798
      %v1800 = vpop.f32.mrb[0].mxu0
      %v1801 = vadd.f32 0.0, %v1800
      %v1802 = vpop.f32.mrb[0].mxu0
      %v1803 = vadd.f32 0.0, %v1802
      %v1804 = vpop.f32.mrb[0].mxu0
      %v1805 = vadd.f32 0.0, %v1804
      %1806 = vmatprep.mubr.bf16.mxu0 0
      %1807 = vmatmul.mubr.bf16.gmra.mrb[0].mxu0 %v955
      %v1808 = vpop.f32.mrb[0].mxu0
      %v1809 = vadd.f32 0.0, %v1808
      %v1810 = vpop.f32.mrb[0].mxu0
      %v1811 = vadd.f32 0.0, %v1810
      %v1812 = vpop.f32.mrb[0].mxu0
      %v1813 = vadd.f32 0.0, %v1812
      %v1814 = vpop.f32.mrb[0].mxu0
      %v1815 = vadd.f32 0.0, %v1814
      %1816 = vmatprep.mubr.bf16.mxu0 0
      %1817 = vmatmul.mubr.bf16.gmra.mrb[0].mxu0 %v956
      %v1818 = vpop.f32.mrb[0].mxu0
      %v1819 = vadd.f32 0.0, %v1818
      %v1820 = vpop.f32.mrb[0].mxu0
      %v1821 = vadd.f32 0.0, %v1820
      %v1822 = vpop.f32.mrb[0].mxu0
      %v1823 = vadd.f32 0.0, %v1822
      %v1824 = vpop.f32.mrb[0].mxu0
      %v1825 = vadd.f32 0.0, %v1824
      %1826 = vmatprep.mubr.bf16.mxu0 0
      %1827 = vmatmul.mubr.bf16.gmra.mrb[0].mxu0 %v957
      %v1828 = vpop.f32.mrb[0].mxu0
      %v1829 = vadd.f32 0.0, %v1828
      %v1830 = vpop.f32.mrb[0].mxu0
      %v1831 = vadd.f32 0.0, %v1830
      %v1832 = vpop.f32.mrb[0].mxu0
      %v1833 = vadd.f32 0.0, %v1832
      %v1834 = vpop.f32.mrb[0].mxu0
      %v1835 = vadd.f32 0.0, %v1834
      %1836 = vmatprep.mubr.bf16.mxu0 0
      %1837 = vmatmul.mubr.bf16.gmra.mrb[0].mxu0 %v958
      %v1838 = vpop.f32.mrb[0].mxu0
      %v1839 = vadd.f32 0.0, %v1838
      %v1840 = vpop.f32.mrb[0].mxu0
      %v1841 = vadd.f32 0.0, %v1840
      %v1842 = vpop.f32.mrb[0].mxu0
      %v1843 = vadd.f32 0.0, %v1842
      %v1844 = vpop.f32.mrb[0].mxu0
      %v1845 = vadd.f32 0.0, %v1844
      %1846 = vmatprep.mubr.bf16.mxu0 0
      %1847 = vmatmul.mubr.bf16.gmra.mrb[0].mxu0 %v959
      %v1848 = vpop.f32.mrb[0].mxu0
      %v1849 = vadd.f32 0.0, %v1848
      %v1850 = vpop.f32.mrb[0].mxu0
      %v1851 = vadd.f32 0.0, %v1850
      %v1852 = vpop.f32.mrb[0].mxu0
      %v1853 = vadd.f32 0.0, %v1852
      %v1854 = vpop.f32.mrb[0].mxu0
      %v1855 = vadd.f32 0.0, %v1854
      %1856 = vdwg.mxu0
      %v1857 = vpack.c.bf16 %v1287, %v1283
      %v1858 = vpack.c.bf16 %v1289, %v1285
      %v1859 = vpack.c.bf16 %v1490, %v1486
      %v1860 = vpack.c.bf16 %v1492, %v1488
      %v1861 = vpack.c.bf16 %v1693, %v1689
      %v1862 = vpack.c.bf16 %v1695, %v1691
      %v1863 = vpack.c.bf16 %v1297, %v1293
      %v1864 = vpack.c.bf16 %v1299, %v1295
      %v1865 = vpack.c.bf16 %v1500, %v1496
      %v1866 = vpack.c.bf16 %v1502, %v1498
      %v1867 = vpack.c.bf16 %v1703, %v1699
      %v1868 = vpack.c.bf16 %v1705, %v1701
      %v1869 = vpack.c.bf16 %v1307, %v1303
      %v1870 = vpack.c.bf16 %v1309, %v1305
      %v1871 = vpack.c.bf16 %v1510, %v1506
      %v1872 = vpack.c.bf16 %v1512, %v1508
      %v1873 = vpack.c.bf16 %v1713, %v1709
      %v1874 = vpack.c.bf16 %v1715, %v1711
      %v1875 = vpack.c.bf16 %v1317, %v1313
      %v1876 = vpack.c.bf16 %v1319, %v1315
      %v1877 = vpack.c.bf16 %v1520, %v1516
      %v1878 = vpack.c.bf16 %v1522, %v1518
      %v1879 = vpack.c.bf16 %v1723, %v1719
      %v1880 = vpack.c.bf16 %v1725, %v1721
      %v1881 = vpack.c.bf16 %v1327, %v1323
      %v1882 = vpack.c.bf16 %v1329, %v1325
      %v1883 = vpack.c.bf16 %v1530, %v1526
      %v1884 = vpack.c.bf16 %v1532, %v1528
      %v1885 = vpack.c.bf16 %v1733, %v1729
      %v1886 = vpack.c.bf16 %v1735, %v1731
      %v1887 = vpack.c.bf16 %v1337, %v1333
      %v1888 = vpack.c.bf16 %v1339, %v1335
      %v1889 = vpack.c.bf16 %v1540, %v1536
      %v1890 = vpack.c.bf16 %v1542, %v1538
      %v1891 = vpack.c.bf16 %v1743, %v1739
      %v1892 = vpack.c.bf16 %v1745, %v1741
      %v1893 = vpack.c.bf16 %v1347, %v1343
      %v1894 = vpack.c.bf16 %v1349, %v1345
      %v1895 = vpack.c.bf16 %v1550, %v1546
      %v1896 = vpack.c.bf16 %v1552, %v1548
      %v1897 = vpack.c.bf16 %v1753, %v1749
      %v1898 = vpack.c.bf16 %v1755, %v1751
      %v1899 = vpack.c.bf16 %v1357, %v1353
      %v1900 = vpack.c.bf16 %v1359, %v1355
      %v1901 = vpack.c.bf16 %v1560, %v1556
      %v1902 = vpack.c.bf16 %v1562, %v1558
      %v1903 = vpack.c.bf16 %v1763, %v1759
      %v1904 = vpack.c.bf16 %v1765, %v1761
      %v1905 = vpack.c.bf16 %v1367, %v1363
      %v1906 = vpack.c.bf16 %v1369, %v1365
      %v1907 = vpack.c.bf16 %v1570, %v1566
      %v1908 = vpack.c.bf16 %v1572, %v1568
      %v1909 = vpack.c.bf16 %v1773, %v1769
      %v1910 = vpack.c.bf16 %v1775, %v1771
      %v1911 = vpack.c.bf16 %v1377, %v1373
      %v1912 = vpack.c.bf16 %v1379, %v1375
      %v1913 = vpack.c.bf16 %v1580, %v1576
      %v1914 = vpack.c.bf16 %v1582, %v1578
      %v1915 = vpack.c.bf16 %v1783, %v1779
      %v1916 = vpack.c.bf16 %v1785, %v1781
      %v1917 = vpack.c.bf16 %v1387, %v1383
      %v1918 = vpack.c.bf16 %v1389, %v1385
      %v1919 = vpack.c.bf16 %v1590, %v1586
      %v1920 = vpack.c.bf16 %v1592, %v1588
      %v1921 = vpack.c.bf16 %v1793, %v1789
      %v1922 = vpack.c.bf16 %v1795, %v1791
      %v1923 = vpack.c.bf16 %v1397, %v1393
      %v1924 = vpack.c.bf16 %v1399, %v1395
      %v1925 = vpack.c.bf16 %v1600, %v1596
      %v1926 = vpack.c.bf16 %v1602, %v1598
      %v1927 = vpack.c.bf16 %v1803, %v1799
      %v1928 = vpack.c.bf16 %v1805, %v1801
      %v1929 = vpack.c.bf16 %v1407, %v1403
      %v1930 = vpack.c.bf16 %v1409, %v1405
      %v1931 = vpack.c.bf16 %v1610, %v1606
      %v1932 = vpack.c.bf16 %v1612, %v1608
      %v1933 = vpack.c.bf16 %v1813, %v1809
      %v1934 = vpack.c.bf16 %v1815, %v1811
      %v1935 = vpack.c.bf16 %v1417, %v1413
      %v1936 = vpack.c.bf16 %v1419, %v1415
      %v1937 = vpack.c.bf16 %v1620, %v1616
      %v1938 = vpack.c.bf16 %v1622, %v1618
      %v1939 = vpack.c.bf16 %v1823, %v1819
      %v1940 = vpack.c.bf16 %v1825, %v1821
      %v1941 = vpack.c.bf16 %v1427, %v1423
      %v1942 = vpack.c.bf16 %v1429, %v1425
      %v1943 = vpack.c.bf16 %v1630, %v1626
      %v1944 = vpack.c.bf16 %v1632, %v1628
      %v1945 = vpack.c.bf16 %v1833, %v1829
      %v1946 = vpack.c.bf16 %v1835, %v1831
      %v1947 = vpack.c.bf16 %v1437, %v1433
      %v1948 = vpack.c.bf16 %v1439, %v1435
      %v1949 = vpack.c.bf16 %v1640, %v1636
      %v1950 = vpack.c.bf16 %v1642, %v1638
      %v1951 = vpack.c.bf16 %v1843, %v1839
      %v1952 = vpack.c.bf16 %v1845, %v1841
      %v1953 = vpack.c.bf16 %v1447, %v1443
      %v1954 = vpack.c.bf16 %v1449, %v1445
      %v1955 = vpack.c.bf16 %v1650, %v1646
      %v1956 = vpack.c.bf16 %v1652, %v1648
      %v1957 = vpack.c.bf16 %v1853, %v1849
      %v1958 = vpack.c.bf16 %v1855, %v1851
      %v1959 = vlaneseq
      %v1960 = vshrl.u32 %v1959, 7
      %v1961 = vadd.s32 %v1960, 8
      %v1962 = vadd.s32 %v1960, 16
      %v1963 = vadd.s32 %v1960, 24
      %v1964 = vadd.s32 %v1960, 32
      %v1965 = vadd.s32 %v1960, 40
      %v1966 = vadd.s32 %v1960, 48
      %v1967 = vadd.s32 %v1960, 56
      %v1968 = vadd.s32 %v1960, 64
      %v1969 = vcvt.s32.f32 %v1960
      %v1970 = vcvt.s32.f32 %v1961
      %v1971 = vcvt.s32.f32 %v1962
      %v1972 = vcvt.s32.f32 %v1963
      %v1973 = vcvt.s32.f32 %v1964
      %v1974 = vcvt.s32.f32 %v1965
      %v1975 = vcvt.s32.f32 %v1966
      %v1976 = vcvt.s32.f32 %v1967
      %v1977 = vcvt.s32.f32 %v1968
      %v1978 = vlaneseq
      %v1979 = vand.u32 %v1978, 127
      %v1980 = vcvt.s32.f32 %v1979
      %v1981 = vadd.f32 %v1969, 0.5
      %v1982 = vadd.f32 %v1970, 0.5
      %v1983 = vadd.f32 %v1971, 0.5
      %v1984 = vadd.f32 %v1972, 0.5
      %v1985 = vadd.f32 %v1973, 0.5
      %v1986 = vadd.f32 %v1974, 0.5
      %v1987 = vadd.f32 %v1975, 0.5
      %v1988 = vadd.f32 %v1976, 0.5
      %v1989 = vadd.f32 %v1977, 0.5
      %v1990 = vmul.f32 %v1981, 0.05882353
      %v1991 = vmul.f32 %v1982, 0.05882353
      %v1992 = vmul.f32 %v1983, 0.05882353
      %v1993 = vmul.f32 %v1984, 0.05882353
      %v1994 = vmul.f32 %v1985, 0.05882353
      %v1995 = vmul.f32 %v1986, 0.05882353
      %v1996 = vmul.f32 %v1987, 0.05882353
      %v1997 = vmul.f32 %v1988, 0.05882353
      %v1998 = vmul.f32 %v1989, 0.05882353
      %v1999 = vfloor.f32 %v1990
      %v2000 = vfloor.f32 %v1991
      %v2001 = vfloor.f32 %v1992
      %v2002 = vfloor.f32 %v1993
      %v2003 = vfloor.f32 %v1994
      %v2004 = vfloor.f32 %v1995
      %v2005 = vfloor.f32 %v1996
      %v2006 = vfloor.f32 %v1997
      %v2007 = vfloor.f32 %v1998
      %v2008 = vadd.f32 %v1980, 0.5
      %v2009 = vmul.f32 %v2008, 0.05882353
      %v2010 = vfloor.f32 %v2009
      %vm2011 = vcmp.eq.f32.partialorder %v1999, %v2010
      %vm2012 = vcmp.eq.f32.partialorder %v2000, %v2010
      %vm2013 = vcmp.eq.f32.partialorder %v2001, %v2010
      %vm2014 = vcmp.eq.f32.partialorder %v2002, %v2010
      %vm2015 = vcmp.eq.f32.partialorder %v2003, %v2010
      %vm2016 = vcmp.eq.f32.partialorder %v2004, %v2010
      %vm2017 = vcmp.eq.f32.partialorder %v2005, %v2010
      %vm2018 = vcmp.eq.f32.partialorder %v2006, %v2010
      %vm2019 = vcmp.eq.f32.partialorder %v2007, %v2010
      %v2020 = vsel %vm2011, 0.0, -1e+30
      %v2021 = vsel %vm2012, 0.0, -1e+30
      %v2022 = vsel %vm2013, 0.0, -1e+30
      %v2023 = vsel %vm2014, 0.0, -1e+30
      %v2024 = vsel %vm2015, 0.0, -1e+30
      %v2025 = vsel %vm2016, 0.0, -1e+30
      %v2026 = vsel %vm2017, 0.0, -1e+30
      %v2027 = vsel %vm2018, 0.0, -1e+30
      %v2028 = vsel %vm2019, 0.0, -1e+30
      %vm2029 = vcmask 523264
      %v2031 = vsel %vm2029, %v1857, 0
      %v2034 = vsel %vm2029, %v1863, 0
      %v2037 = vsel %vm2029, %v1869, 0
      %v2040 = vsel %vm2029, %v1875, 0
      %v2043 = vsel %vm2029, %v1881, 0
      %v2046 = vsel %vm2029, %v1859, 0
      %v2049 = vsel %vm2029, %v1865, 0
      %v2052 = vsel %vm2029, %v1871, 0
      %v2055 = vsel %vm2029, %v1877, 0
      %v2058 = vsel %vm2029, %v1883, 0
      %2060 = vmatprep.subr.bf16.mxu0 0
      %2061 = vmatpush1.bf16.xpose.msra.mxu0 %v2046
      %2062 = vmatprep.subr.bf16.mxu0 0
      %2063 = vmatpush1.bf16.xpose.msra.mxu0 %v2049
      %2064 = vmatprep.subr.bf16.mxu0 0
      %2065 = vmatpush1.bf16.xpose.msra.mxu0 %v2052
      %2066 = vmatprep.subr.bf16.mxu0 0
      %2067 = vmatpush1.bf16.xpose.msra.mxu0 %v2055
      %2068 = vmatprep.subr.bf16.mxu0 0
      %2069 = vmatpush1.bf16.xpose.msra.mxu0 %v2058
      %2070 = vmatprep.subr.bf16.mxu0 0
      %2071 = vmatpush1.bf16.xpose.msra.mxu0 0
      %2072 = vmatprep.subr.bf16.mxu0 0
      %2073 = vmatpush1.bf16.xpose.msra.mxu0 0
      %2074 = vmatprep.subr.bf16.mxu0 0
      %2075 = vmatpush1.bf16.xpose.msra.mxu0 0
      %2076 = vmatprep.subr.bf16.mxu0 0
      %2077 = vmatpush1.bf16.xpose.msra.mxu0 0
      %2078 = vmatprep.subr.bf16.mxu0 0
      %2079 = vmatpush1.bf16.xpose.msra.mxu0 0
      %2080 = vmatprep.subr.bf16.mxu0 0
      %2081 = vmatpush1.bf16.xpose.msra.mxu0 0
      %2082 = vmatprep.subr.bf16.mxu0 0
      %2083 = vmatpush1.bf16.xpose.msra.mxu0 0
      %2084 = vmatprep.subr.bf16.mxu0 0
      %2085 = vmatpush1.bf16.xpose.msra.mxu0 0
      %2086 = vmatprep.subr.bf16.mxu0 0
      %2087 = vmatpush1.bf16.xpose.msra.mxu0 0
      %2088 = vmatprep.subr.bf16.mxu0 0
      %2089 = vmatpush1.bf16.xpose.msra.mxu0 0
      %2090 = vmatprep.subr.bf16.mxu0 0
      %2091 = vmatpush1.bf16.xpose.msra.mxu0 0
      %2092 = vmatprep.mubr.bf16.mxu0 0
      %2093 = vmatmul.mubr.bf16.gmra.mrb[0].mxu0 %v2031
      %v2094 = vpop.f32.mrb[0].mxu0
      %v2095 = vadd.f32 %v2020, %v2094
      %v2096 = vpop.f32.mrb[0].mxu0
      %v2097 = vpop.f32.mrb[0].mxu0
      %v2098 = vadd.f32 %v2021, %v2097
      %v2099 = vpop.f32.mrb[0].mxu0
      %2100 = vmatprep.mubr.bf16.mxu0 0
      %2101 = vmatmul.mubr.bf16.gmra.mrb[0].mxu0 %v2034
      %v2102 = vpop.f32.mrb[0].mxu0
      %v2103 = vadd.f32 %v2022, %v2102
      %v2104 = vpop.f32.mrb[0].mxu0
      %v2105 = vpop.f32.mrb[0].mxu0
      %v2106 = vadd.f32 %v2023, %v2105
      %v2107 = vpop.f32.mrb[0].mxu0
      %2108 = vmatprep.mubr.bf16.mxu0 0
      %2109 = vmatmul.mubr.bf16.gmra.mrb[0].mxu0 %v2037
      %v2110 = vpop.f32.mrb[0].mxu0
      %v2111 = vadd.f32 %v2024, %v2110
      %v2112 = vpop.f32.mrb[0].mxu0
      %v2113 = vpop.f32.mrb[0].mxu0
      %v2114 = vadd.f32 %v2025, %v2113
      %v2115 = vpop.f32.mrb[0].mxu0
      %2116 = vmatprep.mubr.bf16.mxu0 0
      %2117 = vmatmul.mubr.bf16.gmra.mrb[0].mxu0 %v2040
      %v2118 = vpop.f32.mrb[0].mxu0
      %v2119 = vadd.f32 %v2026, %v2118
      %v2120 = vpop.f32.mrb[0].mxu0
      %v2121 = vpop.f32.mrb[0].mxu0
      %v2122 = vadd.f32 %v2027, %v2121
      %v2123 = vpop.f32.mrb[0].mxu0
      %2124 = vmatprep.mubr.bf16.mxu0 0
      %2125 = vmatmul.mubr.bf16.gmra.mrb[0].mxu0 %v2043
      %v2126 = vpop.f32.mrb[0].mxu0
      %v2127 = vadd.f32 %v2028, %v2126
      %v2128 = vpop.f32.mrb[0].mxu0
      %v2129 = vpop.f32.mrb[0].mxu0
      %v2130 = vpop.f32.mrb[0].mxu0
      %2131 = vdwg.mxu0
      %vm2132 = vcmask 556032
      %v2133 = vsel %vm2132, %v2095, -inf
      %2134 = vmax.xlane.f32.xlu0 %v2133
      %v2135 = vpop.xlane.xlu0 %2134
      %v2136 = vsel %vm2132, %v2098, -inf
      %2137 = vmax.xlane.f32.xlu0 %v2136
      %v2138 = vpop.xlane.xlu0 %2137
      %v2139 = vsel %vm2132, %v2103, -inf
      %2140 = vmax.xlane.f32.xlu0 %v2139
      %v2141 = vpop.xlane.xlu0 %2140
      %v2142 = vsel %vm2132, %v2106, -inf
      %2143 = vmax.xlane.f32.xlu0 %v2142
      %v2144 = vpop.xlane.xlu0 %2143
      %v2145 = vsel %vm2132, %v2111, -inf
      %2146 = vmax.xlane.f32.xlu0 %v2145
      %v2147 = vpop.xlane.xlu0 %2146
      %v2148 = vsel %vm2132, %v2114, -inf
      %2149 = vmax.xlane.f32.xlu0 %v2148
      %v2150 = vpop.xlane.xlu0 %2149
      %v2151 = vsel %vm2132, %v2119, -inf
      %2152 = vmax.xlane.f32.xlu0 %v2151
      %v2153 = vpop.xlane.xlu0 %2152
      %v2154 = vsel %vm2132, %v2122, -inf
      %2155 = vmax.xlane.f32.xlu0 %v2154
      %v2156 = vpop.xlane.xlu0 %2155
      %vm2157 = vcmask 551936
      %v2158 = vsel %vm2157, %v2127, -inf
      %2159 = vmax.xlane.f32.xlu0 %v2158
      %v2160 = vpop.xlane.xlu0 %2159
      %v2161 = vsub.f32 %v2095, %v2135
      %v2162 = vsub.f32 %v2098, %v2138
      %v2163 = vsub.f32 %v2103, %v2141
      %v2164 = vsub.f32 %v2106, %v2144
      %v2165 = vsub.f32 %v2111, %v2147
      %v2166 = vsub.f32 %v2114, %v2150
      %v2167 = vsub.f32 %v2119, %v2153
      %v2168 = vsub.f32 %v2122, %v2156
      %v2169 = vsub.f32 %v2127, %v2160
      %v2170 = vmul.f32 %v2161, 1.442695
      %v2171 = vpow.pop %v2170
      %v2172 = vmul.f32 %v2162, 1.442695
      %v2173 = vpow.pop %v2172
      %v2174 = vmul.f32 %v2163, 1.442695
      %v2175 = vpow.pop %v2174
      %v2176 = vmul.f32 %v2164, 1.442695
      %v2177 = vpow.pop %v2176
      %v2178 = vmul.f32 %v2165, 1.442695
      %v2179 = vpow.pop %v2178
      %v2180 = vmul.f32 %v2166, 1.442695
      %v2181 = vpow.pop %v2180
      %v2182 = vmul.f32 %v2167, 1.442695
      %v2183 = vpow.pop %v2182
      %v2184 = vmul.f32 %v2168, 1.442695
      %v2185 = vpow.pop %v2184
      %v2186 = vmul.f32 %v2169, 1.442695
      %v2187 = vpow.pop %v2186
      %v2188 = vsel %vm2132, %v2171, 0.0
      %2189 = vadd.xlane.f32.xlu0 %v2188
      %v2190 = vpop.xlane.xlu0 %2189
      %v2191 = vsel %vm2132, %v2173, 0.0
      %2192 = vadd.xlane.f32.xlu0 %v2191
      %v2193 = vpop.xlane.xlu0 %2192
      %v2194 = vsel %vm2132, %v2175, 0.0
      %2195 = vadd.xlane.f32.xlu0 %v2194
      %v2196 = vpop.xlane.xlu0 %2195
      %v2197 = vsel %vm2132, %v2177, 0.0
      %2198 = vadd.xlane.f32.xlu0 %v2197
      %v2199 = vpop.xlane.xlu0 %2198
      %v2200 = vsel %vm2132, %v2179, 0.0
      %2201 = vadd.xlane.f32.xlu0 %v2200
      %v2202 = vpop.xlane.xlu0 %2201
      %v2203 = vsel %vm2132, %v2181, 0.0
      %2204 = vadd.xlane.f32.xlu0 %v2203
      %v2205 = vpop.xlane.xlu0 %2204
      %v2206 = vsel %vm2132, %v2183, 0.0
      %2207 = vadd.xlane.f32.xlu0 %v2206
      %v2208 = vpop.xlane.xlu0 %2207
      %v2209 = vsel %vm2132, %v2185, 0.0
      %2210 = vadd.xlane.f32.xlu0 %v2209
      %v2211 = vpop.xlane.xlu0 %2210
      %v2212 = vsel %vm2157, %v2187, 0.0
      %2213 = vadd.xlane.f32.xlu0 %v2212
      %v2214 = vpop.xlane.xlu0 %2213
      %v2215 = vrcp.pop %v2190
      %v2216 = vrcp.pop %v2193
      %v2217 = vrcp.pop %v2196
      %v2218 = vrcp.pop %v2199
      %v2219 = vrcp.pop %v2202
      %v2220 = vrcp.pop %v2205
      %v2221 = vrcp.pop %v2208
      %v2222 = vrcp.pop %v2211
      %v2223 = vrcp.pop %v2214
      %v2224 = vmul.f32 %v2171, %v2215
      %v2225 = vmul.f32 %v2173, %v2216
      %v2226 = vmul.f32 %v2175, %v2217
      %v2227 = vmul.f32 %v2177, %v2218
      %v2228 = vmul.f32 %v2179, %v2219
      %v2229 = vmul.f32 %v2181, %v2220
      %v2230 = vmul.f32 %v2183, %v2221
      %v2231 = vmul.f32 %v2185, %v2222
      %v2232 = vmul.f32 %v2187, %v2223
      %v2233 = vpack.c.bf16 %v2225, %v2224
      %v2234 = vpack.c.bf16 %v2227, %v2226
      %v2235 = vpack.c.bf16 %v2229, %v2228
      %v2236 = vpack.c.bf16 %v2231, %v2230
      %v2237 = vpack.c.bf16 %v2232, %v2232
      %v2239 = vsel %vm2132, %v2233, 0
      %v2242 = vsel %vm2132, %v2234, 0
      %v2245 = vsel %vm2132, %v2235, 0
      %v2248 = vsel %vm2132, %v2236, 0
      %v2251 = vsel %vm2132, %v2237, 0
      %vm2253 = vcmask 1041408
      %v2255 = vsel %vm2253, %v1885, 0
      %2257 = vmatprep.subr.bf16.mxu0 0
      %2258 = vmatpush1.bf16.msra.mxu0 %v1861
      %2259 = vmatprep.subr.bf16.mxu0 0
      %2260 = vmatpush1.bf16.msra.mxu0 %v1867
      %2261 = vmatprep.subr.bf16.mxu0 0
      %2262 = vmatpush1.bf16.msra.mxu0 %v1873
      %2263 = vmatprep.subr.bf16.mxu0 0
      %2264 = vmatpush1.bf16.msra.mxu0 %v1879
      %2265 = vmatprep.subr.bf16.mxu0 0
      %2266 = vmatpush1.bf16.msra.mxu0 %v2255
      %2267 = vmatprep.subr.bf16.mxu0 0
      %2268 = vmatpush1.bf16.msra.mxu0 0
      %2269 = vmatprep.subr.bf16.mxu0 0
      %2270 = vmatpush1.bf16.msra.mxu0 0
      %2271 = vmatprep.subr.bf16.mxu0 0
      %2272 = vmatpush1.bf16.msra.mxu0 0
      %2273 = vmatprep.subr.bf16.mxu0 0
      %2274 = vmatpush1.bf16.msra.mxu0 0
      %2275 = vmatprep.subr.bf16.mxu0 0
      %2276 = vmatpush1.bf16.msra.mxu0 0
      %2277 = vmatprep.subr.bf16.mxu0 0
      %2278 = vmatpush1.bf16.msra.mxu0 0
      %2279 = vmatprep.subr.bf16.mxu0 0
      %2280 = vmatpush1.bf16.msra.mxu0 0
      %2281 = vmatprep.subr.bf16.mxu0 0
      %2282 = vmatpush1.bf16.msra.mxu0 0
      %2283 = vmatprep.subr.bf16.mxu0 0
      %2284 = vmatpush1.bf16.msra.mxu0 0
      %2285 = vmatprep.subr.bf16.mxu0 0
      %2286 = vmatpush1.bf16.msra.mxu0 0
      %2287 = vmatprep.subr.bf16.mxu0 0
      %2288 = vmatpush1.bf16.msra.mxu0 0
      %2289 = vmatprep.mubr.bf16.mxu0 0
      %2290 = vmatmul.mubr.bf16.gmra.mrb[0].mxu0 %v2239
      %v2291 = vpop.f32.mrb[0].mxu0
      %v2292 = vadd.f32 0.0, %v2291
      %v2293 = vpop.f32.mrb[0].mxu0
      %v2294 = vpop.f32.mrb[0].mxu0
      %v2295 = vadd.f32 0.0, %v2294
      %v2296 = vpop.f32.mrb[0].mxu0
      %2297 = vmatprep.mubr.bf16.mxu0 0
      %2298 = vmatmul.mubr.bf16.gmra.mrb[0].mxu0 %v2242
      %v2299 = vpop.f32.mrb[0].mxu0
      %v2300 = vadd.f32 0.0, %v2299
      %v2301 = vpop.f32.mrb[0].mxu0
      %v2302 = vpop.f32.mrb[0].mxu0
      %v2303 = vadd.f32 0.0, %v2302
      %v2304 = vpop.f32.mrb[0].mxu0
      %2305 = vmatprep.mubr.bf16.mxu0 0
      %2306 = vmatmul.mubr.bf16.gmra.mrb[0].mxu0 %v2245
      %v2307 = vpop.f32.mrb[0].mxu0
      %v2308 = vadd.f32 0.0, %v2307
      %v2309 = vpop.f32.mrb[0].mxu0
      %v2310 = vpop.f32.mrb[0].mxu0
      %v2311 = vadd.f32 0.0, %v2310
      %v2312 = vpop.f32.mrb[0].mxu0
      %2313 = vmatprep.mubr.bf16.mxu0 0
      %2314 = vmatmul.mubr.bf16.gmra.mrb[0].mxu0 %v2248
      %v2315 = vpop.f32.mrb[0].mxu0
      %v2316 = vadd.f32 0.0, %v2315
      %v2317 = vpop.f32.mrb[0].mxu0
      %v2318 = vpop.f32.mrb[0].mxu0
      %v2319 = vadd.f32 0.0, %v2318
      %v2320 = vpop.f32.mrb[0].mxu0
      %2321 = vmatprep.mubr.bf16.mxu0 0
      %2322 = vmatmul.mubr.bf16.gmra.mrb[0].mxu0 %v2251
      %v2323 = vpop.f32.mrb[0].mxu0
      %v2324 = vadd.f32 0.0, %v2323
      %v2325 = vpop.f32.mrb[0].mxu0
      %v2326 = vpop.f32.mrb[0].mxu0
      %v2327 = vpop.f32.mrb[0].mxu0
      %2328 = vdwg.mxu0
      %2329 = vst.msk [vmem:[#allocation2] sm:$0xff] %vm2029, %v2292
      %2330 = vst.msk [vmem:[#allocation2 + $0x10] sm:$0xff] %vm2029, %v2295
      %2331 = vst.msk [vmem:[#allocation2 + $0x20] sm:$0xff] %vm2029, %v2300
      %2332 = vst.msk [vmem:[#allocation2 + $0x30] sm:$0xff] %vm2029, %v2303
      %2333 = vst.msk [vmem:[#allocation2 + $0x40] sm:$0xff] %vm2029, %v2308
      %2334 = vst.msk [vmem:[#allocation2 + $0x50] sm:$0xff] %vm2029, %v2311
      %2335 = vst.msk [vmem:[#allocation2 + $0x60] sm:$0xff] %vm2029, %v2316
      %2336 = vst.msk [vmem:[#allocation2 + $0x70] sm:$0xff] %vm2029, %v2319
      %vm2337 = vcmask 519168
      %2338 = vst.msk [vmem:[#allocation2 + $0x80] sm:$0xf] %vm2337, %v2324
      %2344 = vrot.lane.b32.xlu0 %v1857, 64
      %v2345 = vpop.permute.xlu0 %2344
      %2346 = vrot.lane.b32.xlu0 %v1863, 64
      %v2347 = vpop.permute.xlu0 %2346
      %2348 = vrot.lane.b32.xlu0 %v1869, 64
      %v2349 = vpop.permute.xlu0 %2348
      %2350 = vrot.lane.b32.xlu0 %v1875, 64
      %v2351 = vpop.permute.xlu0 %2350
      %2352 = vrot.lane.b32.xlu0 %v1881, 64
      %v2353 = vpop.permute.xlu0 %2352
      %2359 = vrot.lane.b32.xlu0 %v1859, 64
      %v2360 = vpop.permute.xlu0 %2359
      %2361 = vrot.lane.b32.xlu0 %v1865, 64
      %v2362 = vpop.permute.xlu0 %2361
      %2363 = vrot.lane.b32.xlu0 %v1871, 64
      %v2364 = vpop.permute.xlu0 %2363
      %2365 = vrot.lane.b32.xlu0 %v1877, 64
      %v2366 = vpop.permute.xlu0 %2365
      %2367 = vrot.lane.b32.xlu0 %v1883, 64
      %v2368 = vpop.permute.xlu0 %2367
      %v2370 = vsel %vm2029, %v2345, 0
      %v2373 = vsel %vm2029, %v2347, 0
      %v2376 = vsel %vm2029, %v2349, 0
      %v2379 = vsel %vm2029, %v2351, 0
      %v2382 = vsel %vm2029, %v2353, 0
      %v2385 = vsel %vm2029, %v2360, 0
      %v2388 = vsel %vm2029, %v2362, 0
      %v2391 = vsel %vm2029, %v2364, 0
      %v2394 = vsel %vm2029, %v2366, 0
      %v2397 = vsel %vm2029, %v2368, 0
      %2399 = vmatprep.subr.bf16.mxu0 0
      %2400 = vmatpush1.bf16.xpose.msra.mxu0 %v2385
      %2401 = vmatprep.subr.bf16.mxu0 0
      %2402 = vmatpush1.bf16.xpose.msra.mxu0 %v2388
      %2403 = vmatprep.subr.bf16.mxu0 0
      %2404 = vmatpush1.bf16.xpose.msra.mxu0 %v2391
      %2405 = vmatprep.subr.bf16.mxu0 0
      %2406 = vmatpush1.bf16.xpose.msra.mxu0 %v2394
      %2407 = vmatprep.subr.bf16.mxu0 0
      %2408 = vmatpush1.bf16.xpose.msra.mxu0 %v2397
      %2409 = vmatprep.subr.bf16.mxu0 0
      %2410 = vmatpush1.bf16.xpose.msra.mxu0 0
      %2411 = vmatprep.subr.bf16.mxu0 0
      %2412 = vmatpush1.bf16.xpose.msra.mxu0 0
      %2413 = vmatprep.subr.bf16.mxu0 0
      %2414 = vmatpush1.bf16.xpose.msra.mxu0 0
      %2415 = vmatprep.subr.bf16.mxu0 0
      %2416 = vmatpush1.bf16.xpose.msra.mxu0 0
      %2417 = vmatprep.subr.bf16.mxu0 0
      %2418 = vmatpush1.bf16.xpose.msra.mxu0 0
      %2419 = vmatprep.subr.bf16.mxu0 0
      %2420 = vmatpush1.bf16.xpose.msra.mxu0 0
      %2421 = vmatprep.subr.bf16.mxu0 0
      %2422 = vmatpush1.bf16.xpose.msra.mxu0 0
      %2423 = vmatprep.subr.bf16.mxu0 0
      %2424 = vmatpush1.bf16.xpose.msra.mxu0 0
      %2425 = vmatprep.subr.bf16.mxu0 0
      %2426 = vmatpush1.bf16.xpose.msra.mxu0 0
      %2427 = vmatprep.subr.bf16.mxu0 0
      %2428 = vmatpush1.bf16.xpose.msra.mxu0 0
      %2429 = vmatprep.subr.bf16.mxu0 0
      %2430 = vmatpush1.bf16.xpose.msra.mxu0 0
      %2431 = vmatprep.mubr.bf16.mxu0 0
      %2432 = vmatmul.mubr.bf16.gmra.mrb[0].mxu0 %v2370
      %v2433 = vpop.f32.mrb[0].mxu0
      %v2434 = vadd.f32 %v2020, %v2433
      %v2435 = vpop.f32.mrb[0].mxu0
      %v2436 = vpop.f32.mrb[0].mxu0
      %v2437 = vadd.f32 %v2021, %v2436
      %v2438 = vpop.f32.mrb[0].mxu0
      %2439 = vmatprep.mubr.bf16.mxu0 0
      %2440 = vmatmul.mubr.bf16.gmra.mrb[0].mxu0 %v2373
      %v2441 = vpop.f32.mrb[0].mxu0
      %v2442 = vadd.f32 %v2022, %v2441
      %v2443 = vpop.f32.mrb[0].mxu0
      %v2444 = vpop.f32.mrb[0].mxu0
      %v2445 = vadd.f32 %v2023, %v2444
      %v2446 = vpop.f32.mrb[0].mxu0
      %2447 = vmatprep.mubr.bf16.mxu0 0
      %2448 = vmatmul.mubr.bf16.gmra.mrb[0].mxu0 %v2376
      %v2449 = vpop.f32.mrb[0].mxu0
      %v2450 = vadd.f32 %v2024, %v2449
      %v2451 = vpop.f32.mrb[0].mxu0
      %v2452 = vpop.f32.mrb[0].mxu0
      %v2453 = vadd.f32 %v2025, %v2452
      %v2454 = vpop.f32.mrb[0].mxu0
      %2455 = vmatprep.mubr.bf16.mxu0 0
      %2456 = vmatmul.mubr.bf16.gmra.mrb[0].mxu0 %v2379
      %v2457 = vpop.f32.mrb[0].mxu0
      %v2458 = vadd.f32 %v2026, %v2457
      %v2459 = vpop.f32.mrb[0].mxu0
      %v2460 = vpop.f32.mrb[0].mxu0
      %v2461 = vadd.f32 %v2027, %v2460
      %v2462 = vpop.f32.mrb[0].mxu0
      %2463 = vmatprep.mubr.bf16.mxu0 0
      %2464 = vmatmul.mubr.bf16.gmra.mrb[0].mxu0 %v2382
      %v2465 = vpop.f32.mrb[0].mxu0
      %v2466 = vadd.f32 %v2028, %v2465
      %v2467 = vpop.f32.mrb[0].mxu0
      %v2468 = vpop.f32.mrb[0].mxu0
      %v2469 = vpop.f32.mrb[0].mxu0
      %2470 = vdwg.mxu0
      %v2471 = vsel %vm2132, %v2434, -inf
      %2472 = vmax.xlane.f32.xlu0 %v2471
      %v2473 = vpop.xlane.xlu0 %2472
      %v2474 = vsel %vm2132, %v2437, -inf
      %2475 = vmax.xlane.f32.xlu0 %v2474
      %v2476 = vpop.xlane.xlu0 %2475
      %v2477 = vsel %vm2132, %v2442, -inf
      %2478 = vmax.xlane.f32.xlu0 %v2477
      %v2479 = vpop.xlane.xlu0 %2478
      %v2480 = vsel %vm2132, %v2445, -inf
      %2481 = vmax.xlane.f32.xlu0 %v2480
      %v2482 = vpop.xlane.xlu0 %2481
      %v2483 = vsel %vm2132, %v2450, -inf
      %2484 = vmax.xlane.f32.xlu0 %v2483
      %v2485 = vpop.xlane.xlu0 %2484
      %v2486 = vsel %vm2132, %v2453, -inf
      %2487 = vmax.xlane.f32.xlu0 %v2486
      %v2488 = vpop.xlane.xlu0 %2487
      %v2489 = vsel %vm2132, %v2458, -inf
      %2490 = vmax.xlane.f32.xlu0 %v2489
      %v2491 = vpop.xlane.xlu0 %2490
      %v2492 = vsel %vm2132, %v2461, -inf
      %2493 = vmax.xlane.f32.xlu0 %v2492
      %v2494 = vpop.xlane.xlu0 %2493
      %v2495 = vsel %vm2157, %v2466, -inf
      %2496 = vmax.xlane.f32.xlu0 %v2495
      %v2497 = vpop.xlane.xlu0 %2496
      %v2498 = vsub.f32 %v2434, %v2473
      %v2499 = vsub.f32 %v2437, %v2476
      %v2500 = vsub.f32 %v2442, %v2479
      %v2501 = vsub.f32 %v2445, %v2482
      %v2502 = vsub.f32 %v2450, %v2485
      %v2503 = vsub.f32 %v2453, %v2488
      %v2504 = vsub.f32 %v2458, %v2491
      %v2505 = vsub.f32 %v2461, %v2494
      %v2506 = vsub.f32 %v2466, %v2497
      %v2507 = vmul.f32 %v2498, 1.442695
      %v2508 = vpow.pop %v2507
      %v2509 = vmul.f32 %v2499, 1.442695
      %v2510 = vpow.pop %v2509
      %v2511 = vmul.f32 %v2500, 1.442695
      %v2512 = vpow.pop %v2511
      %v2513 = vmul.f32 %v2501, 1.442695
      %v2514 = vpow.pop %v2513
      %v2515 = vmul.f32 %v2502, 1.442695
      %v2516 = vpow.pop %v2515
      %v2517 = vmul.f32 %v2503, 1.442695
      %v2518 = vpow.pop %v2517
      %v2519 = vmul.f32 %v2504, 1.442695
      %v2520 = vpow.pop %v2519
      %v2521 = vmul.f32 %v2505, 1.442695
      %v2522 = vpow.pop %v2521
      %v2523 = vmul.f32 %v2506, 1.442695
      %v2524 = vpow.pop %v2523
      %v2525 = vsel %vm2132, %v2508, 0.0
      %2526 = vadd.xlane.f32.xlu0 %v2525
      %v2527 = vpop.xlane.xlu0 %2526
      %v2528 = vsel %vm2132, %v2510, 0.0
      %2529 = vadd.xlane.f32.xlu0 %v2528
      %v2530 = vpop.xlane.xlu0 %2529
      %v2531 = vsel %vm2132, %v2512, 0.0
      %2532 = vadd.xlane.f32.xlu0 %v2531
      %v2533 = vpop.xlane.xlu0 %2532
      %v2534 = vsel %vm2132, %v2514, 0.0
      %2535 = vadd.xlane.f32.xlu0 %v2534
      %v2536 = vpop.xlane.xlu0 %2535
      %v2537 = vsel %vm2132, %v2516, 0.0
      %2538 = vadd.xlane.f32.xlu0 %v2537
      %v2539 = vpop.xlane.xlu0 %2538
      %v2540 = vsel %vm2132, %v2518, 0.0
      %2541 = vadd.xlane.f32.xlu0 %v2540
      %v2542 = vpop.xlane.xlu0 %2541
      %v2543 = vsel %vm2132, %v2520, 0.0
      %2544 = vadd.xlane.f32.xlu0 %v2543
      %v2545 = vpop.xlane.xlu0 %2544
      %v2546 = vsel %vm2132, %v2522, 0.0
      %2547 = vadd.xlane.f32.xlu0 %v2546
      %v2548 = vpop.xlane.xlu0 %2547
      %v2549 = vsel %vm2157, %v2524, 0.0
      %2550 = vadd.xlane.f32.xlu0 %v2549
      %v2551 = vpop.xlane.xlu0 %2550
      %v2552 = vrcp.pop %v2527
      %v2553 = vrcp.pop %v2530
      %v2554 = vrcp.pop %v2533
      %v2555 = vrcp.pop %v2536
      %v2556 = vrcp.pop %v2539
      %v2557 = vrcp.pop %v2542
      %v2558 = vrcp.pop %v2545
      %v2559 = vrcp.pop %v2548
      %v2560 = vrcp.pop %v2551
      %v2561 = vmul.f32 %v2508, %v2552
      %v2562 = vmul.f32 %v2510, %v2553
      %v2563 = vmul.f32 %v2512, %v2554
      %v2564 = vmul.f32 %v2514, %v2555
      %v2565 = vmul.f32 %v2516, %v2556
      %v2566 = vmul.f32 %v2518, %v2557
      %v2567 = vmul.f32 %v2520, %v2558
      %v2568 = vmul.f32 %v2522, %v2559
      %v2569 = vmul.f32 %v2524, %v2560
      %v2570 = vpack.c.bf16 %v2562, %v2561
      %v2571 = vpack.c.bf16 %v2564, %v2563
      %v2572 = vpack.c.bf16 %v2566, %v2565
      %v2573 = vpack.c.bf16 %v2568, %v2567
      %v2574 = vpack.c.bf16 %v2569, %v2569
      %2580 = vrot.lane.b32.xlu0 %v1861, 64
      %v2581 = vpop.permute.xlu0 %2580
      %2582 = vrot.lane.b32.xlu0 %v1867, 64
      %v2583 = vpop.permute.xlu0 %2582
      %2584 = vrot.lane.b32.xlu0 %v1873, 64
      %v2585 = vpop.permute.xlu0 %2584
      %2586 = vrot.lane.b32.xlu0 %v1879, 64
      %v2587 = vpop.permute.xlu0 %2586
      %2588 = vrot.lane.b32.xlu0 %v1885, 64
      %v2589 = vpop.permute.xlu0 %2588
      %v2595 = vsel %vm2132, %v2570, 0
      %v2598 = vsel %vm2132, %v2571, 0
      %v2601 = vsel %vm2132, %v2572, 0
      %v2604 = vsel %vm2132, %v2573, 0
      %v2607 = vsel %vm2132, %v2574, 0
      %v2610 = vsel %vm2253, %v2589, 0
      %2612 = vmatprep.subr.bf16.mxu0 0
      %2613 = vmatpush1.bf16.msra.mxu0 %v2581
      %2614 = vmatprep.subr.bf16.mxu0 0
      %2615 = vmatpush1.bf16.msra.mxu0 %v2583
      %2616 = vmatprep.subr.bf16.mxu0 0
      %2617 = vmatpush1.bf16.msra.mxu0 %v2585
      %2618 = vmatprep.subr.bf16.mxu0 0
      %2619 = vmatpush1.bf16.msra.mxu0 %v2587
      %2620 = vmatprep.subr.bf16.mxu0 0
      %2621 = vmatpush1.bf16.msra.mxu0 %v2610
      %2622 = vmatprep.subr.bf16.mxu0 0
      %2623 = vmatpush1.bf16.msra.mxu0 0
      %2624 = vmatprep.subr.bf16.mxu0 0
      %2625 = vmatpush1.bf16.msra.mxu0 0
      %2626 = vmatprep.subr.bf16.mxu0 0
      %2627 = vmatpush1.bf16.msra.mxu0 0
      %2628 = vmatprep.subr.bf16.mxu0 0
      %2629 = vmatpush1.bf16.msra.mxu0 0
      %2630 = vmatprep.subr.bf16.mxu0 0
      %2631 = vmatpush1.bf16.msra.mxu0 0
      %2632 = vmatprep.subr.bf16.mxu0 0
      %2633 = vmatpush1.bf16.msra.mxu0 0
      %2634 = vmatprep.subr.bf16.mxu0 0
      %2635 = vmatpush1.bf16.msra.mxu0 0
      %2636 = vmatprep.subr.bf16.mxu0 0
      %2637 = vmatpush1.bf16.msra.mxu0 0
      %2638 = vmatprep.subr.bf16.mxu0 0
      %2639 = vmatpush1.bf16.msra.mxu0 0
      %2640 = vmatprep.subr.bf16.mxu0 0
      %2641 = vmatpush1.bf16.msra.mxu0 0
      %2642 = vmatprep.subr.bf16.mxu0 0
      %2643 = vmatpush1.bf16.msra.mxu0 0
      %2644 = vmatprep.mubr.bf16.mxu0 0
      %2645 = vmatmul.mubr.bf16.gmra.mrb[0].mxu0 %v2595
      %v2646 = vpop.f32.mrb[0].mxu0
      %v2647 = vadd.f32 0.0, %v2646
      %v2648 = vpop.f32.mrb[0].mxu0
      %v2649 = vpop.f32.mrb[0].mxu0
      %v2650 = vadd.f32 0.0, %v2649
      %v2651 = vpop.f32.mrb[0].mxu0
      %2652 = vmatprep.mubr.bf16.mxu0 0
      %2653 = vmatmul.mubr.bf16.gmra.mrb[0].mxu0 %v2598
      %v2654 = vpop.f32.mrb[0].mxu0
      %v2655 = vadd.f32 0.0, %v2654
      %v2656 = vpop.f32.mrb[0].mxu0
      %v2657 = vpop.f32.mrb[0].mxu0
      %v2658 = vadd.f32 0.0, %v2657
      %v2659 = vpop.f32.mrb[0].mxu0
      %2660 = vmatprep.mubr.bf16.mxu0 0
      %2661 = vmatmul.mubr.bf16.gmra.mrb[0].mxu0 %v2601
      %v2662 = vpop.f32.mrb[0].mxu0
      %v2663 = vadd.f32 0.0, %v2662
      %v2664 = vpop.f32.mrb[0].mxu0
      %v2665 = vpop.f32.mrb[0].mxu0
      %v2666 = vadd.f32 0.0, %v2665
      %v2667 = vpop.f32.mrb[0].mxu0
      %2668 = vmatprep.mubr.bf16.mxu0 0
      %2669 = vmatmul.mubr.bf16.gmra.mrb[0].mxu0 %v2604
      %v2670 = vpop.f32.mrb[0].mxu0
      %v2671 = vadd.f32 0.0, %v2670
      %v2672 = vpop.f32.mrb[0].mxu0
      %v2673 = vpop.f32.mrb[0].mxu0
      %v2674 = vadd.f32 0.0, %v2673
      %v2675 = vpop.f32.mrb[0].mxu0
      %2676 = vmatprep.mubr.bf16.mxu0 0
      %2677 = vmatmul.mubr.bf16.gmra.mrb[0].mxu0 %v2607
      %v2678 = vpop.f32.mrb[0].mxu0
      %v2679 = vadd.f32 0.0, %v2678
      %v2680 = vpop.f32.mrb[0].mxu0
      %v2681 = vpop.f32.mrb[0].mxu0
      %v2682 = vpop.f32.mrb[0].mxu0
      %2683 = vdwg.mxu0
      %2693 = vrot.lane.b32.xlu0 %v2647, 64
      %v2694 = vpop.permute.xlu0 %2693
      %2695 = vrot.lane.b32.xlu0 %v2650, 64
      %v2696 = vpop.permute.xlu0 %2695
      %2697 = vrot.lane.b32.xlu0 %v2655, 64
      %v2698 = vpop.permute.xlu0 %2697
      %2699 = vrot.lane.b32.xlu0 %v2658, 64
      %v2700 = vpop.permute.xlu0 %2699
      %2701 = vrot.lane.b32.xlu0 %v2663, 64
      %v2702 = vpop.permute.xlu0 %2701
      %2703 = vrot.lane.b32.xlu0 %v2666, 64
      %v2704 = vpop.permute.xlu0 %2703
      %2705 = vrot.lane.b32.xlu0 %v2671, 64
      %v2706 = vpop.permute.xlu0 %2705
      %2707 = vrot.lane.b32.xlu0 %v2674, 64
      %v2708 = vpop.permute.xlu0 %2707
      %2709 = vrot.lane.b32.xlu0 %v2679, 64
      %v2710 = vpop.permute.xlu0 %2709
      %vm2720 = vcmask 1048064
      %2721 = vst.msk [vmem:[#allocation2] sm:$0xff] %vm2720, %v2694
      %2722 = vst.msk [vmem:[#allocation2 + $0x10] sm:$0xff] %vm2720, %v2696
      %2723 = vst.msk [vmem:[#allocation2 + $0x20] sm:$0xff] %vm2720, %v2698
      %2724 = vst.msk [vmem:[#allocation2 + $0x30] sm:$0xff] %vm2720, %v2700
      %2725 = vst.msk [vmem:[#allocation2 + $0x40] sm:$0xff] %vm2720, %v2702
      %2726 = vst.msk [vmem:[#allocation2 + $0x50] sm:$0xff] %vm2720, %v2704
      %2727 = vst.msk [vmem:[#allocation2 + $0x60] sm:$0xff] %vm2720, %v2706
      %2728 = vst.msk [vmem:[#allocation2 + $0x70] sm:$0xff] %vm2720, %v2708
      %vm2729 = vcmask 1043968
      %2730 = vst.msk [vmem:[#allocation2 + $0x80] sm:$0xf] %vm2729, %v2710
      %v2732 = vsel %vm2029, %v1858, 0
      %v2735 = vsel %vm2029, %v1864, 0
      %v2738 = vsel %vm2029, %v1870, 0
      %v2741 = vsel %vm2029, %v1876, 0
      %v2744 = vsel %vm2029, %v1882, 0
      %v2747 = vsel %vm2029, %v1860, 0
      %v2750 = vsel %vm2029, %v1866, 0
      %v2753 = vsel %vm2029, %v1872, 0
      %v2756 = vsel %vm2029, %v1878, 0
      %v2759 = vsel %vm2029, %v1884, 0
      %2761 = vmatprep.subr.bf16.mxu0 0
      %2762 = vmatpush1.bf16.xpose.msra.mxu0 %v2747
      %2763 = vmatprep.subr.bf16.mxu0 0
      %2764 = vmatpush1.bf16.xpose.msra.mxu0 %v2750
      %2765 = vmatprep.subr.bf16.mxu0 0
      %2766 = vmatpush1.bf16.xpose.msra.mxu0 %v2753
      %2767 = vmatprep.subr.bf16.mxu0 0
      %2768 = vmatpush1.bf16.xpose.msra.mxu0 %v2756
      %2769 = vmatprep.subr.bf16.mxu0 0
      %2770 = vmatpush1.bf16.xpose.msra.mxu0 %v2759
      %2771 = vmatprep.subr.bf16.mxu0 0
      %2772 = vmatpush1.bf16.xpose.msra.mxu0 0
      %2773 = vmatprep.subr.bf16.mxu0 0
      %2774 = vmatpush1.bf16.xpose.msra.mxu0 0
      %2775 = vmatprep.subr.bf16.mxu0 0
      %2776 = vmatpush1.bf16.xpose.msra.mxu0 0
      %2777 = vmatprep.subr.bf16.mxu0 0
      %2778 = vmatpush1.bf16.xpose.msra.mxu0 0
      %2779 = vmatprep.subr.bf16.mxu0 0
      %2780 = vmatpush1.bf16.xpose.msra.mxu0 0
      %2781 = vmatprep.subr.bf16.mxu0 0
      %2782 = vmatpush1.bf16.xpose.msra.mxu0 0
      %2783 = vmatprep.subr.bf16.mxu0 0
      %2784 = vmatpush1.bf16.xpose.msra.mxu0 0
      %2785 = vmatprep.subr.bf16.mxu0 0
      %2786 = vmatpush1.bf16.xpose.msra.mxu0 0
      %2787 = vmatprep.subr.bf16.mxu0 0
      %2788 = vmatpush1.bf16.xpose.msra.mxu0 0
      %2789 = vmatprep.subr.bf16.mxu0 0
      %2790 = vmatpush1.bf16.xpose.msra.mxu0 0
      %2791 = vmatprep.subr.bf16.mxu0 0
      %2792 = vmatpush1.bf16.xpose.msra.mxu0 0
      %2793 = vmatprep.mubr.bf16.mxu0 0
      %2794 = vmatmul.mubr.bf16.gmra.mrb[0].mxu0 %v2732
      %v2795 = vpop.f32.mrb[0].mxu0
      %v2796 = vadd.f32 %v2020, %v2795
      %v2797 = vpop.f32.mrb[0].mxu0
      %v2798 = vpop.f32.mrb[0].mxu0
      %v2799 = vadd.f32 %v2021, %v2798
      %v2800 = vpop.f32.mrb[0].mxu0
      %2801 = vmatprep.mubr.bf16.mxu0 0
      %2802 = vmatmul.mubr.bf16.gmra.mrb[0].mxu0 %v2735
      %v2803 = vpop.f32.mrb[0].mxu0
      %v2804 = vadd.f32 %v2022, %v2803
      %v2805 = vpop.f32.mrb[0].mxu0
      %v2806 = vpop.f32.mrb[0].mxu0
      %v2807 = vadd.f32 %v2023, %v2806
      %v2808 = vpop.f32.mrb[0].mxu0
      %2809 = vmatprep.mubr.bf16.mxu0 0
      %2810 = vmatmul.mubr.bf16.gmra.mrb[0].mxu0 %v2738
      %v2811 = vpop.f32.mrb[0].mxu0
      %v2812 = vadd.f32 %v2024, %v2811
      %v2813 = vpop.f32.mrb[0].mxu0
      %v2814 = vpop.f32.mrb[0].mxu0
      %v2815 = vadd.f32 %v2025, %v2814
      %v2816 = vpop.f32.mrb[0].mxu0
      %2817 = vmatprep.mubr.bf16.mxu0 0
      %2818 = vmatmul.mubr.bf16.gmra.mrb[0].mxu0 %v2741
      %v2819 = vpop.f32.mrb[0].mxu0
      %v2820 = vadd.f32 %v2026, %v2819
      %v2821 = vpop.f32.mrb[0].mxu0
      %v2822 = vpop.f32.mrb[0].mxu0
      %v2823 = vadd.f32 %v2027, %v2822
      %v2824 = vpop.f32.mrb[0].mxu0
      %2825 = vmatprep.mubr.bf16.mxu0 0
      %2826 = vmatmul.mubr.bf16.gmra.mrb[0].mxu0 %v2744
      %v2827 = vpop.f32.mrb[0].mxu0
      %v2828 = vadd.f32 %v2028, %v2827
      %v2829 = vpop.f32.mrb[0].mxu0
      %v2830 = vpop.f32.mrb[0].mxu0
      %v2831 = vpop.f32.mrb[0].mxu0
      %2832 = vdwg.mxu0
      %v2833 = vsel %vm2132, %v2796, -inf
      %2834 = vmax.xlane.f32.xlu0 %v2833
      %v2835 = vpop.xlane.xlu0 %2834
      %v2836 = vsel %vm2132, %v2799, -inf
      %2837 = vmax.xlane.f32.xlu0 %v2836
      %v2838 = vpop.xlane.xlu0 %2837
      %v2839 = vsel %vm2132, %v2804, -inf
      %2840 = vmax.xlane.f32.xlu0 %v2839
      %v2841 = vpop.xlane.xlu0 %2840
      %v2842 = vsel %vm2132, %v2807, -inf
      %2843 = vmax.xlane.f32.xlu0 %v2842
      %v2844 = vpop.xlane.xlu0 %2843
      %v2845 = vsel %vm2132, %v2812, -inf
      %2846 = vmax.xlane.f32.xlu0 %v2845
      %v2847 = vpop.xlane.xlu0 %2846
      %v2848 = vsel %vm2132, %v2815, -inf
      %2849 = vmax.xlane.f32.xlu0 %v2848
      %v2850 = vpop.xlane.xlu0 %2849
      %v2851 = vsel %vm2132, %v2820, -inf
      %2852 = vmax.xlane.f32.xlu0 %v2851
      %v2853 = vpop.xlane.xlu0 %2852
      %v2854 = vsel %vm2132, %v2823, -inf
      %2855 = vmax.xlane.f32.xlu0 %v2854
      %v2856 = vpop.xlane.xlu0 %2855
      %v2857 = vsel %vm2157, %v2828, -inf
      %2858 = vmax.xlane.f32.xlu0 %v2857
      %v2859 = vpop.xlane.xlu0 %2858
      %v2860 = vsub.f32 %v2796, %v2835
      %v2861 = vsub.f32 %v2799, %v2838
      %v2862 = vsub.f32 %v2804, %v2841
      %v2863 = vsub.f32 %v2807, %v2844
      %v2864 = vsub.f32 %v2812, %v2847
      %v2865 = vsub.f32 %v2815, %v2850
      %v2866 = vsub.f32 %v2820, %v2853
      %v2867 = vsub.f32 %v2823, %v2856
      %v2868 = vsub.f32 %v2828, %v2859
      %v2869 = vmul.f32 %v2860, 1.442695
      %v2870 = vpow.pop %v2869
      %v2871 = vmul.f32 %v2861, 1.442695
      %v2872 = vpow.pop %v2871
      %v2873 = vmul.f32 %v2862, 1.442695
      %v2874 = vpow.pop %v2873
      %v2875 = vmul.f32 %v2863, 1.442695
      %v2876 = vpow.pop %v2875
      %v2877 = vmul.f32 %v2864, 1.442695
      %v2878 = vpow.pop %v2877
      %v2879 = vmul.f32 %v2865, 1.442695
      %v2880 = vpow.pop %v2879
      %v2881 = vmul.f32 %v2866, 1.442695
      %v2882 = vpow.pop %v2881
      %v2883 = vmul.f32 %v2867, 1.442695
      %v2884 = vpow.pop %v2883
      %v2885 = vmul.f32 %v2868, 1.442695
      %v2886 = vpow.pop %v2885
      %v2887 = vsel %vm2132, %v2870, 0.0
      %2888 = vadd.xlane.f32.xlu0 %v2887
      %v2889 = vpop.xlane.xlu0 %2888
      %v2890 = vsel %vm2132, %v2872, 0.0
      %2891 = vadd.xlane.f32.xlu0 %v2890
      %v2892 = vpop.xlane.xlu0 %2891
      %v2893 = vsel %vm2132, %v2874, 0.0
      %2894 = vadd.xlane.f32.xlu0 %v2893
      %v2895 = vpop.xlane.xlu0 %2894
      %v2896 = vsel %vm2132, %v2876, 0.0
      %2897 = vadd.xlane.f32.xlu0 %v2896
      %v2898 = vpop.xlane.xlu0 %2897
      %v2899 = vsel %vm2132, %v2878, 0.0
      %2900 = vadd.xlane.f32.xlu0 %v2899
      %v2901 = vpop.xlane.xlu0 %2900
      %v2902 = vsel %vm2132, %v2880, 0.0
      %2903 = vadd.xlane.f32.xlu0 %v2902
      %v2904 = vpop.xlane.xlu0 %2903
      %v2905 = vsel %vm2132, %v2882, 0.0
      %2906 = vadd.xlane.f32.xlu0 %v2905
      %v2907 = vpop.xlane.xlu0 %2906
      %v2908 = vsel %vm2132, %v2884, 0.0
      %2909 = vadd.xlane.f32.xlu0 %v2908
      %v2910 = vpop.xlane.xlu0 %2909
      %v2911 = vsel %vm2157, %v2886, 0.0
      %2912 = vadd.xlane.f32.xlu0 %v2911
      %v2913 = vpop.xlane.xlu0 %2912
      %v2914 = vrcp.pop %v2889
      %v2915 = vrcp.pop %v2892
      %v2916 = vrcp.pop %v2895
      %v2917 = vrcp.pop %v2898
      %v2918 = vrcp.pop %v2901
      %v2919 = vrcp.pop %v2904
      %v2920 = vrcp.pop %v2907
      %v2921 = vrcp.pop %v2910
      %v2922 = vrcp.pop %v2913
      %v2923 = vmul.f32 %v2870, %v2914
      %v2924 = vmul.f32 %v2872, %v2915
      %v2925 = vmul.f32 %v2874, %v2916
      %v2926 = vmul.f32 %v2876, %v2917
      %v2927 = vmul.f32 %v2878, %v2918
      %v2928 = vmul.f32 %v2880, %v2919
      %v2929 = vmul.f32 %v2882, %v2920
      %v2930 = vmul.f32 %v2884, %v2921
      %v2931 = vmul.f32 %v2886, %v2922
      %v2932 = vpack.c.bf16 %v2924, %v2923
      %v2933 = vpack.c.bf16 %v2926, %v2925
      %v2934 = vpack.c.bf16 %v2928, %v2927
      %v2935 = vpack.c.bf16 %v2930, %v2929
      %v2936 = vpack.c.bf16 %v2931, %v2931
      %v2938 = vsel %vm2132, %v2932, 0
      %v2941 = vsel %vm2132, %v2933, 0
      %v2944 = vsel %vm2132, %v2934, 0
      %v2947 = vsel %vm2132, %v2935, 0
      %v2950 = vsel %vm2132, %v2936, 0
      %v2953 = vsel %vm2253, %v1886, 0
      %2955 = vmatprep.subr.bf16.mxu0 0
      %2956 = vmatpush1.bf16.msra.mxu0 %v1862
      %2957 = vmatprep.subr.bf16.mxu0 0
      %2958 = vmatpush1.bf16.msra.mxu0 %v1868
      %2959 = vmatprep.subr.bf16.mxu0 0
      %2960 = vmatpush1.bf16.msra.mxu0 %v1874
      %2961 = vmatprep.subr.bf16.mxu0 0
      %2962 = vmatpush1.bf16.msra.mxu0 %v1880
      %2963 = vmatprep.subr.bf16.mxu0 0
      %2964 = vmatpush1.bf16.msra.mxu0 %v2953
      %2965 = vmatprep.subr.bf16.mxu0 0
      %2966 = vmatpush1.bf16.msra.mxu0 0
      %2967 = vmatprep.subr.bf16.mxu0 0
      %2968 = vmatpush1.bf16.msra.mxu0 0
      %2969 = vmatprep.subr.bf16.mxu0 0
      %2970 = vmatpush1.bf16.msra.mxu0 0
      %2971 = vmatprep.subr.bf16.mxu0 0
      %2972 = vmatpush1.bf16.msra.mxu0 0
      %2973 = vmatprep.subr.bf16.mxu0 0
      %2974 = vmatpush1.bf16.msra.mxu0 0
      %2975 = vmatprep.subr.bf16.mxu0 0
      %2976 = vmatpush1.bf16.msra.mxu0 0
      %2977 = vmatprep.subr.bf16.mxu0 0
      %2978 = vmatpush1.bf16.msra.mxu0 0
      %2979 = vmatprep.subr.bf16.mxu0 0
      %2980 = vmatpush1.bf16.msra.mxu0 0
      %2981 = vmatprep.subr.bf16.mxu0 0
      %2982 = vmatpush1.bf16.msra.mxu0 0
      %2983 = vmatprep.subr.bf16.mxu0 0
      %2984 = vmatpush1.bf16.msra.mxu0 0
      %2985 = vmatprep.subr.bf16.mxu0 0
      %2986 = vmatpush1.bf16.msra.mxu0 0
      %2987 = vmatprep.mubr.bf16.mxu0 0
      %2988 = vmatmul.mubr.bf16.gmra.mrb[0].mxu0 %v2938
      %v2989 = vpop.f32.mrb[0].mxu0
      %v2990 = vadd.f32 0.0, %v2989
      %v2991 = vpop.f32.mrb[0].mxu0
      %v2992 = vpop.f32.mrb[0].mxu0
      %v2993 = vadd.f32 0.0, %v2992
      %v2994 = vpop.f32.mrb[0].mxu0
      %2995 = vmatprep.mubr.bf16.mxu0 0
      %2996 = vmatmul.mubr.bf16.gmra.mrb[0].mxu0 %v2941
      %v2997 = vpop.f32.mrb[0].mxu0
      %v2998 = vadd.f32 0.0, %v2997
      %v2999 = vpop.f32.mrb[0].mxu0
      %v3000 = vpop.f32.mrb[0].mxu0
      %v3001 = vadd.f32 0.0, %v3000
      %v3002 = vpop.f32.mrb[0].mxu0
      %3003 = vmatprep.mubr.bf16.mxu0 0
      %3004 = vmatmul.mubr.bf16.gmra.mrb[0].mxu0 %v2944
      %v3005 = vpop.f32.mrb[0].mxu0
      %v3006 = vadd.f32 0.0, %v3005
      %v3007 = vpop.f32.mrb[0].mxu0
      %v3008 = vpop.f32.mrb[0].mxu0
      %v3009 = vadd.f32 0.0, %v3008
      %v3010 = vpop.f32.mrb[0].mxu0
      %3011 = vmatprep.mubr.bf16.mxu0 0
      %3012 = vmatmul.mubr.bf16.gmra.mrb[0].mxu0 %v2947
      %v3013 = vpop.f32.mrb[0].mxu0
      %v3014 = vadd.f32 0.0, %v3013
      %v3015 = vpop.f32.mrb[0].mxu0
      %v3016 = vpop.f32.mrb[0].mxu0
      %v3017 = vadd.f32 0.0, %v3016
      %v3018 = vpop.f32.mrb[0].mxu0
      %3019 = vmatprep.mubr.bf16.mxu0 0
      %3020 = vmatmul.mubr.bf16.gmra.mrb[0].mxu0 %v2950
      %v3021 = vpop.f32.mrb[0].mxu0
      %v3022 = vadd.f32 0.0, %v3021
      %v3023 = vpop.f32.mrb[0].mxu0
      %v3024 = vpop.f32.mrb[0].mxu0
      %v3025 = vpop.f32.mrb[0].mxu0
      %3026 = vdwg.mxu0
      %3027 = vst.msk [vmem:[#allocation2 + $0x8] sm:$0xff] %vm2029, %v2990
      %3028 = vst.msk [vmem:[#allocation2 + $0x18] sm:$0xff] %vm2029, %v2993
      %3029 = vst.msk [vmem:[#allocation2 + $0x28] sm:$0xff] %vm2029, %v2998
      %3030 = vst.msk [vmem:[#allocation2 + $0x38] sm:$0xff] %vm2029, %v3001
      %3031 = vst.msk [vmem:[#allocation2 + $0x48] sm:$0xff] %vm2029, %v3006
      %3032 = vst.msk [vmem:[#allocation2 + $0x58] sm:$0xff] %vm2029, %v3009
      %3033 = vst.msk [vmem:[#allocation2 + $0x68] sm:$0xff] %vm2029, %v3014
      %3034 = vst.msk [vmem:[#allocation2 + $0x78] sm:$0xff] %vm2029, %v3017
      %3035 = vst.msk [vmem:[#allocation2 + $0x88] sm:$0xf] %vm2337, %v3022
      %3041 = vrot.lane.b32.xlu0 %v1858, 64
      %v3042 = vpop.permute.xlu0 %3041
      %3043 = vrot.lane.b32.xlu0 %v1864, 64
      %v3044 = vpop.permute.xlu0 %3043
      %3045 = vrot.lane.b32.xlu0 %v1870, 64
      %v3046 = vpop.permute.xlu0 %3045
      %3047 = vrot.lane.b32.xlu0 %v1876, 64
      %v3048 = vpop.permute.xlu0 %3047
      %3049 = vrot.lane.b32.xlu0 %v1882, 64
      %v3050 = vpop.permute.xlu0 %3049
      %3056 = vrot.lane.b32.xlu0 %v1860, 64
      %v3057 = vpop.permute.xlu0 %3056
      %3058 = vrot.lane.b32.xlu0 %v1866, 64
      %v3059 = vpop.permute.xlu0 %3058
      %3060 = vrot.lane.b32.xlu0 %v1872, 64
      %v3061 = vpop.permute.xlu0 %3060
      %3062 = vrot.lane.b32.xlu0 %v1878, 64
      %v3063 = vpop.permute.xlu0 %3062
      %3064 = vrot.lane.b32.xlu0 %v1884, 64
      %v3065 = vpop.permute.xlu0 %3064
      %v3067 = vsel %vm2029, %v3042, 0
      %v3070 = vsel %vm2029, %v3044, 0
      %v3073 = vsel %vm2029, %v3046, 0
      %v3076 = vsel %vm2029, %v3048, 0
      %v3079 = vsel %vm2029, %v3050, 0
      %v3082 = vsel %vm2029, %v3057, 0
      %v3085 = vsel %vm2029, %v3059, 0
      %v3088 = vsel %vm2029, %v3061, 0
      %v3091 = vsel %vm2029, %v3063, 0
      %v3094 = vsel %vm2029, %v3065, 0
      %3096 = vmatprep.subr.bf16.mxu0 0
      %3097 = vmatpush1.bf16.xpose.msra.mxu0 %v3082
      %3098 = vmatprep.subr.bf16.mxu0 0
      %3099 = vmatpush1.bf16.xpose.msra.mxu0 %v3085
      %3100 = vmatprep.subr.bf16.mxu0 0
      %3101 = vmatpush1.bf16.xpose.msra.mxu0 %v3088
      %3102 = vmatprep.subr.bf16.mxu0 0
      %3103 = vmatpush1.bf16.xpose.msra.mxu0 %v3091
      %3104 = vmatprep.subr.bf16.mxu0 0
      %3105 = vmatpush1.bf16.xpose.msra.mxu0 %v3094
      %3106 = vmatprep.subr.bf16.mxu0 0
      %3107 = vmatpush1.bf16.xpose.msra.mxu0 0
      %3108 = vmatprep.subr.bf16.mxu0 0
      %3109 = vmatpush1.bf16.xpose.msra.mxu0 0
      %3110 = vmatprep.subr.bf16.mxu0 0
      %3111 = vmatpush1.bf16.xpose.msra.mxu0 0
      %3112 = vmatprep.subr.bf16.mxu0 0
      %3113 = vmatpush1.bf16.xpose.msra.mxu0 0
      %3114 = vmatprep.subr.bf16.mxu0 0
      %3115 = vmatpush1.bf16.xpose.msra.mxu0 0
      %3116 = vmatprep.subr.bf16.mxu0 0
      %3117 = vmatpush1.bf16.xpose.msra.mxu0 0
      %3118 = vmatprep.subr.bf16.mxu0 0
      %3119 = vmatpush1.bf16.xpose.msra.mxu0 0
      %3120 = vmatprep.subr.bf16.mxu0 0
      %3121 = vmatpush1.bf16.xpose.msra.mxu0 0
      %3122 = vmatprep.subr.bf16.mxu0 0
      %3123 = vmatpush1.bf16.xpose.msra.mxu0 0
      %3124 = vmatprep.subr.bf16.mxu0 0
      %3125 = vmatpush1.bf16.xpose.msra.mxu0 0
      %3126 = vmatprep.subr.bf16.mxu0 0
      %3127 = vmatpush1.bf16.xpose.msra.mxu0 0
      %3128 = vmatprep.mubr.bf16.mxu0 0
      %3129 = vmatmul.mubr.bf16.gmra.mrb[0].mxu0 %v3067
      %v3130 = vpop.f32.mrb[0].mxu0
      %v3131 = vadd.f32 %v2020, %v3130
      %v3132 = vpop.f32.mrb[0].mxu0
      %v3133 = vpop.f32.mrb[0].mxu0
      %v3134 = vadd.f32 %v2021, %v3133
      %v3135 = vpop.f32.mrb[0].mxu0
      %3136 = vmatprep.mubr.bf16.mxu0 0
      %3137 = vmatmul.mubr.bf16.gmra.mrb[0].mxu0 %v3070
      %v3138 = vpop.f32.mrb[0].mxu0
      %v3139 = vadd.f32 %v2022, %v3138
      %v3140 = vpop.f32.mrb[0].mxu0
      %v3141 = vpop.f32.mrb[0].mxu0
      %v3142 = vadd.f32 %v2023, %v3141
      %v3143 = vpop.f32.mrb[0].mxu0
      %3144 = vmatprep.mubr.bf16.mxu0 0
      %3145 = vmatmul.mubr.bf16.gmra.mrb[0].mxu0 %v3073
      %v3146 = vpop.f32.mrb[0].mxu0
      %v3147 = vadd.f32 %v2024, %v3146
      %v3148 = vpop.f32.mrb[0].mxu0
      %v3149 = vpop.f32.mrb[0].mxu0
      %v3150 = vadd.f32 %v2025, %v3149
      %v3151 = vpop.f32.mrb[0].mxu0
      %3152 = vmatprep.mubr.bf16.mxu0 0
      %3153 = vmatmul.mubr.bf16.gmra.mrb[0].mxu0 %v3076
      %v3154 = vpop.f32.mrb[0].mxu0
      %v3155 = vadd.f32 %v2026, %v3154
      %v3156 = vpop.f32.mrb[0].mxu0
      %v3157 = vpop.f32.mrb[0].mxu0
      %v3158 = vadd.f32 %v2027, %v3157
      %v3159 = vpop.f32.mrb[0].mxu0
      %3160 = vmatprep.mubr.bf16.mxu0 0
      %3161 = vmatmul.mubr.bf16.gmra.mrb[0].mxu0 %v3079
      %v3162 = vpop.f32.mrb[0].mxu0
      %v3163 = vadd.f32 %v2028, %v3162
      %v3164 = vpop.f32.mrb[0].mxu0
      %v3165 = vpop.f32.mrb[0].mxu0
      %v3166 = vpop.f32.mrb[0].mxu0
      %3167 = vdwg.mxu0
      %v3168 = vsel %vm2132, %v3131, -inf
      %3169 = vmax.xlane.f32.xlu0 %v3168
      %v3170 = vpop.xlane.xlu0 %3169
      %v3171 = vsel %vm2132, %v3134, -inf
      %3172 = vmax.xlane.f32.xlu0 %v3171
      %v3173 = vpop.xlane.xlu0 %3172
      %v3174 = vsel %vm2132, %v3139, -inf
      %3175 = vmax.xlane.f32.xlu0 %v3174
      %v3176 = vpop.xlane.xlu0 %3175
      %v3177 = vsel %vm2132, %v3142, -inf
      %3178 = vmax.xlane.f32.xlu0 %v3177
      %v3179 = vpop.xlane.xlu0 %3178
      %v3180 = vsel %vm2132, %v3147, -inf
      %3181 = vmax.xlane.f32.xlu0 %v3180
      %v3182 = vpop.xlane.xlu0 %3181
      %v3183 = vsel %vm2132, %v3150, -inf
      %3184 = vmax.xlane.f32.xlu0 %v3183
      %v3185 = vpop.xlane.xlu0 %3184
      %v3186 = vsel %vm2132, %v3155, -inf
      %3187 = vmax.xlane.f32.xlu0 %v3186
      %v3188 = vpop.xlane.xlu0 %3187
      %v3189 = vsel %vm2132, %v3158, -inf
      %3190 = vmax.xlane.f32.xlu0 %v3189
      %v3191 = vpop.xlane.xlu0 %3190
      %v3192 = vsel %vm2157, %v3163, -inf
      %3193 = vmax.xlane.f32.xlu0 %v3192
      %v3194 = vpop.xlane.xlu0 %3193
      %v3195 = vsub.f32 %v3131, %v3170
      %v3196 = vsub.f32 %v3134, %v3173
      %v3197 = vsub.f32 %v3139, %v3176
      %v3198 = vsub.f32 %v3142, %v3179
      %v3199 = vsub.f32 %v3147, %v3182
      %v3200 = vsub.f32 %v3150, %v3185
      %v3201 = vsub.f32 %v3155, %v3188
      %v3202 = vsub.f32 %v3158, %v3191
      %v3203 = vsub.f32 %v3163, %v3194
      %v3204 = vmul.f32 %v3195, 1.442695
      %v3205 = vpow.pop %v3204
      %v3206 = vmul.f32 %v3196, 1.442695
      %v3207 = vpow.pop %v3206
      %v3208 = vmul.f32 %v3197, 1.442695
      %v3209 = vpow.pop %v3208
      %v3210 = vmul.f32 %v3198, 1.442695
      %v3211 = vpow.pop %v3210
      %v3212 = vmul.f32 %v3199, 1.442695
      %v3213 = vpow.pop %v3212
      %v3214 = vmul.f32 %v3200, 1.442695
      %v3215 = vpow.pop %v3214
      %v3216 = vmul.f32 %v3201, 1.442695
      %v3217 = vpow.pop %v3216
      %v3218 = vmul.f32 %v3202, 1.442695
      %v3219 = vpow.pop %v3218
      %v3220 = vmul.f32 %v3203, 1.442695
      %v3221 = vpow.pop %v3220
      %v3222 = vsel %vm2132, %v3205, 0.0
      %3223 = vadd.xlane.f32.xlu0 %v3222
      %v3224 = vpop.xlane.xlu0 %3223
      %v3225 = vsel %vm2132, %v3207, 0.0
      %3226 = vadd.xlane.f32.xlu0 %v3225
      %v3227 = vpop.xlane.xlu0 %3226
      %v3228 = vsel %vm2132, %v3209, 0.0
      %3229 = vadd.xlane.f32.xlu0 %v3228
      %v3230 = vpop.xlane.xlu0 %3229
      %v3231 = vsel %vm2132, %v3211, 0.0
      %3232 = vadd.xlane.f32.xlu0 %v3231
      %v3233 = vpop.xlane.xlu0 %3232
      %v3234 = vsel %vm2132, %v3213, 0.0
      %3235 = vadd.xlane.f32.xlu0 %v3234
      %v3236 = vpop.xlane.xlu0 %3235
      %v3237 = vsel %vm2132, %v3215, 0.0
      %3238 = vadd.xlane.f32.xlu0 %v3237
      %v3239 = vpop.xlane.xlu0 %3238
      %v3240 = vsel %vm2132, %v3217, 0.0
      %3241 = vadd.xlane.f32.xlu0 %v3240
      %v3242 = vpop.xlane.xlu0 %3241
      %v3243 = vsel %vm2132, %v3219, 0.0
      %3244 = vadd.xlane.f32.xlu0 %v3243
      %v3245 = vpop.xlane.xlu0 %3244
      %v3246 = vsel %vm2157, %v3221, 0.0
      %3247 = vadd.xlane.f32.xlu0 %v3246
      %v3248 = vpop.xlane.xlu0 %3247
      %v3249 = vrcp.pop %v3224
      %v3250 = vrcp.pop %v3227
      %v3251 = vrcp.pop %v3230
      %v3252 = vrcp.pop %v3233
      %v3253 = vrcp.pop %v3236
      %v3254 = vrcp.pop %v3239
      %v3255 = vrcp.pop %v3242
      %v3256 = vrcp.pop %v3245
      %v3257 = vrcp.pop %v3248
      %v3258 = vmul.f32 %v3205, %v3249
      %v3259 = vmul.f32 %v3207, %v3250
      %v3260 = vmul.f32 %v3209, %v3251
      %v3261 = vmul.f32 %v3211, %v3252
      %v3262 = vmul.f32 %v3213, %v3253
      %v3263 = vmul.f32 %v3215, %v3254
      %v3264 = vmul.f32 %v3217, %v3255
      %v3265 = vmul.f32 %v3219, %v3256
      %v3266 = vmul.f32 %v3221, %v3257
      %v3267 = vpack.c.bf16 %v3259, %v3258
      %v3268 = vpack.c.bf16 %v3261, %v3260
      %v3269 = vpack.c.bf16 %v3263, %v3262
      %v3270 = vpack.c.bf16 %v3265, %v3264
      %v3271 = vpack.c.bf16 %v3266, %v3266
      %3277 = vrot.lane.b32.xlu0 %v1862, 64
      %v3278 = vpop.permute.xlu0 %3277
      %3279 = vrot.lane.b32.xlu0 %v1868, 64
      %v3280 = vpop.permute.xlu0 %3279
      %3281 = vrot.lane.b32.xlu0 %v1874, 64
      %v3282 = vpop.permute.xlu0 %3281
      %3283 = vrot.lane.b32.xlu0 %v1880, 64
      %v3284 = vpop.permute.xlu0 %3283
      %3285 = vrot.lane.b32.xlu0 %v1886, 64
      %v3286 = vpop.permute.xlu0 %3285
      %v3292 = vsel %vm2132, %v3267, 0
      %v3295 = vsel %vm2132, %v3268, 0
      %v3298 = vsel %vm2132, %v3269, 0
      %v3301 = vsel %vm2132, %v3270, 0
      %v3304 = vsel %vm2132, %v3271, 0
      %v3307 = vsel %vm2253, %v3286, 0
      %3309 = vmatprep.subr.bf16.mxu0 0
      %3310 = vmatpush1.bf16.msra.mxu0 %v3278
      %3311 = vmatprep.subr.bf16.mxu0 0
      %3312 = vmatpush1.bf16.msra.mxu0 %v3280
      %3313 = vmatprep.subr.bf16.mxu0 0
      %3314 = vmatpush1.bf16.msra.mxu0 %v3282
      %3315 = vmatprep.subr.bf16.mxu0 0
      %3316 = vmatpush1.bf16.msra.mxu0 %v3284
      %3317 = vmatprep.subr.bf16.mxu0 0
      %3318 = vmatpush1.bf16.msra.mxu0 %v3307
      %3319 = vmatprep.subr.bf16.mxu0 0
      %3320 = vmatpush1.bf16.msra.mxu0 0
      %3321 = vmatprep.subr.bf16.mxu0 0
      %3322 = vmatpush1.bf16.msra.mxu0 0
      %3323 = vmatprep.subr.bf16.mxu0 0
      %3324 = vmatpush1.bf16.msra.mxu0 0
      %3325 = vmatprep.subr.bf16.mxu0 0
      %3326 = vmatpush1.bf16.msra.mxu0 0
      %3327 = vmatprep.subr.bf16.mxu0 0
      %3328 = vmatpush1.bf16.msra.mxu0 0
      %3329 = vmatprep.subr.bf16.mxu0 0
      %3330 = vmatpush1.bf16.msra.mxu0 0
      %3331 = vmatprep.subr.bf16.mxu0 0
      %3332 = vmatpush1.bf16.msra.mxu0 0
      %3333 = vmatprep.subr.bf16.mxu0 0
      %3334 = vmatpush1.bf16.msra.mxu0 0
      %3335 = vmatprep.subr.bf16.mxu0 0
      %3336 = vmatpush1.bf16.msra.mxu0 0
      %3337 = vmatprep.subr.bf16.mxu0 0
      %3338 = vmatpush1.bf16.msra.mxu0 0
      %3339 = vmatprep.subr.bf16.mxu0 0
      %3340 = vmatpush1.bf16.msra.mxu0 0
      %3341 = vmatprep.mubr.bf16.mxu0 0
      %3342 = vmatmul.mubr.bf16.gmra.mrb[0].mxu0 %v3292
      %v3343 = vpop.f32.mrb[0].mxu0
      %v3344 = vadd.f32 0.0, %v3343
      %v3345 = vpop.f32.mrb[0].mxu0
      %v3346 = vpop.f32.mrb[0].mxu0
      %v3347 = vadd.f32 0.0, %v3346
      %v3348 = vpop.f32.mrb[0].mxu0
      %3349 = vmatprep.mubr.bf16.mxu0 0
      %3350 = vmatmul.mubr.bf16.gmra.mrb[0].mxu0 %v3295
      %v3351 = vpop.f32.mrb[0].mxu0
      %v3352 = vadd.f32 0.0, %v3351
      %v3353 = vpop.f32.mrb[0].mxu0
      %v3354 = vpop.f32.mrb[0].mxu0
      %v3355 = vadd.f32 0.0, %v3354
      %v3356 = vpop.f32.mrb[0].mxu0
      %3357 = vmatprep.mubr.bf16.mxu0 0
      %3358 = vmatmul.mubr.bf16.gmra.mrb[0].mxu0 %v3298
      %v3359 = vpop.f32.mrb[0].mxu0
      %v3360 = vadd.f32 0.0, %v3359
      %v3361 = vpop.f32.mrb[0].mxu0
      %v3362 = vpop.f32.mrb[0].mxu0
      %v3363 = vadd.f32 0.0, %v3362
      %v3364 = vpop.f32.mrb[0].mxu0
      %3365 = vmatprep.mubr.bf16.mxu0 0
      %3366 = vmatmul.mubr.bf16.gmra.mrb[0].mxu0 %v3301
      %v3367 = vpop.f32.mrb[0].mxu0
      %v3368 = vadd.f32 0.0, %v3367
      %v3369 = vpop.f32.mrb[0].mxu0
      %v3370 = vpop.f32.mrb[0].mxu0
      %v3371 = vadd.f32 0.0, %v3370
      %v3372 = vpop.f32.mrb[0].mxu0
      %3373 = vmatprep.mubr.bf16.mxu0 0
      %3374 = vmatmul.mubr.bf16.gmra.mrb[0].mxu0 %v3304
      %v3375 = vpop.f32.mrb[0].mxu0
      %v3376 = vadd.f32 0.0, %v3375
      %v3377 = vpop.f32.mrb[0].mxu0
      %v3378 = vpop.f32.mrb[0].mxu0
      %v3379 = vpop.f32.mrb[0].mxu0
      %3380 = vdwg.mxu0
      %3390 = vrot.lane.b32.xlu0 %v3344, 64
      %v3391 = vpop.permute.xlu0 %3390
      %3392 = vrot.lane.b32.xlu0 %v3347, 64
      %v3393 = vpop.permute.xlu0 %3392
      %3394 = vrot.lane.b32.xlu0 %v3352, 64
      %v3395 = vpop.permute.xlu0 %3394
      %3396 = vrot.lane.b32.xlu0 %v3355, 64
      %v3397 = vpop.permute.xlu0 %3396
      %3398 = vrot.lane.b32.xlu0 %v3360, 64
      %v3399 = vpop.permute.xlu0 %3398
      %3400 = vrot.lane.b32.xlu0 %v3363, 64
      %v3401 = vpop.permute.xlu0 %3400
      %3402 = vrot.lane.b32.xlu0 %v3368, 64
      %v3403 = vpop.permute.xlu0 %3402
      %3404 = vrot.lane.b32.xlu0 %v3371, 64
      %v3405 = vpop.permute.xlu0 %3404
      %3406 = vrot.lane.b32.xlu0 %v3376, 64
      %v3407 = vpop.permute.xlu0 %3406
      %3417 = vst.msk [vmem:[#allocation2 + $0x8] sm:$0xff] %vm2720, %v3391
      %3418 = vst.msk [vmem:[#allocation2 + $0x18] sm:$0xff] %vm2720, %v3393
      %3419 = vst.msk [vmem:[#allocation2 + $0x28] sm:$0xff] %vm2720, %v3395
      %3420 = vst.msk [vmem:[#allocation2 + $0x38] sm:$0xff] %vm2720, %v3397
      %3421 = vst.msk [vmem:[#allocation2 + $0x48] sm:$0xff] %vm2720, %v3399
      %3422 = vst.msk [vmem:[#allocation2 + $0x58] sm:$0xff] %vm2720, %v3401
      %3423 = vst.msk [vmem:[#allocation2 + $0x68] sm:$0xff] %vm2720, %v3403
      %3424 = vst.msk [vmem:[#allocation2 + $0x78] sm:$0xff] %vm2720, %v3405
      %3425 = vst.msk [vmem:[#allocation2 + $0x88] sm:$0xf] %vm2729, %v3407
      %vm3430 = vcmask 1045504
      %v3431 = vrot.slane %v1881, 2
      %v3432 = vrot.slane %v1887, 2
      %v3433 = vsel %vm3430, %v3431, %v3432
      %v3434 = vrot.slane %v1893, 2
      %v3435 = vsel %vm3430, %v3432, %v3434
      %v3436 = vrot.slane %v1899, 2
      %v3437 = vsel %vm3430, %v3434, %v3436
      %v3438 = vrot.slane %v1905, 2
      %v3439 = vsel %vm3430, %v3436, %v3438
      %v3444 = vrot.slane %v1883, 2
      %v3445 = vrot.slane %v1889, 2
      %v3446 = vsel %vm3430, %v3444, %v3445
      %v3447 = vrot.slane %v1895, 2
      %v3448 = vsel %vm3430, %v3445, %v3447
      %v3449 = vrot.slane %v1901, 2
      %v3450 = vsel %vm3430, %v3447, %v3449
      %v3451 = vrot.slane %v1907, 2
      %v3452 = vsel %vm3430, %v3449, %v3451
      %v3454 = vsel %vm2029, %v3433, 0
      %v3457 = vsel %vm2029, %v3435, 0
      %v3460 = vsel %vm2029, %v3437, 0
      %v3463 = vsel %vm2029, %v3439, 0
      %v3466 = vsel %vm2029, %v3438, 0
      %v3469 = vsel %vm2029, %v3446, 0
      %v3472 = vsel %vm2029, %v3448, 0
      %v3475 = vsel %vm2029, %v3450, 0
      %v3478 = vsel %vm2029, %v3452, 0
      %v3481 = vsel %vm2029, %v3451, 0
      %3483 = vmatprep.subr.bf16.mxu0 0
      %3484 = vmatpush1.bf16.xpose.msra.mxu0 %v3469
      %3485 = vmatprep.subr.bf16.mxu0 0
      %3486 = vmatpush1.bf16.xpose.msra.mxu0 %v3472
      %3487 = vmatprep.subr.bf16.mxu0 0
      %3488 = vmatpush1.bf16.xpose.msra.mxu0 %v3475
      %3489 = vmatprep.subr.bf16.mxu0 0
      %3490 = vmatpush1.bf16.xpose.msra.mxu0 %v3478
      %3491 = vmatprep.subr.bf16.mxu0 0
      %3492 = vmatpush1.bf16.xpose.msra.mxu0 %v3481
      %3493 = vmatprep.subr.bf16.mxu0 0
      %3494 = vmatpush1.bf16.xpose.msra.mxu0 0
      %3495 = vmatprep.subr.bf16.mxu0 0
      %3496 = vmatpush1.bf16.xpose.msra.mxu0 0
      %3497 = vmatprep.subr.bf16.mxu0 0
      %3498 = vmatpush1.bf16.xpose.msra.mxu0 0
      %3499 = vmatprep.subr.bf16.mxu0 0
      %3500 = vmatpush1.bf16.xpose.msra.mxu0 0
      %3501 = vmatprep.subr.bf16.mxu0 0
      %3502 = vmatpush1.bf16.xpose.msra.mxu0 0
      %3503 = vmatprep.subr.bf16.mxu0 0
      %3504 = vmatpush1.bf16.xpose.msra.mxu0 0
      %3505 = vmatprep.subr.bf16.mxu0 0
      %3506 = vmatpush1.bf16.xpose.msra.mxu0 0
      %3507 = vmatprep.subr.bf16.mxu0 0
      %3508 = vmatpush1.bf16.xpose.msra.mxu0 0
      %3509 = vmatprep.subr.bf16.mxu0 0
      %3510 = vmatpush1.bf16.xpose.msra.mxu0 0
      %3511 = vmatprep.subr.bf16.mxu0 0
      %3512 = vmatpush1.bf16.xpose.msra.mxu0 0
      %3513 = vmatprep.subr.bf16.mxu0 0
      %3514 = vmatpush1.bf16.xpose.msra.mxu0 0
      %3515 = vmatprep.mubr.bf16.mxu0 0
      %3516 = vmatmul.mubr.bf16.gmra.mrb[0].mxu0 %v3454
      %v3517 = vpop.f32.mrb[0].mxu0
      %v3518 = vadd.f32 %v2020, %v3517
      %v3519 = vpop.f32.mrb[0].mxu0
      %v3520 = vpop.f32.mrb[0].mxu0
      %v3521 = vadd.f32 %v2021, %v3520
      %v3522 = vpop.f32.mrb[0].mxu0
      %3523 = vmatprep.mubr.bf16.mxu0 0
      %3524 = vmatmul.mubr.bf16.gmra.mrb[0].mxu0 %v3457
      %v3525 = vpop.f32.mrb[0].mxu0
      %v3526 = vadd.f32 %v2022, %v3525
      %v3527 = vpop.f32.mrb[0].mxu0
      %v3528 = vpop.f32.mrb[0].mxu0
      %v3529 = vadd.f32 %v2023, %v3528
      %v3530 = vpop.f32.mrb[0].mxu0
      %3531 = vmatprep.mubr.bf16.mxu0 0
      %3532 = vmatmul.mubr.bf16.gmra.mrb[0].mxu0 %v3460
      %v3533 = vpop.f32.mrb[0].mxu0
      %v3534 = vadd.f32 %v2024, %v3533
      %v3535 = vpop.f32.mrb[0].mxu0
      %v3536 = vpop.f32.mrb[0].mxu0
      %v3537 = vadd.f32 %v2025, %v3536
      %v3538 = vpop.f32.mrb[0].mxu0
      %3539 = vmatprep.mubr.bf16.mxu0 0
      %3540 = vmatmul.mubr.bf16.gmra.mrb[0].mxu0 %v3463
      %v3541 = vpop.f32.mrb[0].mxu0
      %v3542 = vadd.f32 %v2026, %v3541
      %v3543 = vpop.f32.mrb[0].mxu0
      %v3544 = vpop.f32.mrb[0].mxu0
      %v3545 = vadd.f32 %v2027, %v3544
      %v3546 = vpop.f32.mrb[0].mxu0
      %3547 = vmatprep.mubr.bf16.mxu0 0
      %3548 = vmatmul.mubr.bf16.gmra.mrb[0].mxu0 %v3466
      %v3549 = vpop.f32.mrb[0].mxu0
      %v3550 = vadd.f32 %v2028, %v3549
      %v3551 = vpop.f32.mrb[0].mxu0
      %v3552 = vpop.f32.mrb[0].mxu0
      %v3553 = vpop.f32.mrb[0].mxu0
      %3554 = vdwg.mxu0
      %v3555 = vsel %vm2132, %v3518, -inf
      %3556 = vmax.xlane.f32.xlu0 %v3555
      %v3557 = vpop.xlane.xlu0 %3556
      %v3558 = vsel %vm2132, %v3521, -inf
      %3559 = vmax.xlane.f32.xlu0 %v3558
      %v3560 = vpop.xlane.xlu0 %3559
      %v3561 = vsel %vm2132, %v3526, -inf
      %3562 = vmax.xlane.f32.xlu0 %v3561
      %v3563 = vpop.xlane.xlu0 %3562
      %v3564 = vsel %vm2132, %v3529, -inf
      %3565 = vmax.xlane.f32.xlu0 %v3564
      %v3566 = vpop.xlane.xlu0 %3565
      %v3567 = vsel %vm2132, %v3534, -inf
      %3568 = vmax.xlane.f32.xlu0 %v3567
      %v3569 = vpop.xlane.xlu0 %3568
      %v3570 = vsel %vm2132, %v3537, -inf
      %3571 = vmax.xlane.f32.xlu0 %v3570
      %v3572 = vpop.xlane.xlu0 %3571
      %v3573 = vsel %vm2132, %v3542, -inf
      %3574 = vmax.xlane.f32.xlu0 %v3573
      %v3575 = vpop.xlane.xlu0 %3574
      %v3576 = vsel %vm2132, %v3545, -inf
      %3577 = vmax.xlane.f32.xlu0 %v3576
      %v3578 = vpop.xlane.xlu0 %3577
      %v3579 = vsel %vm2157, %v3550, -inf
      %3580 = vmax.xlane.f32.xlu0 %v3579
      %v3581 = vpop.xlane.xlu0 %3580
      %v3582 = vsub.f32 %v3518, %v3557
      %v3583 = vsub.f32 %v3521, %v3560
      %v3584 = vsub.f32 %v3526, %v3563
      %v3585 = vsub.f32 %v3529, %v3566
      %v3586 = vsub.f32 %v3534, %v3569
      %v3587 = vsub.f32 %v3537, %v3572
      %v3588 = vsub.f32 %v3542, %v3575
      %v3589 = vsub.f32 %v3545, %v3578
      %v3590 = vsub.f32 %v3550, %v3581
      %v3591 = vmul.f32 %v3582, 1.442695
      %v3592 = vpow.pop %v3591
      %v3593 = vmul.f32 %v3583, 1.442695
      %v3594 = vpow.pop %v3593
      %v3595 = vmul.f32 %v3584, 1.442695
      %v3596 = vpow.pop %v3595
      %v3597 = vmul.f32 %v3585, 1.442695
      %v3598 = vpow.pop %v3597
      %v3599 = vmul.f32 %v3586, 1.442695
      %v3600 = vpow.pop %v3599
      %v3601 = vmul.f32 %v3587, 1.442695
      %v3602 = vpow.pop %v3601
      %v3603 = vmul.f32 %v3588, 1.442695
      %v3604 = vpow.pop %v3603
      %v3605 = vmul.f32 %v3589, 1.442695
      %v3606 = vpow.pop %v3605
      %v3607 = vmul.f32 %v3590, 1.442695
      %v3608 = vpow.pop %v3607
      %v3609 = vsel %vm2132, %v3592, 0.0
      %3610 = vadd.xlane.f32.xlu0 %v3609
      %v3611 = vpop.xlane.xlu0 %3610
      %v3612 = vsel %vm2132, %v3594, 0.0
      %3613 = vadd.xlane.f32.xlu0 %v3612
      %v3614 = vpop.xlane.xlu0 %3613
      %v3615 = vsel %vm2132, %v3596, 0.0
      %3616 = vadd.xlane.f32.xlu0 %v3615
      %v3617 = vpop.xlane.xlu0 %3616
      %v3618 = vsel %vm2132, %v3598, 0.0
      %3619 = vadd.xlane.f32.xlu0 %v3618
      %v3620 = vpop.xlane.xlu0 %3619
      %v3621 = vsel %vm2132, %v3600, 0.0
      %3622 = vadd.xlane.f32.xlu0 %v3621
      %v3623 = vpop.xlane.xlu0 %3622
      %v3624 = vsel %vm2132, %v3602, 0.0
      %3625 = vadd.xlane.f32.xlu0 %v3624
      %v3626 = vpop.xlane.xlu0 %3625
      %v3627 = vsel %vm2132, %v3604, 0.0
      %3628 = vadd.xlane.f32.xlu0 %v3627
      %v3629 = vpop.xlane.xlu0 %3628
      %v3630 = vsel %vm2132, %v3606, 0.0
      %3631 = vadd.xlane.f32.xlu0 %v3630
      %v3632 = vpop.xlane.xlu0 %3631
      %v3633 = vsel %vm2157, %v3608, 0.0
      %3634 = vadd.xlane.f32.xlu0 %v3633
      %v3635 = vpop.xlane.xlu0 %3634
      %v3636 = vrcp.pop %v3611
      %v3637 = vrcp.pop %v3614
      %v3638 = vrcp.pop %v3617
      %v3639 = vrcp.pop %v3620
      %v3640 = vrcp.pop %v3623
      %v3641 = vrcp.pop %v3626
      %v3642 = vrcp.pop %v3629
      %v3643 = vrcp.pop %v3632
      %v3644 = vrcp.pop %v3635
      %v3645 = vmul.f32 %v3592, %v3636
      %v3646 = vmul.f32 %v3594, %v3637
      %v3647 = vmul.f32 %v3596, %v3638
      %v3648 = vmul.f32 %v3598, %v3639
      %v3649 = vmul.f32 %v3600, %v3640
      %v3650 = vmul.f32 %v3602, %v3641
      %v3651 = vmul.f32 %v3604, %v3642
      %v3652 = vmul.f32 %v3606, %v3643
      %v3653 = vmul.f32 %v3608, %v3644
      %v3654 = vpack.c.bf16 %v3646, %v3645
      %v3655 = vpack.c.bf16 %v3648, %v3647
      %v3656 = vpack.c.bf16 %v3650, %v3649
      %v3657 = vpack.c.bf16 %v3652, %v3651
      %v3658 = vpack.c.bf16 %v3653, %v3653
      %v3663 = vrot.slane %v1885, 2
      %v3664 = vrot.slane %v1891, 2
      %v3665 = vsel %vm3430, %v3663, %v3664
      %v3666 = vrot.slane %v1897, 2
      %v3667 = vsel %vm3430, %v3664, %v3666
      %v3668 = vrot.slane %v1903, 2
      %v3669 = vsel %vm3430, %v3666, %v3668
      %v3670 = vrot.slane %v1909, 2
      %v3671 = vsel %vm3430, %v3668, %v3670
      %v3677 = vsel %vm2132, %v3654, 0
      %v3680 = vsel %vm2132, %v3655, 0
      %v3683 = vsel %vm2132, %v3656, 0
      %v3686 = vsel %vm2132, %v3657, 0
      %v3689 = vsel %vm2132, %v3658, 0
      %v3692 = vsel %vm2253, %v3670, 0
      %3694 = vmatprep.subr.bf16.mxu0 0
      %3695 = vmatpush1.bf16.msra.mxu0 %v3665
      %3696 = vmatprep.subr.bf16.mxu0 0
      %3697 = vmatpush1.bf16.msra.mxu0 %v3667
      %3698 = vmatprep.subr.bf16.mxu0 0
      %3699 = vmatpush1.bf16.msra.mxu0 %v3669
      %3700 = vmatprep.subr.bf16.mxu0 0
      %3701 = vmatpush1.bf16.msra.mxu0 %v3671
      %3702 = vmatprep.subr.bf16.mxu0 0
      %3703 = vmatpush1.bf16.msra.mxu0 %v3692
      %3704 = vmatprep.subr.bf16.mxu0 0
      %3705 = vmatpush1.bf16.msra.mxu0 0
      %3706 = vmatprep.subr.bf16.mxu0 0
      %3707 = vmatpush1.bf16.msra.mxu0 0
      %3708 = vmatprep.subr.bf16.mxu0 0
      %3709 = vmatpush1.bf16.msra.mxu0 0
      %3710 = vmatprep.subr.bf16.mxu0 0
      %3711 = vmatpush1.bf16.msra.mxu0 0
      %3712 = vmatprep.subr.bf16.mxu0 0
      %3713 = vmatpush1.bf16.msra.mxu0 0
      %3714 = vmatprep.subr.bf16.mxu0 0
      %3715 = vmatpush1.bf16.msra.mxu0 0
      %3716 = vmatprep.subr.bf16.mxu0 0
      %3717 = vmatpush1.bf16.msra.mxu0 0
      %3718 = vmatprep.subr.bf16.mxu0 0
      %3719 = vmatpush1.bf16.msra.mxu0 0
      %3720 = vmatprep.subr.bf16.mxu0 0
      %3721 = vmatpush1.bf16.msra.mxu0 0
      %3722 = vmatprep.subr.bf16.mxu0 0
      %3723 = vmatpush1.bf16.msra.mxu0 0
      %3724 = vmatprep.subr.bf16.mxu0 0
      %3725 = vmatpush1.bf16.msra.mxu0 0
      %3726 = vmatprep.mubr.bf16.mxu0 0
      %3727 = vmatmul.mubr.bf16.gmra.mrb[0].mxu0 %v3677
      %v3728 = vpop.f32.mrb[0].mxu0
      %v3729 = vadd.f32 0.0, %v3728
      %v3730 = vpop.f32.mrb[0].mxu0
      %v3731 = vpop.f32.mrb[0].mxu0
      %v3732 = vadd.f32 0.0, %v3731
      %v3733 = vpop.f32.mrb[0].mxu0
      %3734 = vmatprep.mubr.bf16.mxu0 0
      %3735 = vmatmul.mubr.bf16.gmra.mrb[0].mxu0 %v3680
      %v3736 = vpop.f32.mrb[0].mxu0
      %v3737 = vadd.f32 0.0, %v3736
      %v3738 = vpop.f32.mrb[0].mxu0
      %v3739 = vpop.f32.mrb[0].mxu0
      %v3740 = vadd.f32 0.0, %v3739
      %v3741 = vpop.f32.mrb[0].mxu0
      %3742 = vmatprep.mubr.bf16.mxu0 0
      %3743 = vmatmul.mubr.bf16.gmra.mrb[0].mxu0 %v3683
      %v3744 = vpop.f32.mrb[0].mxu0
      %v3745 = vadd.f32 0.0, %v3744
      %v3746 = vpop.f32.mrb[0].mxu0
      %v3747 = vpop.f32.mrb[0].mxu0
      %v3748 = vadd.f32 0.0, %v3747
      %v3749 = vpop.f32.mrb[0].mxu0
      %3750 = vmatprep.mubr.bf16.mxu0 0
      %3751 = vmatmul.mubr.bf16.gmra.mrb[0].mxu0 %v3686
      %v3752 = vpop.f32.mrb[0].mxu0
      %v3753 = vadd.f32 0.0, %v3752
      %v3754 = vpop.f32.mrb[0].mxu0
      %v3755 = vpop.f32.mrb[0].mxu0
      %v3756 = vadd.f32 0.0, %v3755
      %v3757 = vpop.f32.mrb[0].mxu0
      %3758 = vmatprep.mubr.bf16.mxu0 0
      %3759 = vmatmul.mubr.bf16.gmra.mrb[0].mxu0 %v3689
      %v3760 = vpop.f32.mrb[0].mxu0
      %v3761 = vadd.f32 0.0, %v3760
      %v3762 = vpop.f32.mrb[0].mxu0
      %v3763 = vpop.f32.mrb[0].mxu0
      %v3764 = vpop.f32.mrb[0].mxu0
      %3765 = vdwg.mxu0
      %vm3775 = vcmask 1043456
      %v3776 = vrot.slane %v3729, 4
      %v3777 = vrot.slane %v3732, 4
      %v3778 = vsel %vm3775, %v3776, %v3777
      %v3779 = vrot.slane %v3737, 4
      %v3780 = vsel %vm3775, %v3777, %v3779
      %v3781 = vrot.slane %v3740, 4
      %v3782 = vsel %vm3775, %v3779, %v3781
      %v3783 = vrot.slane %v3745, 4
      %v3784 = vsel %vm3775, %v3781, %v3783
      %v3785 = vrot.slane %v3748, 4
      %v3786 = vsel %vm3775, %v3783, %v3785
      %v3787 = vrot.slane %v3753, 4
      %v3788 = vsel %vm3775, %v3785, %v3787
      %v3789 = vrot.slane %v3756, 4
      %v3790 = vsel %vm3775, %v3787, %v3789
      %v3791 = vrot.slane %v3761, 4
      %v3792 = vsel %vm3775, %v3789, %v3791
      %vm3802 = vcmask 523268
      %3803 = vst.msk [vmem:[#allocation2 + $0x80] sm:$0xf0] %vm3802, %v3776
      %3804 = vst.msk [vmem:[#allocation2 + $0x90] sm:$0xff] %vm2029, %v3778
      %3805 = vst.msk [vmem:[#allocation2 + $0xa0] sm:$0xff] %vm2029, %v3780
      %3806 = vst.msk [vmem:[#allocation2 + $0xb0] sm:$0xff] %vm2029, %v3782
      %3807 = vst.msk [vmem:[#allocation2 + $0xc0] sm:$0xff] %vm2029, %v3784
      %3808 = vst.msk [vmem:[#allocation2 + $0xd0] sm:$0xff] %vm2029, %v3786
      %3809 = vst.msk [vmem:[#allocation2 + $0xe0] sm:$0xff] %vm2029, %v3788
      %3810 = vst.msk [vmem:[#allocation2 + $0xf0] sm:$0xff] %vm2029, %v3790
      %3811 = vst.msk [vmem:[#allocation2 + $0x100] sm:$0xff] %vm2029, %v3792
      %3812 = vrot.lane.b32.xlu0 %v3433, 64
      %v3813 = vpop.permute.xlu0 %3812
      %3814 = vrot.lane.b32.xlu0 %v3435, 64
      %v3815 = vpop.permute.xlu0 %3814
      %3816 = vrot.lane.b32.xlu0 %v3437, 64
      %v3817 = vpop.permute.xlu0 %3816
      %3818 = vrot.lane.b32.xlu0 %v3439, 64
      %v3819 = vpop.permute.xlu0 %3818
      %3820 = vrot.lane.b32.xlu0 %v3438, 64
      %v3821 = vpop.permute.xlu0 %3820
      %3822 = vrot.lane.b32.xlu0 %v3446, 64
      %v3823 = vpop.permute.xlu0 %3822
      %3824 = vrot.lane.b32.xlu0 %v3448, 64
      %v3825 = vpop.permute.xlu0 %3824
      %3826 = vrot.lane.b32.xlu0 %v3450, 64
      %v3827 = vpop.permute.xlu0 %3826
      %3828 = vrot.lane.b32.xlu0 %v3452, 64
      %v3829 = vpop.permute.xlu0 %3828
      %3830 = vrot.lane.b32.xlu0 %v3451, 64
      %v3831 = vpop.permute.xlu0 %3830
      %v3833 = vsel %vm2029, %v3813, 0
      %v3836 = vsel %vm2029, %v3815, 0
      %v3839 = vsel %vm2029, %v3817, 0
      %v3842 = vsel %vm2029, %v3819, 0
      %v3845 = vsel %vm2029, %v3821, 0
      %v3848 = vsel %vm2029, %v3823, 0
      %v3851 = vsel %vm2029, %v3825, 0
      %v3854 = vsel %vm2029, %v3827, 0
      %v3857 = vsel %vm2029, %v3829, 0
      %v3860 = vsel %vm2029, %v3831, 0
      %3862 = vmatprep.subr.bf16.mxu0 0
      %3863 = vmatpush1.bf16.xpose.msra.mxu0 %v3848
      %3864 = vmatprep.subr.bf16.mxu0 0
      %3865 = vmatpush1.bf16.xpose.msra.mxu0 %v3851
      %3866 = vmatprep.subr.bf16.mxu0 0
      %3867 = vmatpush1.bf16.xpose.msra.mxu0 %v3854
      %3868 = vmatprep.subr.bf16.mxu0 0
      %3869 = vmatpush1.bf16.xpose.msra.mxu0 %v3857
      %3870 = vmatprep.subr.bf16.mxu0 0
      %3871 = vmatpush1.bf16.xpose.msra.mxu0 %v3860
      %3872 = vmatprep.subr.bf16.mxu0 0
      %3873 = vmatpush1.bf16.xpose.msra.mxu0 0
      %3874 = vmatprep.subr.bf16.mxu0 0
      %3875 = vmatpush1.bf16.xpose.msra.mxu0 0
      %3876 = vmatprep.subr.bf16.mxu0 0
      %3877 = vmatpush1.bf16.xpose.msra.mxu0 0
      %3878 = vmatprep.subr.bf16.mxu0 0
      %3879 = vmatpush1.bf16.xpose.msra.mxu0 0
      %3880 = vmatprep.subr.bf16.mxu0 0
      %3881 = vmatpush1.bf16.xpose.msra.mxu0 0
      %3882 = vmatprep.subr.bf16.mxu0 0
      %3883 = vmatpush1.bf16.xpose.msra.mxu0 0
      %3884 = vmatprep.subr.bf16.mxu0 0
      %3885 = vmatpush1.bf16.xpose.msra.mxu0 0
      %3886 = vmatprep.subr.bf16.mxu0 0
      %3887 = vmatpush1.bf16.xpose.msra.mxu0 0
      %3888 = vmatprep.subr.bf16.mxu0 0
      %3889 = vmatpush1.bf16.xpose.msra.mxu0 0
      %3890 = vmatprep.subr.bf16.mxu0 0
      %3891 = vmatpush1.bf16.xpose.msra.mxu0 0
      %3892 = vmatprep.subr.bf16.mxu0 0
      %3893 = vmatpush1.bf16.xpose.msra.mxu0 0
      %3894 = vmatprep.mubr.bf16.mxu0 0
      %3895 = vmatmul.mubr.bf16.gmra.mrb[0].mxu0 %v3833
      %v3896 = vpop.f32.mrb[0].mxu0
      %v3897 = vadd.f32 %v2020, %v3896
      %v3898 = vpop.f32.mrb[0].mxu0
      %v3899 = vpop.f32.mrb[0].mxu0
      %v3900 = vadd.f32 %v2021, %v3899
      %v3901 = vpop.f32.mrb[0].mxu0
      %3902 = vmatprep.mubr.bf16.mxu0 0
      %3903 = vmatmul.mubr.bf16.gmra.mrb[0].mxu0 %v3836
      %v3904 = vpop.f32.mrb[0].mxu0
      %v3905 = vadd.f32 %v2022, %v3904
      %v3906 = vpop.f32.mrb[0].mxu0
      %v3907 = vpop.f32.mrb[0].mxu0
      %v3908 = vadd.f32 %v2023, %v3907
      %v3909 = vpop.f32.mrb[0].mxu0
      %3910 = vmatprep.mubr.bf16.mxu0 0
      %3911 = vmatmul.mubr.bf16.gmra.mrb[0].mxu0 %v3839
      %v3912 = vpop.f32.mrb[0].mxu0
      %v3913 = vadd.f32 %v2024, %v3912
      %v3914 = vpop.f32.mrb[0].mxu0
      %v3915 = vpop.f32.mrb[0].mxu0
      %v3916 = vadd.f32 %v2025, %v3915
      %v3917 = vpop.f32.mrb[0].mxu0
      %3918 = vmatprep.mubr.bf16.mxu0 0
      %3919 = vmatmul.mubr.bf16.gmra.mrb[0].mxu0 %v3842
      %v3920 = vpop.f32.mrb[0].mxu0
      %v3921 = vadd.f32 %v2026, %v3920
      %v3922 = vpop.f32.mrb[0].mxu0
      %v3923 = vpop.f32.mrb[0].mxu0
      %v3924 = vadd.f32 %v2027, %v3923
      %v3925 = vpop.f32.mrb[0].mxu0
      %3926 = vmatprep.mubr.bf16.mxu0 0
      %3927 = vmatmul.mubr.bf16.gmra.mrb[0].mxu0 %v3845
      %v3928 = vpop.f32.mrb[0].mxu0
      %v3929 = vadd.f32 %v2028, %v3928
      %v3930 = vpop.f32.mrb[0].mxu0
      %v3931 = vpop.f32.mrb[0].mxu0
      %v3932 = vpop.f32.mrb[0].mxu0
      %3933 = vdwg.mxu0
      %v3934 = vsel %vm2132, %v3897, -inf
      %3935 = vmax.xlane.f32.xlu0 %v3934
      %v3936 = vpop.xlane.xlu0 %3935
      %v3937 = vsel %vm2132, %v3900, -inf
      %3938 = vmax.xlane.f32.xlu0 %v3937
      %v3939 = vpop.xlane.xlu0 %3938
      %v3940 = vsel %vm2132, %v3905, -inf
      %3941 = vmax.xlane.f32.xlu0 %v3940
      %v3942 = vpop.xlane.xlu0 %3941
      %v3943 = vsel %vm2132, %v3908, -inf
      %3944 = vmax.xlane.f32.xlu0 %v3943
      %v3945 = vpop.xlane.xlu0 %3944
      %v3946 = vsel %vm2132, %v3913, -inf
      %3947 = vmax.xlane.f32.xlu0 %v3946
      %v3948 = vpop.xlane.xlu0 %3947
      %v3949 = vsel %vm2132, %v3916, -inf
      %3950 = vmax.xlane.f32.xlu0 %v3949
      %v3951 = vpop.xlane.xlu0 %3950
      %v3952 = vsel %vm2132, %v3921, -inf
      %3953 = vmax.xlane.f32.xlu0 %v3952
      %v3954 = vpop.xlane.xlu0 %3953
      %v3955 = vsel %vm2132, %v3924, -inf
      %3956 = vmax.xlane.f32.xlu0 %v3955
      %v3957 = vpop.xlane.xlu0 %3956
      %v3958 = vsel %vm2157, %v3929, -inf
      %3959 = vmax.xlane.f32.xlu0 %v3958
      %v3960 = vpop.xlane.xlu0 %3959
      %v3961 = vsub.f32 %v3897, %v3936
      %v3962 = vsub.f32 %v3900, %v3939
      %v3963 = vsub.f32 %v3905, %v3942
      %v3964 = vsub.f32 %v3908, %v3945
      %v3965 = vsub.f32 %v3913, %v3948
      %v3966 = vsub.f32 %v3916, %v3951
      %v3967 = vsub.f32 %v3921, %v3954
      %v3968 = vsub.f32 %v3924, %v3957
      %v3969 = vsub.f32 %v3929, %v3960
      %v3970 = vmul.f32 %v3961, 1.442695
      %v3971 = vpow.pop %v3970
      %v3972 = vmul.f32 %v3962, 1.442695
      %v3973 = vpow.pop %v3972
      %v3974 = vmul.f32 %v3963, 1.442695
      %v3975 = vpow.pop %v3974
      %v3976 = vmul.f32 %v3964, 1.442695
      %v3977 = vpow.pop %v3976
      %v3978 = vmul.f32 %v3965, 1.442695
      %v3979 = vpow.pop %v3978
      %v3980 = vmul.f32 %v3966, 1.442695
      %v3981 = vpow.pop %v3980
      %v3982 = vmul.f32 %v3967, 1.442695
      %v3983 = vpow.pop %v3982
      %v3984 = vmul.f32 %v3968, 1.442695
      %v3985 = vpow.pop %v3984
      %v3986 = vmul.f32 %v3969, 1.442695
      %v3987 = vpow.pop %v3986
      %v3988 = vsel %vm2132, %v3971, 0.0
      %3989 = vadd.xlane.f32.xlu0 %v3988
      %v3990 = vpop.xlane.xlu0 %3989
      %v3991 = vsel %vm2132, %v3973, 0.0
      %3992 = vadd.xlane.f32.xlu0 %v3991
      %v3993 = vpop.xlane.xlu0 %3992
      %v3994 = vsel %vm2132, %v3975, 0.0
      %3995 = vadd.xlane.f32.xlu0 %v3994
      %v3996 = vpop.xlane.xlu0 %3995
      %v3997 = vsel %vm2132, %v3977, 0.0
      %3998 = vadd.xlane.f32.xlu0 %v3997
      %v3999 = vpop.xlane.xlu0 %3998
      %v4000 = vsel %vm2132, %v3979, 0.0
      %4001 = vadd.xlane.f32.xlu0 %v4000
      %v4002 = vpop.xlane.xlu0 %4001
      %v4003 = vsel %vm2132, %v3981, 0.0
      %4004 = vadd.xlane.f32.xlu0 %v4003
      %v4005 = vpop.xlane.xlu0 %4004
      %v4006 = vsel %vm2132, %v3983, 0.0
      %4007 = vadd.xlane.f32.xlu0 %v4006
      %v4008 = vpop.xlane.xlu0 %4007
      %v4009 = vsel %vm2132, %v3985, 0.0
      %4010 = vadd.xlane.f32.xlu0 %v4009
      %v4011 = vpop.xlane.xlu0 %4010
      %v4012 = vsel %vm2157, %v3987, 0.0
      %4013 = vadd.xlane.f32.xlu0 %v4012
      %v4014 = vpop.xlane.xlu0 %4013
      %v4015 = vrcp.pop %v3990
      %v4016 = vrcp.pop %v3993
      %v4017 = vrcp.pop %v3996
      %v4018 = vrcp.pop %v3999
      %v4019 = vrcp.pop %v4002
      %v4020 = vrcp.pop %v4005
      %v4021 = vrcp.pop %v4008
      %v4022 = vrcp.pop %v4011
      %v4023 = vrcp.pop %v4014
      %v4024 = vmul.f32 %v3971, %v4015
      %v4025 = vmul.f32 %v3973, %v4016
      %v4026 = vmul.f32 %v3975, %v4017
      %v4027 = vmul.f32 %v3977, %v4018
      %v4028 = vmul.f32 %v3979, %v4019
      %v4029 = vmul.f32 %v3981, %v4020
      %v4030 = vmul.f32 %v3983, %v4021
      %v4031 = vmul.f32 %v3985, %v4022
      %v4032 = vmul.f32 %v3987, %v4023
      %v4033 = vpack.c.bf16 %v4025, %v4024
      %v4034 = vpack.c.bf16 %v4027, %v4026
      %v4035 = vpack.c.bf16 %v4029, %v4028
      %v4036 = vpack.c.bf16 %v4031, %v4030
      %v4037 = vpack.c.bf16 %v4032, %v4032
      %4038 = vrot.lane.b32.xlu0 %v3665, 64
      %v4039 = vpop.permute.xlu0 %4038
      %4040 = vrot.lane.b32.xlu0 %v3667, 64
      %v4041 = vpop.permute.xlu0 %4040
      %4042 = vrot.lane.b32.xlu0 %v3669, 64
      %v4043 = vpop.permute.xlu0 %4042
      %4044 = vrot.lane.b32.xlu0 %v3671, 64
      %v4045 = vpop.permute.xlu0 %4044
      %4046 = vrot.lane.b32.xlu0 %v3670, 64
      %v4047 = vpop.permute.xlu0 %4046
      %v4053 = vsel %vm2132, %v4033, 0
      %v4056 = vsel %vm2132, %v4034, 0
      %v4059 = vsel %vm2132, %v4035, 0
      %v4062 = vsel %vm2132, %v4036, 0
      %v4065 = vsel %vm2132, %v4037, 0
      %v4068 = vsel %vm2253, %v4047, 0
      %4070 = vmatprep.subr.bf16.mxu0 0
      %4071 = vmatpush1.bf16.msra.mxu0 %v4039
      %4072 = vmatprep.subr.bf16.mxu0 0
      %4073 = vmatpush1.bf16.msra.mxu0 %v4041
      %4074 = vmatprep.subr.bf16.mxu0 0
      %4075 = vmatpush1.bf16.msra.mxu0 %v4043
      %4076 = vmatprep.subr.bf16.mxu0 0
      %4077 = vmatpush1.bf16.msra.mxu0 %v4045
      %4078 = vmatprep.subr.bf16.mxu0 0
      %4079 = vmatpush1.bf16.msra.mxu0 %v4068
      %4080 = vmatprep.subr.bf16.mxu0 0
      %4081 = vmatpush1.bf16.msra.mxu0 0
      %4082 = vmatprep.subr.bf16.mxu0 0
      %4083 = vmatpush1.bf16.msra.mxu0 0
      %4084 = vmatprep.subr.bf16.mxu0 0
      %4085 = vmatpush1.bf16.msra.mxu0 0
      %4086 = vmatprep.subr.bf16.mxu0 0
      %4087 = vmatpush1.bf16.msra.mxu0 0
      %4088 = vmatprep.subr.bf16.mxu0 0
      %4089 = vmatpush1.bf16.msra.mxu0 0
      %4090 = vmatprep.subr.bf16.mxu0 0
      %4091 = vmatpush1.bf16.msra.mxu0 0
      %4092 = vmatprep.subr.bf16.mxu0 0
      %4093 = vmatpush1.bf16.msra.mxu0 0
      %4094 = vmatprep.subr.bf16.mxu0 0
      %4095 = vmatpush1.bf16.msra.mxu0 0
      %4096 = vmatprep.subr.bf16.mxu0 0
      %4097 = vmatpush1.bf16.msra.mxu0 0
      %4098 = vmatprep.subr.bf16.mxu0 0
      %4099 = vmatpush1.bf16.msra.mxu0 0
      %4100 = vmatprep.subr.bf16.mxu0 0
      %4101 = vmatpush1.bf16.msra.mxu0 0
      %4102 = vmatprep.mubr.bf16.mxu0 0
      %4103 = vmatmul.mubr.bf16.gmra.mrb[0].mxu0 %v4053
      %v4104 = vpop.f32.mrb[0].mxu0
      %v4105 = vadd.f32 0.0, %v4104
      %v4106 = vpop.f32.mrb[0].mxu0
      %v4107 = vpop.f32.mrb[0].mxu0
      %v4108 = vadd.f32 0.0, %v4107
      %v4109 = vpop.f32.mrb[0].mxu0
      %4110 = vmatprep.mubr.bf16.mxu0 0
      %4111 = vmatmul.mubr.bf16.gmra.mrb[0].mxu0 %v4056
      %v4112 = vpop.f32.mrb[0].mxu0
      %v4113 = vadd.f32 0.0, %v4112
      %v4114 = vpop.f32.mrb[0].mxu0
      %v4115 = vpop.f32.mrb[0].mxu0
      %v4116 = vadd.f32 0.0, %v4115
      %v4117 = vpop.f32.mrb[0].mxu0
      %4118 = vmatprep.mubr.bf16.mxu0 0
      %4119 = vmatmul.mubr.bf16.gmra.mrb[0].mxu0 %v4059
      %v4120 = vpop.f32.mrb[0].mxu0
      %v4121 = vadd.f32 0.0, %v4120
      %v4122 = vpop.f32.mrb[0].mxu0
      %v4123 = vpop.f32.mrb[0].mxu0
      %v4124 = vadd.f32 0.0, %v4123
      %v4125 = vpop.f32.mrb[0].mxu0
      %4126 = vmatprep.mubr.bf16.mxu0 0
      %4127 = vmatmul.mubr.bf16.gmra.mrb[0].mxu0 %v4062
      %v4128 = vpop.f32.mrb[0].mxu0
      %v4129 = vadd.f32 0.0, %v4128
      %v4130 = vpop.f32.mrb[0].mxu0
      %v4131 = vpop.f32.mrb[0].mxu0
      %v4132 = vadd.f32 0.0, %v4131
      %v4133 = vpop.f32.mrb[0].mxu0
      %4134 = vmatprep.mubr.bf16.mxu0 0
      %4135 = vmatmul.mubr.bf16.gmra.mrb[0].mxu0 %v4065
      %v4136 = vpop.f32.mrb[0].mxu0
      %v4137 = vadd.f32 0.0, %v4136
      %v4138 = vpop.f32.mrb[0].mxu0
      %v4139 = vpop.f32.mrb[0].mxu0
      %v4140 = vpop.f32.mrb[0].mxu0
      %4141 = vdwg.mxu0
      %v4151 = vrot.slane %v4105, 4
      %v4152 = vrot.slane %v4108, 4
      %v4153 = vsel %vm3775, %v4151, %v4152
      %v4154 = vrot.slane %v4113, 4
      %v4155 = vsel %vm3775, %v4152, %v4154
      %v4156 = vrot.slane %v4116, 4
      %v4157 = vsel %vm3775, %v4154, %v4156
      %v4158 = vrot.slane %v4121, 4
      %v4159 = vsel %vm3775, %v4156, %v4158
      %v4160 = vrot.slane %v4124, 4
      %v4161 = vsel %vm3775, %v4158, %v4160
      %v4162 = vrot.slane %v4129, 4
      %v4163 = vsel %vm3775, %v4160, %v4162
      %v4164 = vrot.slane %v4132, 4
      %v4165 = vsel %vm3775, %v4162, %v4164
      %v4166 = vrot.slane %v4137, 4
      %v4167 = vsel %vm3775, %v4164, %v4166
      %4168 = vrot.lane.b32.xlu0 %v4151, 64
      %v4169 = vpop.permute.xlu0 %4168
      %4170 = vrot.lane.b32.xlu0 %v4153, 64
      %v4171 = vpop.permute.xlu0 %4170
      %4172 = vrot.lane.b32.xlu0 %v4155, 64
      %v4173 = vpop.permute.xlu0 %4172
      %4174 = vrot.lane.b32.xlu0 %v4157, 64
      %v4175 = vpop.permute.xlu0 %4174
      %4176 = vrot.lane.b32.xlu0 %v4159, 64
      %v4177 = vpop.permute.xlu0 %4176
      %4178 = vrot.lane.b32.xlu0 %v4161, 64
      %v4179 = vpop.permute.xlu0 %4178
      %4180 = vrot.lane.b32.xlu0 %v4163, 64
      %v4181 = vpop.permute.xlu0 %4180
      %4182 = vrot.lane.b32.xlu0 %v4165, 64
      %v4183 = vpop.permute.xlu0 %4182
      %4184 = vrot.lane.b32.xlu0 %v4167, 64
      %v4185 = vpop.permute.xlu0 %4184
      %vm4195 = vcmask 1048068
      %4196 = vst.msk [vmem:[#allocation2 + $0x80] sm:$0xf0] %vm4195, %v4169
      %4197 = vst.msk [vmem:[#allocation2 + $0x90] sm:$0xff] %vm2720, %v4171
      %4198 = vst.msk [vmem:[#allocation2 + $0xa0] sm:$0xff] %vm2720, %v4173
      %4199 = vst.msk [vmem:[#allocation2 + $0xb0] sm:$0xff] %vm2720, %v4175
      %4200 = vst.msk [vmem:[#allocation2 + $0xc0] sm:$0xff] %vm2720, %v4177
      %4201 = vst.msk [vmem:[#allocation2 + $0xd0] sm:$0xff] %vm2720, %v4179
      %4202 = vst.msk [vmem:[#allocation2 + $0xe0] sm:$0xff] %vm2720, %v4181
      %4203 = vst.msk [vmem:[#allocation2 + $0xf0] sm:$0xff] %vm2720, %v4183
      %4204 = vst.msk [vmem:[#allocation2 + $0x100] sm:$0xff] %vm2720, %v4185
      %v4209 = vrot.slane %v1882, 2
      %v4210 = vrot.slane %v1888, 2
      %v4211 = vsel %vm3430, %v4209, %v4210
      %v4212 = vrot.slane %v1894, 2
      %v4213 = vsel %vm3430, %v4210, %v4212
      %v4214 = vrot.slane %v1900, 2
      %v4215 = vsel %vm3430, %v4212, %v4214
      %v4216 = vrot.slane %v1906, 2
      %v4217 = vsel %vm3430, %v4214, %v4216
      %v4222 = vrot.slane %v1884, 2
      %v4223 = vrot.slane %v1890, 2
      %v4224 = vsel %vm3430, %v4222, %v4223
      %v4225 = vrot.slane %v1896, 2
      %v4226 = vsel %vm3430, %v4223, %v4225
      %v4227 = vrot.slane %v1902, 2
      %v4228 = vsel %vm3430, %v4225, %v4227
      %v4229 = vrot.slane %v1908, 2
      %v4230 = vsel %vm3430, %v4227, %v4229
      %v4232 = vsel %vm2029, %v4211, 0
      %v4235 = vsel %vm2029, %v4213, 0
      %v4238 = vsel %vm2029, %v4215, 0
      %v4241 = vsel %vm2029, %v4217, 0
      %v4244 = vsel %vm2029, %v4216, 0
      %v4247 = vsel %vm2029, %v4224, 0
      %v4250 = vsel %vm2029, %v4226, 0
      %v4253 = vsel %vm2029, %v4228, 0
      %v4256 = vsel %vm2029, %v4230, 0
      %v4259 = vsel %vm2029, %v4229, 0
      %4261 = vmatprep.subr.bf16.mxu0 0
      %4262 = vmatpush1.bf16.xpose.msra.mxu0 %v4247
      %4263 = vmatprep.subr.bf16.mxu0 0
      %4264 = vmatpush1.bf16.xpose.msra.mxu0 %v4250
      %4265 = vmatprep.subr.bf16.mxu0 0
      %4266 = vmatpush1.bf16.xpose.msra.mxu0 %v4253
      %4267 = vmatprep.subr.bf16.mxu0 0
      %4268 = vmatpush1.bf16.xpose.msra.mxu0 %v4256
      %4269 = vmatprep.subr.bf16.mxu0 0
      %4270 = vmatpush1.bf16.xpose.msra.mxu0 %v4259
      %4271 = vmatprep.subr.bf16.mxu0 0
      %4272 = vmatpush1.bf16.xpose.msra.mxu0 0
      %4273 = vmatprep.subr.bf16.mxu0 0
      %4274 = vmatpush1.bf16.xpose.msra.mxu0 0
      %4275 = vmatprep.subr.bf16.mxu0 0
      %4276 = vmatpush1.bf16.xpose.msra.mxu0 0
      %4277 = vmatprep.subr.bf16.mxu0 0
      %4278 = vmatpush1.bf16.xpose.msra.mxu0 0
      %4279 = vmatprep.subr.bf16.mxu0 0
      %4280 = vmatpush1.bf16.xpose.msra.mxu0 0
      %4281 = vmatprep.subr.bf16.mxu0 0
      %4282 = vmatpush1.bf16.xpose.msra.mxu0 0
      %4283 = vmatprep.subr.bf16.mxu0 0
      %4284 = vmatpush1.bf16.xpose.msra.mxu0 0
      %4285 = vmatprep.subr.bf16.mxu0 0
      %4286 = vmatpush1.bf16.xpose.msra.mxu0 0
      %4287 = vmatprep.subr.bf16.mxu0 0
      %4288 = vmatpush1.bf16.xpose.msra.mxu0 0
      %4289 = vmatprep.subr.bf16.mxu0 0
      %4290 = vmatpush1.bf16.xpose.msra.mxu0 0
      %4291 = vmatprep.subr.bf16.mxu0 0
      %4292 = vmatpush1.bf16.xpose.msra.mxu0 0
      %4293 = vmatprep.mubr.bf16.mxu0 0
      %4294 = vmatmul.mubr.bf16.gmra.mrb[0].mxu0 %v4232
      %v4295 = vpop.f32.mrb[0].mxu0
      %v4296 = vadd.f32 %v2020, %v4295
      %v4297 = vpop.f32.mrb[0].mxu0
      %v4298 = vpop.f32.mrb[0].mxu0
      %v4299 = vadd.f32 %v2021, %v4298
      %v4300 = vpop.f32.mrb[0].mxu0
      %4301 = vmatprep.mubr.bf16.mxu0 0
      %4302 = vmatmul.mubr.bf16.gmra.mrb[0].mxu0 %v4235
      %v4303 = vpop.f32.mrb[0].mxu0
      %v4304 = vadd.f32 %v2022, %v4303
      %v4305 = vpop.f32.mrb[0].mxu0
      %v4306 = vpop.f32.mrb[0].mxu0
      %v4307 = vadd.f32 %v2023, %v4306
      %v4308 = vpop.f32.mrb[0].mxu0
      %4309 = vmatprep.mubr.bf16.mxu0 0
      %4310 = vmatmul.mubr.bf16.gmra.mrb[0].mxu0 %v4238
      %v4311 = vpop.f32.mrb[0].mxu0
      %v4312 = vadd.f32 %v2024, %v4311
      %v4313 = vpop.f32.mrb[0].mxu0
      %v4314 = vpop.f32.mrb[0].mxu0
      %v4315 = vadd.f32 %v2025, %v4314
      %v4316 = vpop.f32.mrb[0].mxu0
      %4317 = vmatprep.mubr.bf16.mxu0 0
      %4318 = vmatmul.mubr.bf16.gmra.mrb[0].mxu0 %v4241
      %v4319 = vpop.f32.mrb[0].mxu0
      %v4320 = vadd.f32 %v2026, %v4319
      %v4321 = vpop.f32.mrb[0].mxu0
      %v4322 = vpop.f32.mrb[0].mxu0
      %v4323 = vadd.f32 %v2027, %v4322
      %v4324 = vpop.f32.mrb[0].mxu0
      %4325 = vmatprep.mubr.bf16.mxu0 0
      %4326 = vmatmul.mubr.bf16.gmra.mrb[0].mxu0 %v4244
      %v4327 = vpop.f32.mrb[0].mxu0
      %v4328 = vadd.f32 %v2028, %v4327
      %v4329 = vpop.f32.mrb[0].mxu0
      %v4330 = vpop.f32.mrb[0].mxu0
      %v4331 = vpop.f32.mrb[0].mxu0
      %4332 = vdwg.mxu0
      %v4333 = vsel %vm2132, %v4296, -inf
      %4334 = vmax.xlane.f32.xlu0 %v4333
      %v4335 = vpop.xlane.xlu0 %4334
      %v4336 = vsel %vm2132, %v4299, -inf
      %4337 = vmax.xlane.f32.xlu0 %v4336
      %v4338 = vpop.xlane.xlu0 %4337
      %v4339 = vsel %vm2132, %v4304, -inf
      %4340 = vmax.xlane.f32.xlu0 %v4339
      %v4341 = vpop.xlane.xlu0 %4340
      %v4342 = vsel %vm2132, %v4307, -inf
      %4343 = vmax.xlane.f32.xlu0 %v4342
      %v4344 = vpop.xlane.xlu0 %4343
      %v4345 = vsel %vm2132, %v4312, -inf
      %4346 = vmax.xlane.f32.xlu0 %v4345
      %v4347 = vpop.xlane.xlu0 %4346
      %v4348 = vsel %vm2132, %v4315, -inf
      %4349 = vmax.xlane.f32.xlu0 %v4348
      %v4350 = vpop.xlane.xlu0 %4349
      %v4351 = vsel %vm2132, %v4320, -inf
      %4352 = vmax.xlane.f32.xlu0 %v4351
      %v4353 = vpop.xlane.xlu0 %4352
      %v4354 = vsel %vm2132, %v4323, -inf
      %4355 = vmax.xlane.f32.xlu0 %v4354
      %v4356 = vpop.xlane.xlu0 %4355
      %v4357 = vsel %vm2157, %v4328, -inf
      %4358 = vmax.xlane.f32.xlu0 %v4357
      %v4359 = vpop.xlane.xlu0 %4358
      %v4360 = vsub.f32 %v4296, %v4335
      %v4361 = vsub.f32 %v4299, %v4338
      %v4362 = vsub.f32 %v4304, %v4341
      %v4363 = vsub.f32 %v4307, %v4344
      %v4364 = vsub.f32 %v4312, %v4347
      %v4365 = vsub.f32 %v4315, %v4350
      %v4366 = vsub.f32 %v4320, %v4353
      %v4367 = vsub.f32 %v4323, %v4356
      %v4368 = vsub.f32 %v4328, %v4359
      %v4369 = vmul.f32 %v4360, 1.442695
      %v4370 = vpow.pop %v4369
      %v4371 = vmul.f32 %v4361, 1.442695
      %v4372 = vpow.pop %v4371
      %v4373 = vmul.f32 %v4362, 1.442695
      %v4374 = vpow.pop %v4373
      %v4375 = vmul.f32 %v4363, 1.442695
      %v4376 = vpow.pop %v4375
      %v4377 = vmul.f32 %v4364, 1.442695
      %v4378 = vpow.pop %v4377
      %v4379 = vmul.f32 %v4365, 1.442695
      %v4380 = vpow.pop %v4379
      %v4381 = vmul.f32 %v4366, 1.442695
      %v4382 = vpow.pop %v4381
      %v4383 = vmul.f32 %v4367, 1.442695
      %v4384 = vpow.pop %v4383
      %v4385 = vmul.f32 %v4368, 1.442695
      %v4386 = vpow.pop %v4385
      %v4387 = vsel %vm2132, %v4370, 0.0
      %4388 = vadd.xlane.f32.xlu0 %v4387
      %v4389 = vpop.xlane.xlu0 %4388
      %v4390 = vsel %vm2132, %v4372, 0.0
      %4391 = vadd.xlane.f32.xlu0 %v4390
      %v4392 = vpop.xlane.xlu0 %4391
      %v4393 = vsel %vm2132, %v4374, 0.0
      %4394 = vadd.xlane.f32.xlu0 %v4393
      %v4395 = vpop.xlane.xlu0 %4394
      %v4396 = vsel %vm2132, %v4376, 0.0
      %4397 = vadd.xlane.f32.xlu0 %v4396
      %v4398 = vpop.xlane.xlu0 %4397
      %v4399 = vsel %vm2132, %v4378, 0.0
      %4400 = vadd.xlane.f32.xlu0 %v4399
      %v4401 = vpop.xlane.xlu0 %4400
      %v4402 = vsel %vm2132, %v4380, 0.0
      %4403 = vadd.xlane.f32.xlu0 %v4402
      %v4404 = vpop.xlane.xlu0 %4403
      %v4405 = vsel %vm2132, %v4382, 0.0
      %4406 = vadd.xlane.f32.xlu0 %v4405
      %v4407 = vpop.xlane.xlu0 %4406
      %v4408 = vsel %vm2132, %v4384, 0.0
      %4409 = vadd.xlane.f32.xlu0 %v4408
      %v4410 = vpop.xlane.xlu0 %4409
      %v4411 = vsel %vm2157, %v4386, 0.0
      %4412 = vadd.xlane.f32.xlu0 %v4411
      %v4413 = vpop.xlane.xlu0 %4412
      %v4414 = vrcp.pop %v4389
      %v4415 = vrcp.pop %v4392
      %v4416 = vrcp.pop %v4395
      %v4417 = vrcp.pop %v4398
      %v4418 = vrcp.pop %v4401
      %v4419 = vrcp.pop %v4404
      %v4420 = vrcp.pop %v4407
      %v4421 = vrcp.pop %v4410
      %v4422 = vrcp.pop %v4413
      %v4423 = vmul.f32 %v4370, %v4414
      %v4424 = vmul.f32 %v4372, %v4415
      %v4425 = vmul.f32 %v4374, %v4416
      %v4426 = vmul.f32 %v4376, %v4417
      %v4427 = vmul.f32 %v4378, %v4418
      %v4428 = vmul.f32 %v4380, %v4419
      %v4429 = vmul.f32 %v4382, %v4420
      %v4430 = vmul.f32 %v4384, %v4421
      %v4431 = vmul.f32 %v4386, %v4422
      %v4432 = vpack.c.bf16 %v4424, %v4423
      %v4433 = vpack.c.bf16 %v4426, %v4425
      %v4434 = vpack.c.bf16 %v4428, %v4427
      %v4435 = vpack.c.bf16 %v4430, %v4429
      %v4436 = vpack.c.bf16 %v4431, %v4431
      %v4441 = vrot.slane %v1886, 2
      %v4442 = vrot.slane %v1892, 2
      %v4443 = vsel %vm3430, %v4441, %v4442
      %v4444 = vrot.slane %v1898, 2
      %v4445 = vsel %vm3430, %v4442, %v4444
      %v4446 = vrot.slane %v1904, 2
      %v4447 = vsel %vm3430, %v4444, %v4446
      %v4448 = vrot.slane %v1910, 2
      %v4449 = vsel %vm3430, %v4446, %v4448
      %v4455 = vsel %vm2132, %v4432, 0
      %v4458 = vsel %vm2132, %v4433, 0
      %v4461 = vsel %vm2132, %v4434, 0
      %v4464 = vsel %vm2132, %v4435, 0
      %v4467 = vsel %vm2132, %v4436, 0
      %v4470 = vsel %vm2253, %v4448, 0
      %4472 = vmatprep.subr.bf16.mxu0 0
      %4473 = vmatpush1.bf16.msra.mxu0 %v4443
      %4474 = vmatprep.subr.bf16.mxu0 0
      %4475 = vmatpush1.bf16.msra.mxu0 %v4445
      %4476 = vmatprep.subr.bf16.mxu0 0
      %4477 = vmatpush1.bf16.msra.mxu0 %v4447
      %4478 = vmatprep.subr.bf16.mxu0 0
      %4479 = vmatpush1.bf16.msra.mxu0 %v4449
      %4480 = vmatprep.subr.bf16.mxu0 0
      %4481 = vmatpush1.bf16.msra.mxu0 %v4470
      %4482 = vmatprep.subr.bf16.mxu0 0
      %4483 = vmatpush1.bf16.msra.mxu0 0
      %4484 = vmatprep.subr.bf16.mxu0 0
      %4485 = vmatpush1.bf16.msra.mxu0 0
      %4486 = vmatprep.subr.bf16.mxu0 0
      %4487 = vmatpush1.bf16.msra.mxu0 0
      %4488 = vmatprep.subr.bf16.mxu0 0
      %4489 = vmatpush1.bf16.msra.mxu0 0
      %4490 = vmatprep.subr.bf16.mxu0 0
      %4491 = vmatpush1.bf16.msra.mxu0 0
      %4492 = vmatprep.subr.bf16.mxu0 0
      %4493 = vmatpush1.bf16.msra.mxu0 0
      %4494 = vmatprep.subr.bf16.mxu0 0
      %4495 = vmatpush1.bf16.msra.mxu0 0
      %4496 = vmatprep.subr.bf16.mxu0 0
      %4497 = vmatpush1.bf16.msra.mxu0 0
      %4498 = vmatprep.subr.bf16.mxu0 0
      %4499 = vmatpush1.bf16.msra.mxu0 0
      %4500 = vmatprep.subr.bf16.mxu0 0
      %4501 = vmatpush1.bf16.msra.mxu0 0
      %4502 = vmatprep.subr.bf16.mxu0 0
      %4503 = vmatpush1.bf16.msra.mxu0 0
      %4504 = vmatprep.mubr.bf16.mxu0 0
      %4505 = vmatmul.mubr.bf16.gmra.mrb[0].mxu0 %v4455
      %v4506 = vpop.f32.mrb[0].mxu0
      %v4507 = vadd.f32 0.0, %v4506
      %v4508 = vpop.f32.mrb[0].mxu0
      %v4509 = vpop.f32.mrb[0].mxu0
      %v4510 = vadd.f32 0.0, %v4509
      %v4511 = vpop.f32.mrb[0].mxu0
      %4512 = vmatprep.mubr.bf16.mxu0 0
      %4513 = vmatmul.mubr.bf16.gmra.mrb[0].mxu0 %v4458
      %v4514 = vpop.f32.mrb[0].mxu0
      %v4515 = vadd.f32 0.0, %v4514
      %v4516 = vpop.f32.mrb[0].mxu0
      %v4517 = vpop.f32.mrb[0].mxu0
      %v4518 = vadd.f32 0.0, %v4517
      %v4519 = vpop.f32.mrb[0].mxu0
      %4520 = vmatprep.mubr.bf16.mxu0 0
      %4521 = vmatmul.mubr.bf16.gmra.mrb[0].mxu0 %v4461
      %v4522 = vpop.f32.mrb[0].mxu0
      %v4523 = vadd.f32 0.0, %v4522
      %v4524 = vpop.f32.mrb[0].mxu0
      %v4525 = vpop.f32.mrb[0].mxu0
      %v4526 = vadd.f32 0.0, %v4525
      %v4527 = vpop.f32.mrb[0].mxu0
      %4528 = vmatprep.mubr.bf16.mxu0 0
      %4529 = vmatmul.mubr.bf16.gmra.mrb[0].mxu0 %v4464
      %v4530 = vpop.f32.mrb[0].mxu0
      %v4531 = vadd.f32 0.0, %v4530
      %v4532 = vpop.f32.mrb[0].mxu0
      %v4533 = vpop.f32.mrb[0].mxu0
      %v4534 = vadd.f32 0.0, %v4533
      %v4535 = vpop.f32.mrb[0].mxu0
      %4536 = vmatprep.mubr.bf16.mxu0 0
      %4537 = vmatmul.mubr.bf16.gmra.mrb[0].mxu0 %v4467
      %v4538 = vpop.f32.mrb[0].mxu0
      %v4539 = vadd.f32 0.0, %v4538
      %v4540 = vpop.f32.mrb[0].mxu0
      %v4541 = vpop.f32.mrb[0].mxu0
      %v4542 = vpop.f32.mrb[0].mxu0
      %4543 = vdwg.mxu0
      %v4553 = vrot.slane %v4507, 4
      %v4554 = vrot.slane %v4510, 4
      %v4555 = vsel %vm3775, %v4553, %v4554
      %v4556 = vrot.slane %v4515, 4
      %v4557 = vsel %vm3775, %v4554, %v4556
      %v4558 = vrot.slane %v4518, 4
      %v4559 = vsel %vm3775, %v4556, %v4558
      %v4560 = vrot.slane %v4523, 4
      %v4561 = vsel %vm3775, %v4558, %v4560
      %v4562 = vrot.slane %v4526, 4
      %v4563 = vsel %vm3775, %v4560, %v4562
      %v4564 = vrot.slane %v4531, 4
      %v4565 = vsel %vm3775, %v4562, %v4564
      %v4566 = vrot.slane %v4534, 4
      %v4567 = vsel %vm3775, %v4564, %v4566
      %v4568 = vrot.slane %v4539, 4
      %v4569 = vsel %vm3775, %v4566, %v4568
      %4579 = vst.msk [vmem:[#allocation2 + $0x88] sm:$0xf0] %vm3802, %v4553
      %4580 = vst.msk [vmem:[#allocation2 + $0x98] sm:$0xff] %vm2029, %v4555
      %4581 = vst.msk [vmem:[#allocation2 + $0xa8] sm:$0xff] %vm2029, %v4557
      %4582 = vst.msk [vmem:[#allocation2 + $0xb8] sm:$0xff] %vm2029, %v4559
      %4583 = vst.msk [vmem:[#allocation2 + $0xc8] sm:$0xff] %vm2029, %v4561
      %4584 = vst.msk [vmem:[#allocation2 + $0xd8] sm:$0xff] %vm2029, %v4563
      %4585 = vst.msk [vmem:[#allocation2 + $0xe8] sm:$0xff] %vm2029, %v4565
      %4586 = vst.msk [vmem:[#allocation2 + $0xf8] sm:$0xff] %vm2029, %v4567
      %4587 = vst.msk [vmem:[#allocation2 + $0x108] sm:$0xff] %vm2029, %v4569
      %4588 = vrot.lane.b32.xlu0 %v4211, 64
      %v4589 = vpop.permute.xlu0 %4588
      %4590 = vrot.lane.b32.xlu0 %v4213, 64
      %v4591 = vpop.permute.xlu0 %4590
      %4592 = vrot.lane.b32.xlu0 %v4215, 64
      %v4593 = vpop.permute.xlu0 %4592
      %4594 = vrot.lane.b32.xlu0 %v4217, 64
      %v4595 = vpop.permute.xlu0 %4594
      %4596 = vrot.lane.b32.xlu0 %v4216, 64
      %v4597 = vpop.permute.xlu0 %4596
      %4598 = vrot.lane.b32.xlu0 %v4224, 64
      %v4599 = vpop.permute.xlu0 %4598
      %4600 = vrot.lane.b32.xlu0 %v4226, 64
      %v4601 = vpop.permute.xlu0 %4600
      %4602 = vrot.lane.b32.xlu0 %v4228, 64
      %v4603 = vpop.permute.xlu0 %4602
      %4604 = vrot.lane.b32.xlu0 %v4230, 64
      %v4605 = vpop.permute.xlu0 %4604
      %4606 = vrot.lane.b32.xlu0 %v4229, 64
      %v4607 = vpop.permute.xlu0 %4606
      %v4609 = vsel %vm2029, %v4589, 0
      %v4612 = vsel %vm2029, %v4591, 0
      %v4615 = vsel %vm2029, %v4593, 0
      %v4618 = vsel %vm2029, %v4595, 0
      %v4621 = vsel %vm2029, %v4597, 0
      %v4624 = vsel %vm2029, %v4599, 0
      %v4627 = vsel %vm2029, %v4601, 0
      %v4630 = vsel %vm2029, %v4603, 0
      %v4633 = vsel %vm2029, %v4605, 0
      %v4636 = vsel %vm2029, %v4607, 0
      %4638 = vmatprep.subr.bf16.mxu0 0
      %4639 = vmatpush1.bf16.xpose.msra.mxu0 %v4624
      %4640 = vmatprep.subr.bf16.mxu0 0
      %4641 = vmatpush1.bf16.xpose.msra.mxu0 %v4627
      %4642 = vmatprep.subr.bf16.mxu0 0
      %4643 = vmatpush1.bf16.xpose.msra.mxu0 %v4630
      %4644 = vmatprep.subr.bf16.mxu0 0
      %4645 = vmatpush1.bf16.xpose.msra.mxu0 %v4633
      %4646 = vmatprep.subr.bf16.mxu0 0
      %4647 = vmatpush1.bf16.xpose.msra.mxu0 %v4636
      %4648 = vmatprep.subr.bf16.mxu0 0
      %4649 = vmatpush1.bf16.xpose.msra.mxu0 0
      %4650 = vmatprep.subr.bf16.mxu0 0
      %4651 = vmatpush1.bf16.xpose.msra.mxu0 0
      %4652 = vmatprep.subr.bf16.mxu0 0
      %4653 = vmatpush1.bf16.xpose.msra.mxu0 0
      %4654 = vmatprep.subr.bf16.mxu0 0
      %4655 = vmatpush1.bf16.xpose.msra.mxu0 0
      %4656 = vmatprep.subr.bf16.mxu0 0
      %4657 = vmatpush1.bf16.xpose.msra.mxu0 0
      %4658 = vmatprep.subr.bf16.mxu0 0
      %4659 = vmatpush1.bf16.xpose.msra.mxu0 0
      %4660 = vmatprep.subr.bf16.mxu0 0
      %4661 = vmatpush1.bf16.xpose.msra.mxu0 0
      %4662 = vmatprep.subr.bf16.mxu0 0
      %4663 = vmatpush1.bf16.xpose.msra.mxu0 0
      %4664 = vmatprep.subr.bf16.mxu0 0
      %4665 = vmatpush1.bf16.xpose.msra.mxu0 0
      %4666 = vmatprep.subr.bf16.mxu0 0
      %4667 = vmatpush1.bf16.xpose.msra.mxu0 0
      %4668 = vmatprep.subr.bf16.mxu0 0
      %4669 = vmatpush1.bf16.xpose.msra.mxu0 0
      %4670 = vmatprep.mubr.bf16.mxu0 0
      %4671 = vmatmul.mubr.bf16.gmra.mrb[0].mxu0 %v4609
      %v4672 = vpop.f32.mrb[0].mxu0
      %v4673 = vadd.f32 %v2020, %v4672
      %v4674 = vpop.f32.mrb[0].mxu0
      %v4675 = vpop.f32.mrb[0].mxu0
      %v4676 = vadd.f32 %v2021, %v4675
      %v4677 = vpop.f32.mrb[0].mxu0
      %4678 = vmatprep.mubr.bf16.mxu0 0
      %4679 = vmatmul.mubr.bf16.gmra.mrb[0].mxu0 %v4612
      %v4680 = vpop.f32.mrb[0].mxu0
      %v4681 = vadd.f32 %v2022, %v4680
      %v4682 = vpop.f32.mrb[0].mxu0
      %v4683 = vpop.f32.mrb[0].mxu0
      %v4684 = vadd.f32 %v2023, %v4683
      %v4685 = vpop.f32.mrb[0].mxu0
      %4686 = vmatprep.mubr.bf16.mxu0 0
      %4687 = vmatmul.mubr.bf16.gmra.mrb[0].mxu0 %v4615
      %v4688 = vpop.f32.mrb[0].mxu0
      %v4689 = vadd.f32 %v2024, %v4688
      %v4690 = vpop.f32.mrb[0].mxu0
      %v4691 = vpop.f32.mrb[0].mxu0
      %v4692 = vadd.f32 %v2025, %v4691
      %v4693 = vpop.f32.mrb[0].mxu0
      %4694 = vmatprep.mubr.bf16.mxu0 0
      %4695 = vmatmul.mubr.bf16.gmra.mrb[0].mxu0 %v4618
      %v4696 = vpop.f32.mrb[0].mxu0
      %v4697 = vadd.f32 %v2026, %v4696
      %v4698 = vpop.f32.mrb[0].mxu0
      %v4699 = vpop.f32.mrb[0].mxu0
      %v4700 = vadd.f32 %v2027, %v4699
      %v4701 = vpop.f32.mrb[0].mxu0
      %4702 = vmatprep.mubr.bf16.mxu0 0
      %4703 = vmatmul.mubr.bf16.gmra.mrb[0].mxu0 %v4621
      %v4704 = vpop.f32.mrb[0].mxu0
      %v4705 = vadd.f32 %v2028, %v4704
      %v4706 = vpop.f32.mrb[0].mxu0
      %v4707 = vpop.f32.mrb[0].mxu0
      %v4708 = vpop.f32.mrb[0].mxu0
      %4709 = vdwg.mxu0
      %v4710 = vsel %vm2132, %v4673, -inf
      %4711 = vmax.xlane.f32.xlu0 %v4710
      %v4712 = vpop.xlane.xlu0 %4711
      %v4713 = vsel %vm2132, %v4676, -inf
      %4714 = vmax.xlane.f32.xlu0 %v4713
      %v4715 = vpop.xlane.xlu0 %4714
      %v4716 = vsel %vm2132, %v4681, -inf
      %4717 = vmax.xlane.f32.xlu0 %v4716
      %v4718 = vpop.xlane.xlu0 %4717
      %v4719 = vsel %vm2132, %v4684, -inf
      %4720 = vmax.xlane.f32.xlu0 %v4719
      %v4721 = vpop.xlane.xlu0 %4720
      %v4722 = vsel %vm2132, %v4689, -inf
      %4723 = vmax.xlane.f32.xlu0 %v4722
      %v4724 = vpop.xlane.xlu0 %4723
      %v4725 = vsel %vm2132, %v4692, -inf
      %4726 = vmax.xlane.f32.xlu0 %v4725
      %v4727 = vpop.xlane.xlu0 %4726
      %v4728 = vsel %vm2132, %v4697, -inf
      %4729 = vmax.xlane.f32.xlu0 %v4728
      %v4730 = vpop.xlane.xlu0 %4729
      %v4731 = vsel %vm2132, %v4700, -inf
      %4732 = vmax.xlane.f32.xlu0 %v4731
      %v4733 = vpop.xlane.xlu0 %4732
      %v4734 = vsel %vm2157, %v4705, -inf
      %4735 = vmax.xlane.f32.xlu0 %v4734
      %v4736 = vpop.xlane.xlu0 %4735
      %v4737 = vsub.f32 %v4673, %v4712
      %v4738 = vsub.f32 %v4676, %v4715
      %v4739 = vsub.f32 %v4681, %v4718
      %v4740 = vsub.f32 %v4684, %v4721
      %v4741 = vsub.f32 %v4689, %v4724
      %v4742 = vsub.f32 %v4692, %v4727
      %v4743 = vsub.f32 %v4697, %v4730
      %v4744 = vsub.f32 %v4700, %v4733
      %v4745 = vsub.f32 %v4705, %v4736
      %v4746 = vmul.f32 %v4737, 1.442695
      %v4747 = vpow.pop %v4746
      %v4748 = vmul.f32 %v4738, 1.442695
      %v4749 = vpow.pop %v4748
      %v4750 = vmul.f32 %v4739, 1.442695
      %v4751 = vpow.pop %v4750
      %v4752 = vmul.f32 %v4740, 1.442695
      %v4753 = vpow.pop %v4752
      %v4754 = vmul.f32 %v4741, 1.442695
      %v4755 = vpow.pop %v4754
      %v4756 = vmul.f32 %v4742, 1.442695
      %v4757 = vpow.pop %v4756
      %v4758 = vmul.f32 %v4743, 1.442695
      %v4759 = vpow.pop %v4758
      %v4760 = vmul.f32 %v4744, 1.442695
      %v4761 = vpow.pop %v4760
      %v4762 = vmul.f32 %v4745, 1.442695
      %v4763 = vpow.pop %v4762
      %v4764 = vsel %vm2132, %v4747, 0.0
      %4765 = vadd.xlane.f32.xlu0 %v4764
      %v4766 = vpop.xlane.xlu0 %4765
      %v4767 = vsel %vm2132, %v4749, 0.0
      %4768 = vadd.xlane.f32.xlu0 %v4767
      %v4769 = vpop.xlane.xlu0 %4768
      %v4770 = vsel %vm2132, %v4751, 0.0
      %4771 = vadd.xlane.f32.xlu0 %v4770
      %v4772 = vpop.xlane.xlu0 %4771
      %v4773 = vsel %vm2132, %v4753, 0.0
      %4774 = vadd.xlane.f32.xlu0 %v4773
      %v4775 = vpop.xlane.xlu0 %4774
      %v4776 = vsel %vm2132, %v4755, 0.0
      %4777 = vadd.xlane.f32.xlu0 %v4776
      %v4778 = vpop.xlane.xlu0 %4777
      %v4779 = vsel %vm2132, %v4757, 0.0
      %4780 = vadd.xlane.f32.xlu0 %v4779
      %v4781 = vpop.xlane.xlu0 %4780
      %v4782 = vsel %vm2132, %v4759, 0.0
      %4783 = vadd.xlane.f32.xlu0 %v4782
      %v4784 = vpop.xlane.xlu0 %4783
      %v4785 = vsel %vm2132, %v4761, 0.0
      %4786 = vadd.xlane.f32.xlu0 %v4785
      %v4787 = vpop.xlane.xlu0 %4786
      %v4788 = vsel %vm2157, %v4763, 0.0
      %4789 = vadd.xlane.f32.xlu0 %v4788
      %v4790 = vpop.xlane.xlu0 %4789
      %v4791 = vrcp.pop %v4766
      %v4792 = vrcp.pop %v4769
      %v4793 = vrcp.pop %v4772
      %v4794 = vrcp.pop %v4775
      %v4795 = vrcp.pop %v4778
      %v4796 = vrcp.pop %v4781
      %v4797 = vrcp.pop %v4784
      %v4798 = vrcp.pop %v4787
      %v4799 = vrcp.pop %v4790
      %v4800 = vmul.f32 %v4747, %v4791
      %v4801 = vmul.f32 %v4749, %v4792
      %v4802 = vmul.f32 %v4751, %v4793
      %v4803 = vmul.f32 %v4753, %v4794
      %v4804 = vmul.f32 %v4755, %v4795
      %v4805 = vmul.f32 %v4757, %v4796
      %v4806 = vmul.f32 %v4759, %v4797
      %v4807 = vmul.f32 %v4761, %v4798
      %v4808 = vmul.f32 %v4763, %v4799
      %v4809 = vpack.c.bf16 %v4801, %v4800
      %v4810 = vpack.c.bf16 %v4803, %v4802
      %v4811 = vpack.c.bf16 %v4805, %v4804
      %v4812 = vpack.c.bf16 %v4807, %v4806
      %v4813 = vpack.c.bf16 %v4808, %v4808
      %4814 = vrot.lane.b32.xlu0 %v4443, 64
      %v4815 = vpop.permute.xlu0 %4814
      %4816 = vrot.lane.b32.xlu0 %v4445, 64
      %v4817 = vpop.permute.xlu0 %4816
      %4818 = vrot.lane.b32.xlu0 %v4447, 64
      %v4819 = vpop.permute.xlu0 %4818
      %4820 = vrot.lane.b32.xlu0 %v4449, 64
      %v4821 = vpop.permute.xlu0 %4820
      %4822 = vrot.lane.b32.xlu0 %v4448, 64
      %v4823 = vpop.permute.xlu0 %4822
      %v4829 = vsel %vm2132, %v4809, 0
      %v4832 = vsel %vm2132, %v4810, 0
      %v4835 = vsel %vm2132, %v4811, 0
      %v4838 = vsel %vm2132, %v4812, 0
      %v4841 = vsel %vm2132, %v4813, 0
      %v4844 = vsel %vm2253, %v4823, 0
      %4846 = vmatprep.subr.bf16.mxu0 0
      %4847 = vmatpush1.bf16.msra.mxu0 %v4815
      %4848 = vmatprep.subr.bf16.mxu0 0
      %4849 = vmatpush1.bf16.msra.mxu0 %v4817
      %4850 = vmatprep.subr.bf16.mxu0 0
      %4851 = vmatpush1.bf16.msra.mxu0 %v4819
      %4852 = vmatprep.subr.bf16.mxu0 0
      %4853 = vmatpush1.bf16.msra.mxu0 %v4821
      %4854 = vmatprep.subr.bf16.mxu0 0
      %4855 = vmatpush1.bf16.msra.mxu0 %v4844
      %4856 = vmatprep.subr.bf16.mxu0 0
      %4857 = vmatpush1.bf16.msra.mxu0 0
      %4858 = vmatprep.subr.bf16.mxu0 0
      %4859 = vmatpush1.bf16.msra.mxu0 0
      %4860 = vmatprep.subr.bf16.mxu0 0
      %4861 = vmatpush1.bf16.msra.mxu0 0
      %4862 = vmatprep.subr.bf16.mxu0 0
      %4863 = vmatpush1.bf16.msra.mxu0 0
      %4864 = vmatprep.subr.bf16.mxu0 0
      %4865 = vmatpush1.bf16.msra.mxu0 0
      %4866 = vmatprep.subr.bf16.mxu0 0
      %4867 = vmatpush1.bf16.msra.mxu0 0
      %4868 = vmatprep.subr.bf16.mxu0 0
      %4869 = vmatpush1.bf16.msra.mxu0 0
      %4870 = vmatprep.subr.bf16.mxu0 0
      %4871 = vmatpush1.bf16.msra.mxu0 0
      %4872 = vmatprep.subr.bf16.mxu0 0
      %4873 = vmatpush1.bf16.msra.mxu0 0
      %4874 = vmatprep.subr.bf16.mxu0 0
      %4875 = vmatpush1.bf16.msra.mxu0 0
      %4876 = vmatprep.subr.bf16.mxu0 0
      %4877 = vmatpush1.bf16.msra.mxu0 0
      %4878 = vmatprep.mubr.bf16.mxu0 0
      %4879 = vmatmul.mubr.bf16.gmra.mrb[0].mxu0 %v4829
      %v4880 = vpop.f32.mrb[0].mxu0
      %v4881 = vadd.f32 0.0, %v4880
      %v4882 = vpop.f32.mrb[0].mxu0
      %v4883 = vpop.f32.mrb[0].mxu0
      %v4884 = vadd.f32 0.0, %v4883
      %v4885 = vpop.f32.mrb[0].mxu0
      %4886 = vmatprep.mubr.bf16.mxu0 0
      %4887 = vmatmul.mubr.bf16.gmra.mrb[0].mxu0 %v4832
      %v4888 = vpop.f32.mrb[0].mxu0
      %v4889 = vadd.f32 0.0, %v4888
      %v4890 = vpop.f32.mrb[0].mxu0
      %v4891 = vpop.f32.mrb[0].mxu0
      %v4892 = vadd.f32 0.0, %v4891
      %v4893 = vpop.f32.mrb[0].mxu0
      %4894 = vmatprep.mubr.bf16.mxu0 0
      %4895 = vmatmul.mubr.bf16.gmra.mrb[0].mxu0 %v4835
      %v4896 = vpop.f32.mrb[0].mxu0
      %v4897 = vadd.f32 0.0, %v4896
      %v4898 = vpop.f32.mrb[0].mxu0
      %v4899 = vpop.f32.mrb[0].mxu0
      %v4900 = vadd.f32 0.0, %v4899
      %v4901 = vpop.f32.mrb[0].mxu0
      %4902 = vmatprep.mubr.bf16.mxu0 0
      %4903 = vmatmul.mubr.bf16.gmra.mrb[0].mxu0 %v4838
      %v4904 = vpop.f32.mrb[0].mxu0
      %v4905 = vadd.f32 0.0, %v4904
      %v4906 = vpop.f32.mrb[0].mxu0
      %v4907 = vpop.f32.mrb[0].mxu0
      %v4908 = vadd.f32 0.0, %v4907
      %v4909 = vpop.f32.mrb[0].mxu0
      %4910 = vmatprep.mubr.bf16.mxu0 0
      %4911 = vmatmul.mubr.bf16.gmra.mrb[0].mxu0 %v4841
      %v4912 = vpop.f32.mrb[0].mxu0
      %v4913 = vadd.f32 0.0, %v4912
      %v4914 = vpop.f32.mrb[0].mxu0
      %v4915 = vpop.f32.mrb[0].mxu0
      %v4916 = vpop.f32.mrb[0].mxu0
      %4917 = vdwg.mxu0
      %v4927 = vrot.slane %v4881, 4
      %v4928 = vrot.slane %v4884, 4
      %v4929 = vsel %vm3775, %v4927, %v4928
      %v4930 = vrot.slane %v4889, 4
      %v4931 = vsel %vm3775, %v4928, %v4930
      %v4932 = vrot.slane %v4892, 4
      %v4933 = vsel %vm3775, %v4930, %v4932
      %v4934 = vrot.slane %v4897, 4
      %v4935 = vsel %vm3775, %v4932, %v4934
      %v4936 = vrot.slane %v4900, 4
      %v4937 = vsel %vm3775, %v4934, %v4936
      %v4938 = vrot.slane %v4905, 4
      %v4939 = vsel %vm3775, %v4936, %v4938
      %v4940 = vrot.slane %v4908, 4
      %v4941 = vsel %vm3775, %v4938, %v4940
      %v4942 = vrot.slane %v4913, 4
      %v4943 = vsel %vm3775, %v4940, %v4942
      %4944 = vrot.lane.b32.xlu0 %v4927, 64
      %v4945 = vpop.permute.xlu0 %4944
      %4946 = vrot.lane.b32.xlu0 %v4929, 64
      %v4947 = vpop.permute.xlu0 %4946
      %4948 = vrot.lane.b32.xlu0 %v4931, 64
      %v4949 = vpop.permute.xlu0 %4948
      %4950 = vrot.lane.b32.xlu0 %v4933, 64
      %v4951 = vpop.permute.xlu0 %4950
      %4952 = vrot.lane.b32.xlu0 %v4935, 64
      %v4953 = vpop.permute.xlu0 %4952
      %4954 = vrot.lane.b32.xlu0 %v4937, 64
      %v4955 = vpop.permute.xlu0 %4954
      %4956 = vrot.lane.b32.xlu0 %v4939, 64
      %v4957 = vpop.permute.xlu0 %4956
      %4958 = vrot.lane.b32.xlu0 %v4941, 64
      %v4959 = vpop.permute.xlu0 %4958
      %4960 = vrot.lane.b32.xlu0 %v4943, 64
      %v4961 = vpop.permute.xlu0 %4960
      %4971 = vst.msk [vmem:[#allocation2 + $0x88] sm:$0xf0] %vm4195, %v4945
      %4972 = vst.msk [vmem:[#allocation2 + $0x98] sm:$0xff] %vm2720, %v4947
      %4973 = vst.msk [vmem:[#allocation2 + $0xa8] sm:$0xff] %vm2720, %v4949
      %4974 = vst.msk [vmem:[#allocation2 + $0xb8] sm:$0xff] %vm2720, %v4951
      %4975 = vst.msk [vmem:[#allocation2 + $0xc8] sm:$0xff] %vm2720, %v4953
      %4976 = vst.msk [vmem:[#allocation2 + $0xd8] sm:$0xff] %vm2720, %v4955
      %4977 = vst.msk [vmem:[#allocation2 + $0xe8] sm:$0xff] %vm2720, %v4957
      %4978 = vst.msk [vmem:[#allocation2 + $0xf8] sm:$0xff] %vm2720, %v4959
      %4979 = vst.msk [vmem:[#allocation2 + $0x108] sm:$0xff] %vm2720, %v4961
      %vm4984 = vcmask 1043456
      %v4985 = vrot.slane %v1905, 4
      %v4986 = vrot.slane %v1911, 4
      %v4987 = vsel %vm4984, %v4985, %v4986
      %v4988 = vrot.slane %v1917, 4
      %v4989 = vsel %vm4984, %v4986, %v4988
      %v4990 = vrot.slane %v1923, 4
      %v4991 = vsel %vm4984, %v4988, %v4990
      %v4992 = vrot.slane %v1929, 4
      %v4993 = vsel %vm4984, %v4990, %v4992
      %v4998 = vrot.slane %v1907, 4
      %v4999 = vrot.slane %v1913, 4
      %v5000 = vsel %vm4984, %v4998, %v4999
      %v5001 = vrot.slane %v1919, 4
      %v5002 = vsel %vm4984, %v4999, %v5001
      %v5003 = vrot.slane %v1925, 4
      %v5004 = vsel %vm4984, %v5001, %v5003
      %v5005 = vrot.slane %v1931, 4
      %v5006 = vsel %vm4984, %v5003, %v5005
      %v5008 = vsel %vm2029, %v4987, 0
      %v5011 = vsel %vm2029, %v4989, 0
      %v5014 = vsel %vm2029, %v4991, 0
      %v5017 = vsel %vm2029, %v4993, 0
      %v5020 = vsel %vm2029, %v4992, 0
      %v5023 = vsel %vm2029, %v5000, 0
      %v5026 = vsel %vm2029, %v5002, 0
      %v5029 = vsel %vm2029, %v5004, 0
      %v5032 = vsel %vm2029, %v5006, 0
      %v5035 = vsel %vm2029, %v5005, 0
      %5037 = vmatprep.subr.bf16.mxu0 0
      %5038 = vmatpush1.bf16.xpose.msra.mxu0 %v5023
      %5039 = vmatprep.subr.bf16.mxu0 0
      %5040 = vmatpush1.bf16.xpose.msra.mxu0 %v5026
      %5041 = vmatprep.subr.bf16.mxu0 0
      %5042 = vmatpush1.bf16.xpose.msra.mxu0 %v5029
      %5043 = vmatprep.subr.bf16.mxu0 0
      %5044 = vmatpush1.bf16.xpose.msra.mxu0 %v5032
      %5045 = vmatprep.subr.bf16.mxu0 0
      %5046 = vmatpush1.bf16.xpose.msra.mxu0 %v5035
      %5047 = vmatprep.subr.bf16.mxu0 0
      %5048 = vmatpush1.bf16.xpose.msra.mxu0 0
      %5049 = vmatprep.subr.bf16.mxu0 0
      %5050 = vmatpush1.bf16.xpose.msra.mxu0 0
      %5051 = vmatprep.subr.bf16.mxu0 0
      %5052 = vmatpush1.bf16.xpose.msra.mxu0 0
      %5053 = vmatprep.subr.bf16.mxu0 0
      %5054 = vmatpush1.bf16.xpose.msra.mxu0 0
      %5055 = vmatprep.subr.bf16.mxu0 0
      %5056 = vmatpush1.bf16.xpose.msra.mxu0 0
      %5057 = vmatprep.subr.bf16.mxu0 0
      %5058 = vmatpush1.bf16.xpose.msra.mxu0 0
      %5059 = vmatprep.subr.bf16.mxu0 0
      %5060 = vmatpush1.bf16.xpose.msra.mxu0 0
      %5061 = vmatprep.subr.bf16.mxu0 0
      %5062 = vmatpush1.bf16.xpose.msra.mxu0 0
      %5063 = vmatprep.subr.bf16.mxu0 0
      %5064 = vmatpush1.bf16.xpose.msra.mxu0 0
      %5065 = vmatprep.subr.bf16.mxu0 0
      %5066 = vmatpush1.bf16.xpose.msra.mxu0 0
      %5067 = vmatprep.subr.bf16.mxu0 0
      %5068 = vmatpush1.bf16.xpose.msra.mxu0 0
      %5069 = vmatprep.mubr.bf16.mxu0 0
      %5070 = vmatmul.mubr.bf16.gmra.mrb[0].mxu0 %v5008
      %v5071 = vpop.f32.mrb[0].mxu0
      %v5072 = vadd.f32 %v2020, %v5071
      %v5073 = vpop.f32.mrb[0].mxu0
      %v5074 = vpop.f32.mrb[0].mxu0
      %v5075 = vadd.f32 %v2021, %v5074
      %v5076 = vpop.f32.mrb[0].mxu0
      %5077 = vmatprep.mubr.bf16.mxu0 0
      %5078 = vmatmul.mubr.bf16.gmra.mrb[0].mxu0 %v5011
      %v5079 = vpop.f32.mrb[0].mxu0
      %v5080 = vadd.f32 %v2022, %v5079
      %v5081 = vpop.f32.mrb[0].mxu0
      %v5082 = vpop.f32.mrb[0].mxu0
      %v5083 = vadd.f32 %v2023, %v5082
      %v5084 = vpop.f32.mrb[0].mxu0
      %5085 = vmatprep.mubr.bf16.mxu0 0
      %5086 = vmatmul.mubr.bf16.gmra.mrb[0].mxu0 %v5014
      %v5087 = vpop.f32.mrb[0].mxu0
      %v5088 = vadd.f32 %v2024, %v5087
      %v5089 = vpop.f32.mrb[0].mxu0
      %v5090 = vpop.f32.mrb[0].mxu0
      %v5091 = vadd.f32 %v2025, %v5090
      %v5092 = vpop.f32.mrb[0].mxu0
      %5093 = vmatprep.mubr.bf16.mxu0 0
      %5094 = vmatmul.mubr.bf16.gmra.mrb[0].mxu0 %v5017
      %v5095 = vpop.f32.mrb[0].mxu0
      %v5096 = vadd.f32 %v2026, %v5095
      %v5097 = vpop.f32.mrb[0].mxu0
      %v5098 = vpop.f32.mrb[0].mxu0
      %v5099 = vadd.f32 %v2027, %v5098
      %v5100 = vpop.f32.mrb[0].mxu0
      %5101 = vmatprep.mubr.bf16.mxu0 0
      %5102 = vmatmul.mubr.bf16.gmra.mrb[0].mxu0 %v5020
      %v5103 = vpop.f32.mrb[0].mxu0
      %v5104 = vadd.f32 %v2028, %v5103
      %v5105 = vpop.f32.mrb[0].mxu0
      %v5106 = vpop.f32.mrb[0].mxu0
      %v5107 = vpop.f32.mrb[0].mxu0
      %5108 = vdwg.mxu0
      %v5109 = vsel %vm2132, %v5072, -inf
      %5110 = vmax.xlane.f32.xlu0 %v5109
      %v5111 = vpop.xlane.xlu0 %5110
      %v5112 = vsel %vm2132, %v5075, -inf
      %5113 = vmax.xlane.f32.xlu0 %v5112
      %v5114 = vpop.xlane.xlu0 %5113
      %v5115 = vsel %vm2132, %v5080, -inf
      %5116 = vmax.xlane.f32.xlu0 %v5115
      %v5117 = vpop.xlane.xlu0 %5116
      %v5118 = vsel %vm2132, %v5083, -inf
      %5119 = vmax.xlane.f32.xlu0 %v5118
      %v5120 = vpop.xlane.xlu0 %5119
      %v5121 = vsel %vm2132, %v5088, -inf
      %5122 = vmax.xlane.f32.xlu0 %v5121
      %v5123 = vpop.xlane.xlu0 %5122
      %v5124 = vsel %vm2132, %v5091, -inf
      %5125 = vmax.xlane.f32.xlu0 %v5124
      %v5126 = vpop.xlane.xlu0 %5125
      %v5127 = vsel %vm2132, %v5096, -inf
      %5128 = vmax.xlane.f32.xlu0 %v5127
      %v5129 = vpop.xlane.xlu0 %5128
      %v5130 = vsel %vm2132, %v5099, -inf
      %5131 = vmax.xlane.f32.xlu0 %v5130
      %v5132 = vpop.xlane.xlu0 %5131
      %v5133 = vsel %vm2157, %v5104, -inf
      %5134 = vmax.xlane.f32.xlu0 %v5133
      %v5135 = vpop.xlane.xlu0 %5134
      %v5136 = vsub.f32 %v5072, %v5111
      %v5137 = vsub.f32 %v5075, %v5114
      %v5138 = vsub.f32 %v5080, %v5117
      %v5139 = vsub.f32 %v5083, %v5120
      %v5140 = vsub.f32 %v5088, %v5123
      %v5141 = vsub.f32 %v5091, %v5126
      %v5142 = vsub.f32 %v5096, %v5129
      %v5143 = vsub.f32 %v5099, %v5132
      %v5144 = vsub.f32 %v5104, %v5135
      %v5145 = vmul.f32 %v5136, 1.442695
      %v5146 = vpow.pop %v5145
      %v5147 = vmul.f32 %v5137, 1.442695
      %v5148 = vpow.pop %v5147
      %v5149 = vmul.f32 %v5138, 1.442695
      %v5150 = vpow.pop %v5149
      %v5151 = vmul.f32 %v5139, 1.442695
      %v5152 = vpow.pop %v5151
      %v5153 = vmul.f32 %v5140, 1.442695
      %v5154 = vpow.pop %v5153
      %v5155 = vmul.f32 %v5141, 1.442695
      %v5156 = vpow.pop %v5155
      %v5157 = vmul.f32 %v5142, 1.442695
      %v5158 = vpow.pop %v5157
      %v5159 = vmul.f32 %v5143, 1.442695
      %v5160 = vpow.pop %v5159
      %v5161 = vmul.f32 %v5144, 1.442695
      %v5162 = vpow.pop %v5161
      %v5163 = vsel %vm2132, %v5146, 0.0
      %5164 = vadd.xlane.f32.xlu0 %v5163
      %v5165 = vpop.xlane.xlu0 %5164
      %v5166 = vsel %vm2132, %v5148, 0.0
      %5167 = vadd.xlane.f32.xlu0 %v5166
      %v5168 = vpop.xlane.xlu0 %5167
      %v5169 = vsel %vm2132, %v5150, 0.0
      %5170 = vadd.xlane.f32.xlu0 %v5169
      %v5171 = vpop.xlane.xlu0 %5170
      %v5172 = vsel %vm2132, %v5152, 0.0
      %5173 = vadd.xlane.f32.xlu0 %v5172
      %v5174 = vpop.xlane.xlu0 %5173
      %v5175 = vsel %vm2132, %v5154, 0.0
      %5176 = vadd.xlane.f32.xlu0 %v5175
      %v5177 = vpop.xlane.xlu0 %5176
      %v5178 = vsel %vm2132, %v5156, 0.0
      %5179 = vadd.xlane.f32.xlu0 %v5178
      %v5180 = vpop.xlane.xlu0 %5179
      %v5181 = vsel %vm2132, %v5158, 0.0
      %5182 = vadd.xlane.f32.xlu0 %v5181
      %v5183 = vpop.xlane.xlu0 %5182
      %v5184 = vsel %vm2132, %v5160, 0.0
      %5185 = vadd.xlane.f32.xlu0 %v5184
      %v5186 = vpop.xlane.xlu0 %5185
      %v5187 = vsel %vm2157, %v5162, 0.0
      %5188 = vadd.xlane.f32.xlu0 %v5187
      %v5189 = vpop.xlane.xlu0 %5188
      %v5190 = vrcp.pop %v5165
      %v5191 = vrcp.pop %v5168
      %v5192 = vrcp.pop %v5171
      %v5193 = vrcp.pop %v5174
      %v5194 = vrcp.pop %v5177
      %v5195 = vrcp.pop %v5180
      %v5196 = vrcp.pop %v5183
      %v5197 = vrcp.pop %v5186
      %v5198 = vrcp.pop %v5189
      %v5199 = vmul.f32 %v5146, %v5190
      %v5200 = vmul.f32 %v5148, %v5191
      %v5201 = vmul.f32 %v5150, %v5192
      %v5202 = vmul.f32 %v5152, %v5193
      %v5203 = vmul.f32 %v5154, %v5194
      %v5204 = vmul.f32 %v5156, %v5195
      %v5205 = vmul.f32 %v5158, %v5196
      %v5206 = vmul.f32 %v5160, %v5197
      %v5207 = vmul.f32 %v5162, %v5198
      %v5208 = vpack.c.bf16 %v5200, %v5199
      %v5209 = vpack.c.bf16 %v5202, %v5201
      %v5210 = vpack.c.bf16 %v5204, %v5203
      %v5211 = vpack.c.bf16 %v5206, %v5205
      %v5212 = vpack.c.bf16 %v5207, %v5207
      %v5217 = vrot.slane %v1909, 4
      %v5218 = vrot.slane %v1915, 4
      %v5219 = vsel %vm4984, %v5217, %v5218
      %v5220 = vrot.slane %v1921, 4
      %v5221 = vsel %vm4984, %v5218, %v5220
      %v5222 = vrot.slane %v1927, 4
      %v5223 = vsel %vm4984, %v5220, %v5222
      %v5224 = vrot.slane %v1933, 4
      %v5225 = vsel %vm4984, %v5222, %v5224
      %v5231 = vsel %vm2132, %v5208, 0
      %v5234 = vsel %vm2132, %v5209, 0
      %v5237 = vsel %vm2132, %v5210, 0
      %v5240 = vsel %vm2132, %v5211, 0
      %v5243 = vsel %vm2132, %v5212, 0
      %v5246 = vsel %vm2253, %v5224, 0
      %5248 = vmatprep.subr.bf16.mxu0 0
      %5249 = vmatpush1.bf16.msra.mxu0 %v5219
      %5250 = vmatprep.subr.bf16.mxu0 0
      %5251 = vmatpush1.bf16.msra.mxu0 %v5221
      %5252 = vmatprep.subr.bf16.mxu0 0
      %5253 = vmatpush1.bf16.msra.mxu0 %v5223
      %5254 = vmatprep.subr.bf16.mxu0 0
      %5255 = vmatpush1.bf16.msra.mxu0 %v5225
      %5256 = vmatprep.subr.bf16.mxu0 0
      %5257 = vmatpush1.bf16.msra.mxu0 %v5246
      %5258 = vmatprep.subr.bf16.mxu0 0
      %5259 = vmatpush1.bf16.msra.mxu0 0
      %5260 = vmatprep.subr.bf16.mxu0 0
      %5261 = vmatpush1.bf16.msra.mxu0 0
      %5262 = vmatprep.subr.bf16.mxu0 0
      %5263 = vmatpush1.bf16.msra.mxu0 0
      %5264 = vmatprep.subr.bf16.mxu0 0
      %5265 = vmatpush1.bf16.msra.mxu0 0
      %5266 = vmatprep.subr.bf16.mxu0 0
      %5267 = vmatpush1.bf16.msra.mxu0 0
      %5268 = vmatprep.subr.bf16.mxu0 0
      %5269 = vmatpush1.bf16.msra.mxu0 0
      %5270 = vmatprep.subr.bf16.mxu0 0
      %5271 = vmatpush1.bf16.msra.mxu0 0
      %5272 = vmatprep.subr.bf16.mxu0 0
      %5273 = vmatpush1.bf16.msra.mxu0 0
      %5274 = vmatprep.subr.bf16.mxu0 0
      %5275 = vmatpush1.bf16.msra.mxu0 0
      %5276 = vmatprep.subr.bf16.mxu0 0
      %5277 = vmatpush1.bf16.msra.mxu0 0
      %5278 = vmatprep.subr.bf16.mxu0 0
      %5279 = vmatpush1.bf16.msra.mxu0 0
      %5280 = vmatprep.mubr.bf16.mxu0 0
      %5281 = vmatmul.mubr.bf16.gmra.mrb[0].mxu0 %v5231
      %v5282 = vpop.f32.mrb[0].mxu0
      %v5283 = vadd.f32 0.0, %v5282
      %v5284 = vpop.f32.mrb[0].mxu0
      %v5285 = vpop.f32.mrb[0].mxu0
      %v5286 = vadd.f32 0.0, %v5285
      %v5287 = vpop.f32.mrb[0].mxu0
      %5288 = vmatprep.mubr.bf16.mxu0 0
      %5289 = vmatmul.mubr.bf16.gmra.mrb[0].mxu0 %v5234
      %v5290 = vpop.f32.mrb[0].mxu0
      %v5291 = vadd.f32 0.0, %v5290
      %v5292 = vpop.f32.mrb[0].mxu0
      %v5293 = vpop.f32.mrb[0].mxu0
      %v5294 = vadd.f32 0.0, %v5293
      %v5295 = vpop.f32.mrb[0].mxu0
      %5296 = vmatprep.mubr.bf16.mxu0 0
      %5297 = vmatmul.mubr.bf16.gmra.mrb[0].mxu0 %v5237
      %v5298 = vpop.f32.mrb[0].mxu0
      %v5299 = vadd.f32 0.0, %v5298
      %v5300 = vpop.f32.mrb[0].mxu0
      %v5301 = vpop.f32.mrb[0].mxu0
      %v5302 = vadd.f32 0.0, %v5301
      %v5303 = vpop.f32.mrb[0].mxu0
      %5304 = vmatprep.mubr.bf16.mxu0 0
      %5305 = vmatmul.mubr.bf16.gmra.mrb[0].mxu0 %v5240
      %v5306 = vpop.f32.mrb[0].mxu0
      %v5307 = vadd.f32 0.0, %v5306
      %v5308 = vpop.f32.mrb[0].mxu0
      %v5309 = vpop.f32.mrb[0].mxu0
      %v5310 = vadd.f32 0.0, %v5309
      %v5311 = vpop.f32.mrb[0].mxu0
      %5312 = vmatprep.mubr.bf16.mxu0 0
      %5313 = vmatmul.mubr.bf16.gmra.mrb[0].mxu0 %v5243
      %v5314 = vpop.f32.mrb[0].mxu0
      %v5315 = vadd.f32 0.0, %v5314
      %v5316 = vpop.f32.mrb[0].mxu0
      %v5317 = vpop.f32.mrb[0].mxu0
      %v5318 = vpop.f32.mrb[0].mxu0
      %5319 = vdwg.mxu0
      %5320 = vst.msk [vmem:[#allocation2 + $0x110] sm:$0xff] %vm2029, %v5283
      %5321 = vst.msk [vmem:[#allocation2 + $0x120] sm:$0xff] %vm2029, %v5286
      %5322 = vst.msk [vmem:[#allocation2 + $0x130] sm:$0xff] %vm2029, %v5291
      %5323 = vst.msk [vmem:[#allocation2 + $0x140] sm:$0xff] %vm2029, %v5294
      %5324 = vst.msk [vmem:[#allocation2 + $0x150] sm:$0xff] %vm2029, %v5299
      %5325 = vst.msk [vmem:[#allocation2 + $0x160] sm:$0xff] %vm2029, %v5302
      %5326 = vst.msk [vmem:[#allocation2 + $0x170] sm:$0xff] %vm2029, %v5307
      %5327 = vst.msk [vmem:[#allocation2 + $0x180] sm:$0xff] %vm2029, %v5310
      %5328 = vst.msk [vmem:[#allocation2 + $0x190] sm:$0xf] %vm2337, %v5315
      %5329 = vrot.lane.b32.xlu0 %v4987, 64
      %v5330 = vpop.permute.xlu0 %5329
      %5331 = vrot.lane.b32.xlu0 %v4989, 64
      %v5332 = vpop.permute.xlu0 %5331
      %5333 = vrot.lane.b32.xlu0 %v4991, 64
      %v5334 = vpop.permute.xlu0 %5333
      %5335 = vrot.lane.b32.xlu0 %v4993, 64
      %v5336 = vpop.permute.xlu0 %5335
      %5337 = vrot.lane.b32.xlu0 %v4992, 64
      %v5338 = vpop.permute.xlu0 %5337
      %5339 = vrot.lane.b32.xlu0 %v5000, 64
      %v5340 = vpop.permute.xlu0 %5339
      %5341 = vrot.lane.b32.xlu0 %v5002, 64
      %v5342 = vpop.permute.xlu0 %5341
      %5343 = vrot.lane.b32.xlu0 %v5004, 64
      %v5344 = vpop.permute.xlu0 %5343
      %5345 = vrot.lane.b32.xlu0 %v5006, 64
      %v5346 = vpop.permute.xlu0 %5345
      %5347 = vrot.lane.b32.xlu0 %v5005, 64
      %v5348 = vpop.permute.xlu0 %5347
      %v5350 = vsel %vm2029, %v5330, 0
      %v5353 = vsel %vm2029, %v5332, 0
      %v5356 = vsel %vm2029, %v5334, 0
      %v5359 = vsel %vm2029, %v5336, 0
      %v5362 = vsel %vm2029, %v5338, 0
      %v5365 = vsel %vm2029, %v5340, 0
      %v5368 = vsel %vm2029, %v5342, 0
      %v5371 = vsel %vm2029, %v5344, 0
      %v5374 = vsel %vm2029, %v5346, 0
      %v5377 = vsel %vm2029, %v5348, 0
      %5379 = vmatprep.subr.bf16.mxu0 0
      %5380 = vmatpush1.bf16.xpose.msra.mxu0 %v5365
      %5381 = vmatprep.subr.bf16.mxu0 0
      %5382 = vmatpush1.bf16.xpose.msra.mxu0 %v5368
      %5383 = vmatprep.subr.bf16.mxu0 0
      %5384 = vmatpush1.bf16.xpose.msra.mxu0 %v5371
      %5385 = vmatprep.subr.bf16.mxu0 0
      %5386 = vmatpush1.bf16.xpose.msra.mxu0 %v5374
      %5387 = vmatprep.subr.bf16.mxu0 0
      %5388 = vmatpush1.bf16.xpose.msra.mxu0 %v5377
      %5389 = vmatprep.subr.bf16.mxu0 0
      %5390 = vmatpush1.bf16.xpose.msra.mxu0 0
      %5391 = vmatprep.subr.bf16.mxu0 0
      %5392 = vmatpush1.bf16.xpose.msra.mxu0 0
      %5393 = vmatprep.subr.bf16.mxu0 0
      %5394 = vmatpush1.bf16.xpose.msra.mxu0 0
      %5395 = vmatprep.subr.bf16.mxu0 0
      %5396 = vmatpush1.bf16.xpose.msra.mxu0 0
      %5397 = vmatprep.subr.bf16.mxu0 0
      %5398 = vmatpush1.bf16.xpose.msra.mxu0 0
      %5399 = vmatprep.subr.bf16.mxu0 0
      %5400 = vmatpush1.bf16.xpose.msra.mxu0 0
      %5401 = vmatprep.subr.bf16.mxu0 0
      %5402 = vmatpush1.bf16.xpose.msra.mxu0 0
      %5403 = vmatprep.subr.bf16.mxu0 0
      %5404 = vmatpush1.bf16.xpose.msra.mxu0 0
      %5405 = vmatprep.subr.bf16.mxu0 0
      %5406 = vmatpush1.bf16.xpose.msra.mxu0 0
      %5407 = vmatprep.subr.bf16.mxu0 0
      %5408 = vmatpush1.bf16.xpose.msra.mxu0 0
      %5409 = vmatprep.subr.bf16.mxu0 0
      %5410 = vmatpush1.bf16.xpose.msra.mxu0 0
      %5411 = vmatprep.mubr.bf16.mxu0 0
      %5412 = vmatmul.mubr.bf16.gmra.mrb[0].mxu0 %v5350
      %v5413 = vpop.f32.mrb[0].mxu0
      %v5414 = vadd.f32 %v2020, %v5413
      %v5415 = vpop.f32.mrb[0].mxu0
      %v5416 = vpop.f32.mrb[0].mxu0
      %v5417 = vadd.f32 %v2021, %v5416
      %v5418 = vpop.f32.mrb[0].mxu0
      %5419 = vmatprep.mubr.bf16.mxu0 0
      %5420 = vmatmul.mubr.bf16.gmra.mrb[0].mxu0 %v5353
      %v5421 = vpop.f32.mrb[0].mxu0
      %v5422 = vadd.f32 %v2022, %v5421
      %v5423 = vpop.f32.mrb[0].mxu0
      %v5424 = vpop.f32.mrb[0].mxu0
      %v5425 = vadd.f32 %v2023, %v5424
      %v5426 = vpop.f32.mrb[0].mxu0
      %5427 = vmatprep.mubr.bf16.mxu0 0
      %5428 = vmatmul.mubr.bf16.gmra.mrb[0].mxu0 %v5356
      %v5429 = vpop.f32.mrb[0].mxu0
      %v5430 = vadd.f32 %v2024, %v5429
      %v5431 = vpop.f32.mrb[0].mxu0
      %v5432 = vpop.f32.mrb[0].mxu0
      %v5433 = vadd.f32 %v2025, %v5432
      %v5434 = vpop.f32.mrb[0].mxu0
      %5435 = vmatprep.mubr.bf16.mxu0 0
      %5436 = vmatmul.mubr.bf16.gmra.mrb[0].mxu0 %v5359
      %v5437 = vpop.f32.mrb[0].mxu0
      %v5438 = vadd.f32 %v2026, %v5437
      %v5439 = vpop.f32.mrb[0].mxu0
      %v5440 = vpop.f32.mrb[0].mxu0
      %v5441 = vadd.f32 %v2027, %v5440
      %v5442 = vpop.f32.mrb[0].mxu0
      %5443 = vmatprep.mubr.bf16.mxu0 0
      %5444 = vmatmul.mubr.bf16.gmra.mrb[0].mxu0 %v5362
      %v5445 = vpop.f32.mrb[0].mxu0
      %v5446 = vadd.f32 %v2028, %v5445
      %v5447 = vpop.f32.mrb[0].mxu0
      %v5448 = vpop.f32.mrb[0].mxu0
      %v5449 = vpop.f32.mrb[0].mxu0
      %5450 = vdwg.mxu0
      %v5451 = vsel %vm2132, %v5414, -inf
      %5452 = vmax.xlane.f32.xlu0 %v5451
      %v5453 = vpop.xlane.xlu0 %5452
      %v5454 = vsel %vm2132, %v5417, -inf
      %5455 = vmax.xlane.f32.xlu0 %v5454
      %v5456 = vpop.xlane.xlu0 %5455
      %v5457 = vsel %vm2132, %v5422, -inf
      %5458 = vmax.xlane.f32.xlu0 %v5457
      %v5459 = vpop.xlane.xlu0 %5458
      %v5460 = vsel %vm2132, %v5425, -inf
      %5461 = vmax.xlane.f32.xlu0 %v5460
      %v5462 = vpop.xlane.xlu0 %5461
      %v5463 = vsel %vm2132, %v5430, -inf
      %5464 = vmax.xlane.f32.xlu0 %v5463
      %v5465 = vpop.xlane.xlu0 %5464
      %v5466 = vsel %vm2132, %v5433, -inf
      %5467 = vmax.xlane.f32.xlu0 %v5466
      %v5468 = vpop.xlane.xlu0 %5467
      %v5469 = vsel %vm2132, %v5438, -inf
      %5470 = vmax.xlane.f32.xlu0 %v5469
      %v5471 = vpop.xlane.xlu0 %5470
      %v5472 = vsel %vm2132, %v5441, -inf
      %5473 = vmax.xlane.f32.xlu0 %v5472
      %v5474 = vpop.xlane.xlu0 %5473
      %v5475 = vsel %vm2157, %v5446, -inf
      %5476 = vmax.xlane.f32.xlu0 %v5475
      %v5477 = vpop.xlane.xlu0 %5476
      %v5478 = vsub.f32 %v5414, %v5453
      %v5479 = vsub.f32 %v5417, %v5456
      %v5480 = vsub.f32 %v5422, %v5459
      %v5481 = vsub.f32 %v5425, %v5462
      %v5482 = vsub.f32 %v5430, %v5465
      %v5483 = vsub.f32 %v5433, %v5468
      %v5484 = vsub.f32 %v5438, %v5471
      %v5485 = vsub.f32 %v5441, %v5474
      %v5486 = vsub.f32 %v5446, %v5477
      %v5487 = vmul.f32 %v5478, 1.442695
      %v5488 = vpow.pop %v5487
      %v5489 = vmul.f32 %v5479, 1.442695
      %v5490 = vpow.pop %v5489
      %v5491 = vmul.f32 %v5480, 1.442695
      %v5492 = vpow.pop %v5491
      %v5493 = vmul.f32 %v5481, 1.442695
      %v5494 = vpow.pop %v5493
      %v5495 = vmul.f32 %v5482, 1.442695
      %v5496 = vpow.pop %v5495
      %v5497 = vmul.f32 %v5483, 1.442695
      %v5498 = vpow.pop %v5497
      %v5499 = vmul.f32 %v5484, 1.442695
      %v5500 = vpow.pop %v5499
      %v5501 = vmul.f32 %v5485, 1.442695
      %v5502 = vpow.pop %v5501
      %v5503 = vmul.f32 %v5486, 1.442695
      %v5504 = vpow.pop %v5503
      %v5505 = vsel %vm2132, %v5488, 0.0
      %5506 = vadd.xlane.f32.xlu0 %v5505
      %v5507 = vpop.xlane.xlu0 %5506
      %v5508 = vsel %vm2132, %v5490, 0.0
      %5509 = vadd.xlane.f32.xlu0 %v5508
      %v5510 = vpop.xlane.xlu0 %5509
      %v5511 = vsel %vm2132, %v5492, 0.0
      %5512 = vadd.xlane.f32.xlu0 %v5511
      %v5513 = vpop.xlane.xlu0 %5512
      %v5514 = vsel %vm2132, %v5494, 0.0
      %5515 = vadd.xlane.f32.xlu0 %v5514
      %v5516 = vpop.xlane.xlu0 %5515
      %v5517 = vsel %vm2132, %v5496, 0.0
      %5518 = vadd.xlane.f32.xlu0 %v5517
      %v5519 = vpop.xlane.xlu0 %5518
      %v5520 = vsel %vm2132, %v5498, 0.0
      %5521 = vadd.xlane.f32.xlu0 %v5520
      %v5522 = vpop.xlane.xlu0 %5521
      %v5523 = vsel %vm2132, %v5500, 0.0
      %5524 = vadd.xlane.f32.xlu0 %v5523
      %v5525 = vpop.xlane.xlu0 %5524
      %v5526 = vsel %vm2132, %v5502, 0.0
      %5527 = vadd.xlane.f32.xlu0 %v5526
      %v5528 = vpop.xlane.xlu0 %5527
      %v5529 = vsel %vm2157, %v5504, 0.0
      %5530 = vadd.xlane.f32.xlu0 %v5529
      %v5531 = vpop.xlane.xlu0 %5530
      %v5532 = vrcp.pop %v5507
      %v5533 = vrcp.pop %v5510
      %v5534 = vrcp.pop %v5513
      %v5535 = vrcp.pop %v5516
      %v5536 = vrcp.pop %v5519
      %v5537 = vrcp.pop %v5522
      %v5538 = vrcp.pop %v5525
      %v5539 = vrcp.pop %v5528
      %v5540 = vrcp.pop %v5531
      %v5541 = vmul.f32 %v5488, %v5532
      %v5542 = vmul.f32 %v5490, %v5533
      %v5543 = vmul.f32 %v5492, %v5534
      %v5544 = vmul.f32 %v5494, %v5535
      %v5545 = vmul.f32 %v5496, %v5536
      %v5546 = vmul.f32 %v5498, %v5537
      %v5547 = vmul.f32 %v5500, %v5538
      %v5548 = vmul.f32 %v5502, %v5539
      %v5549 = vmul.f32 %v5504, %v5540
      %v5550 = vpack.c.bf16 %v5542, %v5541
      %v5551 = vpack.c.bf16 %v5544, %v5543
      %v5552 = vpack.c.bf16 %v5546, %v5545
      %v5553 = vpack.c.bf16 %v5548, %v5547
      %v5554 = vpack.c.bf16 %v5549, %v5549
      %5555 = vrot.lane.b32.xlu0 %v5219, 64
      %v5556 = vpop.permute.xlu0 %5555
      %5557 = vrot.lane.b32.xlu0 %v5221, 64
      %v5558 = vpop.permute.xlu0 %5557
      %5559 = vrot.lane.b32.xlu0 %v5223, 64
      %v5560 = vpop.permute.xlu0 %5559
      %5561 = vrot.lane.b32.xlu0 %v5225, 64
      %v5562 = vpop.permute.xlu0 %5561
      %5563 = vrot.lane.b32.xlu0 %v5224, 64
      %v5564 = vpop.permute.xlu0 %5563
      %v5570 = vsel %vm2132, %v5550, 0
      %v5573 = vsel %vm2132, %v5551, 0
      %v5576 = vsel %vm2132, %v5552, 0
      %v5579 = vsel %vm2132, %v5553, 0
      %v5582 = vsel %vm2132, %v5554, 0
      %v5585 = vsel %vm2253, %v5564, 0
      %5587 = vmatprep.subr.bf16.mxu0 0
      %5588 = vmatpush1.bf16.msra.mxu0 %v5556
      %5589 = vmatprep.subr.bf16.mxu0 0
      %5590 = vmatpush1.bf16.msra.mxu0 %v5558
      %5591 = vmatprep.subr.bf16.mxu0 0
      %5592 = vmatpush1.bf16.msra.mxu0 %v5560
      %5593 = vmatprep.subr.bf16.mxu0 0
      %5594 = vmatpush1.bf16.msra.mxu0 %v5562
      %5595 = vmatprep.subr.bf16.mxu0 0
      %5596 = vmatpush1.bf16.msra.mxu0 %v5585
      %5597 = vmatprep.subr.bf16.mxu0 0
      %5598 = vmatpush1.bf16.msra.mxu0 0
      %5599 = vmatprep.subr.bf16.mxu0 0
      %5600 = vmatpush1.bf16.msra.mxu0 0
      %5601 = vmatprep.subr.bf16.mxu0 0
      %5602 = vmatpush1.bf16.msra.mxu0 0
      %5603 = vmatprep.subr.bf16.mxu0 0
      %5604 = vmatpush1.bf16.msra.mxu0 0
      %5605 = vmatprep.subr.bf16.mxu0 0
      %5606 = vmatpush1.bf16.msra.mxu0 0
      %5607 = vmatprep.subr.bf16.mxu0 0
      %5608 = vmatpush1.bf16.msra.mxu0 0
      %5609 = vmatprep.subr.bf16.mxu0 0
      %5610 = vmatpush1.bf16.msra.mxu0 0
      %5611 = vmatprep.subr.bf16.mxu0 0
      %5612 = vmatpush1.bf16.msra.mxu0 0
      %5613 = vmatprep.subr.bf16.mxu0 0
      %5614 = vmatpush1.bf16.msra.mxu0 0
      %5615 = vmatprep.subr.bf16.mxu0 0
      %5616 = vmatpush1.bf16.msra.mxu0 0
      %5617 = vmatprep.subr.bf16.mxu0 0
      %5618 = vmatpush1.bf16.msra.mxu0 0
      %5619 = vmatprep.mubr.bf16.mxu0 0
      %5620 = vmatmul.mubr.bf16.gmra.mrb[0].mxu0 %v5570
      %v5621 = vpop.f32.mrb[0].mxu0
      %v5622 = vadd.f32 0.0, %v5621
      %v5623 = vpop.f32.mrb[0].mxu0
      %v5624 = vpop.f32.mrb[0].mxu0
      %v5625 = vadd.f32 0.0, %v5624
      %v5626 = vpop.f32.mrb[0].mxu0
      %5627 = vmatprep.mubr.bf16.mxu0 0
      %5628 = vmatmul.mubr.bf16.gmra.mrb[0].mxu0 %v5573
      %v5629 = vpop.f32.mrb[0].mxu0
      %v5630 = vadd.f32 0.0, %v5629
      %v5631 = vpop.f32.mrb[0].mxu0
      %v5632 = vpop.f32.mrb[0].mxu0
      %v5633 = vadd.f32 0.0, %v5632
      %v5634 = vpop.f32.mrb[0].mxu0
      %5635 = vmatprep.mubr.bf16.mxu0 0
      %5636 = vmatmul.mubr.bf16.gmra.mrb[0].mxu0 %v5576
      %v5637 = vpop.f32.mrb[0].mxu0
      %v5638 = vadd.f32 0.0, %v5637
      %v5639 = vpop.f32.mrb[0].mxu0
      %v5640 = vpop.f32.mrb[0].mxu0
      %v5641 = vadd.f32 0.0, %v5640
      %v5642 = vpop.f32.mrb[0].mxu0
      %5643 = vmatprep.mubr.bf16.mxu0 0
      %5644 = vmatmul.mubr.bf16.gmra.mrb[0].mxu0 %v5579
      %v5645 = vpop.f32.mrb[0].mxu0
      %v5646 = vadd.f32 0.0, %v5645
      %v5647 = vpop.f32.mrb[0].mxu0
      %v5648 = vpop.f32.mrb[0].mxu0
      %v5649 = vadd.f32 0.0, %v5648
      %v5650 = vpop.f32.mrb[0].mxu0
      %5651 = vmatprep.mubr.bf16.mxu0 0
      %5652 = vmatmul.mubr.bf16.gmra.mrb[0].mxu0 %v5582
      %v5653 = vpop.f32.mrb[0].mxu0
      %v5654 = vadd.f32 0.0, %v5653
      %v5655 = vpop.f32.mrb[0].mxu0
      %v5656 = vpop.f32.mrb[0].mxu0
      %v5657 = vpop.f32.mrb[0].mxu0
      %5658 = vdwg.mxu0
      %5668 = vrot.lane.b32.xlu0 %v5622, 64
      %v5669 = vpop.permute.xlu0 %5668
      %5670 = vrot.lane.b32.xlu0 %v5625, 64
      %v5671 = vpop.permute.xlu0 %5670
      %5672 = vrot.lane.b32.xlu0 %v5630, 64
      %v5673 = vpop.permute.xlu0 %5672
      %5674 = vrot.lane.b32.xlu0 %v5633, 64
      %v5675 = vpop.permute.xlu0 %5674
      %5676 = vrot.lane.b32.xlu0 %v5638, 64
      %v5677 = vpop.permute.xlu0 %5676
      %5678 = vrot.lane.b32.xlu0 %v5641, 64
      %v5679 = vpop.permute.xlu0 %5678
      %5680 = vrot.lane.b32.xlu0 %v5646, 64
      %v5681 = vpop.permute.xlu0 %5680
      %5682 = vrot.lane.b32.xlu0 %v5649, 64
      %v5683 = vpop.permute.xlu0 %5682
      %5684 = vrot.lane.b32.xlu0 %v5654, 64
      %v5685 = vpop.permute.xlu0 %5684
      %5695 = vst.msk [vmem:[#allocation2 + $0x110] sm:$0xff] %vm2720, %v5669
      %5696 = vst.msk [vmem:[#allocation2 + $0x120] sm:$0xff] %vm2720, %v5671
      %5697 = vst.msk [vmem:[#allocation2 + $0x130] sm:$0xff] %vm2720, %v5673
      %5698 = vst.msk [vmem:[#allocation2 + $0x140] sm:$0xff] %vm2720, %v5675
      %5699 = vst.msk [vmem:[#allocation2 + $0x150] sm:$0xff] %vm2720, %v5677
      %5700 = vst.msk [vmem:[#allocation2 + $0x160] sm:$0xff] %vm2720, %v5679
      %5701 = vst.msk [vmem:[#allocation2 + $0x170] sm:$0xff] %vm2720, %v5681
      %5702 = vst.msk [vmem:[#allocation2 + $0x180] sm:$0xff] %vm2720, %v5683
      %5703 = vst.msk [vmem:[#allocation2 + $0x190] sm:$0xf] %vm2729, %v5685
      %v5708 = vrot.slane %v1906, 4
      %v5709 = vrot.slane %v1912, 4
      %v5710 = vsel %vm4984, %v5708, %v5709
      %v5711 = vrot.slane %v1918, 4
      %v5712 = vsel %vm4984, %v5709, %v5711
      %v5713 = vrot.slane %v1924, 4
      %v5714 = vsel %vm4984, %v5711, %v5713
      %v5715 = vrot.slane %v1930, 4
      %v5716 = vsel %vm4984, %v5713, %v5715
      %v5721 = vrot.slane %v1908, 4
      %v5722 = vrot.slane %v1914, 4
      %v5723 = vsel %vm4984, %v5721, %v5722
      %v5724 = vrot.slane %v1920, 4
      %v5725 = vsel %vm4984, %v5722, %v5724
      %v5726 = vrot.slane %v1926, 4
      %v5727 = vsel %vm4984, %v5724, %v5726
      %v5728 = vrot.slane %v1932, 4
      %v5729 = vsel %vm4984, %v5726, %v5728
      %v5731 = vsel %vm2029, %v5710, 0
      %v5734 = vsel %vm2029, %v5712, 0
      %v5737 = vsel %vm2029, %v5714, 0
      %v5740 = vsel %vm2029, %v5716, 0
      %v5743 = vsel %vm2029, %v5715, 0
      %v5746 = vsel %vm2029, %v5723, 0
      %v5749 = vsel %vm2029, %v5725, 0
      %v5752 = vsel %vm2029, %v5727, 0
      %v5755 = vsel %vm2029, %v5729, 0
      %v5758 = vsel %vm2029, %v5728, 0
      %5760 = vmatprep.subr.bf16.mxu0 0
      %5761 = vmatpush1.bf16.xpose.msra.mxu0 %v5746
      %5762 = vmatprep.subr.bf16.mxu0 0
      %5763 = vmatpush1.bf16.xpose.msra.mxu0 %v5749
      %5764 = vmatprep.subr.bf16.mxu0 0
      %5765 = vmatpush1.bf16.xpose.msra.mxu0 %v5752
      %5766 = vmatprep.subr.bf16.mxu0 0
      %5767 = vmatpush1.bf16.xpose.msra.mxu0 %v5755
      %5768 = vmatprep.subr.bf16.mxu0 0
      %5769 = vmatpush1.bf16.xpose.msra.mxu0 %v5758
      %5770 = vmatprep.subr.bf16.mxu0 0
      %5771 = vmatpush1.bf16.xpose.msra.mxu0 0
      %5772 = vmatprep.subr.bf16.mxu0 0
      %5773 = vmatpush1.bf16.xpose.msra.mxu0 0
      %5774 = vmatprep.subr.bf16.mxu0 0
      %5775 = vmatpush1.bf16.xpose.msra.mxu0 0
      %5776 = vmatprep.subr.bf16.mxu0 0
      %5777 = vmatpush1.bf16.xpose.msra.mxu0 0
      %5778 = vmatprep.subr.bf16.mxu0 0
      %5779 = vmatpush1.bf16.xpose.msra.mxu0 0
      %5780 = vmatprep.subr.bf16.mxu0 0
      %5781 = vmatpush1.bf16.xpose.msra.mxu0 0
      %5782 = vmatprep.subr.bf16.mxu0 0
      %5783 = vmatpush1.bf16.xpose.msra.mxu0 0
      %5784 = vmatprep.subr.bf16.mxu0 0
      %5785 = vmatpush1.bf16.xpose.msra.mxu0 0
      %5786 = vmatprep.subr.bf16.mxu0 0
      %5787 = vmatpush1.bf16.xpose.msra.mxu0 0
      %5788 = vmatprep.subr.bf16.mxu0 0
      %5789 = vmatpush1.bf16.xpose.msra.mxu0 0
      %5790 = vmatprep.subr.bf16.mxu0 0
      %5791 = vmatpush1.bf16.xpose.msra.mxu0 0
      %5792 = vmatprep.mubr.bf16.mxu0 0
      %5793 = vmatmul.mubr.bf16.gmra.mrb[0].mxu0 %v5731
      %v5794 = vpop.f32.mrb[0].mxu0
      %v5795 = vadd.f32 %v2020, %v5794
      %v5796 = vpop.f32.mrb[0].mxu0
      %v5797 = vpop.f32.mrb[0].mxu0
      %v5798 = vadd.f32 %v2021, %v5797
      %v5799 = vpop.f32.mrb[0].mxu0
      %5800 = vmatprep.mubr.bf16.mxu0 0
      %5801 = vmatmul.mubr.bf16.gmra.mrb[0].mxu0 %v5734
      %v5802 = vpop.f32.mrb[0].mxu0
      %v5803 = vadd.f32 %v2022, %v5802
      %v5804 = vpop.f32.mrb[0].mxu0
      %v5805 = vpop.f32.mrb[0].mxu0
      %v5806 = vadd.f32 %v2023, %v5805
      %v5807 = vpop.f32.mrb[0].mxu0
      %5808 = vmatprep.mubr.bf16.mxu0 0
      %5809 = vmatmul.mubr.bf16.gmra.mrb[0].mxu0 %v5737
      %v5810 = vpop.f32.mrb[0].mxu0
      %v5811 = vadd.f32 %v2024, %v5810
      %v5812 = vpop.f32.mrb[0].mxu0
      %v5813 = vpop.f32.mrb[0].mxu0
      %v5814 = vadd.f32 %v2025, %v5813
      %v5815 = vpop.f32.mrb[0].mxu0
      %5816 = vmatprep.mubr.bf16.mxu0 0
      %5817 = vmatmul.mubr.bf16.gmra.mrb[0].mxu0 %v5740
      %v5818 = vpop.f32.mrb[0].mxu0
      %v5819 = vadd.f32 %v2026, %v5818
      %v5820 = vpop.f32.mrb[0].mxu0
      %v5821 = vpop.f32.mrb[0].mxu0
      %v5822 = vadd.f32 %v2027, %v5821
      %v5823 = vpop.f32.mrb[0].mxu0
      %5824 = vmatprep.mubr.bf16.mxu0 0
      %5825 = vmatmul.mubr.bf16.gmra.mrb[0].mxu0 %v5743
      %v5826 = vpop.f32.mrb[0].mxu0
      %v5827 = vadd.f32 %v2028, %v5826
      %v5828 = vpop.f32.mrb[0].mxu0
      %v5829 = vpop.f32.mrb[0].mxu0
      %v5830 = vpop.f32.mrb[0].mxu0
      %5831 = vdwg.mxu0
      %v5832 = vsel %vm2132, %v5795, -inf
      %5833 = vmax.xlane.f32.xlu0 %v5832
      %v5834 = vpop.xlane.xlu0 %5833
      %v5835 = vsel %vm2132, %v5798, -inf
      %5836 = vmax.xlane.f32.xlu0 %v5835
      %v5837 = vpop.xlane.xlu0 %5836
      %v5838 = vsel %vm2132, %v5803, -inf
      %5839 = vmax.xlane.f32.xlu0 %v5838
      %v5840 = vpop.xlane.xlu0 %5839
      %v5841 = vsel %vm2132, %v5806, -inf
      %5842 = vmax.xlane.f32.xlu0 %v5841
      %v5843 = vpop.xlane.xlu0 %5842
      %v5844 = vsel %vm2132, %v5811, -inf
      %5845 = vmax.xlane.f32.xlu0 %v5844
      %v5846 = vpop.xlane.xlu0 %5845
      %v5847 = vsel %vm2132, %v5814, -inf
      %5848 = vmax.xlane.f32.xlu0 %v5847
      %v5849 = vpop.xlane.xlu0 %5848
      %v5850 = vsel %vm2132, %v5819, -inf
      %5851 = vmax.xlane.f32.xlu0 %v5850
      %v5852 = vpop.xlane.xlu0 %5851
      %v5853 = vsel %vm2132, %v5822, -inf
      %5854 = vmax.xlane.f32.xlu0 %v5853
      %v5855 = vpop.xlane.xlu0 %5854
      %v5856 = vsel %vm2157, %v5827, -inf
      %5857 = vmax.xlane.f32.xlu0 %v5856
      %v5858 = vpop.xlane.xlu0 %5857
      %v5859 = vsub.f32 %v5795, %v5834
      %v5860 = vsub.f32 %v5798, %v5837
      %v5861 = vsub.f32 %v5803, %v5840
      %v5862 = vsub.f32 %v5806, %v5843
      %v5863 = vsub.f32 %v5811, %v5846
      %v5864 = vsub.f32 %v5814, %v5849
      %v5865 = vsub.f32 %v5819, %v5852
      %v5866 = vsub.f32 %v5822, %v5855
      %v5867 = vsub.f32 %v5827, %v5858
      %v5868 = vmul.f32 %v5859, 1.442695
      %v5869 = vpow.pop %v5868
      %v5870 = vmul.f32 %v5860, 1.442695
      %v5871 = vpow.pop %v5870
      %v5872 = vmul.f32 %v5861, 1.442695
      %v5873 = vpow.pop %v5872
      %v5874 = vmul.f32 %v5862, 1.442695
      %v5875 = vpow.pop %v5874
      %v5876 = vmul.f32 %v5863, 1.442695
      %v5877 = vpow.pop %v5876
      %v5878 = vmul.f32 %v5864, 1.442695
      %v5879 = vpow.pop %v5878
      %v5880 = vmul.f32 %v5865, 1.442695
      %v5881 = vpow.pop %v5880
      %v5882 = vmul.f32 %v5866, 1.442695
      %v5883 = vpow.pop %v5882
      %v5884 = vmul.f32 %v5867, 1.442695
      %v5885 = vpow.pop %v5884
      %v5886 = vsel %vm2132, %v5869, 0.0
      %5887 = vadd.xlane.f32.xlu0 %v5886
      %v5888 = vpop.xlane.xlu0 %5887
      %v5889 = vsel %vm2132, %v5871, 0.0
      %5890 = vadd.xlane.f32.xlu0 %v5889
      %v5891 = vpop.xlane.xlu0 %5890
      %v5892 = vsel %vm2132, %v5873, 0.0
      %5893 = vadd.xlane.f32.xlu0 %v5892
      %v5894 = vpop.xlane.xlu0 %5893
      %v5895 = vsel %vm2132, %v5875, 0.0
      %5896 = vadd.xlane.f32.xlu0 %v5895
      %v5897 = vpop.xlane.xlu0 %5896
      %v5898 = vsel %vm2132, %v5877, 0.0
      %5899 = vadd.xlane.f32.xlu0 %v5898
      %v5900 = vpop.xlane.xlu0 %5899
      %v5901 = vsel %vm2132, %v5879, 0.0
      %5902 = vadd.xlane.f32.xlu0 %v5901
      %v5903 = vpop.xlane.xlu0 %5902
      %v5904 = vsel %vm2132, %v5881, 0.0
      %5905 = vadd.xlane.f32.xlu0 %v5904
      %v5906 = vpop.xlane.xlu0 %5905
      %v5907 = vsel %vm2132, %v5883, 0.0
      %5908 = vadd.xlane.f32.xlu0 %v5907
      %v5909 = vpop.xlane.xlu0 %5908
      %v5910 = vsel %vm2157, %v5885, 0.0
      %5911 = vadd.xlane.f32.xlu0 %v5910
      %v5912 = vpop.xlane.xlu0 %5911
      %v5913 = vrcp.pop %v5888
      %v5914 = vrcp.pop %v5891
      %v5915 = vrcp.pop %v5894
      %v5916 = vrcp.pop %v5897
      %v5917 = vrcp.pop %v5900
      %v5918 = vrcp.pop %v5903
      %v5919 = vrcp.pop %v5906
      %v5920 = vrcp.pop %v5909
      %v5921 = vrcp.pop %v5912
      %v5922 = vmul.f32 %v5869, %v5913
      %v5923 = vmul.f32 %v5871, %v5914
      %v5924 = vmul.f32 %v5873, %v5915
      %v5925 = vmul.f32 %v5875, %v5916
      %v5926 = vmul.f32 %v5877, %v5917
      %v5927 = vmul.f32 %v5879, %v5918
      %v5928 = vmul.f32 %v5881, %v5919
      %v5929 = vmul.f32 %v5883, %v5920
      %v5930 = vmul.f32 %v5885, %v5921
      %v5931 = vpack.c.bf16 %v5923, %v5922
      %v5932 = vpack.c.bf16 %v5925, %v5924
      %v5933 = vpack.c.bf16 %v5927, %v5926
      %v5934 = vpack.c.bf16 %v5929, %v5928
      %v5935 = vpack.c.bf16 %v5930, %v5930
      %v5940 = vrot.slane %v1910, 4
      %v5941 = vrot.slane %v1916, 4
      %v5942 = vsel %vm4984, %v5940, %v5941
      %v5943 = vrot.slane %v1922, 4
      %v5944 = vsel %vm4984, %v5941, %v5943
      %v5945 = vrot.slane %v1928, 4
      %v5946 = vsel %vm4984, %v5943, %v5945
      %v5947 = vrot.slane %v1934, 4
      %v5948 = vsel %vm4984, %v5945, %v5947
      %v5954 = vsel %vm2132, %v5931, 0
      %v5957 = vsel %vm2132, %v5932, 0
      %v5960 = vsel %vm2132, %v5933, 0
      %v5963 = vsel %vm2132, %v5934, 0
      %v5966 = vsel %vm2132, %v5935, 0
      %v5969 = vsel %vm2253, %v5947, 0
      %5971 = vmatprep.subr.bf16.mxu0 0
      %5972 = vmatpush1.bf16.msra.mxu0 %v5942
      %5973 = vmatprep.subr.bf16.mxu0 0
      %5974 = vmatpush1.bf16.msra.mxu0 %v5944
      %5975 = vmatprep.subr.bf16.mxu0 0
      %5976 = vmatpush1.bf16.msra.mxu0 %v5946
      %5977 = vmatprep.subr.bf16.mxu0 0
      %5978 = vmatpush1.bf16.msra.mxu0 %v5948
      %5979 = vmatprep.subr.bf16.mxu0 0
      %5980 = vmatpush1.bf16.msra.mxu0 %v5969
      %5981 = vmatprep.subr.bf16.mxu0 0
      %5982 = vmatpush1.bf16.msra.mxu0 0
      %5983 = vmatprep.subr.bf16.mxu0 0
      %5984 = vmatpush1.bf16.msra.mxu0 0
      %5985 = vmatprep.subr.bf16.mxu0 0
      %5986 = vmatpush1.bf16.msra.mxu0 0
      %5987 = vmatprep.subr.bf16.mxu0 0
      %5988 = vmatpush1.bf16.msra.mxu0 0
      %5989 = vmatprep.subr.bf16.mxu0 0
      %5990 = vmatpush1.bf16.msra.mxu0 0
      %5991 = vmatprep.subr.bf16.mxu0 0
      %5992 = vmatpush1.bf16.msra.mxu0 0
      %5993 = vmatprep.subr.bf16.mxu0 0
      %5994 = vmatpush1.bf16.msra.mxu0 0
      %5995 = vmatprep.subr.bf16.mxu0 0
      %5996 = vmatpush1.bf16.msra.mxu0 0
      %5997 = vmatprep.subr.bf16.mxu0 0
      %5998 = vmatpush1.bf16.msra.mxu0 0
      %5999 = vmatprep.subr.bf16.mxu0 0
      %6000 = vmatpush1.bf16.msra.mxu0 0
      %6001 = vmatprep.subr.bf16.mxu0 0
      %6002 = vmatpush1.bf16.msra.mxu0 0
      %6003 = vmatprep.mubr.bf16.mxu0 0
      %6004 = vmatmul.mubr.bf16.gmra.mrb[0].mxu0 %v5954
      %v6005 = vpop.f32.mrb[0].mxu0
      %v6006 = vadd.f32 0.0, %v6005
      %v6007 = vpop.f32.mrb[0].mxu0
      %v6008 = vpop.f32.mrb[0].mxu0
      %v6009 = vadd.f32 0.0, %v6008
      %v6010 = vpop.f32.mrb[0].mxu0
      %6011 = vmatprep.mubr.bf16.mxu0 0
      %6012 = vmatmul.mubr.bf16.gmra.mrb[0].mxu0 %v5957
      %v6013 = vpop.f32.mrb[0].mxu0
      %v6014 = vadd.f32 0.0, %v6013
      %v6015 = vpop.f32.mrb[0].mxu0
      %v6016 = vpop.f32.mrb[0].mxu0
      %v6017 = vadd.f32 0.0, %v6016
      %v6018 = vpop.f32.mrb[0].mxu0
      %6019 = vmatprep.mubr.bf16.mxu0 0
      %6020 = vmatmul.mubr.bf16.gmra.mrb[0].mxu0 %v5960
      %v6021 = vpop.f32.mrb[0].mxu0
      %v6022 = vadd.f32 0.0, %v6021
      %v6023 = vpop.f32.mrb[0].mxu0
      %v6024 = vpop.f32.mrb[0].mxu0
      %v6025 = vadd.f32 0.0, %v6024
      %v6026 = vpop.f32.mrb[0].mxu0
      %6027 = vmatprep.mubr.bf16.mxu0 0
      %6028 = vmatmul.mubr.bf16.gmra.mrb[0].mxu0 %v5963
      %v6029 = vpop.f32.mrb[0].mxu0
      %v6030 = vadd.f32 0.0, %v6029
      %v6031 = vpop.f32.mrb[0].mxu0
      %v6032 = vpop.f32.mrb[0].mxu0
      %v6033 = vadd.f32 0.0, %v6032
      %v6034 = vpop.f32.mrb[0].mxu0
      %6035 = vmatprep.mubr.bf16.mxu0 0
      %6036 = vmatmul.mubr.bf16.gmra.mrb[0].mxu0 %v5966
      %v6037 = vpop.f32.mrb[0].mxu0
      %v6038 = vadd.f32 0.0, %v6037
      %v6039 = vpop.f32.mrb[0].mxu0
      %v6040 = vpop.f32.mrb[0].mxu0
      %v6041 = vpop.f32.mrb[0].mxu0
      %6042 = vdwg.mxu0
      %6043 = vst.msk [vmem:[#allocation2 + $0x118] sm:$0xff] %vm2029, %v6006
      %6044 = vst.msk [vmem:[#allocation2 + $0x128] sm:$0xff] %vm2029, %v6009
      %6045 = vst.msk [vmem:[#allocation2 + $0x138] sm:$0xff] %vm2029, %v6014
      %6046 = vst.msk [vmem:[#allocation2 + $0x148] sm:$0xff] %vm2029, %v6017
      %6047 = vst.msk [vmem:[#allocation2 + $0x158] sm:$0xff] %vm2029, %v6022
      %6048 = vst.msk [vmem:[#allocation2 + $0x168] sm:$0xff] %vm2029, %v6025
      %6049 = vst.msk [vmem:[#allocation2 + $0x178] sm:$0xff] %vm2029, %v6030
      %6050 = vst.msk [vmem:[#allocation2 + $0x188] sm:$0xff] %vm2029, %v6033
      %6051 = vst.msk [vmem:[#allocation2 + $0x198] sm:$0xf] %vm2337, %v6038
      %6052 = vrot.lane.b32.xlu0 %v5710, 64
      %v6053 = vpop.permute.xlu0 %6052
      %6054 = vrot.lane.b32.xlu0 %v5712, 64
      %v6055 = vpop.permute.xlu0 %6054
      %6056 = vrot.lane.b32.xlu0 %v5714, 64
      %v6057 = vpop.permute.xlu0 %6056
      %6058 = vrot.lane.b32.xlu0 %v5716, 64
      %v6059 = vpop.permute.xlu0 %6058
      %6060 = vrot.lane.b32.xlu0 %v5715, 64
      %v6061 = vpop.permute.xlu0 %6060
      %6062 = vrot.lane.b32.xlu0 %v5723, 64
      %v6063 = vpop.permute.xlu0 %6062
      %6064 = vrot.lane.b32.xlu0 %v5725, 64
      %v6065 = vpop.permute.xlu0 %6064
      %6066 = vrot.lane.b32.xlu0 %v5727, 64
      %v6067 = vpop.permute.xlu0 %6066
      %6068 = vrot.lane.b32.xlu0 %v5729, 64
      %v6069 = vpop.permute.xlu0 %6068
      %6070 = vrot.lane.b32.xlu0 %v5728, 64
      %v6071 = vpop.permute.xlu0 %6070
      %v6073 = vsel %vm2029, %v6053, 0
      %v6076 = vsel %vm2029, %v6055, 0
      %v6079 = vsel %vm2029, %v6057, 0
      %v6082 = vsel %vm2029, %v6059, 0
      %v6085 = vsel %vm2029, %v6061, 0
      %v6088 = vsel %vm2029, %v6063, 0
      %v6091 = vsel %vm2029, %v6065, 0
      %v6094 = vsel %vm2029, %v6067, 0
      %v6097 = vsel %vm2029, %v6069, 0
      %v6100 = vsel %vm2029, %v6071, 0
      %6102 = vmatprep.subr.bf16.mxu0 0
      %6103 = vmatpush1.bf16.xpose.msra.mxu0 %v6088
      %6104 = vmatprep.subr.bf16.mxu0 0
      %6105 = vmatpush1.bf16.xpose.msra.mxu0 %v6091
      %6106 = vmatprep.subr.bf16.mxu0 0
      %6107 = vmatpush1.bf16.xpose.msra.mxu0 %v6094
      %6108 = vmatprep.subr.bf16.mxu0 0
      %6109 = vmatpush1.bf16.xpose.msra.mxu0 %v6097
      %6110 = vmatprep.subr.bf16.mxu0 0
      %6111 = vmatpush1.bf16.xpose.msra.mxu0 %v6100
      %6112 = vmatprep.subr.bf16.mxu0 0
      %6113 = vmatpush1.bf16.xpose.msra.mxu0 0
      %6114 = vmatprep.subr.bf16.mxu0 0
      %6115 = vmatpush1.bf16.xpose.msra.mxu0 0
      %6116 = vmatprep.subr.bf16.mxu0 0
      %6117 = vmatpush1.bf16.xpose.msra.mxu0 0
      %6118 = vmatprep.subr.bf16.mxu0 0
      %6119 = vmatpush1.bf16.xpose.msra.mxu0 0
      %6120 = vmatprep.subr.bf16.mxu0 0
      %6121 = vmatpush1.bf16.xpose.msra.mxu0 0
      %6122 = vmatprep.subr.bf16.mxu0 0
      %6123 = vmatpush1.bf16.xpose.msra.mxu0 0
      %6124 = vmatprep.subr.bf16.mxu0 0
      %6125 = vmatpush1.bf16.xpose.msra.mxu0 0
      %6126 = vmatprep.subr.bf16.mxu0 0
      %6127 = vmatpush1.bf16.xpose.msra.mxu0 0
      %6128 = vmatprep.subr.bf16.mxu0 0
      %6129 = vmatpush1.bf16.xpose.msra.mxu0 0
      %6130 = vmatprep.subr.bf16.mxu0 0
      %6131 = vmatpush1.bf16.xpose.msra.mxu0 0
      %6132 = vmatprep.subr.bf16.mxu0 0
      %6133 = vmatpush1.bf16.xpose.msra.mxu0 0
      %6134 = vmatprep.mubr.bf16.mxu0 0
      %6135 = vmatmul.mubr.bf16.gmra.mrb[0].mxu0 %v6073
      %v6136 = vpop.f32.mrb[0].mxu0
      %v6137 = vadd.f32 %v2020, %v6136
      %v6138 = vpop.f32.mrb[0].mxu0
      %v6139 = vpop.f32.mrb[0].mxu0
      %v6140 = vadd.f32 %v2021, %v6139
      %v6141 = vpop.f32.mrb[0].mxu0
      %6142 = vmatprep.mubr.bf16.mxu0 0
      %6143 = vmatmul.mubr.bf16.gmra.mrb[0].mxu0 %v6076
      %v6144 = vpop.f32.mrb[0].mxu0
      %v6145 = vadd.f32 %v2022, %v6144
      %v6146 = vpop.f32.mrb[0].mxu0
      %v6147 = vpop.f32.mrb[0].mxu0
      %v6148 = vadd.f32 %v2023, %v6147
      %v6149 = vpop.f32.mrb[0].mxu0
      %6150 = vmatprep.mubr.bf16.mxu0 0
      %6151 = vmatmul.mubr.bf16.gmra.mrb[0].mxu0 %v6079
      %v6152 = vpop.f32.mrb[0].mxu0
      %v6153 = vadd.f32 %v2024, %v6152
      %v6154 = vpop.f32.mrb[0].mxu0
      %v6155 = vpop.f32.mrb[0].mxu0
      %v6156 = vadd.f32 %v2025, %v6155
      %v6157 = vpop.f32.mrb[0].mxu0
      %6158 = vmatprep.mubr.bf16.mxu0 0
      %6159 = vmatmul.mubr.bf16.gmra.mrb[0].mxu0 %v6082
      %v6160 = vpop.f32.mrb[0].mxu0
      %v6161 = vadd.f32 %v2026, %v6160
      %v6162 = vpop.f32.mrb[0].mxu0
      %v6163 = vpop.f32.mrb[0].mxu0
      %v6164 = vadd.f32 %v2027, %v6163
      %v6165 = vpop.f32.mrb[0].mxu0
      %6166 = vmatprep.mubr.bf16.mxu0 0
      %6167 = vmatmul.mubr.bf16.gmra.mrb[0].mxu0 %v6085
      %v6168 = vpop.f32.mrb[0].mxu0
      %v6169 = vadd.f32 %v2028, %v6168
      %v6170 = vpop.f32.mrb[0].mxu0
      %v6171 = vpop.f32.mrb[0].mxu0
      %v6172 = vpop.f32.mrb[0].mxu0
      %6173 = vdwg.mxu0
      %v6174 = vsel %vm2132, %v6137, -inf
      %6175 = vmax.xlane.f32.xlu0 %v6174
      %v6176 = vpop.xlane.xlu0 %6175
      %v6177 = vsel %vm2132, %v6140, -inf
      %6178 = vmax.xlane.f32.xlu0 %v6177
      %v6179 = vpop.xlane.xlu0 %6178
      %v6180 = vsel %vm2132, %v6145, -inf
      %6181 = vmax.xlane.f32.xlu0 %v6180
      %v6182 = vpop.xlane.xlu0 %6181
      %v6183 = vsel %vm2132, %v6148, -inf
      %6184 = vmax.xlane.f32.xlu0 %v6183
      %v6185 = vpop.xlane.xlu0 %6184
      %v6186 = vsel %vm2132, %v6153, -inf
      %6187 = vmax.xlane.f32.xlu0 %v6186
      %v6188 = vpop.xlane.xlu0 %6187
      %v6189 = vsel %vm2132, %v6156, -inf
      %6190 = vmax.xlane.f32.xlu0 %v6189
      %v6191 = vpop.xlane.xlu0 %6190
      %v6192 = vsel %vm2132, %v6161, -inf
      %6193 = vmax.xlane.f32.xlu0 %v6192
      %v6194 = vpop.xlane.xlu0 %6193
      %v6195 = vsel %vm2132, %v6164, -inf
      %6196 = vmax.xlane.f32.xlu0 %v6195
      %v6197 = vpop.xlane.xlu0 %6196
      %v6198 = vsel %vm2157, %v6169, -inf
      %6199 = vmax.xlane.f32.xlu0 %v6198
      %v6200 = vpop.xlane.xlu0 %6199
      %v6201 = vsub.f32 %v6137, %v6176
      %v6202 = vsub.f32 %v6140, %v6179
      %v6203 = vsub.f32 %v6145, %v6182
      %v6204 = vsub.f32 %v6148, %v6185
      %v6205 = vsub.f32 %v6153, %v6188
      %v6206 = vsub.f32 %v6156, %v6191
      %v6207 = vsub.f32 %v6161, %v6194
      %v6208 = vsub.f32 %v6164, %v6197
      %v6209 = vsub.f32 %v6169, %v6200
      %v6210 = vmul.f32 %v6201, 1.442695
      %v6211 = vpow.pop %v6210
      %v6212 = vmul.f32 %v6202, 1.442695
      %v6213 = vpow.pop %v6212
      %v6214 = vmul.f32 %v6203, 1.442695
      %v6215 = vpow.pop %v6214
      %v6216 = vmul.f32 %v6204, 1.442695
      %v6217 = vpow.pop %v6216
      %v6218 = vmul.f32 %v6205, 1.442695
      %v6219 = vpow.pop %v6218
      %v6220 = vmul.f32 %v6206, 1.442695
      %v6221 = vpow.pop %v6220
      %v6222 = vmul.f32 %v6207, 1.442695
      %v6223 = vpow.pop %v6222
      %v6224 = vmul.f32 %v6208, 1.442695
      %v6225 = vpow.pop %v6224
      %v6226 = vmul.f32 %v6209, 1.442695
      %v6227 = vpow.pop %v6226
      %v6228 = vsel %vm2132, %v6211, 0.0
      %6229 = vadd.xlane.f32.xlu0 %v6228
      %v6230 = vpop.xlane.xlu0 %6229
      %v6231 = vsel %vm2132, %v6213, 0.0
      %6232 = vadd.xlane.f32.xlu0 %v6231
      %v6233 = vpop.xlane.xlu0 %6232
      %v6234 = vsel %vm2132, %v6215, 0.0
      %6235 = vadd.xlane.f32.xlu0 %v6234
      %v6236 = vpop.xlane.xlu0 %6235
      %v6237 = vsel %vm2132, %v6217, 0.0
      %6238 = vadd.xlane.f32.xlu0 %v6237
      %v6239 = vpop.xlane.xlu0 %6238
      %v6240 = vsel %vm2132, %v6219, 0.0
      %6241 = vadd.xlane.f32.xlu0 %v6240
      %v6242 = vpop.xlane.xlu0 %6241
      %v6243 = vsel %vm2132, %v6221, 0.0
      %6244 = vadd.xlane.f32.xlu0 %v6243
      %v6245 = vpop.xlane.xlu0 %6244
      %v6246 = vsel %vm2132, %v6223, 0.0
      %6247 = vadd.xlane.f32.xlu0 %v6246
      %v6248 = vpop.xlane.xlu0 %6247
      %v6249 = vsel %vm2132, %v6225, 0.0
      %6250 = vadd.xlane.f32.xlu0 %v6249
      %v6251 = vpop.xlane.xlu0 %6250
      %v6252 = vsel %vm2157, %v6227, 0.0
      %6253 = vadd.xlane.f32.xlu0 %v6252
      %v6254 = vpop.xlane.xlu0 %6253
      %v6255 = vrcp.pop %v6230
      %v6256 = vrcp.pop %v6233
      %v6257 = vrcp.pop %v6236
      %v6258 = vrcp.pop %v6239
      %v6259 = vrcp.pop %v6242
      %v6260 = vrcp.pop %v6245
      %v6261 = vrcp.pop %v6248
      %v6262 = vrcp.pop %v6251
      %v6263 = vrcp.pop %v6254
      %v6264 = vmul.f32 %v6211, %v6255
      %v6265 = vmul.f32 %v6213, %v6256
      %v6266 = vmul.f32 %v6215, %v6257
      %v6267 = vmul.f32 %v6217, %v6258
      %v6268 = vmul.f32 %v6219, %v6259
      %v6269 = vmul.f32 %v6221, %v6260
      %v6270 = vmul.f32 %v6223, %v6261
      %v6271 = vmul.f32 %v6225, %v6262
      %v6272 = vmul.f32 %v6227, %v6263
      %v6273 = vpack.c.bf16 %v6265, %v6264
      %v6274 = vpack.c.bf16 %v6267, %v6266
      %v6275 = vpack.c.bf16 %v6269, %v6268
      %v6276 = vpack.c.bf16 %v6271, %v6270
      %v6277 = vpack.c.bf16 %v6272, %v6272
      %6278 = vrot.lane.b32.xlu0 %v5942, 64
      %v6279 = vpop.permute.xlu0 %6278
      %6280 = vrot.lane.b32.xlu0 %v5944, 64
      %v6281 = vpop.permute.xlu0 %6280
      %6282 = vrot.lane.b32.xlu0 %v5946, 64
      %v6283 = vpop.permute.xlu0 %6282
      %6284 = vrot.lane.b32.xlu0 %v5948, 64
      %v6285 = vpop.permute.xlu0 %6284
      %6286 = vrot.lane.b32.xlu0 %v5947, 64
      %v6287 = vpop.permute.xlu0 %6286
      %v6293 = vsel %vm2132, %v6273, 0
      %v6296 = vsel %vm2132, %v6274, 0
      %v6299 = vsel %vm2132, %v6275, 0
      %v6302 = vsel %vm2132, %v6276, 0
      %v6305 = vsel %vm2132, %v6277, 0
      %v6308 = vsel %vm2253, %v6287, 0
      %6310 = vmatprep.subr.bf16.mxu0 0
      %6311 = vmatpush1.bf16.msra.mxu0 %v6279
      %6312 = vmatprep.subr.bf16.mxu0 0
      %6313 = vmatpush1.bf16.msra.mxu0 %v6281
      %6314 = vmatprep.subr.bf16.mxu0 0
      %6315 = vmatpush1.bf16.msra.mxu0 %v6283
      %6316 = vmatprep.subr.bf16.mxu0 0
      %6317 = vmatpush1.bf16.msra.mxu0 %v6285
      %6318 = vmatprep.subr.bf16.mxu0 0
      %6319 = vmatpush1.bf16.msra.mxu0 %v6308
      %6320 = vmatprep.subr.bf16.mxu0 0
      %6321 = vmatpush1.bf16.msra.mxu0 0
      %6322 = vmatprep.subr.bf16.mxu0 0
      %6323 = vmatpush1.bf16.msra.mxu0 0
      %6324 = vmatprep.subr.bf16.mxu0 0
      %6325 = vmatpush1.bf16.msra.mxu0 0
      %6326 = vmatprep.subr.bf16.mxu0 0
      %6327 = vmatpush1.bf16.msra.mxu0 0
      %6328 = vmatprep.subr.bf16.mxu0 0
      %6329 = vmatpush1.bf16.msra.mxu0 0
      %6330 = vmatprep.subr.bf16.mxu0 0
      %6331 = vmatpush1.bf16.msra.mxu0 0
      %6332 = vmatprep.subr.bf16.mxu0 0
      %6333 = vmatpush1.bf16.msra.mxu0 0
      %6334 = vmatprep.subr.bf16.mxu0 0
      %6335 = vmatpush1.bf16.msra.mxu0 0
      %6336 = vmatprep.subr.bf16.mxu0 0
      %6337 = vmatpush1.bf16.msra.mxu0 0
      %6338 = vmatprep.subr.bf16.mxu0 0
      %6339 = vmatpush1.bf16.msra.mxu0 0
      %6340 = vmatprep.subr.bf16.mxu0 0
      %6341 = vmatpush1.bf16.msra.mxu0 0
      %6342 = vmatprep.mubr.bf16.mxu0 0
      %6343 = vmatmul.mubr.bf16.gmra.mrb[0].mxu0 %v6293
      %v6344 = vpop.f32.mrb[0].mxu0
      %v6345 = vadd.f32 0.0, %v6344
      %v6346 = vpop.f32.mrb[0].mxu0
      %v6347 = vpop.f32.mrb[0].mxu0
      %v6348 = vadd.f32 0.0, %v6347
      %v6349 = vpop.f32.mrb[0].mxu0
      %6350 = vmatprep.mubr.bf16.mxu0 0
      %6351 = vmatmul.mubr.bf16.gmra.mrb[0].mxu0 %v6296
      %v6352 = vpop.f32.mrb[0].mxu0
      %v6353 = vadd.f32 0.0, %v6352
      %v6354 = vpop.f32.mrb[0].mxu0
      %v6355 = vpop.f32.mrb[0].mxu0
      %v6356 = vadd.f32 0.0, %v6355
      %v6357 = vpop.f32.mrb[0].mxu0
      %6358 = vmatprep.mubr.bf16.mxu0 0
      %6359 = vmatmul.mubr.bf16.gmra.mrb[0].mxu0 %v6299
      %v6360 = vpop.f32.mrb[0].mxu0
      %v6361 = vadd.f32 0.0, %v6360
      %v6362 = vpop.f32.mrb[0].mxu0
      %v6363 = vpop.f32.mrb[0].mxu0
      %v6364 = vadd.f32 0.0, %v6363
      %v6365 = vpop.f32.mrb[0].mxu0
      %6366 = vmatprep.mubr.bf16.mxu0 0
      %6367 = vmatmul.mubr.bf16.gmra.mrb[0].mxu0 %v6302
      %v6368 = vpop.f32.mrb[0].mxu0
      %v6369 = vadd.f32 0.0, %v6368
      %v6370 = vpop.f32.mrb[0].mxu0
      %v6371 = vpop.f32.mrb[0].mxu0
      %v6372 = vadd.f32 0.0, %v6371
      %v6373 = vpop.f32.mrb[0].mxu0
      %6374 = vmatprep.mubr.bf16.mxu0 0
      %6375 = vmatmul.mubr.bf16.gmra.mrb[0].mxu0 %v6305
      %v6376 = vpop.f32.mrb[0].mxu0
      %v6377 = vadd.f32 0.0, %v6376
      %v6378 = vpop.f32.mrb[0].mxu0
      %v6379 = vpop.f32.mrb[0].mxu0
      %v6380 = vpop.f32.mrb[0].mxu0
      %6381 = vdwg.mxu0
      %6391 = vrot.lane.b32.xlu0 %v6345, 64
      %v6392 = vpop.permute.xlu0 %6391
      %6393 = vrot.lane.b32.xlu0 %v6348, 64
      %v6394 = vpop.permute.xlu0 %6393
      %6395 = vrot.lane.b32.xlu0 %v6353, 64
      %v6396 = vpop.permute.xlu0 %6395
      %6397 = vrot.lane.b32.xlu0 %v6356, 64
      %v6398 = vpop.permute.xlu0 %6397
      %6399 = vrot.lane.b32.xlu0 %v6361, 64
      %v6400 = vpop.permute.xlu0 %6399
      %6401 = vrot.lane.b32.xlu0 %v6364, 64
      %v6402 = vpop.permute.xlu0 %6401
      %6403 = vrot.lane.b32.xlu0 %v6369, 64
      %v6404 = vpop.permute.xlu0 %6403
      %6405 = vrot.lane.b32.xlu0 %v6372, 64
      %v6406 = vpop.permute.xlu0 %6405
      %6407 = vrot.lane.b32.xlu0 %v6377, 64
      %v6408 = vpop.permute.xlu0 %6407
      %6418 = vst.msk [vmem:[#allocation2 + $0x118] sm:$0xff] %vm2720, %v6392
      %6419 = vst.msk [vmem:[#allocation2 + $0x128] sm:$0xff] %vm2720, %v6394
      %6420 = vst.msk [vmem:[#allocation2 + $0x138] sm:$0xff] %vm2720, %v6396
      %6421 = vst.msk [vmem:[#allocation2 + $0x148] sm:$0xff] %vm2720, %v6398
      %6422 = vst.msk [vmem:[#allocation2 + $0x158] sm:$0xff] %vm2720, %v6400
      %6423 = vst.msk [vmem:[#allocation2 + $0x168] sm:$0xff] %vm2720, %v6402
      %6424 = vst.msk [vmem:[#allocation2 + $0x178] sm:$0xff] %vm2720, %v6404
      %6425 = vst.msk [vmem:[#allocation2 + $0x188] sm:$0xff] %vm2720, %v6406
      %6426 = vst.msk [vmem:[#allocation2 + $0x198] sm:$0xf] %vm2729, %v6408
      %vm6431 = vcmask 1041408
      %v6432 = vrot.slane %v1929, 6
      %v6433 = vrot.slane %v1935, 6
      %v6434 = vsel %vm6431, %v6432, %v6433
      %v6435 = vrot.slane %v1941, 6
      %v6436 = vsel %vm6431, %v6433, %v6435
      %v6437 = vrot.slane %v1947, 6
      %v6438 = vsel %vm6431, %v6435, %v6437
      %v6439 = vrot.slane %v1953, 6
      %v6440 = vsel %vm6431, %v6437, %v6439
      %v6445 = vrot.slane %v1931, 6
      %v6446 = vrot.slane %v1937, 6
      %v6447 = vsel %vm6431, %v6445, %v6446
      %v6448 = vrot.slane %v1943, 6
      %v6449 = vsel %vm6431, %v6446, %v6448
      %v6450 = vrot.slane %v1949, 6
      %v6451 = vsel %vm6431, %v6448, %v6450
      %v6452 = vrot.slane %v1955, 6
      %v6453 = vsel %vm6431, %v6450, %v6452
      %v6455 = vsel %vm2029, %v6434, 0
      %v6458 = vsel %vm2029, %v6436, 0
      %v6461 = vsel %vm2029, %v6438, 0
      %v6464 = vsel %vm2029, %v6440, 0
      %v6467 = vsel %vm2029, %v6439, 0
      %v6470 = vsel %vm2029, %v6447, 0
      %v6473 = vsel %vm2029, %v6449, 0
      %v6476 = vsel %vm2029, %v6451, 0
      %v6479 = vsel %vm2029, %v6453, 0
      %v6482 = vsel %vm2029, %v6452, 0
      %6484 = vmatprep.subr.bf16.mxu0 0
      %6485 = vmatpush1.bf16.xpose.msra.mxu0 %v6470
      %6486 = vmatprep.subr.bf16.mxu0 0
      %6487 = vmatpush1.bf16.xpose.msra.mxu0 %v6473
      %6488 = vmatprep.subr.bf16.mxu0 0
      %6489 = vmatpush1.bf16.xpose.msra.mxu0 %v6476
      %6490 = vmatprep.subr.bf16.mxu0 0
      %6491 = vmatpush1.bf16.xpose.msra.mxu0 %v6479
      %6492 = vmatprep.subr.bf16.mxu0 0
      %6493 = vmatpush1.bf16.xpose.msra.mxu0 %v6482
      %6494 = vmatprep.subr.bf16.mxu0 0
      %6495 = vmatpush1.bf16.xpose.msra.mxu0 0
      %6496 = vmatprep.subr.bf16.mxu0 0
      %6497 = vmatpush1.bf16.xpose.msra.mxu0 0
      %6498 = vmatprep.subr.bf16.mxu0 0
      %6499 = vmatpush1.bf16.xpose.msra.mxu0 0
      %6500 = vmatprep.subr.bf16.mxu0 0
      %6501 = vmatpush1.bf16.xpose.msra.mxu0 0
      %6502 = vmatprep.subr.bf16.mxu0 0
      %6503 = vmatpush1.bf16.xpose.msra.mxu0 0
      %6504 = vmatprep.subr.bf16.mxu0 0
      %6505 = vmatpush1.bf16.xpose.msra.mxu0 0
      %6506 = vmatprep.subr.bf16.mxu0 0
      %6507 = vmatpush1.bf16.xpose.msra.mxu0 0
      %6508 = vmatprep.subr.bf16.mxu0 0
      %6509 = vmatpush1.bf16.xpose.msra.mxu0 0
      %6510 = vmatprep.subr.bf16.mxu0 0
      %6511 = vmatpush1.bf16.xpose.msra.mxu0 0
      %6512 = vmatprep.subr.bf16.mxu0 0
      %6513 = vmatpush1.bf16.xpose.msra.mxu0 0
      %6514 = vmatprep.subr.bf16.mxu0 0
      %6515 = vmatpush1.bf16.xpose.msra.mxu0 0
      %6516 = vmatprep.mubr.bf16.mxu0 0
      %6517 = vmatmul.mubr.bf16.gmra.mrb[0].mxu0 %v6455
      %v6518 = vpop.f32.mrb[0].mxu0
      %v6519 = vadd.f32 %v2020, %v6518
      %v6520 = vpop.f32.mrb[0].mxu0
      %v6521 = vpop.f32.mrb[0].mxu0
      %v6522 = vadd.f32 %v2021, %v6521
      %v6523 = vpop.f32.mrb[0].mxu0
      %6524 = vmatprep.mubr.bf16.mxu0 0
      %6525 = vmatmul.mubr.bf16.gmra.mrb[0].mxu0 %v6458
      %v6526 = vpop.f32.mrb[0].mxu0
      %v6527 = vadd.f32 %v2022, %v6526
      %v6528 = vpop.f32.mrb[0].mxu0
      %v6529 = vpop.f32.mrb[0].mxu0
      %v6530 = vadd.f32 %v2023, %v6529
      %v6531 = vpop.f32.mrb[0].mxu0
      %6532 = vmatprep.mubr.bf16.mxu0 0
      %6533 = vmatmul.mubr.bf16.gmra.mrb[0].mxu0 %v6461
      %v6534 = vpop.f32.mrb[0].mxu0
      %v6535 = vadd.f32 %v2024, %v6534
      %v6536 = vpop.f32.mrb[0].mxu0
      %v6537 = vpop.f32.mrb[0].mxu0
      %v6538 = vadd.f32 %v2025, %v6537
      %v6539 = vpop.f32.mrb[0].mxu0
      %6540 = vmatprep.mubr.bf16.mxu0 0
      %6541 = vmatmul.mubr.bf16.gmra.mrb[0].mxu0 %v6464
      %v6542 = vpop.f32.mrb[0].mxu0
      %v6543 = vadd.f32 %v2026, %v6542
      %v6544 = vpop.f32.mrb[0].mxu0
      %v6545 = vpop.f32.mrb[0].mxu0
      %v6546 = vadd.f32 %v2027, %v6545
      %v6547 = vpop.f32.mrb[0].mxu0
      %6548 = vmatprep.mubr.bf16.mxu0 0
      %6549 = vmatmul.mubr.bf16.gmra.mrb[0].mxu0 %v6467
      %v6550 = vpop.f32.mrb[0].mxu0
      %v6551 = vadd.f32 %v2028, %v6550
      %v6552 = vpop.f32.mrb[0].mxu0
      %v6553 = vpop.f32.mrb[0].mxu0
      %v6554 = vpop.f32.mrb[0].mxu0
      %6555 = vdwg.mxu0
      %v6556 = vsel %vm2132, %v6519, -inf
      %6557 = vmax.xlane.f32.xlu0 %v6556
      %v6558 = vpop.xlane.xlu0 %6557
      %v6559 = vsel %vm2132, %v6522, -inf
      %6560 = vmax.xlane.f32.xlu0 %v6559
      %v6561 = vpop.xlane.xlu0 %6560
      %v6562 = vsel %vm2132, %v6527, -inf
      %6563 = vmax.xlane.f32.xlu0 %v6562
      %v6564 = vpop.xlane.xlu0 %6563
      %v6565 = vsel %vm2132, %v6530, -inf
      %6566 = vmax.xlane.f32.xlu0 %v6565
      %v6567 = vpop.xlane.xlu0 %6566
      %v6568 = vsel %vm2132, %v6535, -inf
      %6569 = vmax.xlane.f32.xlu0 %v6568
      %v6570 = vpop.xlane.xlu0 %6569
      %v6571 = vsel %vm2132, %v6538, -inf
      %6572 = vmax.xlane.f32.xlu0 %v6571
      %v6573 = vpop.xlane.xlu0 %6572
      %v6574 = vsel %vm2132, %v6543, -inf
      %6575 = vmax.xlane.f32.xlu0 %v6574
      %v6576 = vpop.xlane.xlu0 %6575
      %v6577 = vsel %vm2132, %v6546, -inf
      %6578 = vmax.xlane.f32.xlu0 %v6577
      %v6579 = vpop.xlane.xlu0 %6578
      %v6580 = vsel %vm2157, %v6551, -inf
      %6581 = vmax.xlane.f32.xlu0 %v6580
      %v6582 = vpop.xlane.xlu0 %6581
      %v6583 = vsub.f32 %v6519, %v6558
      %v6584 = vsub.f32 %v6522, %v6561
      %v6585 = vsub.f32 %v6527, %v6564
      %v6586 = vsub.f32 %v6530, %v6567
      %v6587 = vsub.f32 %v6535, %v6570
      %v6588 = vsub.f32 %v6538, %v6573
      %v6589 = vsub.f32 %v6543, %v6576
      %v6590 = vsub.f32 %v6546, %v6579
      %v6591 = vsub.f32 %v6551, %v6582
      %v6592 = vmul.f32 %v6583, 1.442695
      %v6593 = vpow.pop %v6592
      %v6594 = vmul.f32 %v6584, 1.442695
      %v6595 = vpow.pop %v6594
      %v6596 = vmul.f32 %v6585, 1.442695
      %v6597 = vpow.pop %v6596
      %v6598 = vmul.f32 %v6586, 1.442695
      %v6599 = vpow.pop %v6598
      %v6600 = vmul.f32 %v6587, 1.442695
      %v6601 = vpow.pop %v6600
      %v6602 = vmul.f32 %v6588, 1.442695
      %v6603 = vpow.pop %v6602
      %v6604 = vmul.f32 %v6589, 1.442695
      %v6605 = vpow.pop %v6604
      %v6606 = vmul.f32 %v6590, 1.442695
      %v6607 = vpow.pop %v6606
      %v6608 = vmul.f32 %v6591, 1.442695
      %v6609 = vpow.pop %v6608
      %v6610 = vsel %vm2132, %v6593, 0.0
      %6611 = vadd.xlane.f32.xlu0 %v6610
      %v6612 = vpop.xlane.xlu0 %6611
      %v6613 = vsel %vm2132, %v6595, 0.0
      %6614 = vadd.xlane.f32.xlu0 %v6613
      %v6615 = vpop.xlane.xlu0 %6614
      %v6616 = vsel %vm2132, %v6597, 0.0
      %6617 = vadd.xlane.f32.xlu0 %v6616
      %v6618 = vpop.xlane.xlu0 %6617
      %v6619 = vsel %vm2132, %v6599, 0.0
      %6620 = vadd.xlane.f32.xlu0 %v6619
      %v6621 = vpop.xlane.xlu0 %6620
      %v6622 = vsel %vm2132, %v6601, 0.0
      %6623 = vadd.xlane.f32.xlu0 %v6622
      %v6624 = vpop.xlane.xlu0 %6623
      %v6625 = vsel %vm2132, %v6603, 0.0
      %6626 = vadd.xlane.f32.xlu0 %v6625
      %v6627 = vpop.xlane.xlu0 %6626
      %v6628 = vsel %vm2132, %v6605, 0.0
      %6629 = vadd.xlane.f32.xlu0 %v6628
      %v6630 = vpop.xlane.xlu0 %6629
      %v6631 = vsel %vm2132, %v6607, 0.0
      %6632 = vadd.xlane.f32.xlu0 %v6631
      %v6633 = vpop.xlane.xlu0 %6632
      %v6634 = vsel %vm2157, %v6609, 0.0
      %6635 = vadd.xlane.f32.xlu0 %v6634
      %v6636 = vpop.xlane.xlu0 %6635
      %v6637 = vrcp.pop %v6612
      %v6638 = vrcp.pop %v6615
      %v6639 = vrcp.pop %v6618
      %v6640 = vrcp.pop %v6621
      %v6641 = vrcp.pop %v6624
      %v6642 = vrcp.pop %v6627
      %v6643 = vrcp.pop %v6630
      %v6644 = vrcp.pop %v6633
      %v6645 = vrcp.pop %v6636
      %v6646 = vmul.f32 %v6593, %v6637
      %v6647 = vmul.f32 %v6595, %v6638
      %v6648 = vmul.f32 %v6597, %v6639
      %v6649 = vmul.f32 %v6599, %v6640
      %v6650 = vmul.f32 %v6601, %v6641
      %v6651 = vmul.f32 %v6603, %v6642
      %v6652 = vmul.f32 %v6605, %v6643
      %v6653 = vmul.f32 %v6607, %v6644
      %v6654 = vmul.f32 %v6609, %v6645
      %v6655 = vpack.c.bf16 %v6647, %v6646
      %v6656 = vpack.c.bf16 %v6649, %v6648
      %v6657 = vpack.c.bf16 %v6651, %v6650
      %v6658 = vpack.c.bf16 %v6653, %v6652
      %v6659 = vpack.c.bf16 %v6654, %v6654
      %v6664 = vrot.slane %v1933, 6
      %v6665 = vrot.slane %v1939, 6
      %v6666 = vsel %vm6431, %v6664, %v6665
      %v6667 = vrot.slane %v1945, 6
      %v6668 = vsel %vm6431, %v6665, %v6667
      %v6669 = vrot.slane %v1951, 6
      %v6670 = vsel %vm6431, %v6667, %v6669
      %v6671 = vrot.slane %v1957, 6
      %v6672 = vsel %vm6431, %v6669, %v6671
      %v6678 = vsel %vm2132, %v6655, 0
      %v6681 = vsel %vm2132, %v6656, 0
      %v6684 = vsel %vm2132, %v6657, 0
      %v6687 = vsel %vm2132, %v6658, 0
      %v6690 = vsel %vm2132, %v6659, 0
      %v6693 = vsel %vm2253, %v6671, 0
      %6695 = vmatprep.subr.bf16.mxu0 0
      %6696 = vmatpush1.bf16.msra.mxu0 %v6666
      %6697 = vmatprep.subr.bf16.mxu0 0
      %6698 = vmatpush1.bf16.msra.mxu0 %v6668
      %6699 = vmatprep.subr.bf16.mxu0 0
      %6700 = vmatpush1.bf16.msra.mxu0 %v6670
      %6701 = vmatprep.subr.bf16.mxu0 0
      %6702 = vmatpush1.bf16.msra.mxu0 %v6672
      %6703 = vmatprep.subr.bf16.mxu0 0
      %6704 = vmatpush1.bf16.msra.mxu0 %v6693
      %6705 = vmatprep.subr.bf16.mxu0 0
      %6706 = vmatpush1.bf16.msra.mxu0 0
      %6707 = vmatprep.subr.bf16.mxu0 0
      %6708 = vmatpush1.bf16.msra.mxu0 0
      %6709 = vmatprep.subr.bf16.mxu0 0
      %6710 = vmatpush1.bf16.msra.mxu0 0
      %6711 = vmatprep.subr.bf16.mxu0 0
      %6712 = vmatpush1.bf16.msra.mxu0 0
      %6713 = vmatprep.subr.bf16.mxu0 0
      %6714 = vmatpush1.bf16.msra.mxu0 0
      %6715 = vmatprep.subr.bf16.mxu0 0
      %6716 = vmatpush1.bf16.msra.mxu0 0
      %6717 = vmatprep.subr.bf16.mxu0 0
      %6718 = vmatpush1.bf16.msra.mxu0 0
      %6719 = vmatprep.subr.bf16.mxu0 0
      %6720 = vmatpush1.bf16.msra.mxu0 0
      %6721 = vmatprep.subr.bf16.mxu0 0
      %6722 = vmatpush1.bf16.msra.mxu0 0
      %6723 = vmatprep.subr.bf16.mxu0 0
      %6724 = vmatpush1.bf16.msra.mxu0 0
      %6725 = vmatprep.subr.bf16.mxu0 0
      %6726 = vmatpush1.bf16.msra.mxu0 0
      %6727 = vmatprep.mubr.bf16.mxu0 0
      %6728 = vmatmul.mubr.bf16.gmra.mrb[0].mxu0 %v6678
      %v6729 = vpop.f32.mrb[0].mxu0
      %v6730 = vadd.f32 0.0, %v6729
      %v6731 = vpop.f32.mrb[0].mxu0
      %v6732 = vpop.f32.mrb[0].mxu0
      %v6733 = vadd.f32 0.0, %v6732
      %v6734 = vpop.f32.mrb[0].mxu0
      %6735 = vmatprep.mubr.bf16.mxu0 0
      %6736 = vmatmul.mubr.bf16.gmra.mrb[0].mxu0 %v6681
      %v6737 = vpop.f32.mrb[0].mxu0
      %v6738 = vadd.f32 0.0, %v6737
      %v6739 = vpop.f32.mrb[0].mxu0
      %v6740 = vpop.f32.mrb[0].mxu0
      %v6741 = vadd.f32 0.0, %v6740
      %v6742 = vpop.f32.mrb[0].mxu0
      %6743 = vmatprep.mubr.bf16.mxu0 0
      %6744 = vmatmul.mubr.bf16.gmra.mrb[0].mxu0 %v6684
      %v6745 = vpop.f32.mrb[0].mxu0
      %v6746 = vadd.f32 0.0, %v6745
      %v6747 = vpop.f32.mrb[0].mxu0
      %v6748 = vpop.f32.mrb[0].mxu0
      %v6749 = vadd.f32 0.0, %v6748
      %v6750 = vpop.f32.mrb[0].mxu0
      %6751 = vmatprep.mubr.bf16.mxu0 0
      %6752 = vmatmul.mubr.bf16.gmra.mrb[0].mxu0 %v6687
      %v6753 = vpop.f32.mrb[0].mxu0
      %v6754 = vadd.f32 0.0, %v6753
      %v6755 = vpop.f32.mrb[0].mxu0
      %v6756 = vpop.f32.mrb[0].mxu0
      %v6757 = vadd.f32 0.0, %v6756
      %v6758 = vpop.f32.mrb[0].mxu0
      %6759 = vmatprep.mubr.bf16.mxu0 0
      %6760 = vmatmul.mubr.bf16.gmra.mrb[0].mxu0 %v6690
      %v6761 = vpop.f32.mrb[0].mxu0
      %v6762 = vadd.f32 0.0, %v6761
      %v6763 = vpop.f32.mrb[0].mxu0
      %v6764 = vpop.f32.mrb[0].mxu0
      %v6765 = vpop.f32.mrb[0].mxu0
      %6766 = vdwg.mxu0
      %v6776 = vrot.slane %v6730, 4
      %v6777 = vrot.slane %v6733, 4
      %v6778 = vsel %vm3775, %v6776, %v6777
      %v6779 = vrot.slane %v6738, 4
      %v6780 = vsel %vm3775, %v6777, %v6779
      %v6781 = vrot.slane %v6741, 4
      %v6782 = vsel %vm3775, %v6779, %v6781
      %v6783 = vrot.slane %v6746, 4
      %v6784 = vsel %vm3775, %v6781, %v6783
      %v6785 = vrot.slane %v6749, 4
      %v6786 = vsel %vm3775, %v6783, %v6785
      %v6787 = vrot.slane %v6754, 4
      %v6788 = vsel %vm3775, %v6785, %v6787
      %v6789 = vrot.slane %v6757, 4
      %v6790 = vsel %vm3775, %v6787, %v6789
      %v6791 = vrot.slane %v6762, 4
      %v6792 = vsel %vm3775, %v6789, %v6791
      %6802 = vst.msk [vmem:[#allocation2 + $0x190] sm:$0xf0] %vm3802, %v6776
      %6803 = vst.msk [vmem:[#allocation2 + $0x1a0] sm:$0xff] %vm2029, %v6778
      %6804 = vst.msk [vmem:[#allocation2 + $0x1b0] sm:$0xff] %vm2029, %v6780
      %6805 = vst.msk [vmem:[#allocation2 + $0x1c0] sm:$0xff] %vm2029, %v6782
      %6806 = vst.msk [vmem:[#allocation2 + $0x1d0] sm:$0xff] %vm2029, %v6784
      %6807 = vst.msk [vmem:[#allocation2 + $0x1e0] sm:$0xff] %vm2029, %v6786
      %6808 = vst.msk [vmem:[#allocation2 + $0x1f0] sm:$0xff] %vm2029, %v6788
      %6809 = vst.msk [vmem:[#allocation2 + $0x200] sm:$0xff] %vm2029, %v6790
      %6810 = vst.msk [vmem:[#allocation2 + $0x210] sm:$0xff] %vm2029, %v6792
      %6811 = vrot.lane.b32.xlu0 %v6434, 64
      %v6812 = vpop.permute.xlu0 %6811
      %6813 = vrot.lane.b32.xlu0 %v6436, 64
      %v6814 = vpop.permute.xlu0 %6813
      %6815 = vrot.lane.b32.xlu0 %v6438, 64
      %v6816 = vpop.permute.xlu0 %6815
      %6817 = vrot.lane.b32.xlu0 %v6440, 64
      %v6818 = vpop.permute.xlu0 %6817
      %6819 = vrot.lane.b32.xlu0 %v6439, 64
      %v6820 = vpop.permute.xlu0 %6819
      %6821 = vrot.lane.b32.xlu0 %v6447, 64
      %v6822 = vpop.permute.xlu0 %6821
      %6823 = vrot.lane.b32.xlu0 %v6449, 64
      %v6824 = vpop.permute.xlu0 %6823
      %6825 = vrot.lane.b32.xlu0 %v6451, 64
      %v6826 = vpop.permute.xlu0 %6825
      %6827 = vrot.lane.b32.xlu0 %v6453, 64
      %v6828 = vpop.permute.xlu0 %6827
      %6829 = vrot.lane.b32.xlu0 %v6452, 64
      %v6830 = vpop.permute.xlu0 %6829
      %v6832 = vsel %vm2029, %v6812, 0
      %v6835 = vsel %vm2029, %v6814, 0
      %v6838 = vsel %vm2029, %v6816, 0
      %v6841 = vsel %vm2029, %v6818, 0
      %v6844 = vsel %vm2029, %v6820, 0
      %v6847 = vsel %vm2029, %v6822, 0
      %v6850 = vsel %vm2029, %v6824, 0
      %v6853 = vsel %vm2029, %v6826, 0
      %v6856 = vsel %vm2029, %v6828, 0
      %v6859 = vsel %vm2029, %v6830, 0
      %6861 = vmatprep.subr.bf16.mxu0 0
      %6862 = vmatpush1.bf16.xpose.msra.mxu0 %v6847
      %6863 = vmatprep.subr.bf16.mxu0 0
      %6864 = vmatpush1.bf16.xpose.msra.mxu0 %v6850
      %6865 = vmatprep.subr.bf16.mxu0 0
      %6866 = vmatpush1.bf16.xpose.msra.mxu0 %v6853
      %6867 = vmatprep.subr.bf16.mxu0 0
      %6868 = vmatpush1.bf16.xpose.msra.mxu0 %v6856
      %6869 = vmatprep.subr.bf16.mxu0 0
      %6870 = vmatpush1.bf16.xpose.msra.mxu0 %v6859
      %6871 = vmatprep.subr.bf16.mxu0 0
      %6872 = vmatpush1.bf16.xpose.msra.mxu0 0
      %6873 = vmatprep.subr.bf16.mxu0 0
      %6874 = vmatpush1.bf16.xpose.msra.mxu0 0
      %6875 = vmatprep.subr.bf16.mxu0 0
      %6876 = vmatpush1.bf16.xpose.msra.mxu0 0
      %6877 = vmatprep.subr.bf16.mxu0 0
      %6878 = vmatpush1.bf16.xpose.msra.mxu0 0
      %6879 = vmatprep.subr.bf16.mxu0 0
      %6880 = vmatpush1.bf16.xpose.msra.mxu0 0
      %6881 = vmatprep.subr.bf16.mxu0 0
      %6882 = vmatpush1.bf16.xpose.msra.mxu0 0
      %6883 = vmatprep.subr.bf16.mxu0 0
      %6884 = vmatpush1.bf16.xpose.msra.mxu0 0
      %6885 = vmatprep.subr.bf16.mxu0 0
      %6886 = vmatpush1.bf16.xpose.msra.mxu0 0
      %6887 = vmatprep.subr.bf16.mxu0 0
      %6888 = vmatpush1.bf16.xpose.msra.mxu0 0
      %6889 = vmatprep.subr.bf16.mxu0 0
      %6890 = vmatpush1.bf16.xpose.msra.mxu0 0
      %6891 = vmatprep.subr.bf16.mxu0 0
      %6892 = vmatpush1.bf16.xpose.msra.mxu0 0
      %6893 = vmatprep.mubr.bf16.mxu0 0
      %6894 = vmatmul.mubr.bf16.gmra.mrb[0].mxu0 %v6832
      %v6895 = vpop.f32.mrb[0].mxu0
      %v6896 = vadd.f32 %v2020, %v6895
      %v6897 = vpop.f32.mrb[0].mxu0
      %v6898 = vpop.f32.mrb[0].mxu0
      %v6899 = vadd.f32 %v2021, %v6898
      %v6900 = vpop.f32.mrb[0].mxu0
      %6901 = vmatprep.mubr.bf16.mxu0 0
      %6902 = vmatmul.mubr.bf16.gmra.mrb[0].mxu0 %v6835
      %v6903 = vpop.f32.mrb[0].mxu0
      %v6904 = vadd.f32 %v2022, %v6903
      %v6905 = vpop.f32.mrb[0].mxu0
      %v6906 = vpop.f32.mrb[0].mxu0
      %v6907 = vadd.f32 %v2023, %v6906
      %v6908 = vpop.f32.mrb[0].mxu0
      %6909 = vmatprep.mubr.bf16.mxu0 0
      %6910 = vmatmul.mubr.bf16.gmra.mrb[0].mxu0 %v6838
      %v6911 = vpop.f32.mrb[0].mxu0
      %v6912 = vadd.f32 %v2024, %v6911
      %v6913 = vpop.f32.mrb[0].mxu0
      %v6914 = vpop.f32.mrb[0].mxu0
      %v6915 = vadd.f32 %v2025, %v6914
      %v6916 = vpop.f32.mrb[0].mxu0
      %6917 = vmatprep.mubr.bf16.mxu0 0
      %6918 = vmatmul.mubr.bf16.gmra.mrb[0].mxu0 %v6841
      %v6919 = vpop.f32.mrb[0].mxu0
      %v6920 = vadd.f32 %v2026, %v6919
      %v6921 = vpop.f32.mrb[0].mxu0
      %v6922 = vpop.f32.mrb[0].mxu0
      %v6923 = vadd.f32 %v2027, %v6922
      %v6924 = vpop.f32.mrb[0].mxu0
      %6925 = vmatprep.mubr.bf16.mxu0 0
      %6926 = vmatmul.mubr.bf16.gmra.mrb[0].mxu0 %v6844
      %v6927 = vpop.f32.mrb[0].mxu0
      %v6928 = vadd.f32 %v2028, %v6927
      %v6929 = vpop.f32.mrb[0].mxu0
      %v6930 = vpop.f32.mrb[0].mxu0
      %v6931 = vpop.f32.mrb[0].mxu0
      %6932 = vdwg.mxu0
      %v6933 = vsel %vm2132, %v6896, -inf
      %6934 = vmax.xlane.f32.xlu0 %v6933
      %v6935 = vpop.xlane.xlu0 %6934
      %v6936 = vsel %vm2132, %v6899, -inf
      %6937 = vmax.xlane.f32.xlu0 %v6936
      %v6938 = vpop.xlane.xlu0 %6937
      %v6939 = vsel %vm2132, %v6904, -inf
      %6940 = vmax.xlane.f32.xlu0 %v6939
      %v6941 = vpop.xlane.xlu0 %6940
      %v6942 = vsel %vm2132, %v6907, -inf
      %6943 = vmax.xlane.f32.xlu0 %v6942
      %v6944 = vpop.xlane.xlu0 %6943
      %v6945 = vsel %vm2132, %v6912, -inf
      %6946 = vmax.xlane.f32.xlu0 %v6945
      %v6947 = vpop.xlane.xlu0 %6946
      %v6948 = vsel %vm2132, %v6915, -inf
      %6949 = vmax.xlane.f32.xlu0 %v6948
      %v6950 = vpop.xlane.xlu0 %6949
      %v6951 = vsel %vm2132, %v6920, -inf
      %6952 = vmax.xlane.f32.xlu0 %v6951
      %v6953 = vpop.xlane.xlu0 %6952
      %v6954 = vsel %vm2132, %v6923, -inf
      %6955 = vmax.xlane.f32.xlu0 %v6954
      %v6956 = vpop.xlane.xlu0 %6955
      %v6957 = vsel %vm2157, %v6928, -inf
      %6958 = vmax.xlane.f32.xlu0 %v6957
      %v6959 = vpop.xlane.xlu0 %6958
      %v6960 = vsub.f32 %v6896, %v6935
      %v6961 = vsub.f32 %v6899, %v6938
      %v6962 = vsub.f32 %v6904, %v6941
      %v6963 = vsub.f32 %v6907, %v6944
      %v6964 = vsub.f32 %v6912, %v6947
      %v6965 = vsub.f32 %v6915, %v6950
      %v6966 = vsub.f32 %v6920, %v6953
      %v6967 = vsub.f32 %v6923, %v6956
      %v6968 = vsub.f32 %v6928, %v6959
      %v6969 = vmul.f32 %v6960, 1.442695
      %v6970 = vpow.pop %v6969
      %v6971 = vmul.f32 %v6961, 1.442695
      %v6972 = vpow.pop %v6971
      %v6973 = vmul.f32 %v6962, 1.442695
      %v6974 = vpow.pop %v6973
      %v6975 = vmul.f32 %v6963, 1.442695
      %v6976 = vpow.pop %v6975
      %v6977 = vmul.f32 %v6964, 1.442695
      %v6978 = vpow.pop %v6977
      %v6979 = vmul.f32 %v6965, 1.442695
      %v6980 = vpow.pop %v6979
      %v6981 = vmul.f32 %v6966, 1.442695
      %v6982 = vpow.pop %v6981
      %v6983 = vmul.f32 %v6967, 1.442695
      %v6984 = vpow.pop %v6983
      %v6985 = vmul.f32 %v6968, 1.442695
      %v6986 = vpow.pop %v6985
      %v6987 = vsel %vm2132, %v6970, 0.0
      %6988 = vadd.xlane.f32.xlu0 %v6987
      %v6989 = vpop.xlane.xlu0 %6988
      %v6990 = vsel %vm2132, %v6972, 0.0
      %6991 = vadd.xlane.f32.xlu0 %v6990
      %v6992 = vpop.xlane.xlu0 %6991
      %v6993 = vsel %vm2132, %v6974, 0.0
      %6994 = vadd.xlane.f32.xlu0 %v6993
      %v6995 = vpop.xlane.xlu0 %6994
      %v6996 = vsel %vm2132, %v6976, 0.0
      %6997 = vadd.xlane.f32.xlu0 %v6996
      %v6998 = vpop.xlane.xlu0 %6997
      %v6999 = vsel %vm2132, %v6978, 0.0
      %7000 = vadd.xlane.f32.xlu0 %v6999
      %v7001 = vpop.xlane.xlu0 %7000
      %v7002 = vsel %vm2132, %v6980, 0.0
      %7003 = vadd.xlane.f32.xlu0 %v7002
      %v7004 = vpop.xlane.xlu0 %7003
      %v7005 = vsel %vm2132, %v6982, 0.0
      %7006 = vadd.xlane.f32.xlu0 %v7005
      %v7007 = vpop.xlane.xlu0 %7006
      %v7008 = vsel %vm2132, %v6984, 0.0
      %7009 = vadd.xlane.f32.xlu0 %v7008
      %v7010 = vpop.xlane.xlu0 %7009
      %v7011 = vsel %vm2157, %v6986, 0.0
      %7012 = vadd.xlane.f32.xlu0 %v7011
      %v7013 = vpop.xlane.xlu0 %7012
      %v7014 = vrcp.pop %v6989
      %v7015 = vrcp.pop %v6992
      %v7016 = vrcp.pop %v6995
      %v7017 = vrcp.pop %v6998
      %v7018 = vrcp.pop %v7001
      %v7019 = vrcp.pop %v7004
      %v7020 = vrcp.pop %v7007
      %v7021 = vrcp.pop %v7010
      %v7022 = vrcp.pop %v7013
      %v7023 = vmul.f32 %v6970, %v7014
      %v7024 = vmul.f32 %v6972, %v7015
      %v7025 = vmul.f32 %v6974, %v7016
      %v7026 = vmul.f32 %v6976, %v7017
      %v7027 = vmul.f32 %v6978, %v7018
      %v7028 = vmul.f32 %v6980, %v7019
      %v7029 = vmul.f32 %v6982, %v7020
      %v7030 = vmul.f32 %v6984, %v7021
      %v7031 = vmul.f32 %v6986, %v7022
      %v7032 = vpack.c.bf16 %v7024, %v7023
      %v7033 = vpack.c.bf16 %v7026, %v7025
      %v7034 = vpack.c.bf16 %v7028, %v7027
      %v7035 = vpack.c.bf16 %v7030, %v7029
      %v7036 = vpack.c.bf16 %v7031, %v7031
      %7037 = vrot.lane.b32.xlu0 %v6666, 64
      %v7038 = vpop.permute.xlu0 %7037
      %7039 = vrot.lane.b32.xlu0 %v6668, 64
      %v7040 = vpop.permute.xlu0 %7039
      %7041 = vrot.lane.b32.xlu0 %v6670, 64
      %v7042 = vpop.permute.xlu0 %7041
      %7043 = vrot.lane.b32.xlu0 %v6672, 64
      %v7044 = vpop.permute.xlu0 %7043
      %7045 = vrot.lane.b32.xlu0 %v6671, 64
      %v7046 = vpop.permute.xlu0 %7045
      %v7052 = vsel %vm2132, %v7032, 0
      %v7055 = vsel %vm2132, %v7033, 0
      %v7058 = vsel %vm2132, %v7034, 0
      %v7061 = vsel %vm2132, %v7035, 0
      %v7064 = vsel %vm2132, %v7036, 0
      %v7067 = vsel %vm2253, %v7046, 0
      %7069 = vmatprep.subr.bf16.mxu0 0
      %7070 = vmatpush1.bf16.msra.mxu0 %v7038
      %7071 = vmatprep.subr.bf16.mxu0 0
      %7072 = vmatpush1.bf16.msra.mxu0 %v7040
      %7073 = vmatprep.subr.bf16.mxu0 0
      %7074 = vmatpush1.bf16.msra.mxu0 %v7042
      %7075 = vmatprep.subr.bf16.mxu0 0
      %7076 = vmatpush1.bf16.msra.mxu0 %v7044
      %7077 = vmatprep.subr.bf16.mxu0 0
      %7078 = vmatpush1.bf16.msra.mxu0 %v7067
      %7079 = vmatprep.subr.bf16.mxu0 0
      %7080 = vmatpush1.bf16.msra.mxu0 0
      %7081 = vmatprep.subr.bf16.mxu0 0
      %7082 = vmatpush1.bf16.msra.mxu0 0
      %7083 = vmatprep.subr.bf16.mxu0 0
      %7084 = vmatpush1.bf16.msra.mxu0 0
      %7085 = vmatprep.subr.bf16.mxu0 0
      %7086 = vmatpush1.bf16.msra.mxu0 0
      %7087 = vmatprep.subr.bf16.mxu0 0
      %7088 = vmatpush1.bf16.msra.mxu0 0
      %7089 = vmatprep.subr.bf16.mxu0 0
      %7090 = vmatpush1.bf16.msra.mxu0 0
      %7091 = vmatprep.subr.bf16.mxu0 0
      %7092 = vmatpush1.bf16.msra.mxu0 0
      %7093 = vmatprep.subr.bf16.mxu0 0
      %7094 = vmatpush1.bf16.msra.mxu0 0
      %7095 = vmatprep.subr.bf16.mxu0 0
      %7096 = vmatpush1.bf16.msra.mxu0 0
      %7097 = vmatprep.subr.bf16.mxu0 0
      %7098 = vmatpush1.bf16.msra.mxu0 0
      %7099 = vmatprep.subr.bf16.mxu0 0
      %7100 = vmatpush1.bf16.msra.mxu0 0
      %7101 = vmatprep.mubr.bf16.mxu0 0
      %7102 = vmatmul.mubr.bf16.gmra.mrb[0].mxu0 %v7052
      %v7103 = vpop.f32.mrb[0].mxu0
      %v7104 = vadd.f32 0.0, %v7103
      %v7105 = vpop.f32.mrb[0].mxu0
      %v7106 = vpop.f32.mrb[0].mxu0
      %v7107 = vadd.f32 0.0, %v7106
      %v7108 = vpop.f32.mrb[0].mxu0
      %7109 = vmatprep.mubr.bf16.mxu0 0
      %7110 = vmatmul.mubr.bf16.gmra.mrb[0].mxu0 %v7055
      %v7111 = vpop.f32.mrb[0].mxu0
      %v7112 = vadd.f32 0.0, %v7111
      %v7113 = vpop.f32.mrb[0].mxu0
      %v7114 = vpop.f32.mrb[0].mxu0
      %v7115 = vadd.f32 0.0, %v7114
      %v7116 = vpop.f32.mrb[0].mxu0
      %7117 = vmatprep.mubr.bf16.mxu0 0
      %7118 = vmatmul.mubr.bf16.gmra.mrb[0].mxu0 %v7058
      %v7119 = vpop.f32.mrb[0].mxu0
      %v7120 = vadd.f32 0.0, %v7119
      %v7121 = vpop.f32.mrb[0].mxu0
      %v7122 = vpop.f32.mrb[0].mxu0
      %v7123 = vadd.f32 0.0, %v7122
      %v7124 = vpop.f32.mrb[0].mxu0
      %7125 = vmatprep.mubr.bf16.mxu0 0
      %7126 = vmatmul.mubr.bf16.gmra.mrb[0].mxu0 %v7061
      %v7127 = vpop.f32.mrb[0].mxu0
      %v7128 = vadd.f32 0.0, %v7127
      %v7129 = vpop.f32.mrb[0].mxu0
      %v7130 = vpop.f32.mrb[0].mxu0
      %v7131 = vadd.f32 0.0, %v7130
      %v7132 = vpop.f32.mrb[0].mxu0
      %7133 = vmatprep.mubr.bf16.mxu0 0
      %7134 = vmatmul.mubr.bf16.gmra.mrb[0].mxu0 %v7064
      %v7135 = vpop.f32.mrb[0].mxu0
      %v7136 = vadd.f32 0.0, %v7135
      %v7137 = vpop.f32.mrb[0].mxu0
      %v7138 = vpop.f32.mrb[0].mxu0
      %v7139 = vpop.f32.mrb[0].mxu0
      %7140 = vdwg.mxu0
      %v7150 = vrot.slane %v7104, 4
      %v7151 = vrot.slane %v7107, 4
      %v7152 = vsel %vm3775, %v7150, %v7151
      %v7153 = vrot.slane %v7112, 4
      %v7154 = vsel %vm3775, %v7151, %v7153
      %v7155 = vrot.slane %v7115, 4
      %v7156 = vsel %vm3775, %v7153, %v7155
      %v7157 = vrot.slane %v7120, 4
      %v7158 = vsel %vm3775, %v7155, %v7157
      %v7159 = vrot.slane %v7123, 4
      %v7160 = vsel %vm3775, %v7157, %v7159
      %v7161 = vrot.slane %v7128, 4
      %v7162 = vsel %vm3775, %v7159, %v7161
      %v7163 = vrot.slane %v7131, 4
      %v7164 = vsel %vm3775, %v7161, %v7163
      %v7165 = vrot.slane %v7136, 4
      %v7166 = vsel %vm3775, %v7163, %v7165
      %7167 = vrot.lane.b32.xlu0 %v7150, 64
      %v7168 = vpop.permute.xlu0 %7167
      %7169 = vrot.lane.b32.xlu0 %v7152, 64
      %v7170 = vpop.permute.xlu0 %7169
      %7171 = vrot.lane.b32.xlu0 %v7154, 64
      %v7172 = vpop.permute.xlu0 %7171
      %7173 = vrot.lane.b32.xlu0 %v7156, 64
      %v7174 = vpop.permute.xlu0 %7173
      %7175 = vrot.lane.b32.xlu0 %v7158, 64
      %v7176 = vpop.permute.xlu0 %7175
      %7177 = vrot.lane.b32.xlu0 %v7160, 64
      %v7178 = vpop.permute.xlu0 %7177
      %7179 = vrot.lane.b32.xlu0 %v7162, 64
      %v7180 = vpop.permute.xlu0 %7179
      %7181 = vrot.lane.b32.xlu0 %v7164, 64
      %v7182 = vpop.permute.xlu0 %7181
      %7183 = vrot.lane.b32.xlu0 %v7166, 64
      %v7184 = vpop.permute.xlu0 %7183
      %7194 = vst.msk [vmem:[#allocation2 + $0x190] sm:$0xf0] %vm4195, %v7168
      %7195 = vst.msk [vmem:[#allocation2 + $0x1a0] sm:$0xff] %vm2720, %v7170
      %7196 = vst.msk [vmem:[#allocation2 + $0x1b0] sm:$0xff] %vm2720, %v7172
      %7197 = vst.msk [vmem:[#allocation2 + $0x1c0] sm:$0xff] %vm2720, %v7174
      %7198 = vst.msk [vmem:[#allocation2 + $0x1d0] sm:$0xff] %vm2720, %v7176
      %7199 = vst.msk [vmem:[#allocation2 + $0x1e0] sm:$0xff] %vm2720, %v7178
      %7200 = vst.msk [vmem:[#allocation2 + $0x1f0] sm:$0xff] %vm2720, %v7180
      %7201 = vst.msk [vmem:[#allocation2 + $0x200] sm:$0xff] %vm2720, %v7182
      %7202 = vst.msk [vmem:[#allocation2 + $0x210] sm:$0xff] %vm2720, %v7184
      %v7207 = vrot.slane %v1930, 6
      %v7208 = vrot.slane %v1936, 6
      %v7209 = vsel %vm6431, %v7207, %v7208
      %v7210 = vrot.slane %v1942, 6
      %v7211 = vsel %vm6431, %v7208, %v7210
      %v7212 = vrot.slane %v1948, 6
      %v7213 = vsel %vm6431, %v7210, %v7212
      %v7214 = vrot.slane %v1954, 6
      %v7215 = vsel %vm6431, %v7212, %v7214
      %v7220 = vrot.slane %v1932, 6
      %v7221 = vrot.slane %v1938, 6
      %v7222 = vsel %vm6431, %v7220, %v7221
      %v7223 = vrot.slane %v1944, 6
      %v7224 = vsel %vm6431, %v7221, %v7223
      %v7225 = vrot.slane %v1950, 6
      %v7226 = vsel %vm6431, %v7223, %v7225
      %v7227 = vrot.slane %v1956, 6
      %v7228 = vsel %vm6431, %v7225, %v7227
      %v7230 = vsel %vm2029, %v7209, 0
      %v7233 = vsel %vm2029, %v7211, 0
      %v7236 = vsel %vm2029, %v7213, 0
      %v7239 = vsel %vm2029, %v7215, 0
      %v7242 = vsel %vm2029, %v7214, 0
      %v7245 = vsel %vm2029, %v7222, 0
      %v7248 = vsel %vm2029, %v7224, 0
      %v7251 = vsel %vm2029, %v7226, 0
      %v7254 = vsel %vm2029, %v7228, 0
      %v7257 = vsel %vm2029, %v7227, 0
      %7259 = vmatprep.subr.bf16.mxu0 0
      %7260 = vmatpush1.bf16.xpose.msra.mxu0 %v7245
      %7261 = vmatprep.subr.bf16.mxu0 0
      %7262 = vmatpush1.bf16.xpose.msra.mxu0 %v7248
      %7263 = vmatprep.subr.bf16.mxu0 0
      %7264 = vmatpush1.bf16.xpose.msra.mxu0 %v7251
      %7265 = vmatprep.subr.bf16.mxu0 0
      %7266 = vmatpush1.bf16.xpose.msra.mxu0 %v7254
      %7267 = vmatprep.subr.bf16.mxu0 0
      %7268 = vmatpush1.bf16.xpose.msra.mxu0 %v7257
      %7269 = vmatprep.subr.bf16.mxu0 0
      %7270 = vmatpush1.bf16.xpose.msra.mxu0 0
      %7271 = vmatprep.subr.bf16.mxu0 0
      %7272 = vmatpush1.bf16.xpose.msra.mxu0 0
      %7273 = vmatprep.subr.bf16.mxu0 0
      %7274 = vmatpush1.bf16.xpose.msra.mxu0 0
      %7275 = vmatprep.subr.bf16.mxu0 0
      %7276 = vmatpush1.bf16.xpose.msra.mxu0 0
      %7277 = vmatprep.subr.bf16.mxu0 0
      %7278 = vmatpush1.bf16.xpose.msra.mxu0 0
      %7279 = vmatprep.subr.bf16.mxu0 0
      %7280 = vmatpush1.bf16.xpose.msra.mxu0 0
      %7281 = vmatprep.subr.bf16.mxu0 0
      %7282 = vmatpush1.bf16.xpose.msra.mxu0 0
      %7283 = vmatprep.subr.bf16.mxu0 0
      %7284 = vmatpush1.bf16.xpose.msra.mxu0 0
      %7285 = vmatprep.subr.bf16.mxu0 0
      %7286 = vmatpush1.bf16.xpose.msra.mxu0 0
      %7287 = vmatprep.subr.bf16.mxu0 0
      %7288 = vmatpush1.bf16.xpose.msra.mxu0 0
      %7289 = vmatprep.subr.bf16.mxu0 0
      %7290 = vmatpush1.bf16.xpose.msra.mxu0 0
      %7291 = vmatprep.mubr.bf16.mxu0 0
      %7292 = vmatmul.mubr.bf16.gmra.mrb[0].mxu0 %v7230
      %v7293 = vpop.f32.mrb[0].mxu0
      %v7294 = vadd.f32 %v2020, %v7293
      %v7295 = vpop.f32.mrb[0].mxu0
      %v7296 = vpop.f32.mrb[0].mxu0
      %v7297 = vadd.f32 %v2021, %v7296
      %v7298 = vpop.f32.mrb[0].mxu0
      %7299 = vmatprep.mubr.bf16.mxu0 0
      %7300 = vmatmul.mubr.bf16.gmra.mrb[0].mxu0 %v7233
      %v7301 = vpop.f32.mrb[0].mxu0
      %v7302 = vadd.f32 %v2022, %v7301
      %v7303 = vpop.f32.mrb[0].mxu0
      %v7304 = vpop.f32.mrb[0].mxu0
      %v7305 = vadd.f32 %v2023, %v7304
      %v7306 = vpop.f32.mrb[0].mxu0
      %7307 = vmatprep.mubr.bf16.mxu0 0
      %7308 = vmatmul.mubr.bf16.gmra.mrb[0].mxu0 %v7236
      %v7309 = vpop.f32.mrb[0].mxu0
      %v7310 = vadd.f32 %v2024, %v7309
      %v7311 = vpop.f32.mrb[0].mxu0
      %v7312 = vpop.f32.mrb[0].mxu0
      %v7313 = vadd.f32 %v2025, %v7312
      %v7314 = vpop.f32.mrb[0].mxu0
      %7315 = vmatprep.mubr.bf16.mxu0 0
      %7316 = vmatmul.mubr.bf16.gmra.mrb[0].mxu0 %v7239
      %v7317 = vpop.f32.mrb[0].mxu0
      %v7318 = vadd.f32 %v2026, %v7317
      %v7319 = vpop.f32.mrb[0].mxu0
      %v7320 = vpop.f32.mrb[0].mxu0
      %v7321 = vadd.f32 %v2027, %v7320
      %v7322 = vpop.f32.mrb[0].mxu0
      %7323 = vmatprep.mubr.bf16.mxu0 0
      %7324 = vmatmul.mubr.bf16.gmra.mrb[0].mxu0 %v7242
      %v7325 = vpop.f32.mrb[0].mxu0
      %v7326 = vadd.f32 %v2028, %v7325
      %v7327 = vpop.f32.mrb[0].mxu0
      %v7328 = vpop.f32.mrb[0].mxu0
      %v7329 = vpop.f32.mrb[0].mxu0
      %7330 = vdwg.mxu0
      %v7331 = vsel %vm2132, %v7294, -inf
      %7332 = vmax.xlane.f32.xlu0 %v7331
      %v7333 = vpop.xlane.xlu0 %7332
      %v7334 = vsel %vm2132, %v7297, -inf
      %7335 = vmax.xlane.f32.xlu0 %v7334
      %v7336 = vpop.xlane.xlu0 %7335
      %v7337 = vsel %vm2132, %v7302, -inf
      %7338 = vmax.xlane.f32.xlu0 %v7337
      %v7339 = vpop.xlane.xlu0 %7338
      %v7340 = vsel %vm2132, %v7305, -inf
      %7341 = vmax.xlane.f32.xlu0 %v7340
      %v7342 = vpop.xlane.xlu0 %7341
      %v7343 = vsel %vm2132, %v7310, -inf
      %7344 = vmax.xlane.f32.xlu0 %v7343
      %v7345 = vpop.xlane.xlu0 %7344
      %v7346 = vsel %vm2132, %v7313, -inf
      %7347 = vmax.xlane.f32.xlu0 %v7346
      %v7348 = vpop.xlane.xlu0 %7347
      %v7349 = vsel %vm2132, %v7318, -inf
      %7350 = vmax.xlane.f32.xlu0 %v7349
      %v7351 = vpop.xlane.xlu0 %7350
      %v7352 = vsel %vm2132, %v7321, -inf
      %7353 = vmax.xlane.f32.xlu0 %v7352
      %v7354 = vpop.xlane.xlu0 %7353
      %v7355 = vsel %vm2157, %v7326, -inf
      %7356 = vmax.xlane.f32.xlu0 %v7355
      %v7357 = vpop.xlane.xlu0 %7356
      %v7358 = vsub.f32 %v7294, %v7333
      %v7359 = vsub.f32 %v7297, %v7336
      %v7360 = vsub.f32 %v7302, %v7339
      %v7361 = vsub.f32 %v7305, %v7342
      %v7362 = vsub.f32 %v7310, %v7345
      %v7363 = vsub.f32 %v7313, %v7348
      %v7364 = vsub.f32 %v7318, %v7351
      %v7365 = vsub.f32 %v7321, %v7354
      %v7366 = vsub.f32 %v7326, %v7357
      %v7367 = vmul.f32 %v7358, 1.442695
      %v7368 = vpow.pop %v7367
      %v7369 = vmul.f32 %v7359, 1.442695
      %v7370 = vpow.pop %v7369
      %v7371 = vmul.f32 %v7360, 1.442695
      %v7372 = vpow.pop %v7371
      %v7373 = vmul.f32 %v7361, 1.442695
      %v7374 = vpow.pop %v7373
      %v7375 = vmul.f32 %v7362, 1.442695
      %v7376 = vpow.pop %v7375
      %v7377 = vmul.f32 %v7363, 1.442695
      %v7378 = vpow.pop %v7377
      %v7379 = vmul.f32 %v7364, 1.442695
      %v7380 = vpow.pop %v7379
      %v7381 = vmul.f32 %v7365, 1.442695
      %v7382 = vpow.pop %v7381
      %v7383 = vmul.f32 %v7366, 1.442695
      %v7384 = vpow.pop %v7383
      %v7385 = vsel %vm2132, %v7368, 0.0
      %7386 = vadd.xlane.f32.xlu0 %v7385
      %v7387 = vpop.xlane.xlu0 %7386
      %v7388 = vsel %vm2132, %v7370, 0.0
      %7389 = vadd.xlane.f32.xlu0 %v7388
      %v7390 = vpop.xlane.xlu0 %7389
      %v7391 = vsel %vm2132, %v7372, 0.0
      %7392 = vadd.xlane.f32.xlu0 %v7391
      %v7393 = vpop.xlane.xlu0 %7392
      %v7394 = vsel %vm2132, %v7374, 0.0
      %7395 = vadd.xlane.f32.xlu0 %v7394
      %v7396 = vpop.xlane.xlu0 %7395
      %v7397 = vsel %vm2132, %v7376, 0.0
      %7398 = vadd.xlane.f32.xlu0 %v7397
      %v7399 = vpop.xlane.xlu0 %7398
      %v7400 = vsel %vm2132, %v7378, 0.0
      %7401 = vadd.xlane.f32.xlu0 %v7400
      %v7402 = vpop.xlane.xlu0 %7401
      %v7403 = vsel %vm2132, %v7380, 0.0
      %7404 = vadd.xlane.f32.xlu0 %v7403
      %v7405 = vpop.xlane.xlu0 %7404
      %v7406 = vsel %vm2132, %v7382, 0.0
      %7407 = vadd.xlane.f32.xlu0 %v7406
      %v7408 = vpop.xlane.xlu0 %7407
      %v7409 = vsel %vm2157, %v7384, 0.0
      %7410 = vadd.xlane.f32.xlu0 %v7409
      %v7411 = vpop.xlane.xlu0 %7410
      %v7412 = vrcp.pop %v7387
      %v7413 = vrcp.pop %v7390
      %v7414 = vrcp.pop %v7393
      %v7415 = vrcp.pop %v7396
      %v7416 = vrcp.pop %v7399
      %v7417 = vrcp.pop %v7402
      %v7418 = vrcp.pop %v7405
      %v7419 = vrcp.pop %v7408
      %v7420 = vrcp.pop %v7411
      %v7421 = vmul.f32 %v7368, %v7412
      %v7422 = vmul.f32 %v7370, %v7413
      %v7423 = vmul.f32 %v7372, %v7414
      %v7424 = vmul.f32 %v7374, %v7415
      %v7425 = vmul.f32 %v7376, %v7416
      %v7426 = vmul.f32 %v7378, %v7417
      %v7427 = vmul.f32 %v7380, %v7418
      %v7428 = vmul.f32 %v7382, %v7419
      %v7429 = vmul.f32 %v7384, %v7420
      %v7430 = vpack.c.bf16 %v7422, %v7421
      %v7431 = vpack.c.bf16 %v7424, %v7423
      %v7432 = vpack.c.bf16 %v7426, %v7425
      %v7433 = vpack.c.bf16 %v7428, %v7427
      %v7434 = vpack.c.bf16 %v7429, %v7429
      %v7439 = vrot.slane %v1934, 6
      %v7440 = vrot.slane %v1940, 6
      %v7441 = vsel %vm6431, %v7439, %v7440
      %v7442 = vrot.slane %v1946, 6
      %v7443 = vsel %vm6431, %v7440, %v7442
      %v7444 = vrot.slane %v1952, 6
      %v7445 = vsel %vm6431, %v7442, %v7444
      %v7446 = vrot.slane %v1958, 6
      %v7447 = vsel %vm6431, %v7444, %v7446
      %v7453 = vsel %vm2132, %v7430, 0
      %v7456 = vsel %vm2132, %v7431, 0
      %v7459 = vsel %vm2132, %v7432, 0
      %v7462 = vsel %vm2132, %v7433, 0
      %v7465 = vsel %vm2132, %v7434, 0
      %v7468 = vsel %vm2253, %v7446, 0
      %7470 = vmatprep.subr.bf16.mxu0 0
      %7471 = vmatpush1.bf16.msra.mxu0 %v7441
      %7472 = vmatprep.subr.bf16.mxu0 0
      %7473 = vmatpush1.bf16.msra.mxu0 %v7443
      %7474 = vmatprep.subr.bf16.mxu0 0
      %7475 = vmatpush1.bf16.msra.mxu0 %v7445
      %7476 = vmatprep.subr.bf16.mxu0 0
      %7477 = vmatpush1.bf16.msra.mxu0 %v7447
      %7478 = vmatprep.subr.bf16.mxu0 0
      %7479 = vmatpush1.bf16.msra.mxu0 %v7468
      %7480 = vmatprep.subr.bf16.mxu0 0
      %7481 = vmatpush1.bf16.msra.mxu0 0
      %7482 = vmatprep.subr.bf16.mxu0 0
      %7483 = vmatpush1.bf16.msra.mxu0 0
      %7484 = vmatprep.subr.bf16.mxu0 0
      %7485 = vmatpush1.bf16.msra.mxu0 0
      %7486 = vmatprep.subr.bf16.mxu0 0
      %7487 = vmatpush1.bf16.msra.mxu0 0
      %7488 = vmatprep.subr.bf16.mxu0 0
      %7489 = vmatpush1.bf16.msra.mxu0 0
      %7490 = vmatprep.subr.bf16.mxu0 0
      %7491 = vmatpush1.bf16.msra.mxu0 0
      %7492 = vmatprep.subr.bf16.mxu0 0
      %7493 = vmatpush1.bf16.msra.mxu0 0
      %7494 = vmatprep.subr.bf16.mxu0 0
      %7495 = vmatpush1.bf16.msra.mxu0 0
      %7496 = vmatprep.subr.bf16.mxu0 0
      %7497 = vmatpush1.bf16.msra.mxu0 0
      %7498 = vmatprep.subr.bf16.mxu0 0
      %7499 = vmatpush1.bf16.msra.mxu0 0
      %7500 = vmatprep.subr.bf16.mxu0 0
      %7501 = vmatpush1.bf16.msra.mxu0 0
      %7502 = vmatprep.mubr.bf16.mxu0 0
      %7503 = vmatmul.mubr.bf16.gmra.mrb[0].mxu0 %v7453
      %v7504 = vpop.f32.mrb[0].mxu0
      %v7505 = vadd.f32 0.0, %v7504
      %v7506 = vpop.f32.mrb[0].mxu0
      %v7507 = vpop.f32.mrb[0].mxu0
      %v7508 = vadd.f32 0.0, %v7507
      %v7509 = vpop.f32.mrb[0].mxu0
      %7510 = vmatprep.mubr.bf16.mxu0 0
      %7511 = vmatmul.mubr.bf16.gmra.mrb[0].mxu0 %v7456
      %v7512 = vpop.f32.mrb[0].mxu0
      %v7513 = vadd.f32 0.0, %v7512
      %v7514 = vpop.f32.mrb[0].mxu0
      %v7515 = vpop.f32.mrb[0].mxu0
      %v7516 = vadd.f32 0.0, %v7515
      %v7517 = vpop.f32.mrb[0].mxu0
      %7518 = vmatprep.mubr.bf16.mxu0 0
      %7519 = vmatmul.mubr.bf16.gmra.mrb[0].mxu0 %v7459
      %v7520 = vpop.f32.mrb[0].mxu0
      %v7521 = vadd.f32 0.0, %v7520
      %v7522 = vpop.f32.mrb[0].mxu0
      %v7523 = vpop.f32.mrb[0].mxu0
      %v7524 = vadd.f32 0.0, %v7523
      %v7525 = vpop.f32.mrb[0].mxu0
      %7526 = vmatprep.mubr.bf16.mxu0 0
      %7527 = vmatmul.mubr.bf16.gmra.mrb[0].mxu0 %v7462
      %v7528 = vpop.f32.mrb[0].mxu0
      %v7529 = vadd.f32 0.0, %v7528
      %v7530 = vpop.f32.mrb[0].mxu0
      %v7531 = vpop.f32.mrb[0].mxu0
      %v7532 = vadd.f32 0.0, %v7531
      %v7533 = vpop.f32.mrb[0].mxu0
      %7534 = vmatprep.mubr.bf16.mxu0 0
      %7535 = vmatmul.mubr.bf16.gmra.mrb[0].mxu0 %v7465
      %v7536 = vpop.f32.mrb[0].mxu0
      %v7537 = vadd.f32 0.0, %v7536
      %v7538 = vpop.f32.mrb[0].mxu0
      %v7539 = vpop.f32.mrb[0].mxu0
      %v7540 = vpop.f32.mrb[0].mxu0
      %7541 = vdwg.mxu0
      %v7551 = vrot.slane %v7505, 4
      %v7552 = vrot.slane %v7508, 4
      %v7553 = vsel %vm3775, %v7551, %v7552
      %v7554 = vrot.slane %v7513, 4
      %v7555 = vsel %vm3775, %v7552, %v7554
      %v7556 = vrot.slane %v7516, 4
      %v7557 = vsel %vm3775, %v7554, %v7556
      %v7558 = vrot.slane %v7521, 4
      %v7559 = vsel %vm3775, %v7556, %v7558
      %v7560 = vrot.slane %v7524, 4
      %v7561 = vsel %vm3775, %v7558, %v7560
      %v7562 = vrot.slane %v7529, 4
      %v7563 = vsel %vm3775, %v7560, %v7562
      %v7564 = vrot.slane %v7532, 4
      %v7565 = vsel %vm3775, %v7562, %v7564
      %v7566 = vrot.slane %v7537, 4
      %v7567 = vsel %vm3775, %v7564, %v7566
      %7577 = vst.msk [vmem:[#allocation2 + $0x198] sm:$0xf0] %vm3802, %v7551
      %7578 = vst.msk [vmem:[#allocation2 + $0x1a8] sm:$0xff] %vm2029, %v7553
      %7579 = vst.msk [vmem:[#allocation2 + $0x1b8] sm:$0xff] %vm2029, %v7555
      %7580 = vst.msk [vmem:[#allocation2 + $0x1c8] sm:$0xff] %vm2029, %v7557
      %7581 = vst.msk [vmem:[#allocation2 + $0x1d8] sm:$0xff] %vm2029, %v7559
      %7582 = vst.msk [vmem:[#allocation2 + $0x1e8] sm:$0xff] %vm2029, %v7561
      %7583 = vst.msk [vmem:[#allocation2 + $0x1f8] sm:$0xff] %vm2029, %v7563
      %7584 = vst.msk [vmem:[#allocation2 + $0x208] sm:$0xff] %vm2029, %v7565
      %7585 = vst.msk [vmem:[#allocation2 + $0x218] sm:$0xff] %vm2029, %v7567
      %7586 = vrot.lane.b32.xlu0 %v7209, 64
      %v7587 = vpop.permute.xlu0 %7586
      %7588 = vrot.lane.b32.xlu0 %v7211, 64
      %v7589 = vpop.permute.xlu0 %7588
      %7590 = vrot.lane.b32.xlu0 %v7213, 64
      %v7591 = vpop.permute.xlu0 %7590
      %7592 = vrot.lane.b32.xlu0 %v7215, 64
      %v7593 = vpop.permute.xlu0 %7592
      %7594 = vrot.lane.b32.xlu0 %v7214, 64
      %v7595 = vpop.permute.xlu0 %7594
      %7596 = vrot.lane.b32.xlu0 %v7222, 64
      %v7597 = vpop.permute.xlu0 %7596
      %7598 = vrot.lane.b32.xlu0 %v7224, 64
      %v7599 = vpop.permute.xlu0 %7598
      %7600 = vrot.lane.b32.xlu0 %v7226, 64
      %v7601 = vpop.permute.xlu0 %7600
      %7602 = vrot.lane.b32.xlu0 %v7228, 64
      %v7603 = vpop.permute.xlu0 %7602
      %7604 = vrot.lane.b32.xlu0 %v7227, 64
      %v7605 = vpop.permute.xlu0 %7604
      %v7607 = vsel %vm2029, %v7587, 0
      %v7610 = vsel %vm2029, %v7589, 0
      %v7613 = vsel %vm2029, %v7591, 0
      %v7616 = vsel %vm2029, %v7593, 0
      %v7619 = vsel %vm2029, %v7595, 0
      %v7622 = vsel %vm2029, %v7597, 0
      %v7625 = vsel %vm2029, %v7599, 0
      %v7628 = vsel %vm2029, %v7601, 0
      %v7631 = vsel %vm2029, %v7603, 0
      %v7634 = vsel %vm2029, %v7605, 0
      %7636 = vmatprep.subr.bf16.mxu0 0
      %7637 = vmatpush1.bf16.xpose.msra.mxu0 %v7622
      %7638 = vmatprep.subr.bf16.mxu0 0
      %7639 = vmatpush1.bf16.xpose.msra.mxu0 %v7625
      %7640 = vmatprep.subr.bf16.mxu0 0
      %7641 = vmatpush1.bf16.xpose.msra.mxu0 %v7628
      %7642 = vmatprep.subr.bf16.mxu0 0
      %7643 = vmatpush1.bf16.xpose.msra.mxu0 %v7631
      %7644 = vmatprep.subr.bf16.mxu0 0
      %7645 = vmatpush1.bf16.xpose.msra.mxu0 %v7634
      %7646 = vmatprep.subr.bf16.mxu0 0
      %7647 = vmatpush1.bf16.xpose.msra.mxu0 0
      %7648 = vmatprep.subr.bf16.mxu0 0
      %7649 = vmatpush1.bf16.xpose.msra.mxu0 0
      %7650 = vmatprep.subr.bf16.mxu0 0
      %7651 = vmatpush1.bf16.xpose.msra.mxu0 0
      %7652 = vmatprep.subr.bf16.mxu0 0
      %7653 = vmatpush1.bf16.xpose.msra.mxu0 0
      %7654 = vmatprep.subr.bf16.mxu0 0
      %7655 = vmatpush1.bf16.xpose.msra.mxu0 0
      %7656 = vmatprep.subr.bf16.mxu0 0
      %7657 = vmatpush1.bf16.xpose.msra.mxu0 0
      %7658 = vmatprep.subr.bf16.mxu0 0
      %7659 = vmatpush1.bf16.xpose.msra.mxu0 0
      %7660 = vmatprep.subr.bf16.mxu0 0
      %7661 = vmatpush1.bf16.xpose.msra.mxu0 0
      %7662 = vmatprep.subr.bf16.mxu0 0
      %7663 = vmatpush1.bf16.xpose.msra.mxu0 0
      %7664 = vmatprep.subr.bf16.mxu0 0
      %7665 = vmatpush1.bf16.xpose.msra.mxu0 0
      %7666 = vmatprep.subr.bf16.mxu0 0
      %7667 = vmatpush1.bf16.xpose.msra.mxu0 0
      %7668 = vmatprep.mubr.bf16.mxu0 0
      %7669 = vmatmul.mubr.bf16.gmra.mrb[0].mxu0 %v7607
      %v7670 = vpop.f32.mrb[0].mxu0
      %v7671 = vadd.f32 %v2020, %v7670
      %v7672 = vpop.f32.mrb[0].mxu0
      %v7673 = vpop.f32.mrb[0].mxu0
      %v7674 = vadd.f32 %v2021, %v7673
      %v7675 = vpop.f32.mrb[0].mxu0
      %7676 = vmatprep.mubr.bf16.mxu0 0
      %7677 = vmatmul.mubr.bf16.gmra.mrb[0].mxu0 %v7610
      %v7678 = vpop.f32.mrb[0].mxu0
      %v7679 = vadd.f32 %v2022, %v7678
      %v7680 = vpop.f32.mrb[0].mxu0
      %v7681 = vpop.f32.mrb[0].mxu0
      %v7682 = vadd.f32 %v2023, %v7681
      %v7683 = vpop.f32.mrb[0].mxu0
      %7684 = vmatprep.mubr.bf16.mxu0 0
      %7685 = vmatmul.mubr.bf16.gmra.mrb[0].mxu0 %v7613
      %v7686 = vpop.f32.mrb[0].mxu0
      %v7687 = vadd.f32 %v2024, %v7686
      %v7688 = vpop.f32.mrb[0].mxu0
      %v7689 = vpop.f32.mrb[0].mxu0
      %v7690 = vadd.f32 %v2025, %v7689
      %v7691 = vpop.f32.mrb[0].mxu0
      %7692 = vmatprep.mubr.bf16.mxu0 0
      %7693 = vmatmul.mubr.bf16.gmra.mrb[0].mxu0 %v7616
      %v7694 = vpop.f32.mrb[0].mxu0
      %v7695 = vadd.f32 %v2026, %v7694
      %v7696 = vpop.f32.mrb[0].mxu0
      %v7697 = vpop.f32.mrb[0].mxu0
      %v7698 = vadd.f32 %v2027, %v7697
      %v7699 = vpop.f32.mrb[0].mxu0
      %7700 = vmatprep.mubr.bf16.mxu0 0
      %7701 = vmatmul.mubr.bf16.gmra.mrb[0].mxu0 %v7619
      %v7702 = vpop.f32.mrb[0].mxu0
      %v7703 = vadd.f32 %v2028, %v7702
      %v7704 = vpop.f32.mrb[0].mxu0
      %v7705 = vpop.f32.mrb[0].mxu0
      %v7706 = vpop.f32.mrb[0].mxu0
      %7707 = vdwg.mxu0
      %v7708 = vsel %vm2132, %v7671, -inf
      %7709 = vmax.xlane.f32.xlu0 %v7708
      %v7710 = vpop.xlane.xlu0 %7709
      %v7711 = vsel %vm2132, %v7674, -inf
      %7712 = vmax.xlane.f32.xlu0 %v7711
      %v7713 = vpop.xlane.xlu0 %7712
      %v7714 = vsel %vm2132, %v7679, -inf
      %7715 = vmax.xlane.f32.xlu0 %v7714
      %v7716 = vpop.xlane.xlu0 %7715
      %v7717 = vsel %vm2132, %v7682, -inf
      %7718 = vmax.xlane.f32.xlu0 %v7717
      %v7719 = vpop.xlane.xlu0 %7718
      %v7720 = vsel %vm2132, %v7687, -inf
      %7721 = vmax.xlane.f32.xlu0 %v7720
      %v7722 = vpop.xlane.xlu0 %7721
      %v7723 = vsel %vm2132, %v7690, -inf
      %7724 = vmax.xlane.f32.xlu0 %v7723
      %v7725 = vpop.xlane.xlu0 %7724
      %v7726 = vsel %vm2132, %v7695, -inf
      %7727 = vmax.xlane.f32.xlu0 %v7726
      %v7728 = vpop.xlane.xlu0 %7727
      %v7729 = vsel %vm2132, %v7698, -inf
      %7730 = vmax.xlane.f32.xlu0 %v7729
      %v7731 = vpop.xlane.xlu0 %7730
      %v7732 = vsel %vm2157, %v7703, -inf
      %7733 = vmax.xlane.f32.xlu0 %v7732
      %v7734 = vpop.xlane.xlu0 %7733
      %v7735 = vsub.f32 %v7671, %v7710
      %v7736 = vsub.f32 %v7674, %v7713
      %v7737 = vsub.f32 %v7679, %v7716
      %v7738 = vsub.f32 %v7682, %v7719
      %v7739 = vsub.f32 %v7687, %v7722
      %v7740 = vsub.f32 %v7690, %v7725
      %v7741 = vsub.f32 %v7695, %v7728
      %v7742 = vsub.f32 %v7698, %v7731
      %v7743 = vsub.f32 %v7703, %v7734
      %v7744 = vmul.f32 %v7735, 1.442695
      %v7745 = vpow.pop %v7744
      %v7746 = vmul.f32 %v7736, 1.442695
      %v7747 = vpow.pop %v7746
      %v7748 = vmul.f32 %v7737, 1.442695
      %v7749 = vpow.pop %v7748
      %v7750 = vmul.f32 %v7738, 1.442695
      %v7751 = vpow.pop %v7750
      %v7752 = vmul.f32 %v7739, 1.442695
      %v7753 = vpow.pop %v7752
      %v7754 = vmul.f32 %v7740, 1.442695
      %v7755 = vpow.pop %v7754
      %v7756 = vmul.f32 %v7741, 1.442695
      %v7757 = vpow.pop %v7756
      %v7758 = vmul.f32 %v7742, 1.442695
      %v7759 = vpow.pop %v7758
      %v7760 = vmul.f32 %v7743, 1.442695
      %v7761 = vpow.pop %v7760
      %v7762 = vsel %vm2132, %v7745, 0.0
      %7763 = vadd.xlane.f32.xlu0 %v7762
      %v7764 = vpop.xlane.xlu0 %7763
      %v7765 = vsel %vm2132, %v7747, 0.0
      %7766 = vadd.xlane.f32.xlu0 %v7765
      %v7767 = vpop.xlane.xlu0 %7766
      %v7768 = vsel %vm2132, %v7749, 0.0
      %7769 = vadd.xlane.f32.xlu0 %v7768
      %v7770 = vpop.xlane.xlu0 %7769
      %v7771 = vsel %vm2132, %v7751, 0.0
      %7772 = vadd.xlane.f32.xlu0 %v7771
      %v7773 = vpop.xlane.xlu0 %7772
      %v7774 = vsel %vm2132, %v7753, 0.0
      %7775 = vadd.xlane.f32.xlu0 %v7774
      %v7776 = vpop.xlane.xlu0 %7775
      %v7777 = vsel %vm2132, %v7755, 0.0
      %7778 = vadd.xlane.f32.xlu0 %v7777
      %v7779 = vpop.xlane.xlu0 %7778
      %v7780 = vsel %vm2132, %v7757, 0.0
      %7781 = vadd.xlane.f32.xlu0 %v7780
      %v7782 = vpop.xlane.xlu0 %7781
      %v7783 = vsel %vm2132, %v7759, 0.0
      %7784 = vadd.xlane.f32.xlu0 %v7783
      %v7785 = vpop.xlane.xlu0 %7784
      %v7786 = vsel %vm2157, %v7761, 0.0
      %7787 = vadd.xlane.f32.xlu0 %v7786
      %v7788 = vpop.xlane.xlu0 %7787
      %v7789 = vrcp.pop %v7764
      %v7790 = vrcp.pop %v7767
      %v7791 = vrcp.pop %v7770
      %v7792 = vrcp.pop %v7773
      %v7793 = vrcp.pop %v7776
      %v7794 = vrcp.pop %v7779
      %v7795 = vrcp.pop %v7782
      %v7796 = vrcp.pop %v7785
      %v7797 = vrcp.pop %v7788
      %v7798 = vmul.f32 %v7745, %v7789
      %v7799 = vmul.f32 %v7747, %v7790
      %v7800 = vmul.f32 %v7749, %v7791
      %v7801 = vmul.f32 %v7751, %v7792
      %v7802 = vmul.f32 %v7753, %v7793
      %v7803 = vmul.f32 %v7755, %v7794
      %v7804 = vmul.f32 %v7757, %v7795
      %v7805 = vmul.f32 %v7759, %v7796
      %v7806 = vmul.f32 %v7761, %v7797
      %v7807 = vpack.c.bf16 %v7799, %v7798
      %v7808 = vpack.c.bf16 %v7801, %v7800
      %v7809 = vpack.c.bf16 %v7803, %v7802
      %v7810 = vpack.c.bf16 %v7805, %v7804
      %v7811 = vpack.c.bf16 %v7806, %v7806
      %7812 = vrot.lane.b32.xlu0 %v7441, 64
      %v7813 = vpop.permute.xlu0 %7812
      %7814 = vrot.lane.b32.xlu0 %v7443, 64
      %v7815 = vpop.permute.xlu0 %7814
      %7816 = vrot.lane.b32.xlu0 %v7445, 64
      %v7817 = vpop.permute.xlu0 %7816
      %7818 = vrot.lane.b32.xlu0 %v7447, 64
      %v7819 = vpop.permute.xlu0 %7818
      %7820 = vrot.lane.b32.xlu0 %v7446, 64
      %v7821 = vpop.permute.xlu0 %7820
      %v7827 = vsel %vm2132, %v7807, 0
      %v7830 = vsel %vm2132, %v7808, 0
      %v7833 = vsel %vm2132, %v7809, 0
      %v7836 = vsel %vm2132, %v7810, 0
      %v7839 = vsel %vm2132, %v7811, 0
      %v7842 = vsel %vm2253, %v7821, 0
      %7844 = vmatprep.subr.bf16.mxu0 0
      %7845 = vmatpush1.bf16.msra.mxu0 %v7813
      %7846 = vmatprep.subr.bf16.mxu0 0
      %7847 = vmatpush1.bf16.msra.mxu0 %v7815
      %7848 = vmatprep.subr.bf16.mxu0 0
      %7849 = vmatpush1.bf16.msra.mxu0 %v7817
      %7850 = vmatprep.subr.bf16.mxu0 0
      %7851 = vmatpush1.bf16.msra.mxu0 %v7819
      %7852 = vmatprep.subr.bf16.mxu0 0
      %7853 = vmatpush1.bf16.msra.mxu0 %v7842
      %7854 = vmatprep.subr.bf16.mxu0 0
      %7855 = vmatpush1.bf16.msra.mxu0 0
      %7856 = vmatprep.subr.bf16.mxu0 0
      %7857 = vmatpush1.bf16.msra.mxu0 0
      %7858 = vmatprep.subr.bf16.mxu0 0
      %7859 = vmatpush1.bf16.msra.mxu0 0
      %7860 = vmatprep.subr.bf16.mxu0 0
      %7861 = vmatpush1.bf16.msra.mxu0 0
      %7862 = vmatprep.subr.bf16.mxu0 0
      %7863 = vmatpush1.bf16.msra.mxu0 0
      %7864 = vmatprep.subr.bf16.mxu0 0
      %7865 = vmatpush1.bf16.msra.mxu0 0
      %7866 = vmatprep.subr.bf16.mxu0 0
      %7867 = vmatpush1.bf16.msra.mxu0 0
      %7868 = vmatprep.subr.bf16.mxu0 0
      %7869 = vmatpush1.bf16.msra.mxu0 0
      %7870 = vmatprep.subr.bf16.mxu0 0
      %7871 = vmatpush1.bf16.msra.mxu0 0
      %7872 = vmatprep.subr.bf16.mxu0 0
      %7873 = vmatpush1.bf16.msra.mxu0 0
      %7874 = vmatprep.subr.bf16.mxu0 0
      %7875 = vmatpush1.bf16.msra.mxu0 0
      %7876 = vmatprep.mubr.bf16.mxu0 0
      %7877 = vmatmul.mubr.bf16.gmra.mrb[0].mxu0 %v7827
      %v7878 = vpop.f32.mrb[0].mxu0
      %v7879 = vadd.f32 0.0, %v7878
      %v7880 = vpop.f32.mrb[0].mxu0
      %v7881 = vpop.f32.mrb[0].mxu0
      %v7882 = vadd.f32 0.0, %v7881
      %v7883 = vpop.f32.mrb[0].mxu0
      %7884 = vmatprep.mubr.bf16.mxu0 0
      %7885 = vmatmul.mubr.bf16.gmra.mrb[0].mxu0 %v7830
      %v7886 = vpop.f32.mrb[0].mxu0
      %v7887 = vadd.f32 0.0, %v7886
      %v7888 = vpop.f32.mrb[0].mxu0
      %v7889 = vpop.f32.mrb[0].mxu0
      %v7890 = vadd.f32 0.0, %v7889
      %v7891 = vpop.f32.mrb[0].mxu0
      %7892 = vmatprep.mubr.bf16.mxu0 0
      %7893 = vmatmul.mubr.bf16.gmra.mrb[0].mxu0 %v7833
      %v7894 = vpop.f32.mrb[0].mxu0
      %v7895 = vadd.f32 0.0, %v7894
      %v7896 = vpop.f32.mrb[0].mxu0
      %v7897 = vpop.f32.mrb[0].mxu0
      %v7898 = vadd.f32 0.0, %v7897
      %v7899 = vpop.f32.mrb[0].mxu0
      %7900 = vmatprep.mubr.bf16.mxu0 0
      %7901 = vmatmul.mubr.bf16.gmra.mrb[0].mxu0 %v7836
      %v7902 = vpop.f32.mrb[0].mxu0
      %v7903 = vadd.f32 0.0, %v7902
      %v7904 = vpop.f32.mrb[0].mxu0
      %v7905 = vpop.f32.mrb[0].mxu0
      %v7906 = vadd.f32 0.0, %v7905
      %v7907 = vpop.f32.mrb[0].mxu0
      %7908 = vmatprep.mubr.bf16.mxu0 0
      %7909 = vmatmul.mubr.bf16.gmra.mrb[0].mxu0 %v7839
      %v7910 = vpop.f32.mrb[0].mxu0
      %v7911 = vadd.f32 0.0, %v7910
      %v7912 = vpop.f32.mrb[0].mxu0
      %v7913 = vpop.f32.mrb[0].mxu0
      %v7914 = vpop.f32.mrb[0].mxu0
      %7915 = vdwg.mxu0
      %v7925 = vrot.slane %v7879, 4
      %v7926 = vrot.slane %v7882, 4
      %v7927 = vsel %vm3775, %v7925, %v7926
      %v7928 = vrot.slane %v7887, 4
      %v7929 = vsel %vm3775, %v7926, %v7928
      %v7930 = vrot.slane %v7890, 4
      %v7931 = vsel %vm3775, %v7928, %v7930
      %v7932 = vrot.slane %v7895, 4
      %v7933 = vsel %vm3775, %v7930, %v7932
      %v7934 = vrot.slane %v7898, 4
      %v7935 = vsel %vm3775, %v7932, %v7934
      %v7936 = vrot.slane %v7903, 4
      %v7937 = vsel %vm3775, %v7934, %v7936
      %v7938 = vrot.slane %v7906, 4
      %v7939 = vsel %vm3775, %v7936, %v7938
      %v7940 = vrot.slane %v7911, 4
      %v7941 = vsel %vm3775, %v7938, %v7940
      %7942 = vrot.lane.b32.xlu0 %v7925, 64
      %v7943 = vpop.permute.xlu0 %7942
      %7944 = vrot.lane.b32.xlu0 %v7927, 64
      %v7945 = vpop.permute.xlu0 %7944
      %7946 = vrot.lane.b32.xlu0 %v7929, 64
      %v7947 = vpop.permute.xlu0 %7946
      %7948 = vrot.lane.b32.xlu0 %v7931, 64
      %v7949 = vpop.permute.xlu0 %7948
      %7950 = vrot.lane.b32.xlu0 %v7933, 64
      %v7951 = vpop.permute.xlu0 %7950
      %7952 = vrot.lane.b32.xlu0 %v7935, 64
      %v7953 = vpop.permute.xlu0 %7952
      %7954 = vrot.lane.b32.xlu0 %v7937, 64
      %v7955 = vpop.permute.xlu0 %7954
      %7956 = vrot.lane.b32.xlu0 %v7939, 64
      %v7957 = vpop.permute.xlu0 %7956
      %7958 = vrot.lane.b32.xlu0 %v7941, 64
      %v7959 = vpop.permute.xlu0 %7958
      %7969 = vst.msk [vmem:[#allocation2 + $0x198] sm:$0xf0] %vm4195, %v7943
      %7970 = vst.msk [vmem:[#allocation2 + $0x1a8] sm:$0xff] %vm2720, %v7945
      %7971 = vst.msk [vmem:[#allocation2 + $0x1b8] sm:$0xff] %vm2720, %v7947
      %7972 = vst.msk [vmem:[#allocation2 + $0x1c8] sm:$0xff] %vm2720, %v7949
      %7973 = vst.msk [vmem:[#allocation2 + $0x1d8] sm:$0xff] %vm2720, %v7951
      %7974 = vst.msk [vmem:[#allocation2 + $0x1e8] sm:$0xff] %vm2720, %v7953
      %7975 = vst.msk [vmem:[#allocation2 + $0x1f8] sm:$0xff] %vm2720, %v7955
      %7976 = vst.msk [vmem:[#allocation2 + $0x208] sm:$0xff] %vm2720, %v7957
      %7977 = vst.msk [vmem:[#allocation2 + $0x218] sm:$0xff] %vm2720, %v7959
      %v7978 = vld [vmem:[#allocation2] sm:$0xff]
      %v7979 = vld [vmem:[#allocation2 + $0x8] sm:$0xff]
      %v7980 = vld [vmem:[#allocation2 + $0x10] sm:$0xff]
      %v7981 = vld [vmem:[#allocation2 + $0x18] sm:$0xff]
      %v7982 = vld [vmem:[#allocation2 + $0x20] sm:$0xff]
      %v7983 = vld [vmem:[#allocation2 + $0x28] sm:$0xff]
      %v7984 = vld [vmem:[#allocation2 + $0x30] sm:$0xff]
      %v7985 = vld [vmem:[#allocation2 + $0x38] sm:$0xff]
      %v7986 = vld [vmem:[#allocation2 + $0x40] sm:$0xff]
      %v7987 = vld [vmem:[#allocation2 + $0x48] sm:$0xff]
      %v7988 = vld [vmem:[#allocation2 + $0x50] sm:$0xff]
      %v7989 = vld [vmem:[#allocation2 + $0x58] sm:$0xff]
      %v7990 = vld [vmem:[#allocation2 + $0x60] sm:$0xff]
      %v7991 = vld [vmem:[#allocation2 + $0x68] sm:$0xff]
      %v7992 = vld [vmem:[#allocation2 + $0x70] sm:$0xff]
      %v7993 = vld [vmem:[#allocation2 + $0x78] sm:$0xff]
      %v7994 = vld [vmem:[#allocation2 + $0x80] sm:$0xff]
      %v7995 = vld [vmem:[#allocation2 + $0x88] sm:$0xff]
      %v7996 = vld [vmem:[#allocation2 + $0x90] sm:$0xff]
      %v7997 = vld [vmem:[#allocation2 + $0x98] sm:$0xff]
      %v7998 = vld [vmem:[#allocation2 + $0xa0] sm:$0xff]
      %v7999 = vld [vmem:[#allocation2 + $0xa8] sm:$0xff]
      %v8000 = vld [vmem:[#allocation2 + $0xb0] sm:$0xff]
      %v8001 = vld [vmem:[#allocation2 + $0xb8] sm:$0xff]
      %v8002 = vld [vmem:[#allocation2 + $0xc0] sm:$0xff]
      %v8003 = vld [vmem:[#allocation2 + $0xc8] sm:$0xff]
      %v8004 = vld [vmem:[#allocation2 + $0xd0] sm:$0xff]
      %v8005 = vld [vmem:[#allocation2 + $0xd8] sm:$0xff]
      %v8006 = vld [vmem:[#allocation2 + $0xe0] sm:$0xff]
      %v8007 = vld [vmem:[#allocation2 + $0xe8] sm:$0xff]
      %v8008 = vld [vmem:[#allocation2 + $0xf0] sm:$0xff]
      %v8009 = vld [vmem:[#allocation2 + $0xf8] sm:$0xff]
      %v8010 = vld [vmem:[#allocation2 + $0x100] sm:$0xff]
      %v8011 = vld [vmem:[#allocation2 + $0x108] sm:$0xff]
      %v8012 = vld [vmem:[#allocation2 + $0x110] sm:$0xff]
      %v8013 = vld [vmem:[#allocation2 + $0x118] sm:$0xff]
      %v8014 = vld [vmem:[#allocation2 + $0x120] sm:$0xff]
      %v8015 = vld [vmem:[#allocation2 + $0x128] sm:$0xff]
      %v8016 = vld [vmem:[#allocation2 + $0x130] sm:$0xff]
      %v8017 = vld [vmem:[#allocation2 + $0x138] sm:$0xff]
      %v8018 = vld [vmem:[#allocation2 + $0x140] sm:$0xff]
      %v8019 = vld [vmem:[#allocation2 + $0x148] sm:$0xff]
      %v8020 = vld [vmem:[#allocation2 + $0x150] sm:$0xff]
      %v8021 = vld [vmem:[#allocation2 + $0x158] sm:$0xff]
      %v8022 = vld [vmem:[#allocation2 + $0x160] sm:$0xff]
      %v8023 = vld [vmem:[#allocation2 + $0x168] sm:$0xff]
      %v8024 = vld [vmem:[#allocation2 + $0x170] sm:$0xff]
      %v8025 = vld [vmem:[#allocation2 + $0x178] sm:$0xff]
      %v8026 = vld [vmem:[#allocation2 + $0x180] sm:$0xff]
      %v8027 = vld [vmem:[#allocation2 + $0x188] sm:$0xff]
      %v8028 = vld [vmem:[#allocation2 + $0x190] sm:$0xff]
      %v8029 = vld [vmem:[#allocation2 + $0x198] sm:$0xff]
      %v8030 = vld [vmem:[#allocation2 + $0x1a0] sm:$0xff]
      %v8031 = vld [vmem:[#allocation2 + $0x1a8] sm:$0xff]
      %v8032 = vld [vmem:[#allocation2 + $0x1b0] sm:$0xff]
      %v8033 = vld [vmem:[#allocation2 + $0x1b8] sm:$0xff]
      %v8034 = vld [vmem:[#allocation2 + $0x1c0] sm:$0xff]
      %v8035 = vld [vmem:[#allocation2 + $0x1c8] sm:$0xff]
      %v8036 = vld [vmem:[#allocation2 + $0x1d0] sm:$0xff]
      %v8037 = vld [vmem:[#allocation2 + $0x1d8] sm:$0xff]
      %v8038 = vld [vmem:[#allocation2 + $0x1e0] sm:$0xff]
      %v8039 = vld [vmem:[#allocation2 + $0x1e8] sm:$0xff]
      %v8040 = vld [vmem:[#allocation2 + $0x1f0] sm:$0xff]
      %v8041 = vld [vmem:[#allocation2 + $0x1f8] sm:$0xff]
      %v8042 = vld [vmem:[#allocation2 + $0x200] sm:$0xff]
      %v8043 = vld [vmem:[#allocation2 + $0x208] sm:$0xff]
      %v8044 = vld [vmem:[#allocation2 + $0x210] sm:$0xff]
      %v8045 = vld [vmem:[#allocation2 + $0x218] sm:$0xff]
      %v8046 = vpack.c.bf16 %v7980, %v7978
      %v8047 = vpack.c.bf16 %v7981, %v7979
      %v8048 = vpack.c.bf16 %v7984, %v7982
      %v8049 = vpack.c.bf16 %v7985, %v7983
      %v8050 = vpack.c.bf16 %v7988, %v7986
      %v8051 = vpack.c.bf16 %v7989, %v7987
      %v8052 = vpack.c.bf16 %v7992, %v7990
      %v8053 = vpack.c.bf16 %v7993, %v7991
      %v8054 = vpack.c.bf16 %v7996, %v7994
      %v8055 = vpack.c.bf16 %v7997, %v7995
      %v8056 = vpack.c.bf16 %v8000, %v7998
      %v8057 = vpack.c.bf16 %v8001, %v7999
      %v8058 = vpack.c.bf16 %v8004, %v8002
      %v8059 = vpack.c.bf16 %v8005, %v8003
      %v8060 = vpack.c.bf16 %v8008, %v8006
      %v8061 = vpack.c.bf16 %v8009, %v8007
      %v8062 = vpack.c.bf16 %v8012, %v8010
      %v8063 = vpack.c.bf16 %v8013, %v8011
      %v8064 = vpack.c.bf16 %v8016, %v8014
      %v8065 = vpack.c.bf16 %v8017, %v8015
      %v8066 = vpack.c.bf16 %v8020, %v8018
      %v8067 = vpack.c.bf16 %v8021, %v8019
      %v8068 = vpack.c.bf16 %v8024, %v8022
      %v8069 = vpack.c.bf16 %v8025, %v8023
      %v8070 = vpack.c.bf16 %v8028, %v8026
      %v8071 = vpack.c.bf16 %v8029, %v8027
      %v8072 = vpack.c.bf16 %v8032, %v8030
      %v8073 = vpack.c.bf16 %v8033, %v8031
      %v8074 = vpack.c.bf16 %v8036, %v8034
      %v8075 = vpack.c.bf16 %v8037, %v8035
      %v8076 = vpack.c.bf16 %v8040, %v8038
      %v8077 = vpack.c.bf16 %v8041, %v8039
      %v8078 = vpack.c.bf16 %v8044, %v8042
      %v8079 = vpack.c.bf16 %v8045, %v8043
      %v8080 = vld [vmem:[%s4] sm:$0xf]
      %v8081 = vld [vmem:[%s4 + $0x4] sm:$0xf]
      %v8082 = vld [vmem:[%s4 + $0x8] sm:$0xf]
      %v8083 = vld [vmem:[%s4 + $0xc] sm:$0xf]
      %v8084 = vld [vmem:[%s4 + $0x10] sm:$0xf]
      %v8085 = vld [vmem:[%s4 + $0x14] sm:$0xf]
      %v8086 = vld [vmem:[%s4 + $0x18] sm:$0xf]
      %v8087 = vld [vmem:[%s4 + $0x1c] sm:$0xf]
      %v8088 = vld [vmem:[%s4 + $0x20] sm:$0xf]
      %v8089 = vld [vmem:[%s4 + $0x24] sm:$0xf]
      %v8090 = vld [vmem:[%s4 + $0x28] sm:$0xf]
      %v8091 = vld [vmem:[%s4 + $0x2c] sm:$0xf]
      %v8092 = vld [vmem:[%s4 + $0x30] sm:$0xf]
      %v8093 = vld [vmem:[%s4 + $0x34] sm:$0xf]
      %v8094 = vld [vmem:[%s4 + $0x38] sm:$0xf]
      %v8095 = vld [vmem:[%s4 + $0x3c] sm:$0xf]
      %v8096 = vld [vmem:[%s4 + $0x40] sm:$0xf]
      %v8097 = vld [vmem:[%s4 + $0x44] sm:$0xf]
      %v8098 = vld [vmem:[%s4 + $0x48] sm:$0xf]
      %v8099 = vld [vmem:[%s4 + $0x4c] sm:$0xf]
      %v8100 = vld [vmem:[%s4 + $0x50] sm:$0xf]
      %v8101 = vld [vmem:[%s4 + $0x54] sm:$0xf]
      %v8102 = vld [vmem:[%s4 + $0x58] sm:$0xf]
      %v8103 = vld [vmem:[%s4 + $0x5c] sm:$0xf]
      %v8104 = vld [vmem:[%s4 + $0x60] sm:$0xf]
      %v8105 = vld [vmem:[%s4 + $0x64] sm:$0xf]
      %v8106 = vld [vmem:[%s4 + $0x68] sm:$0xf]
      %v8107 = vld [vmem:[%s4 + $0x6c] sm:$0xf]
      %v8108 = vld [vmem:[%s4 + $0x70] sm:$0xf]
      %v8109 = vld [vmem:[%s4 + $0x74] sm:$0xf]
      %v8110 = vld [vmem:[%s4 + $0x78] sm:$0xf]
      %v8111 = vld [vmem:[%s4 + $0x7c] sm:$0xf]
      %v8144 = vunpack.c.l.b16 %v8080
      %v8145 = vunpack.c.l.b16 %v8081
      %v8146 = vunpack.c.l.b16 %v8082
      %v8147 = vunpack.c.l.b16 %v8083
      %v8148 = vunpack.c.l.b16 %v8084
      %v8149 = vunpack.c.l.b16 %v8085
      %v8150 = vunpack.c.l.b16 %v8086
      %v8151 = vunpack.c.l.b16 %v8087
      %v8152 = vunpack.c.l.b16 %v8088
      %v8153 = vunpack.c.l.b16 %v8089
      %v8154 = vunpack.c.l.b16 %v8090
      %v8155 = vunpack.c.l.b16 %v8091
      %v8156 = vunpack.c.l.b16 %v8092
      %v8157 = vunpack.c.l.b16 %v8093
      %v8158 = vunpack.c.l.b16 %v8094
      %v8159 = vunpack.c.l.b16 %v8095
      %v8160 = vunpack.c.l.b16 %v8096
      %v8161 = vunpack.c.l.b16 %v8097
      %v8162 = vunpack.c.l.b16 %v8098
      %v8163 = vunpack.c.l.b16 %v8099
      %v8164 = vunpack.c.l.b16 %v8100
      %v8165 = vunpack.c.l.b16 %v8101
      %v8166 = vunpack.c.l.b16 %v8102
      %v8167 = vunpack.c.l.b16 %v8103
      %v8168 = vunpack.c.l.b16 %v8104
      %v8169 = vunpack.c.l.b16 %v8105
      %v8170 = vunpack.c.l.b16 %v8106
      %v8171 = vunpack.c.l.b16 %v8107
      %v8172 = vunpack.c.l.b16 %v8108
      %v8173 = vunpack.c.l.b16 %v8109
      %v8174 = vunpack.c.l.b16 %v8110
      %v8175 = vunpack.c.l.b16 %v8111
      %v8176 = vpack.c.b16 %v8145, %v8144
      %v8177 = vpack.c.b16 %v8147, %v8146
      %v8178 = vpack.c.b16 %v8149, %v8148
      %v8179 = vpack.c.b16 %v8151, %v8150
      %v8180 = vpack.c.b16 %v8153, %v8152
      %v8181 = vpack.c.b16 %v8155, %v8154
      %v8182 = vpack.c.b16 %v8157, %v8156
      %v8183 = vpack.c.b16 %v8159, %v8158
      %v8184 = vpack.c.b16 %v8161, %v8160
      %v8185 = vpack.c.b16 %v8163, %v8162
      %v8186 = vpack.c.b16 %v8165, %v8164
      %v8187 = vpack.c.b16 %v8167, %v8166
      %v8188 = vpack.c.b16 %v8169, %v8168
      %v8189 = vpack.c.b16 %v8171, %v8170
      %v8190 = vpack.c.b16 %v8173, %v8172
      %v8191 = vpack.c.b16 %v8175, %v8174
      %8208 = vmatprep.subr.bf16.mxu0 0
      %8209 = vmatpush1.bf16.msra.mxu0 %v8176
      %8210 = vmatprep.subr.bf16.mxu0 0
      %8211 = vmatpush1.bf16.msra.mxu0 %v8177
      %8212 = vmatprep.subr.bf16.mxu0 0
      %8213 = vmatpush1.bf16.msra.mxu0 %v8178
      %8214 = vmatprep.subr.bf16.mxu0 0
      %8215 = vmatpush1.bf16.msra.mxu0 %v8179
      %8216 = vmatprep.subr.bf16.mxu0 0
      %8217 = vmatpush1.bf16.msra.mxu0 %v8180
      %8218 = vmatprep.subr.bf16.mxu0 0
      %8219 = vmatpush1.bf16.msra.mxu0 %v8181
      %8220 = vmatprep.subr.bf16.mxu0 0
      %8221 = vmatpush1.bf16.msra.mxu0 %v8182
      %8222 = vmatprep.subr.bf16.mxu0 0
      %8223 = vmatpush1.bf16.msra.mxu0 %v8183
      %8224 = vmatprep.subr.bf16.mxu0 0
      %8225 = vmatpush1.bf16.msra.mxu0 %v8184
      %8226 = vmatprep.subr.bf16.mxu0 0
      %8227 = vmatpush1.bf16.msra.mxu0 %v8185
      %8228 = vmatprep.subr.bf16.mxu0 0
      %8229 = vmatpush1.bf16.msra.mxu0 %v8186
      %8230 = vmatprep.subr.bf16.mxu0 0
      %8231 = vmatpush1.bf16.msra.mxu0 %v8187
      %8232 = vmatprep.subr.bf16.mxu0 0
      %8233 = vmatpush1.bf16.msra.mxu0 %v8188
      %8234 = vmatprep.subr.bf16.mxu0 0
      %8235 = vmatpush1.bf16.msra.mxu0 %v8189
      %8236 = vmatprep.subr.bf16.mxu0 0
      %8237 = vmatpush1.bf16.msra.mxu0 %v8190
      %8238 = vmatprep.subr.bf16.mxu0 0
      %8239 = vmatpush1.bf16.msra.mxu0 %v8191
      %8240 = vmatprep.mubr.bf16.mxu0 %v8047
      %8241 = vmatmul.mubr.bf16.gmra.mrb[0].mxu0 %v8046
      %v8242 = vpop.f32.mrb[0].mxu0
      %v8243 = vadd.f32 0.0, %v8242
      %v8244 = vpop.f32.mrb[0].mxu0
      %v8245 = vpop.f32.mrb[0].mxu0
      %v8246 = vadd.f32 0.0, %v8245
      %v8247 = vpop.f32.mrb[0].mxu0
      %8248 = vmatprep.mubr.bf16.mxu0 %v8049
      %8249 = vmatmul.mubr.bf16.gmra.mrb[0].mxu0 %v8048
      %v8250 = vpop.f32.mrb[0].mxu0
      %v8251 = vadd.f32 0.0, %v8250
      %v8252 = vpop.f32.mrb[0].mxu0
      %v8253 = vpop.f32.mrb[0].mxu0
      %v8254 = vadd.f32 0.0, %v8253
      %v8255 = vpop.f32.mrb[0].mxu0
      %8256 = vmatprep.mubr.bf16.mxu0 %v8051
      %8257 = vmatmul.mubr.bf16.gmra.mrb[0].mxu0 %v8050
      %v8258 = vpop.f32.mrb[0].mxu0
      %v8259 = vadd.f32 0.0, %v8258
      %v8260 = vpop.f32.mrb[0].mxu0
      %v8261 = vpop.f32.mrb[0].mxu0
      %v8262 = vadd.f32 0.0, %v8261
      %v8263 = vpop.f32.mrb[0].mxu0
      %8264 = vmatprep.mubr.bf16.mxu0 %v8053
      %8265 = vmatmul.mubr.bf16.gmra.mrb[0].mxu0 %v8052
      %v8266 = vpop.f32.mrb[0].mxu0
      %v8267 = vadd.f32 0.0, %v8266
      %v8268 = vpop.f32.mrb[0].mxu0
      %v8269 = vpop.f32.mrb[0].mxu0
      %v8270 = vadd.f32 0.0, %v8269
      %v8271 = vpop.f32.mrb[0].mxu0
      %8272 = vmatprep.mubr.bf16.mxu0 %v8055
      %8273 = vmatmul.mubr.bf16.gmra.mrb[0].mxu0 %v8054
      %v8274 = vpop.f32.mrb[0].mxu0
      %v8275 = vadd.f32 0.0, %v8274
      %v8276 = vpop.f32.mrb[0].mxu0
      %v8277 = vpop.f32.mrb[0].mxu0
      %v8278 = vadd.f32 0.0, %v8277
      %v8279 = vpop.f32.mrb[0].mxu0
      %8280 = vmatprep.mubr.bf16.mxu0 %v8057
      %8281 = vmatmul.mubr.bf16.gmra.mrb[0].mxu0 %v8056
      %v8282 = vpop.f32.mrb[0].mxu0
      %v8283 = vadd.f32 0.0, %v8282
      %v8284 = vpop.f32.mrb[0].mxu0
      %v8285 = vpop.f32.mrb[0].mxu0
      %v8286 = vadd.f32 0.0, %v8285
      %v8287 = vpop.f32.mrb[0].mxu0
      %8288 = vmatprep.mubr.bf16.mxu0 %v8059
      %8289 = vmatmul.mubr.bf16.gmra.mrb[0].mxu0 %v8058
      %v8290 = vpop.f32.mrb[0].mxu0
      %v8291 = vadd.f32 0.0, %v8290
      %v8292 = vpop.f32.mrb[0].mxu0
      %v8293 = vpop.f32.mrb[0].mxu0
      %v8294 = vadd.f32 0.0, %v8293
      %v8295 = vpop.f32.mrb[0].mxu0
      %8296 = vmatprep.mubr.bf16.mxu0 %v8061
      %8297 = vmatmul.mubr.bf16.gmra.mrb[0].mxu0 %v8060
      %v8298 = vpop.f32.mrb[0].mxu0
      %v8299 = vadd.f32 0.0, %v8298
      %v8300 = vpop.f32.mrb[0].mxu0
      %v8301 = vpop.f32.mrb[0].mxu0
      %v8302 = vadd.f32 0.0, %v8301
      %v8303 = vpop.f32.mrb[0].mxu0
      %8304 = vmatprep.mubr.bf16.mxu0 %v8063
      %8305 = vmatmul.mubr.bf16.gmra.mrb[0].mxu0 %v8062
      %v8306 = vpop.f32.mrb[0].mxu0
      %v8307 = vadd.f32 0.0, %v8306
      %v8308 = vpop.f32.mrb[0].mxu0
      %v8309 = vpop.f32.mrb[0].mxu0
      %v8310 = vadd.f32 0.0, %v8309
      %v8311 = vpop.f32.mrb[0].mxu0
      %8312 = vmatprep.mubr.bf16.mxu0 %v8065
      %8313 = vmatmul.mubr.bf16.gmra.mrb[0].mxu0 %v8064
      %v8314 = vpop.f32.mrb[0].mxu0
      %v8315 = vadd.f32 0.0, %v8314
      %v8316 = vpop.f32.mrb[0].mxu0
      %v8317 = vpop.f32.mrb[0].mxu0
      %v8318 = vadd.f32 0.0, %v8317
      %v8319 = vpop.f32.mrb[0].mxu0
      %8320 = vmatprep.mubr.bf16.mxu0 %v8067
      %8321 = vmatmul.mubr.bf16.gmra.mrb[0].mxu0 %v8066
      %v8322 = vpop.f32.mrb[0].mxu0
      %v8323 = vadd.f32 0.0, %v8322
      %v8324 = vpop.f32.mrb[0].mxu0
      %v8325 = vpop.f32.mrb[0].mxu0
      %v8326 = vadd.f32 0.0, %v8325
      %v8327 = vpop.f32.mrb[0].mxu0
      %8328 = vmatprep.mubr.bf16.mxu0 %v8069
      %8329 = vmatmul.mubr.bf16.gmra.mrb[0].mxu0 %v8068
      %v8330 = vpop.f32.mrb[0].mxu0
      %v8331 = vadd.f32 0.0, %v8330
      %v8332 = vpop.f32.mrb[0].mxu0
      %v8333 = vpop.f32.mrb[0].mxu0
      %v8334 = vadd.f32 0.0, %v8333
      %v8335 = vpop.f32.mrb[0].mxu0
      %8336 = vmatprep.mubr.bf16.mxu0 %v8071
      %8337 = vmatmul.mubr.bf16.gmra.mrb[0].mxu0 %v8070
      %v8338 = vpop.f32.mrb[0].mxu0
      %v8339 = vadd.f32 0.0, %v8338
      %v8340 = vpop.f32.mrb[0].mxu0
      %v8341 = vpop.f32.mrb[0].mxu0
      %v8342 = vadd.f32 0.0, %v8341
      %v8343 = vpop.f32.mrb[0].mxu0
      %8344 = vmatprep.mubr.bf16.mxu0 %v8073
      %8345 = vmatmul.mubr.bf16.gmra.mrb[0].mxu0 %v8072
      %v8346 = vpop.f32.mrb[0].mxu0
      %v8347 = vadd.f32 0.0, %v8346
      %v8348 = vpop.f32.mrb[0].mxu0
      %v8349 = vpop.f32.mrb[0].mxu0
      %v8350 = vadd.f32 0.0, %v8349
      %v8351 = vpop.f32.mrb[0].mxu0
      %8352 = vmatprep.mubr.bf16.mxu0 %v8075
      %8353 = vmatmul.mubr.bf16.gmra.mrb[0].mxu0 %v8074
      %v8354 = vpop.f32.mrb[0].mxu0
      %v8355 = vadd.f32 0.0, %v8354
      %v8356 = vpop.f32.mrb[0].mxu0
      %v8357 = vpop.f32.mrb[0].mxu0
      %v8358 = vadd.f32 0.0, %v8357
      %v8359 = vpop.f32.mrb[0].mxu0
      %8360 = vmatprep.mubr.bf16.mxu0 %v8077
      %8361 = vmatmul.mubr.bf16.gmra.mrb[0].mxu0 %v8076
      %v8362 = vpop.f32.mrb[0].mxu0
      %v8363 = vadd.f32 0.0, %v8362
      %v8364 = vpop.f32.mrb[0].mxu0
      %v8365 = vpop.f32.mrb[0].mxu0
      %v8366 = vadd.f32 0.0, %v8365
      %v8367 = vpop.f32.mrb[0].mxu0
      %8368 = vmatprep.mubr.bf16.mxu0 %v8079
      %8369 = vmatmul.mubr.bf16.gmra.mrb[0].mxu0 %v8078
      %v8370 = vpop.f32.mrb[0].mxu0
      %v8371 = vadd.f32 0.0, %v8370
      %v8372 = vpop.f32.mrb[0].mxu0
      %v8373 = vpop.f32.mrb[0].mxu0
      %v8374 = vadd.f32 0.0, %v8373
      %v8375 = vpop.f32.mrb[0].mxu0
      %8376 = vdwg.mxu0
      %v8377 = vadd.f32 %v452, %v8243
      %v8378 = vadd.f32 %v453, %v8246
      %v8379 = vadd.f32 %v454, %v8251
      %v8380 = vadd.f32 %v455, %v8254
      %v8381 = vadd.f32 %v456, %v8259
      %v8382 = vadd.f32 %v457, %v8262
      %v8383 = vadd.f32 %v458, %v8267
      %v8384 = vadd.f32 %v459, %v8270
      %v8385 = vadd.f32 %v460, %v8275
      %v8386 = vadd.f32 %v461, %v8278
      %v8387 = vadd.f32 %v462, %v8283
      %v8388 = vadd.f32 %v463, %v8286
      %v8389 = vadd.f32 %v464, %v8291
      %v8390 = vadd.f32 %v465, %v8294
      %v8391 = vadd.f32 %v466, %v8299
      %v8392 = vadd.f32 %v467, %v8302
      %v8393 = vadd.f32 %v468, %v8307
      %v8394 = vadd.f32 %v469, %v8310
      %v8395 = vadd.f32 %v470, %v8315
      %v8396 = vadd.f32 %v471, %v8318
      %v8397 = vadd.f32 %v472, %v8323
      %v8398 = vadd.f32 %v473, %v8326
      %v8399 = vadd.f32 %v474, %v8331
      %v8400 = vadd.f32 %v475, %v8334
      %v8401 = vadd.f32 %v476, %v8339
      %v8402 = vadd.f32 %v477, %v8342
      %v8403 = vadd.f32 %v478, %v8347
      %v8404 = vadd.f32 %v479, %v8350
      %v8405 = vadd.f32 %v480, %v8355
      %v8406 = vadd.f32 %v481, %v8358
      %v8407 = vadd.f32 %v482, %v8363
      %v8408 = vadd.f32 %v483, %v8366
      %v8409 = vadd.f32 %v484, %v8371
      %v8410 = vadd.f32 %v485, %v8374
      %v8411 = vld [vmem:[%s5] sm:$0x1]
      %v8413 = vlaneseq
      %v8414 = vshrl.u32 %v8413, 7
      %v8415 = vsub.s32 0, %v8414
      %v8416 = vrot.slane %v8411, %v8415
      %v8418 = vadd.f32 %v8377, %v8416
      %v8419 = vadd.f32 %v8378, %v8416
      %v8420 = vadd.f32 %v8379, %v8416
      %v8421 = vadd.f32 %v8380, %v8416
      %v8422 = vadd.f32 %v8381, %v8416
      %v8423 = vadd.f32 %v8382, %v8416
      %v8424 = vadd.f32 %v8383, %v8416
      %v8425 = vadd.f32 %v8384, %v8416
      %v8426 = vadd.f32 %v8385, %v8416
      %v8427 = vadd.f32 %v8386, %v8416
      %v8428 = vadd.f32 %v8387, %v8416
      %v8429 = vadd.f32 %v8388, %v8416
      %v8430 = vadd.f32 %v8389, %v8416
      %v8431 = vadd.f32 %v8390, %v8416
      %v8432 = vadd.f32 %v8391, %v8416
      %v8433 = vadd.f32 %v8392, %v8416
      %v8434 = vadd.f32 %v8393, %v8416
      %v8435 = vadd.f32 %v8394, %v8416
      %v8436 = vadd.f32 %v8395, %v8416
      %v8437 = vadd.f32 %v8396, %v8416
      %v8438 = vadd.f32 %v8397, %v8416
      %v8439 = vadd.f32 %v8398, %v8416
      %v8440 = vadd.f32 %v8399, %v8416
      %v8441 = vadd.f32 %v8400, %v8416
      %v8442 = vadd.f32 %v8401, %v8416
      %v8443 = vadd.f32 %v8402, %v8416
      %v8444 = vadd.f32 %v8403, %v8416
      %v8445 = vadd.f32 %v8404, %v8416
      %v8446 = vadd.f32 %v8405, %v8416
      %v8447 = vadd.f32 %v8406, %v8416
      %v8448 = vadd.f32 %v8407, %v8416
      %v8449 = vadd.f32 %v8408, %v8416
      %v8450 = vadd.f32 %v8409, %v8416
      %v8451 = vadd.f32 %v8410, %v8416
      %v8452 = vld [vmem:[%s6] sm:$0x1]
      %v8453 = vld [vmem:[%s7] sm:$0x1]
      %8454 = vadd.xlane.f32.xlu0 %v8418
      %v8455 = vpop.xlane.xlu0 %8454
      %8456 = vadd.xlane.f32.xlu0 %v8419
      %v8457 = vpop.xlane.xlu0 %8456
      %8458 = vadd.xlane.f32.xlu0 %v8420
      %v8459 = vpop.xlane.xlu0 %8458
      %8460 = vadd.xlane.f32.xlu0 %v8421
      %v8461 = vpop.xlane.xlu0 %8460
      %8462 = vadd.xlane.f32.xlu0 %v8422
      %v8463 = vpop.xlane.xlu0 %8462
      %8464 = vadd.xlane.f32.xlu0 %v8423
      %v8465 = vpop.xlane.xlu0 %8464
      %8466 = vadd.xlane.f32.xlu0 %v8424
      %v8467 = vpop.xlane.xlu0 %8466
      %8468 = vadd.xlane.f32.xlu0 %v8425
      %v8469 = vpop.xlane.xlu0 %8468
      %8470 = vadd.xlane.f32.xlu0 %v8426
      %v8471 = vpop.xlane.xlu0 %8470
      %8472 = vadd.xlane.f32.xlu0 %v8427
      %v8473 = vpop.xlane.xlu0 %8472
      %8474 = vadd.xlane.f32.xlu0 %v8428
      %v8475 = vpop.xlane.xlu0 %8474
      %8476 = vadd.xlane.f32.xlu0 %v8429
      %v8477 = vpop.xlane.xlu0 %8476
      %8478 = vadd.xlane.f32.xlu0 %v8430
      %v8479 = vpop.xlane.xlu0 %8478
      %8480 = vadd.xlane.f32.xlu0 %v8431
      %v8481 = vpop.xlane.xlu0 %8480
      %8482 = vadd.xlane.f32.xlu0 %v8432
      %v8483 = vpop.xlane.xlu0 %8482
      %8484 = vadd.xlane.f32.xlu0 %v8433
      %v8485 = vpop.xlane.xlu0 %8484
      %8486 = vadd.xlane.f32.xlu0 %v8434
      %v8487 = vpop.xlane.xlu0 %8486
      %8488 = vadd.xlane.f32.xlu0 %v8435
      %v8489 = vpop.xlane.xlu0 %8488
      %8490 = vadd.xlane.f32.xlu0 %v8436
      %v8491 = vpop.xlane.xlu0 %8490
      %8492 = vadd.xlane.f32.xlu0 %v8437
      %v8493 = vpop.xlane.xlu0 %8492
      %8494 = vadd.xlane.f32.xlu0 %v8438
      %v8495 = vpop.xlane.xlu0 %8494
      %8496 = vadd.xlane.f32.xlu0 %v8439
      %v8497 = vpop.xlane.xlu0 %8496
      %8498 = vadd.xlane.f32.xlu0 %v8440
      %v8499 = vpop.xlane.xlu0 %8498
      %8500 = vadd.xlane.f32.xlu0 %v8441
      %v8501 = vpop.xlane.xlu0 %8500
      %8502 = vadd.xlane.f32.xlu0 %v8442
      %v8503 = vpop.xlane.xlu0 %8502
      %8504 = vadd.xlane.f32.xlu0 %v8443
      %v8505 = vpop.xlane.xlu0 %8504
      %8506 = vadd.xlane.f32.xlu0 %v8444
      %v8507 = vpop.xlane.xlu0 %8506
      %8508 = vadd.xlane.f32.xlu0 %v8445
      %v8509 = vpop.xlane.xlu0 %8508
      %8510 = vadd.xlane.f32.xlu0 %v8446
      %v8511 = vpop.xlane.xlu0 %8510
      %8512 = vadd.xlane.f32.xlu0 %v8447
      %v8513 = vpop.xlane.xlu0 %8512
      %8514 = vadd.xlane.f32.xlu0 %v8448
      %v8515 = vpop.xlane.xlu0 %8514
      %8516 = vadd.xlane.f32.xlu0 %v8449
      %v8517 = vpop.xlane.xlu0 %8516
      %8518 = vadd.xlane.f32.xlu0 %v8450
      %v8519 = vpop.xlane.xlu0 %8518
      %8520 = vadd.xlane.f32.xlu0 %v8451
      %v8521 = vpop.xlane.xlu0 %8520
      %v8522 = vmul.f32 %v8455, %v556
      %v8523 = vmul.f32 %v8457, %v556
      %v8524 = vmul.f32 %v8459, %v556
      %v8525 = vmul.f32 %v8461, %v556
      %v8526 = vmul.f32 %v8463, %v556
      %v8527 = vmul.f32 %v8465, %v556
      %v8528 = vmul.f32 %v8467, %v556
      %v8529 = vmul.f32 %v8469, %v556
      %v8530 = vmul.f32 %v8471, %v556
      %v8531 = vmul.f32 %v8473, %v556
      %v8532 = vmul.f32 %v8475, %v556
      %v8533 = vmul.f32 %v8477, %v556
      %v8534 = vmul.f32 %v8479, %v556
      %v8535 = vmul.f32 %v8481, %v556
      %v8536 = vmul.f32 %v8483, %v556
      %v8537 = vmul.f32 %v8485, %v556
      %v8538 = vmul.f32 %v8487, %v556
      %v8539 = vmul.f32 %v8489, %v556
      %v8540 = vmul.f32 %v8491, %v556
      %v8541 = vmul.f32 %v8493, %v556
      %v8542 = vmul.f32 %v8495, %v556
      %v8543 = vmul.f32 %v8497, %v556
      %v8544 = vmul.f32 %v8499, %v556
      %v8545 = vmul.f32 %v8501, %v556
      %v8546 = vmul.f32 %v8503, %v556
      %v8547 = vmul.f32 %v8505, %v556
      %v8548 = vmul.f32 %v8507, %v556
      %v8549 = vmul.f32 %v8509, %v556
      %v8550 = vmul.f32 %v8511, %v556
      %v8551 = vmul.f32 %v8513, %v556
      %v8552 = vmul.f32 %v8515, %v556
      %v8553 = vmul.f32 %v8517, %v556
      %v8554 = vmul.f32 %v8519, %v556
      %v8555 = vmul.f32 %v8521, %v556
      %v8556 = vsub.f32 %v8418, %v8522
      %v8557 = vsub.f32 %v8419, %v8523
      %v8558 = vsub.f32 %v8420, %v8524
      %v8559 = vsub.f32 %v8421, %v8525
      %v8560 = vsub.f32 %v8422, %v8526
      %v8561 = vsub.f32 %v8423, %v8527
      %v8562 = vsub.f32 %v8424, %v8528
      %v8563 = vsub.f32 %v8425, %v8529
      %v8564 = vsub.f32 %v8426, %v8530
      %v8565 = vsub.f32 %v8427, %v8531
      %v8566 = vsub.f32 %v8428, %v8532
      %v8567 = vsub.f32 %v8429, %v8533
      %v8568 = vsub.f32 %v8430, %v8534
      %v8569 = vsub.f32 %v8431, %v8535
      %v8570 = vsub.f32 %v8432, %v8536
      %v8571 = vsub.f32 %v8433, %v8537
      %v8572 = vsub.f32 %v8434, %v8538
      %v8573 = vsub.f32 %v8435, %v8539
      %v8574 = vsub.f32 %v8436, %v8540
      %v8575 = vsub.f32 %v8437, %v8541
      %v8576 = vsub.f32 %v8438, %v8542
      %v8577 = vsub.f32 %v8439, %v8543
      %v8578 = vsub.f32 %v8440, %v8544
      %v8579 = vsub.f32 %v8441, %v8545
      %v8580 = vsub.f32 %v8442, %v8546
      %v8581 = vsub.f32 %v8443, %v8547
      %v8582 = vsub.f32 %v8444, %v8548
      %v8583 = vsub.f32 %v8445, %v8549
      %v8584 = vsub.f32 %v8446, %v8550
      %v8585 = vsub.f32 %v8447, %v8551
      %v8586 = vsub.f32 %v8448, %v8552
      %v8587 = vsub.f32 %v8449, %v8553
      %v8588 = vsub.f32 %v8450, %v8554
      %v8589 = vsub.f32 %v8451, %v8555
      %v8590 = vmul.f32 %v8556, %v8556
      %v8591 = vmul.f32 %v8557, %v8557
      %v8592 = vmul.f32 %v8558, %v8558
      %v8593 = vmul.f32 %v8559, %v8559
      %v8594 = vmul.f32 %v8560, %v8560
      %v8595 = vmul.f32 %v8561, %v8561
      %v8596 = vmul.f32 %v8562, %v8562
      %v8597 = vmul.f32 %v8563, %v8563
      %v8598 = vmul.f32 %v8564, %v8564
      %v8599 = vmul.f32 %v8565, %v8565
      %v8600 = vmul.f32 %v8566, %v8566
      %v8601 = vmul.f32 %v8567, %v8567
      %v8602 = vmul.f32 %v8568, %v8568
      %v8603 = vmul.f32 %v8569, %v8569
      %v8604 = vmul.f32 %v8570, %v8570
      %v8605 = vmul.f32 %v8571, %v8571
      %v8606 = vmul.f32 %v8572, %v8572
      %v8607 = vmul.f32 %v8573, %v8573
      %v8608 = vmul.f32 %v8574, %v8574
      %v8609 = vmul.f32 %v8575, %v8575
      %v8610 = vmul.f32 %v8576, %v8576
      %v8611 = vmul.f32 %v8577, %v8577
      %v8612 = vmul.f32 %v8578, %v8578
      %v8613 = vmul.f32 %v8579, %v8579
      %v8614 = vmul.f32 %v8580, %v8580
      %v8615 = vmul.f32 %v8581, %v8581
      %v8616 = vmul.f32 %v8582, %v8582
      %v8617 = vmul.f32 %v8583, %v8583
      %v8618 = vmul.f32 %v8584, %v8584
      %v8619 = vmul.f32 %v8585, %v8585
      %v8620 = vmul.f32 %v8586, %v8586
      %v8621 = vmul.f32 %v8587, %v8587
      %v8622 = vmul.f32 %v8588, %v8588
      %v8623 = vmul.f32 %v8589, %v8589
      %8624 = vadd.xlane.f32.xlu0 %v8590
      %v8625 = vpop.xlane.xlu0 %8624
      %8626 = vadd.xlane.f32.xlu0 %v8591
      %v8627 = vpop.xlane.xlu0 %8626
      %8628 = vadd.xlane.f32.xlu0 %v8592
      %v8629 = vpop.xlane.xlu0 %8628
      %8630 = vadd.xlane.f32.xlu0 %v8593
      %v8631 = vpop.xlane.xlu0 %8630
      %8632 = vadd.xlane.f32.xlu0 %v8594
      %v8633 = vpop.xlane.xlu0 %8632
      %8634 = vadd.xlane.f32.xlu0 %v8595
      %v8635 = vpop.xlane.xlu0 %8634
      %8636 = vadd.xlane.f32.xlu0 %v8596
      %v8637 = vpop.xlane.xlu0 %8636
      %8638 = vadd.xlane.f32.xlu0 %v8597
      %v8639 = vpop.xlane.xlu0 %8638
      %8640 = vadd.xlane.f32.xlu0 %v8598
      %v8641 = vpop.xlane.xlu0 %8640
      %8642 = vadd.xlane.f32.xlu0 %v8599
      %v8643 = vpop.xlane.xlu0 %8642
      %8644 = vadd.xlane.f32.xlu0 %v8600
      %v8645 = vpop.xlane.xlu0 %8644
      %8646 = vadd.xlane.f32.xlu0 %v8601
      %v8647 = vpop.xlane.xlu0 %8646
      %8648 = vadd.xlane.f32.xlu0 %v8602
      %v8649 = vpop.xlane.xlu0 %8648
      %8650 = vadd.xlane.f32.xlu0 %v8603
      %v8651 = vpop.xlane.xlu0 %8650
      %8652 = vadd.xlane.f32.xlu0 %v8604
      %v8653 = vpop.xlane.xlu0 %8652
      %8654 = vadd.xlane.f32.xlu0 %v8605
      %v8655 = vpop.xlane.xlu0 %8654
      %8656 = vadd.xlane.f32.xlu0 %v8606
      %v8657 = vpop.xlane.xlu0 %8656
      %8658 = vadd.xlane.f32.xlu0 %v8607
      %v8659 = vpop.xlane.xlu0 %8658
      %8660 = vadd.xlane.f32.xlu0 %v8608
      %v8661 = vpop.xlane.xlu0 %8660
      %8662 = vadd.xlane.f32.xlu0 %v8609
      %v8663 = vpop.xlane.xlu0 %8662
      %8664 = vadd.xlane.f32.xlu0 %v8610
      %v8665 = vpop.xlane.xlu0 %8664
      %8666 = vadd.xlane.f32.xlu0 %v8611
      %v8667 = vpop.xlane.xlu0 %8666
      %8668 = vadd.xlane.f32.xlu0 %v8612
      %v8669 = vpop.xlane.xlu0 %8668
      %8670 = vadd.xlane.f32.xlu0 %v8613
      %v8671 = vpop.xlane.xlu0 %8670
      %8672 = vadd.xlane.f32.xlu0 %v8614
      %v8673 = vpop.xlane.xlu0 %8672
      %8674 = vadd.xlane.f32.xlu0 %v8615
      %v8675 = vpop.xlane.xlu0 %8674
      %8676 = vadd.xlane.f32.xlu0 %v8616
      %v8677 = vpop.xlane.xlu0 %8676
      %8678 = vadd.xlane.f32.xlu0 %v8617
      %v8679 = vpop.xlane.xlu0 %8678
      %8680 = vadd.xlane.f32.xlu0 %v8618
      %v8681 = vpop.xlane.xlu0 %8680
      %8682 = vadd.xlane.f32.xlu0 %v8619
      %v8683 = vpop.xlane.xlu0 %8682
      %8684 = vadd.xlane.f32.xlu0 %v8620
      %v8685 = vpop.xlane.xlu0 %8684
      %8686 = vadd.xlane.f32.xlu0 %v8621
      %v8687 = vpop.xlane.xlu0 %8686
      %8688 = vadd.xlane.f32.xlu0 %v8622
      %v8689 = vpop.xlane.xlu0 %8688
      %8690 = vadd.xlane.f32.xlu0 %v8623
      %v8691 = vpop.xlane.xlu0 %8690
      %v8692 = vmul.f32 %v8625, %v556
      %v8693 = vmul.f32 %v8627, %v556
      %v8694 = vmul.f32 %v8629, %v556
      %v8695 = vmul.f32 %v8631, %v556
      %v8696 = vmul.f32 %v8633, %v556
      %v8697 = vmul.f32 %v8635, %v556
      %v8698 = vmul.f32 %v8637, %v556
      %v8699 = vmul.f32 %v8639, %v556
      %v8700 = vmul.f32 %v8641, %v556
      %v8701 = vmul.f32 %v8643, %v556
      %v8702 = vmul.f32 %v8645, %v556
      %v8703 = vmul.f32 %v8647, %v556
      %v8704 = vmul.f32 %v8649, %v556
      %v8705 = vmul.f32 %v8651, %v556
      %v8706 = vmul.f32 %v8653, %v556
      %v8707 = vmul.f32 %v8655, %v556
      %v8708 = vmul.f32 %v8657, %v556
      %v8709 = vmul.f32 %v8659, %v556
      %v8710 = vmul.f32 %v8661, %v556
      %v8711 = vmul.f32 %v8663, %v556
      %v8712 = vmul.f32 %v8665, %v556
      %v8713 = vmul.f32 %v8667, %v556
      %v8714 = vmul.f32 %v8669, %v556
      %v8715 = vmul.f32 %v8671, %v556
      %v8716 = vmul.f32 %v8673, %v556
      %v8717 = vmul.f32 %v8675, %v556
      %v8718 = vmul.f32 %v8677, %v556
      %v8719 = vmul.f32 %v8679, %v556
      %v8720 = vmul.f32 %v8681, %v556
      %v8721 = vmul.f32 %v8683, %v556
      %v8722 = vmul.f32 %v8685, %v556
      %v8723 = vmul.f32 %v8687, %v556
      %v8724 = vmul.f32 %v8689, %v556
      %v8725 = vmul.f32 %v8691, %v556
      %v8726 = vadd.f32 %v8692, 1e-05
      %v8727 = vadd.f32 %v8693, 1e-05
      %v8728 = vadd.f32 %v8694, 1e-05
      %v8729 = vadd.f32 %v8695, 1e-05
      %v8730 = vadd.f32 %v8696, 1e-05
      %v8731 = vadd.f32 %v8697, 1e-05
      %v8732 = vadd.f32 %v8698, 1e-05
      %v8733 = vadd.f32 %v8699, 1e-05
      %v8734 = vadd.f32 %v8700, 1e-05
      %v8735 = vadd.f32 %v8701, 1e-05
      %v8736 = vadd.f32 %v8702, 1e-05
      %v8737 = vadd.f32 %v8703, 1e-05
      %v8738 = vadd.f32 %v8704, 1e-05
      %v8739 = vadd.f32 %v8705, 1e-05
      %v8740 = vadd.f32 %v8706, 1e-05
      %v8741 = vadd.f32 %v8707, 1e-05
      %v8742 = vadd.f32 %v8708, 1e-05
      %v8743 = vadd.f32 %v8709, 1e-05
      %v8744 = vadd.f32 %v8710, 1e-05
      %v8745 = vadd.f32 %v8711, 1e-05
      %v8746 = vadd.f32 %v8712, 1e-05
      %v8747 = vadd.f32 %v8713, 1e-05
      %v8748 = vadd.f32 %v8714, 1e-05
      %v8749 = vadd.f32 %v8715, 1e-05
      %v8750 = vadd.f32 %v8716, 1e-05
      %v8751 = vadd.f32 %v8717, 1e-05
      %v8752 = vadd.f32 %v8718, 1e-05
      %v8753 = vadd.f32 %v8719, 1e-05
      %v8754 = vadd.f32 %v8720, 1e-05
      %v8755 = vadd.f32 %v8721, 1e-05
      %v8756 = vadd.f32 %v8722, 1e-05
      %v8757 = vadd.f32 %v8723, 1e-05
      %v8758 = vadd.f32 %v8724, 1e-05
      %v8759 = vadd.f32 %v8725, 1e-05
      %v8760 = vrsqrt.pop %v8726
      %v8761 = vrsqrt.pop %v8727
      %v8762 = vrsqrt.pop %v8728
      %v8763 = vrsqrt.pop %v8729
      %v8764 = vrsqrt.pop %v8730
      %v8765 = vrsqrt.pop %v8731
      %v8766 = vrsqrt.pop %v8732
      %v8767 = vrsqrt.pop %v8733
      %v8768 = vrsqrt.pop %v8734
      %v8769 = vrsqrt.pop %v8735
      %v8770 = vrsqrt.pop %v8736
      %v8771 = vrsqrt.pop %v8737
      %v8772 = vrsqrt.pop %v8738
      %v8773 = vrsqrt.pop %v8739
      %v8774 = vrsqrt.pop %v8740
      %v8775 = vrsqrt.pop %v8741
      %v8776 = vrsqrt.pop %v8742
      %v8777 = vrsqrt.pop %v8743
      %v8778 = vrsqrt.pop %v8744
      %v8779 = vrsqrt.pop %v8745
      %v8780 = vrsqrt.pop %v8746
      %v8781 = vrsqrt.pop %v8747
      %v8782 = vrsqrt.pop %v8748
      %v8783 = vrsqrt.pop %v8749
      %v8784 = vrsqrt.pop %v8750
      %v8785 = vrsqrt.pop %v8751
      %v8786 = vrsqrt.pop %v8752
      %v8787 = vrsqrt.pop %v8753
      %v8788 = vrsqrt.pop %v8754
      %v8789 = vrsqrt.pop %v8755
      %v8790 = vrsqrt.pop %v8756
      %v8791 = vrsqrt.pop %v8757
      %v8792 = vrsqrt.pop %v8758
      %v8793 = vrsqrt.pop %v8759
      %v8794 = vmul.f32 %v8556, %v8760
      %v8795 = vmul.f32 %v8557, %v8761
      %v8796 = vmul.f32 %v8558, %v8762
      %v8797 = vmul.f32 %v8559, %v8763
      %v8798 = vmul.f32 %v8560, %v8764
      %v8799 = vmul.f32 %v8561, %v8765
      %v8800 = vmul.f32 %v8562, %v8766
      %v8801 = vmul.f32 %v8563, %v8767
      %v8802 = vmul.f32 %v8564, %v8768
      %v8803 = vmul.f32 %v8565, %v8769
      %v8804 = vmul.f32 %v8566, %v8770
      %v8805 = vmul.f32 %v8567, %v8771
      %v8806 = vmul.f32 %v8568, %v8772
      %v8807 = vmul.f32 %v8569, %v8773
      %v8808 = vmul.f32 %v8570, %v8774
      %v8809 = vmul.f32 %v8571, %v8775
      %v8810 = vmul.f32 %v8572, %v8776
      %v8811 = vmul.f32 %v8573, %v8777
      %v8812 = vmul.f32 %v8574, %v8778
      %v8813 = vmul.f32 %v8575, %v8779
      %v8814 = vmul.f32 %v8576, %v8780
      %v8815 = vmul.f32 %v8577, %v8781
      %v8816 = vmul.f32 %v8578, %v8782
      %v8817 = vmul.f32 %v8579, %v8783
      %v8818 = vmul.f32 %v8580, %v8784
      %v8819 = vmul.f32 %v8581, %v8785
      %v8820 = vmul.f32 %v8582, %v8786
      %v8821 = vmul.f32 %v8583, %v8787
      %v8822 = vmul.f32 %v8584, %v8788
      %v8823 = vmul.f32 %v8585, %v8789
      %v8824 = vmul.f32 %v8586, %v8790
      %v8825 = vmul.f32 %v8587, %v8791
      %v8826 = vmul.f32 %v8588, %v8792
      %v8827 = vmul.f32 %v8589, %v8793
      %v8829 = vlaneseq
      %v8830 = vshrl.u32 %v8829, 7
      %v8831 = vsub.s32 0, %v8830
      %v8832 = vrot.slane %v8452, %v8831
      %v8834 = vmul.f32 %v8794, %v8832
      %v8835 = vmul.f32 %v8795, %v8832
      %v8836 = vmul.f32 %v8796, %v8832
      %v8837 = vmul.f32 %v8797, %v8832
      %v8838 = vmul.f32 %v8798, %v8832
      %v8839 = vmul.f32 %v8799, %v8832
      %v8840 = vmul.f32 %v8800, %v8832
      %v8841 = vmul.f32 %v8801, %v8832
      %v8842 = vmul.f32 %v8802, %v8832
      %v8843 = vmul.f32 %v8803, %v8832
      %v8844 = vmul.f32 %v8804, %v8832
      %v8845 = vmul.f32 %v8805, %v8832
      %v8846 = vmul.f32 %v8806, %v8832
      %v8847 = vmul.f32 %v8807, %v8832
      %v8848 = vmul.f32 %v8808, %v8832
      %v8849 = vmul.f32 %v8809, %v8832
      %v8850 = vmul.f32 %v8810, %v8832
      %v8851 = vmul.f32 %v8811, %v8832
      %v8852 = vmul.f32 %v8812, %v8832
      %v8853 = vmul.f32 %v8813, %v8832
      %v8854 = vmul.f32 %v8814, %v8832
      %v8855 = vmul.f32 %v8815, %v8832
      %v8856 = vmul.f32 %v8816, %v8832
      %v8857 = vmul.f32 %v8817, %v8832
      %v8858 = vmul.f32 %v8818, %v8832
      %v8859 = vmul.f32 %v8819, %v8832
      %v8860 = vmul.f32 %v8820, %v8832
      %v8861 = vmul.f32 %v8821, %v8832
      %v8862 = vmul.f32 %v8822, %v8832
      %v8863 = vmul.f32 %v8823, %v8832
      %v8864 = vmul.f32 %v8824, %v8832
      %v8865 = vmul.f32 %v8825, %v8832
      %v8866 = vmul.f32 %v8826, %v8832
      %v8867 = vmul.f32 %v8827, %v8832
      %v8869 = vlaneseq
      %v8870 = vshrl.u32 %v8869, 7
      %v8871 = vsub.s32 0, %v8870
      %v8872 = vrot.slane %v8453, %v8871
      %v8874 = vadd.f32 %v8834, %v8872
      %v8875 = vadd.f32 %v8835, %v8872
      %v8876 = vadd.f32 %v8836, %v8872
      %v8877 = vadd.f32 %v8837, %v8872
      %v8878 = vadd.f32 %v8838, %v8872
      %v8879 = vadd.f32 %v8839, %v8872
      %v8880 = vadd.f32 %v8840, %v8872
      %v8881 = vadd.f32 %v8841, %v8872
      %v8882 = vadd.f32 %v8842, %v8872
      %v8883 = vadd.f32 %v8843, %v8872
      %v8884 = vadd.f32 %v8844, %v8872
      %v8885 = vadd.f32 %v8845, %v8872
      %v8886 = vadd.f32 %v8846, %v8872
      %v8887 = vadd.f32 %v8847, %v8872
      %v8888 = vadd.f32 %v8848, %v8872
      %v8889 = vadd.f32 %v8849, %v8872
      %v8890 = vadd.f32 %v8850, %v8872
      %v8891 = vadd.f32 %v8851, %v8872
      %v8892 = vadd.f32 %v8852, %v8872
      %v8893 = vadd.f32 %v8853, %v8872
      %v8894 = vadd.f32 %v8854, %v8872
      %v8895 = vadd.f32 %v8855, %v8872
      %v8896 = vadd.f32 %v8856, %v8872
      %v8897 = vadd.f32 %v8857, %v8872
      %v8898 = vadd.f32 %v8858, %v8872
      %v8899 = vadd.f32 %v8859, %v8872
      %v8900 = vadd.f32 %v8860, %v8872
      %v8901 = vadd.f32 %v8861, %v8872
      %v8902 = vadd.f32 %v8862, %v8872
      %v8903 = vadd.f32 %v8863, %v8872
      %v8904 = vadd.f32 %v8864, %v8872
      %v8905 = vadd.f32 %v8865, %v8872
      %v8906 = vadd.f32 %v8866, %v8872
      %v8907 = vadd.f32 %v8867, %v8872
      %v8908 = vpack.c.bf16 %v8875, %v8874
      %v8909 = vpack.c.bf16 %v8877, %v8876
      %v8910 = vpack.c.bf16 %v8879, %v8878
      %v8911 = vpack.c.bf16 %v8881, %v8880
      %v8912 = vpack.c.bf16 %v8883, %v8882
      %v8913 = vpack.c.bf16 %v8885, %v8884
      %v8914 = vpack.c.bf16 %v8887, %v8886
      %v8915 = vpack.c.bf16 %v8889, %v8888
      %v8916 = vpack.c.bf16 %v8891, %v8890
      %v8917 = vpack.c.bf16 %v8893, %v8892
      %v8918 = vpack.c.bf16 %v8895, %v8894
      %v8919 = vpack.c.bf16 %v8897, %v8896
      %v8920 = vpack.c.bf16 %v8899, %v8898
      %v8921 = vpack.c.bf16 %v8901, %v8900
      %v8922 = vpack.c.bf16 %v8903, %v8902
      %v8923 = vpack.c.bf16 %v8905, %v8904
      %v8924 = vpack.c.bf16 %v8907, %v8906
      %v8925 = vld [vmem:[%s8] sm:$0xff]
      %v8926 = vld [vmem:[%s8 + $0x8] sm:$0xff]
      %v8927 = vld [vmem:[%s8 + $0x10] sm:$0xff]
      %v8928 = vld [vmem:[%s8 + $0x18] sm:$0xff]
      %v8929 = vld [vmem:[%s8 + $0x20] sm:$0xff]
      %v8930 = vld [vmem:[%s8 + $0x28] sm:$0xff]
      %v8931 = vld [vmem:[%s8 + $0x30] sm:$0xff]
      %v8932 = vld [vmem:[%s8 + $0x38] sm:$0xff]
      %v8933 = vld [vmem:[%s8 + $0x40] sm:$0xff]
      %v8934 = vld [vmem:[%s8 + $0x48] sm:$0xff]
      %v8935 = vld [vmem:[%s8 + $0x50] sm:$0xff]
      %v8936 = vld [vmem:[%s8 + $0x58] sm:$0xff]
      %v8937 = vld [vmem:[%s8 + $0x60] sm:$0xff]
      %v8938 = vld [vmem:[%s8 + $0x68] sm:$0xff]
      %v8939 = vld [vmem:[%s8 + $0x70] sm:$0xff]
      %v8940 = vld [vmem:[%s8 + $0x78] sm:$0xff]
      %v8941 = vld [vmem:[%s9] sm:$0x3]
      %v8943 = vlaneseq
      %v8944 = vshrl.u32 %v8943, 7
      %v8945 = vsub.s32 0, %v8944
      %v8946 = vrot.slane %v8941, %v8945
      %v8947 = vlaneseq
      %v8948 = vshrl.u32 %v8947, 7
      %v8949 = vsub.s32 1, %v8948
      %v8950 = vrot.slane %v8941, %v8949
      %v8969 = vunpack.c.l.b16 %v8925
      %v8970 = vunpack.c.h.b16 %v8925
      %v8971 = vunpack.c.l.b16 %v8926
      %v8972 = vunpack.c.h.b16 %v8926
      %v8973 = vunpack.c.l.b16 %v8927
      %v8974 = vunpack.c.h.b16 %v8927
      %v8975 = vunpack.c.l.b16 %v8928
      %v8976 = vunpack.c.h.b16 %v8928
      %v8977 = vunpack.c.l.b16 %v8929
      %v8978 = vunpack.c.h.b16 %v8929
      %v8979 = vunpack.c.l.b16 %v8930
      %v8980 = vunpack.c.h.b16 %v8930
      %v8981 = vunpack.c.l.b16 %v8931
      %v8982 = vunpack.c.h.b16 %v8931
      %v8983 = vunpack.c.l.b16 %v8932
      %v8984 = vunpack.c.h.b16 %v8932
      %v8985 = vunpack.c.l.b16 %v8933
      %v8986 = vunpack.c.h.b16 %v8933
      %v8987 = vunpack.c.l.b16 %v8934
      %v8988 = vunpack.c.h.b16 %v8934
      %v8989 = vunpack.c.l.b16 %v8935
      %v8990 = vunpack.c.h.b16 %v8935
      %v8991 = vunpack.c.l.b16 %v8936
      %v8992 = vunpack.c.h.b16 %v8936
      %v8993 = vunpack.c.l.b16 %v8937
      %v8994 = vunpack.c.h.b16 %v8937
      %v8995 = vunpack.c.l.b16 %v8938
      %v8996 = vunpack.c.h.b16 %v8938
      %v8997 = vunpack.c.l.b16 %v8939
      %v8998 = vunpack.c.h.b16 %v8939
      %v8999 = vunpack.c.l.b16 %v8940
      %v9000 = vunpack.c.h.b16 %v8940
      %v9001 = vpack.c.b16 %v8971, %v8969
      %v9002 = vpack.c.b16 %v8972, %v8970
      %v9003 = vpack.c.b16 %v8975, %v8973
      %v9004 = vpack.c.b16 %v8976, %v8974
      %v9005 = vpack.c.b16 %v8979, %v8977
      %v9006 = vpack.c.b16 %v8980, %v8978
      %v9007 = vpack.c.b16 %v8983, %v8981
      %v9008 = vpack.c.b16 %v8984, %v8982
      %v9009 = vpack.c.b16 %v8987, %v8985
      %v9010 = vpack.c.b16 %v8988, %v8986
      %v9011 = vpack.c.b16 %v8991, %v8989
      %v9012 = vpack.c.b16 %v8992, %v8990
      %v9013 = vpack.c.b16 %v8995, %v8993
      %v9014 = vpack.c.b16 %v8996, %v8994
      %v9015 = vpack.c.b16 %v8999, %v8997
      %v9016 = vpack.c.b16 %v9000, %v8998
      %9033 = vmatprep.subr.bf16.mxu0 %v9002
      %9034 = vmatpush1.bf16.msra.mxu0 %v9001
      %9035 = vmatprep.subr.bf16.mxu0 %v9004
      %9036 = vmatpush1.bf16.msra.mxu0 %v9003
      %9037 = vmatprep.subr.bf16.mxu0 %v9006
      %9038 = vmatpush1.bf16.msra.mxu0 %v9005
      %9039 = vmatprep.subr.bf16.mxu0 %v9008
      %9040 = vmatpush1.bf16.msra.mxu0 %v9007
      %9041 = vmatprep.subr.bf16.mxu0 %v9010
      %9042 = vmatpush1.bf16.msra.mxu0 %v9009
      %9043 = vmatprep.subr.bf16.mxu0 %v9012
      %9044 = vmatpush1.bf16.msra.mxu0 %v9011
      %9045 = vmatprep.subr.bf16.mxu0 %v9014
      %9046 = vmatpush1.bf16.msra.mxu0 %v9013
      %9047 = vmatprep.subr.bf16.mxu0 %v9016
      %9048 = vmatpush1.bf16.msra.mxu0 %v9015
      %9049 = vmatprep.subr.bf16.mxu0 0
      %9050 = vmatpush1.bf16.msra.mxu0 0
      %9051 = vmatprep.subr.bf16.mxu0 0
      %9052 = vmatpush1.bf16.msra.mxu0 0
      %9053 = vmatprep.subr.bf16.mxu0 0
      %9054 = vmatpush1.bf16.msra.mxu0 0
      %9055 = vmatprep.subr.bf16.mxu0 0
      %9056 = vmatpush1.bf16.msra.mxu0 0
      %9057 = vmatprep.subr.bf16.mxu0 0
      %9058 = vmatpush1.bf16.msra.mxu0 0
      %9059 = vmatprep.subr.bf16.mxu0 0
      %9060 = vmatpush1.bf16.msra.mxu0 0
      %9061 = vmatprep.subr.bf16.mxu0 0
      %9062 = vmatpush1.bf16.msra.mxu0 0
      %9063 = vmatprep.subr.bf16.mxu0 0
      %9064 = vmatpush1.bf16.msra.mxu0 0
      %9065 = vmatprep.mubr.bf16.mxu0 0
      %9066 = vmatmul.mubr.bf16.gmra.mrb[0].mxu0 %v8908
      %v9067 = vpop.f32.mrb[0].mxu0
      %v9068 = vadd.f32 %v8946, %v9067
      %v9069 = vpop.f32.mrb[0].mxu0
      %v9070 = vadd.f32 %v8950, %v9069
      %v9071 = vpop.f32.mrb[0].mxu0
      %v9072 = vadd.f32 %v8946, %v9071
      %v9073 = vpop.f32.mrb[0].mxu0
      %v9074 = vadd.f32 %v8950, %v9073
      %9075 = vmatprep.mubr.bf16.mxu0 0
      %9076 = vmatmul.mubr.bf16.gmra.mrb[0].mxu0 %v8909
      %v9077 = vpop.f32.mrb[0].mxu0
      %v9078 = vadd.f32 %v8946, %v9077
      %v9079 = vpop.f32.mrb[0].mxu0
      %v9080 = vadd.f32 %v8950, %v9079
      %v9081 = vpop.f32.mrb[0].mxu0
      %v9082 = vadd.f32 %v8946, %v9081
      %v9083 = vpop.f32.mrb[0].mxu0
      %v9084 = vadd.f32 %v8950, %v9083
      %9085 = vmatprep.mubr.bf16.mxu0 0
      %9086 = vmatmul.mubr.bf16.gmra.mrb[0].mxu0 %v8910
      %v9087 = vpop.f32.mrb[0].mxu0
      %v9088 = vadd.f32 %v8946, %v9087
      %v9089 = vpop.f32.mrb[0].mxu0
      %v9090 = vadd.f32 %v8950, %v9089
      %v9091 = vpop.f32.mrb[0].mxu0
      %v9092 = vadd.f32 %v8946, %v9091
      %v9093 = vpop.f32.mrb[0].mxu0
      %v9094 = vadd.f32 %v8950, %v9093
      %9095 = vmatprep.mubr.bf16.mxu0 0
      %9096 = vmatmul.mubr.bf16.gmra.mrb[0].mxu0 %v8911
      %v9097 = vpop.f32.mrb[0].mxu0
      %v9098 = vadd.f32 %v8946, %v9097
      %v9099 = vpop.f32.mrb[0].mxu0
      %v9100 = vadd.f32 %v8950, %v9099
      %v9101 = vpop.f32.mrb[0].mxu0
      %v9102 = vadd.f32 %v8946, %v9101
      %v9103 = vpop.f32.mrb[0].mxu0
      %v9104 = vadd.f32 %v8950, %v9103
      %9105 = vmatprep.mubr.bf16.mxu0 0
      %9106 = vmatmul.mubr.bf16.gmra.mrb[0].mxu0 %v8912
      %v9107 = vpop.f32.mrb[0].mxu0
      %v9108 = vadd.f32 %v8946, %v9107
      %v9109 = vpop.f32.mrb[0].mxu0
      %v9110 = vadd.f32 %v8950, %v9109
      %v9111 = vpop.f32.mrb[0].mxu0
      %v9112 = vadd.f32 %v8946, %v9111
      %v9113 = vpop.f32.mrb[0].mxu0
      %v9114 = vadd.f32 %v8950, %v9113
      %9115 = vmatprep.mubr.bf16.mxu0 0
      %9116 = vmatmul.mubr.bf16.gmra.mrb[0].mxu0 %v8913
      %v9117 = vpop.f32.mrb[0].mxu0
      %v9118 = vadd.f32 %v8946, %v9117
      %v9119 = vpop.f32.mrb[0].mxu0
      %v9120 = vadd.f32 %v8950, %v9119
      %v9121 = vpop.f32.mrb[0].mxu0
      %v9122 = vadd.f32 %v8946, %v9121
      %v9123 = vpop.f32.mrb[0].mxu0
      %v9124 = vadd.f32 %v8950, %v9123
      %9125 = vmatprep.mubr.bf16.mxu0 0
      %9126 = vmatmul.mubr.bf16.gmra.mrb[0].mxu0 %v8914
      %v9127 = vpop.f32.mrb[0].mxu0
      %v9128 = vadd.f32 %v8946, %v9127
      %v9129 = vpop.f32.mrb[0].mxu0
      %v9130 = vadd.f32 %v8950, %v9129
      %v9131 = vpop.f32.mrb[0].mxu0
      %v9132 = vadd.f32 %v8946, %v9131
      %v9133 = vpop.f32.mrb[0].mxu0
      %v9134 = vadd.f32 %v8950, %v9133
      %9135 = vmatprep.mubr.bf16.mxu0 0
      %9136 = vmatmul.mubr.bf16.gmra.mrb[0].mxu0 %v8915
      %v9137 = vpop.f32.mrb[0].mxu0
      %v9138 = vadd.f32 %v8946, %v9137
      %v9139 = vpop.f32.mrb[0].mxu0
      %v9140 = vadd.f32 %v8950, %v9139
      %v9141 = vpop.f32.mrb[0].mxu0
      %v9142 = vadd.f32 %v8946, %v9141
      %v9143 = vpop.f32.mrb[0].mxu0
      %v9144 = vadd.f32 %v8950, %v9143
      %9145 = vmatprep.mubr.bf16.mxu0 0
      %9146 = vmatmul.mubr.bf16.gmra.mrb[0].mxu0 %v8916
      %v9147 = vpop.f32.mrb[0].mxu0
      %v9148 = vadd.f32 %v8946, %v9147
      %v9149 = vpop.f32.mrb[0].mxu0
      %v9150 = vadd.f32 %v8950, %v9149
      %v9151 = vpop.f32.mrb[0].mxu0
      %v9152 = vadd.f32 %v8946, %v9151
      %v9153 = vpop.f32.mrb[0].mxu0
      %v9154 = vadd.f32 %v8950, %v9153
      %9155 = vmatprep.mubr.bf16.mxu0 0
      %9156 = vmatmul.mubr.bf16.gmra.mrb[0].mxu0 %v8917
      %v9157 = vpop.f32.mrb[0].mxu0
      %v9158 = vadd.f32 %v8946, %v9157
      %v9159 = vpop.f32.mrb[0].mxu0
      %v9160 = vadd.f32 %v8950, %v9159
      %v9161 = vpop.f32.mrb[0].mxu0
      %v9162 = vadd.f32 %v8946, %v9161
      %v9163 = vpop.f32.mrb[0].mxu0
      %v9164 = vadd.f32 %v8950, %v9163
      %9165 = vmatprep.mubr.bf16.mxu0 0
      %9166 = vmatmul.mubr.bf16.gmra.mrb[0].mxu0 %v8918
      %v9167 = vpop.f32.mrb[0].mxu0
      %v9168 = vadd.f32 %v8946, %v9167
      %v9169 = vpop.f32.mrb[0].mxu0
      %v9170 = vadd.f32 %v8950, %v9169
      %v9171 = vpop.f32.mrb[0].mxu0
      %v9172 = vadd.f32 %v8946, %v9171
      %v9173 = vpop.f32.mrb[0].mxu0
      %v9174 = vadd.f32 %v8950, %v9173
      %9175 = vmatprep.mubr.bf16.mxu0 0
      %9176 = vmatmul.mubr.bf16.gmra.mrb[0].mxu0 %v8919
      %v9177 = vpop.f32.mrb[0].mxu0
      %v9178 = vadd.f32 %v8946, %v9177
      %v9179 = vpop.f32.mrb[0].mxu0
      %v9180 = vadd.f32 %v8950, %v9179
      %v9181 = vpop.f32.mrb[0].mxu0
      %v9182 = vadd.f32 %v8946, %v9181
      %v9183 = vpop.f32.mrb[0].mxu0
      %v9184 = vadd.f32 %v8950, %v9183
      %9185 = vmatprep.mubr.bf16.mxu0 0
      %9186 = vmatmul.mubr.bf16.gmra.mrb[0].mxu0 %v8920
      %v9187 = vpop.f32.mrb[0].mxu0
      %v9188 = vadd.f32 %v8946, %v9187
      %v9189 = vpop.f32.mrb[0].mxu0
      %v9190 = vadd.f32 %v8950, %v9189
      %v9191 = vpop.f32.mrb[0].mxu0
      %v9192 = vadd.f32 %v8946, %v9191
      %v9193 = vpop.f32.mrb[0].mxu0
      %v9194 = vadd.f32 %v8950, %v9193
      %9195 = vmatprep.mubr.bf16.mxu0 0
      %9196 = vmatmul.mubr.bf16.gmra.mrb[0].mxu0 %v8921
      %v9197 = vpop.f32.mrb[0].mxu0
      %v9198 = vadd.f32 %v8946, %v9197
      %v9199 = vpop.f32.mrb[0].mxu0
      %v9200 = vadd.f32 %v8950, %v9199
      %v9201 = vpop.f32.mrb[0].mxu0
      %v9202 = vadd.f32 %v8946, %v9201
      %v9203 = vpop.f32.mrb[0].mxu0
      %v9204 = vadd.f32 %v8950, %v9203
      %9205 = vmatprep.mubr.bf16.mxu0 0
      %9206 = vmatmul.mubr.bf16.gmra.mrb[0].mxu0 %v8922
      %v9207 = vpop.f32.mrb[0].mxu0
      %v9208 = vadd.f32 %v8946, %v9207
      %v9209 = vpop.f32.mrb[0].mxu0
      %v9210 = vadd.f32 %v8950, %v9209
      %v9211 = vpop.f32.mrb[0].mxu0
      %v9212 = vadd.f32 %v8946, %v9211
      %v9213 = vpop.f32.mrb[0].mxu0
      %v9214 = vadd.f32 %v8950, %v9213
      %9215 = vmatprep.mubr.bf16.mxu0 0
      %9216 = vmatmul.mubr.bf16.gmra.mrb[0].mxu0 %v8923
      %v9217 = vpop.f32.mrb[0].mxu0
      %v9218 = vadd.f32 %v8946, %v9217
      %v9219 = vpop.f32.mrb[0].mxu0
      %v9220 = vadd.f32 %v8950, %v9219
      %v9221 = vpop.f32.mrb[0].mxu0
      %v9222 = vadd.f32 %v8946, %v9221
      %v9223 = vpop.f32.mrb[0].mxu0
      %v9224 = vadd.f32 %v8950, %v9223
      %9225 = vmatprep.mubr.bf16.mxu0 0
      %9226 = vmatmul.mubr.bf16.gmra.mrb[0].mxu0 %v8924
      %v9227 = vpop.f32.mrb[0].mxu0
      %v9228 = vadd.f32 %v8946, %v9227
      %v9229 = vpop.f32.mrb[0].mxu0
      %v9230 = vadd.f32 %v8950, %v9229
      %v9231 = vpop.f32.mrb[0].mxu0
      %v9232 = vadd.f32 %v8946, %v9231
      %v9233 = vpop.f32.mrb[0].mxu0
      %v9234 = vadd.f32 %v8950, %v9233
      %9235 = vdwg.mxu0
      %v9236 = vmul.f32 %v9068, 0.5
      %v9237 = vmul.f32 %v9070, 0.5
      %v9238 = vmul.f32 %v9072, 0.5
      %v9239 = vmul.f32 %v9074, 0.5
      %v9240 = vmul.f32 %v9078, 0.5
      %v9241 = vmul.f32 %v9080, 0.5
      %v9242 = vmul.f32 %v9082, 0.5
      %v9243 = vmul.f32 %v9084, 0.5
      %v9244 = vmul.f32 %v9088, 0.5
      %v9245 = vmul.f32 %v9090, 0.5
      %v9246 = vmul.f32 %v9092, 0.5
      %v9247 = vmul.f32 %v9094, 0.5
      %v9248 = vmul.f32 %v9098, 0.5
      %v9249 = vmul.f32 %v9100, 0.5
      %v9250 = vmul.f32 %v9102, 0.5
      %v9251 = vmul.f32 %v9104, 0.5
      %v9252 = vmul.f32 %v9108, 0.5
      %v9253 = vmul.f32 %v9110, 0.5
      %v9254 = vmul.f32 %v9112, 0.5
      %v9255 = vmul.f32 %v9114, 0.5
      %v9256 = vmul.f32 %v9118, 0.5
      %v9257 = vmul.f32 %v9120, 0.5
      %v9258 = vmul.f32 %v9122, 0.5
      %v9259 = vmul.f32 %v9124, 0.5
      %v9260 = vmul.f32 %v9128, 0.5
      %v9261 = vmul.f32 %v9130, 0.5
      %v9262 = vmul.f32 %v9132, 0.5
      %v9263 = vmul.f32 %v9134, 0.5
      %v9264 = vmul.f32 %v9138, 0.5
      %v9265 = vmul.f32 %v9140, 0.5
      %v9266 = vmul.f32 %v9142, 0.5
      %v9267 = vmul.f32 %v9144, 0.5
      %v9268 = vmul.f32 %v9148, 0.5
      %v9269 = vmul.f32 %v9150, 0.5
      %v9270 = vmul.f32 %v9152, 0.5
      %v9271 = vmul.f32 %v9154, 0.5
      %v9272 = vmul.f32 %v9158, 0.5
      %v9273 = vmul.f32 %v9160, 0.5
      %v9274 = vmul.f32 %v9162, 0.5
      %v9275 = vmul.f32 %v9164, 0.5
      %v9276 = vmul.f32 %v9168, 0.5
      %v9277 = vmul.f32 %v9170, 0.5
      %v9278 = vmul.f32 %v9172, 0.5
      %v9279 = vmul.f32 %v9174, 0.5
      %v9280 = vmul.f32 %v9178, 0.5
      %v9281 = vmul.f32 %v9180, 0.5
      %v9282 = vmul.f32 %v9182, 0.5
      %v9283 = vmul.f32 %v9184, 0.5
      %v9284 = vmul.f32 %v9188, 0.5
      %v9285 = vmul.f32 %v9190, 0.5
      %v9286 = vmul.f32 %v9192, 0.5
      %v9287 = vmul.f32 %v9194, 0.5
      %v9288 = vmul.f32 %v9198, 0.5
      %v9289 = vmul.f32 %v9200, 0.5
      %v9290 = vmul.f32 %v9202, 0.5
      %v9291 = vmul.f32 %v9204, 0.5
      %v9292 = vmul.f32 %v9208, 0.5
      %v9293 = vmul.f32 %v9210, 0.5
      %v9294 = vmul.f32 %v9212, 0.5
      %v9295 = vmul.f32 %v9214, 0.5
      %v9296 = vmul.f32 %v9218, 0.5
      %v9297 = vmul.f32 %v9220, 0.5
      %v9298 = vmul.f32 %v9222, 0.5
      %v9299 = vmul.f32 %v9224, 0.5
      %v9300 = vmul.f32 %v9228, 0.5
      %v9301 = vmul.f32 %v9230, 0.5
      %v9302 = vmul.f32 %v9232, 0.5
      %v9303 = vmul.f32 %v9234, 0.5
      %v9304 = vmul.f32 %v9068, 0.044715
      %v9305 = vmul.f32 %v9070, 0.044715
      %v9306 = vmul.f32 %v9072, 0.044715
      %v9307 = vmul.f32 %v9074, 0.044715
      %v9308 = vmul.f32 %v9078, 0.044715
      %v9309 = vmul.f32 %v9080, 0.044715
      %v9310 = vmul.f32 %v9082, 0.044715
      %v9311 = vmul.f32 %v9084, 0.044715
      %v9312 = vmul.f32 %v9088, 0.044715
      %v9313 = vmul.f32 %v9090, 0.044715
      %v9314 = vmul.f32 %v9092, 0.044715
      %v9315 = vmul.f32 %v9094, 0.044715
      %v9316 = vmul.f32 %v9098, 0.044715
      %v9317 = vmul.f32 %v9100, 0.044715
      %v9318 = vmul.f32 %v9102, 0.044715
      %v9319 = vmul.f32 %v9104, 0.044715
      %v9320 = vmul.f32 %v9108, 0.044715
      %v9321 = vmul.f32 %v9110, 0.044715
      %v9322 = vmul.f32 %v9112, 0.044715
      %v9323 = vmul.f32 %v9114, 0.044715
      %v9324 = vmul.f32 %v9118, 0.044715
      %v9325 = vmul.f32 %v9120, 0.044715
      %v9326 = vmul.f32 %v9122, 0.044715
      %v9327 = vmul.f32 %v9124, 0.044715
      %v9328 = vmul.f32 %v9128, 0.044715
      %v9329 = vmul.f32 %v9130, 0.044715
      %v9330 = vmul.f32 %v9132, 0.044715
      %v9331 = vmul.f32 %v9134, 0.044715
      %v9332 = vmul.f32 %v9138, 0.044715
      %v9333 = vmul.f32 %v9140, 0.044715
      %v9334 = vmul.f32 %v9142, 0.044715
      %v9335 = vmul.f32 %v9144, 0.044715
      %v9336 = vmul.f32 %v9148, 0.044715
      %v9337 = vmul.f32 %v9150, 0.044715
      %v9338 = vmul.f32 %v9152, 0.044715
      %v9339 = vmul.f32 %v9154, 0.044715
      %v9340 = vmul.f32 %v9158, 0.044715
      %v9341 = vmul.f32 %v9160, 0.044715
      %v9342 = vmul.f32 %v9162, 0.044715
      %v9343 = vmul.f32 %v9164, 0.044715
      %v9344 = vmul.f32 %v9168, 0.044715
      %v9345 = vmul.f32 %v9170, 0.044715
      %v9346 = vmul.f32 %v9172, 0.044715
      %v9347 = vmul.f32 %v9174, 0.044715
      %v9348 = vmul.f32 %v9178, 0.044715
      %v9349 = vmul.f32 %v9180, 0.044715
      %v9350 = vmul.f32 %v9182, 0.044715
      %v9351 = vmul.f32 %v9184, 0.044715
      %v9352 = vmul.f32 %v9188, 0.044715
      %v9353 = vmul.f32 %v9190, 0.044715
      %v9354 = vmul.f32 %v9192, 0.044715
      %v9355 = vmul.f32 %v9194, 0.044715
      %v9356 = vmul.f32 %v9198, 0.044715
      %v9357 = vmul.f32 %v9200, 0.044715
      %v9358 = vmul.f32 %v9202, 0.044715
      %v9359 = vmul.f32 %v9204, 0.044715
      %v9360 = vmul.f32 %v9208, 0.044715
      %v9361 = vmul.f32 %v9210, 0.044715
      %v9362 = vmul.f32 %v9212, 0.044715
      %v9363 = vmul.f32 %v9214, 0.044715
      %v9364 = vmul.f32 %v9218, 0.044715
      %v9365 = vmul.f32 %v9220, 0.044715
      %v9366 = vmul.f32 %v9222, 0.044715
      %v9367 = vmul.f32 %v9224, 0.044715
      %v9368 = vmul.f32 %v9228, 0.044715
      %v9369 = vmul.f32 %v9230, 0.044715
      %v9370 = vmul.f32 %v9232, 0.044715
      %v9371 = vmul.f32 %v9234, 0.044715
      %v9372 = vmul.f32 %v9304, %v9068
      %v9373 = vmul.f32 %v9305, %v9070
      %v9374 = vmul.f32 %v9306, %v9072
      %v9375 = vmul.f32 %v9307, %v9074
      %v9376 = vmul.f32 %v9308, %v9078
      %v9377 = vmul.f32 %v9309, %v9080
      %v9378 = vmul.f32 %v9310, %v9082
      %v9379 = vmul.f32 %v9311, %v9084
      %v9380 = vmul.f32 %v9312, %v9088
      %v9381 = vmul.f32 %v9313, %v9090
      %v9382 = vmul.f32 %v9314, %v9092
      %v9383 = vmul.f32 %v9315, %v9094
      %v9384 = vmul.f32 %v9316, %v9098
      %v9385 = vmul.f32 %v9317, %v9100
      %v9386 = vmul.f32 %v9318, %v9102
      %v9387 = vmul.f32 %v9319, %v9104
      %v9388 = vmul.f32 %v9320, %v9108
      %v9389 = vmul.f32 %v9321, %v9110
      %v9390 = vmul.f32 %v9322, %v9112
      %v9391 = vmul.f32 %v9323, %v9114
      %v9392 = vmul.f32 %v9324, %v9118
      %v9393 = vmul.f32 %v9325, %v9120
      %v9394 = vmul.f32 %v9326, %v9122
      %v9395 = vmul.f32 %v9327, %v9124
      %v9396 = vmul.f32 %v9328, %v9128
      %v9397 = vmul.f32 %v9329, %v9130
      %v9398 = vmul.f32 %v9330, %v9132
      %v9399 = vmul.f32 %v9331, %v9134
      %v9400 = vmul.f32 %v9332, %v9138
      %v9401 = vmul.f32 %v9333, %v9140
      %v9402 = vmul.f32 %v9334, %v9142
      %v9403 = vmul.f32 %v9335, %v9144
      %v9404 = vmul.f32 %v9336, %v9148
      %v9405 = vmul.f32 %v9337, %v9150
      %v9406 = vmul.f32 %v9338, %v9152
      %v9407 = vmul.f32 %v9339, %v9154
      %v9408 = vmul.f32 %v9340, %v9158
      %v9409 = vmul.f32 %v9341, %v9160
      %v9410 = vmul.f32 %v9342, %v9162
      %v9411 = vmul.f32 %v9343, %v9164
      %v9412 = vmul.f32 %v9344, %v9168
      %v9413 = vmul.f32 %v9345, %v9170
      %v9414 = vmul.f32 %v9346, %v9172
      %v9415 = vmul.f32 %v9347, %v9174
      %v9416 = vmul.f32 %v9348, %v9178
      %v9417 = vmul.f32 %v9349, %v9180
      %v9418 = vmul.f32 %v9350, %v9182
      %v9419 = vmul.f32 %v9351, %v9184
      %v9420 = vmul.f32 %v9352, %v9188
      %v9421 = vmul.f32 %v9353, %v9190
      %v9422 = vmul.f32 %v9354, %v9192
      %v9423 = vmul.f32 %v9355, %v9194
      %v9424 = vmul.f32 %v9356, %v9198
      %v9425 = vmul.f32 %v9357, %v9200
      %v9426 = vmul.f32 %v9358, %v9202
      %v9427 = vmul.f32 %v9359, %v9204
      %v9428 = vmul.f32 %v9360, %v9208
      %v9429 = vmul.f32 %v9361, %v9210
      %v9430 = vmul.f32 %v9362, %v9212
      %v9431 = vmul.f32 %v9363, %v9214
      %v9432 = vmul.f32 %v9364, %v9218
      %v9433 = vmul.f32 %v9365, %v9220
      %v9434 = vmul.f32 %v9366, %v9222
      %v9435 = vmul.f32 %v9367, %v9224
      %v9436 = vmul.f32 %v9368, %v9228
      %v9437 = vmul.f32 %v9369, %v9230
      %v9438 = vmul.f32 %v9370, %v9232
      %v9439 = vmul.f32 %v9371, %v9234
      %v9440 = vmul.f32 %v9372, %v9068
      %v9441 = vmul.f32 %v9373, %v9070
      %v9442 = vmul.f32 %v9374, %v9072
      %v9443 = vmul.f32 %v9375, %v9074
      %v9444 = vmul.f32 %v9376, %v9078
      %v9445 = vmul.f32 %v9377, %v9080
      %v9446 = vmul.f32 %v9378, %v9082
      %v9447 = vmul.f32 %v9379, %v9084
      %v9448 = vmul.f32 %v9380, %v9088
      %v9449 = vmul.f32 %v9381, %v9090
      %v9450 = vmul.f32 %v9382, %v9092
      %v9451 = vmul.f32 %v9383, %v9094
      %v9452 = vmul.f32 %v9384, %v9098
      %v9453 = vmul.f32 %v9385, %v9100
      %v9454 = vmul.f32 %v9386, %v9102
      %v9455 = vmul.f32 %v9387, %v9104
      %v9456 = vmul.f32 %v9388, %v9108
      %v9457 = vmul.f32 %v9389, %v9110
      %v9458 = vmul.f32 %v9390, %v9112
      %v9459 = vmul.f32 %v9391, %v9114
      %v9460 = vmul.f32 %v9392, %v9118
      %v9461 = vmul.f32 %v9393, %v9120
      %v9462 = vmul.f32 %v9394, %v9122
      %v9463 = vmul.f32 %v9395, %v9124
      %v9464 = vmul.f32 %v9396, %v9128
      %v9465 = vmul.f32 %v9397, %v9130
      %v9466 = vmul.f32 %v9398, %v9132
      %v9467 = vmul.f32 %v9399, %v9134
      %v9468 = vmul.f32 %v9400, %v9138
      %v9469 = vmul.f32 %v9401, %v9140
      %v9470 = vmul.f32 %v9402, %v9142
      %v9471 = vmul.f32 %v9403, %v9144
      %v9472 = vmul.f32 %v9404, %v9148
      %v9473 = vmul.f32 %v9405, %v9150
      %v9474 = vmul.f32 %v9406, %v9152
      %v9475 = vmul.f32 %v9407, %v9154
      %v9476 = vmul.f32 %v9408, %v9158
      %v9477 = vmul.f32 %v9409, %v9160
      %v9478 = vmul.f32 %v9410, %v9162
      %v9479 = vmul.f32 %v9411, %v9164
      %v9480 = vmul.f32 %v9412, %v9168
      %v9481 = vmul.f32 %v9413, %v9170
      %v9482 = vmul.f32 %v9414, %v9172
      %v9483 = vmul.f32 %v9415, %v9174
      %v9484 = vmul.f32 %v9416, %v9178
      %v9485 = vmul.f32 %v9417, %v9180
      %v9486 = vmul.f32 %v9418, %v9182
      %v9487 = vmul.f32 %v9419, %v9184
      %v9488 = vmul.f32 %v9420, %v9188
      %v9489 = vmul.f32 %v9421, %v9190
      %v9490 = vmul.f32 %v9422, %v9192
      %v9491 = vmul.f32 %v9423, %v9194
      %v9492 = vmul.f32 %v9424, %v9198
      %v9493 = vmul.f32 %v9425, %v9200
      %v9494 = vmul.f32 %v9426, %v9202
      %v9495 = vmul.f32 %v9427, %v9204
      %v9496 = vmul.f32 %v9428, %v9208
      %v9497 = vmul.f32 %v9429, %v9210
      %v9498 = vmul.f32 %v9430, %v9212
      %v9499 = vmul.f32 %v9431, %v9214
      %v9500 = vmul.f32 %v9432, %v9218
      %v9501 = vmul.f32 %v9433, %v9220
      %v9502 = vmul.f32 %v9434, %v9222
      %v9503 = vmul.f32 %v9435, %v9224
      %v9504 = vmul.f32 %v9436, %v9228
      %v9505 = vmul.f32 %v9437, %v9230
      %v9506 = vmul.f32 %v9438, %v9232
      %v9507 = vmul.f32 %v9439, %v9234
      %v9508 = vadd.f32 %v9068, %v9440
      %v9509 = vadd.f32 %v9070, %v9441
      %v9510 = vadd.f32 %v9072, %v9442
      %v9511 = vadd.f32 %v9074, %v9443
      %v9512 = vadd.f32 %v9078, %v9444
      %v9513 = vadd.f32 %v9080, %v9445
      %v9514 = vadd.f32 %v9082, %v9446
      %v9515 = vadd.f32 %v9084, %v9447
      %v9516 = vadd.f32 %v9088, %v9448
      %v9517 = vadd.f32 %v9090, %v9449
      %v9518 = vadd.f32 %v9092, %v9450
      %v9519 = vadd.f32 %v9094, %v9451
      %v9520 = vadd.f32 %v9098, %v9452
      %v9521 = vadd.f32 %v9100, %v9453
      %v9522 = vadd.f32 %v9102, %v9454
      %v9523 = vadd.f32 %v9104, %v9455
      %v9524 = vadd.f32 %v9108, %v9456
      %v9525 = vadd.f32 %v9110, %v9457
      %v9526 = vadd.f32 %v9112, %v9458
      %v9527 = vadd.f32 %v9114, %v9459
      %v9528 = vadd.f32 %v9118, %v9460
      %v9529 = vadd.f32 %v9120, %v9461
      %v9530 = vadd.f32 %v9122, %v9462
      %v9531 = vadd.f32 %v9124, %v9463
      %v9532 = vadd.f32 %v9128, %v9464
      %v9533 = vadd.f32 %v9130, %v9465
      %v9534 = vadd.f32 %v9132, %v9466
      %v9535 = vadd.f32 %v9134, %v9467
      %v9536 = vadd.f32 %v9138, %v9468
      %v9537 = vadd.f32 %v9140, %v9469
      %v9538 = vadd.f32 %v9142, %v9470
      %v9539 = vadd.f32 %v9144, %v9471
      %v9540 = vadd.f32 %v9148, %v9472
      %v9541 = vadd.f32 %v9150, %v9473
      %v9542 = vadd.f32 %v9152, %v9474
      %v9543 = vadd.f32 %v9154, %v9475
      %v9544 = vadd.f32 %v9158, %v9476
      %v9545 = vadd.f32 %v9160, %v9477
      %v9546 = vadd.f32 %v9162, %v9478
      %v9547 = vadd.f32 %v9164, %v9479
      %v9548 = vadd.f32 %v9168, %v9480
      %v9549 = vadd.f32 %v9170, %v9481
      %v9550 = vadd.f32 %v9172, %v9482
      %v9551 = vadd.f32 %v9174, %v9483
      %v9552 = vadd.f32 %v9178, %v9484
      %v9553 = vadd.f32 %v9180, %v9485
      %v9554 = vadd.f32 %v9182, %v9486
      %v9555 = vadd.f32 %v9184, %v9487
      %v9556 = vadd.f32 %v9188, %v9488
      %v9557 = vadd.f32 %v9190, %v9489
      %v9558 = vadd.f32 %v9192, %v9490
      %v9559 = vadd.f32 %v9194, %v9491
      %v9560 = vadd.f32 %v9198, %v9492
      %v9561 = vadd.f32 %v9200, %v9493
      %v9562 = vadd.f32 %v9202, %v9494
      %v9563 = vadd.f32 %v9204, %v9495
      %v9564 = vadd.f32 %v9208, %v9496
      %v9565 = vadd.f32 %v9210, %v9497
      %v9566 = vadd.f32 %v9212, %v9498
      %v9567 = vadd.f32 %v9214, %v9499
      %v9568 = vadd.f32 %v9218, %v9500
      %v9569 = vadd.f32 %v9220, %v9501
      %v9570 = vadd.f32 %v9222, %v9502
      %v9571 = vadd.f32 %v9224, %v9503
      %v9572 = vadd.f32 %v9228, %v9504
      %v9573 = vadd.f32 %v9230, %v9505
      %v9574 = vadd.f32 %v9232, %v9506
      %v9575 = vadd.f32 %v9234, %v9507
      %v9576 = vmul.f32 %v9508, 0.7978846
      %v9577 = vmul.f32 %v9509, 0.7978846
      %v9578 = vmul.f32 %v9510, 0.7978846
      %v9579 = vmul.f32 %v9511, 0.7978846
      %v9580 = vmul.f32 %v9512, 0.7978846
      %v9581 = vmul.f32 %v9513, 0.7978846
      %v9582 = vmul.f32 %v9514, 0.7978846
      %v9583 = vmul.f32 %v9515, 0.7978846
      %v9584 = vmul.f32 %v9516, 0.7978846
      %v9585 = vmul.f32 %v9517, 0.7978846
      %v9586 = vmul.f32 %v9518, 0.7978846
      %v9587 = vmul.f32 %v9519, 0.7978846
      %v9588 = vmul.f32 %v9520, 0.7978846
      %v9589 = vmul.f32 %v9521, 0.7978846
      %v9590 = vmul.f32 %v9522, 0.7978846
      %v9591 = vmul.f32 %v9523, 0.7978846
      %v9592 = vmul.f32 %v9524, 0.7978846
      %v9593 = vmul.f32 %v9525, 0.7978846
      %v9594 = vmul.f32 %v9526, 0.7978846
      %v9595 = vmul.f32 %v9527, 0.7978846
      %v9596 = vmul.f32 %v9528, 0.7978846
      %v9597 = vmul.f32 %v9529, 0.7978846
      %v9598 = vmul.f32 %v9530, 0.7978846
      %v9599 = vmul.f32 %v9531, 0.7978846
      %v9600 = vmul.f32 %v9532, 0.7978846
      %v9601 = vmul.f32 %v9533, 0.7978846
      %v9602 = vmul.f32 %v9534, 0.7978846
      %v9603 = vmul.f32 %v9535, 0.7978846
      %v9604 = vmul.f32 %v9536, 0.7978846
      %v9605 = vmul.f32 %v9537, 0.7978846
      %v9606 = vmul.f32 %v9538, 0.7978846
      %v9607 = vmul.f32 %v9539, 0.7978846
      %v9608 = vmul.f32 %v9540, 0.7978846
      %v9609 = vmul.f32 %v9541, 0.7978846
      %v9610 = vmul.f32 %v9542, 0.7978846
      %v9611 = vmul.f32 %v9543, 0.7978846
      %v9612 = vmul.f32 %v9544, 0.7978846
      %v9613 = vmul.f32 %v9545, 0.7978846
      %v9614 = vmul.f32 %v9546, 0.7978846
      %v9615 = vmul.f32 %v9547, 0.7978846
      %v9616 = vmul.f32 %v9548, 0.7978846
      %v9617 = vmul.f32 %v9549, 0.7978846
      %v9618 = vmul.f32 %v9550, 0.7978846
      %v9619 = vmul.f32 %v9551, 0.7978846
      %v9620 = vmul.f32 %v9552, 0.7978846
      %v9621 = vmul.f32 %v9553, 0.7978846
      %v9622 = vmul.f32 %v9554, 0.7978846
      %v9623 = vmul.f32 %v9555, 0.7978846
      %v9624 = vmul.f32 %v9556, 0.7978846
      %v9625 = vmul.f32 %v9557, 0.7978846
      %v9626 = vmul.f32 %v9558, 0.7978846
      %v9627 = vmul.f32 %v9559, 0.7978846
      %v9628 = vmul.f32 %v9560, 0.7978846
      %v9629 = vmul.f32 %v9561, 0.7978846
      %v9630 = vmul.f32 %v9562, 0.7978846
      %v9631 = vmul.f32 %v9563, 0.7978846
      %v9632 = vmul.f32 %v9564, 0.7978846
      %v9633 = vmul.f32 %v9565, 0.7978846
      %v9634 = vmul.f32 %v9566, 0.7978846
      %v9635 = vmul.f32 %v9567, 0.7978846
      %v9636 = vmul.f32 %v9568, 0.7978846
      %v9637 = vmul.f32 %v9569, 0.7978846
      %v9638 = vmul.f32 %v9570, 0.7978846
      %v9639 = vmul.f32 %v9571, 0.7978846
      %v9640 = vmul.f32 %v9572, 0.7978846
      %v9641 = vmul.f32 %v9573, 0.7978846
      %v9642 = vmul.f32 %v9574, 0.7978846
      %v9643 = vmul.f32 %v9575, 0.7978846
      %v9644 = vtanh.pop %v9576
      %v9645 = vtanh.pop %v9577
      %v9646 = vtanh.pop %v9578
      %v9647 = vtanh.pop %v9579
      %v9648 = vtanh.pop %v9580
      %v9649 = vtanh.pop %v9581
      %v9650 = vtanh.pop %v9582
      %v9651 = vtanh.pop %v9583
      %v9652 = vtanh.pop %v9584
      %v9653 = vtanh.pop %v9585
      %v9654 = vtanh.pop %v9586
      %v9655 = vtanh.pop %v9587
      %v9656 = vtanh.pop %v9588
      %v9657 = vtanh.pop %v9589
      %v9658 = vtanh.pop %v9590
      %v9659 = vtanh.pop %v9591
      %v9660 = vtanh.pop %v9592
      %v9661 = vtanh.pop %v9593
      %v9662 = vtanh.pop %v9594
      %v9663 = vtanh.pop %v9595
      %v9664 = vtanh.pop %v9596
      %v9665 = vtanh.pop %v9597
      %v9666 = vtanh.pop %v9598
      %v9667 = vtanh.pop %v9599
      %v9668 = vtanh.pop %v9600
      %v9669 = vtanh.pop %v9601
      %v9670 = vtanh.pop %v9602
      %v9671 = vtanh.pop %v9603
      %v9672 = vtanh.pop %v9604
      %v9673 = vtanh.pop %v9605
      %v9674 = vtanh.pop %v9606
      %v9675 = vtanh.pop %v9607
      %v9676 = vtanh.pop %v9608
      %v9677 = vtanh.pop %v9609
      %v9678 = vtanh.pop %v9610
      %v9679 = vtanh.pop %v9611
      %v9680 = vtanh.pop %v9612
      %v9681 = vtanh.pop %v9613
      %v9682 = vtanh.pop %v9614
      %v9683 = vtanh.pop %v9615
      %v9684 = vtanh.pop %v9616
      %v9685 = vtanh.pop %v9617
      %v9686 = vtanh.pop %v9618
      %v9687 = vtanh.pop %v9619
      %v9688 = vtanh.pop %v9620
      %v9689 = vtanh.pop %v9621
      %v9690 = vtanh.pop %v9622
      %v9691 = vtanh.pop %v9623
      %v9692 = vtanh.pop %v9624
      %v9693 = vtanh.pop %v9625
      %v9694 = vtanh.pop %v9626
      %v9695 = vtanh.pop %v9627
      %v9696 = vtanh.pop %v9628
      %v9697 = vtanh.pop %v9629
      %v9698 = vtanh.pop %v9630
      %v9699 = vtanh.pop %v9631
      %v9700 = vtanh.pop %v9632
      %v9701 = vtanh.pop %v9633
      %v9702 = vtanh.pop %v9634
      %v9703 = vtanh.pop %v9635
      %v9704 = vtanh.pop %v9636
      %v9705 = vtanh.pop %v9637
      %v9706 = vtanh.pop %v9638
      %v9707 = vtanh.pop %v9639
      %v9708 = vtanh.pop %v9640
      %v9709 = vtanh.pop %v9641
      %v9710 = vtanh.pop %v9642
      %v9711 = vtanh.pop %v9643
      %v9712 = vadd.f32 %v9644, 1.0
      %v9713 = vadd.f32 %v9645, 1.0
      %v9714 = vadd.f32 %v9646, 1.0
      %v9715 = vadd.f32 %v9647, 1.0
      %v9716 = vadd.f32 %v9648, 1.0
      %v9717 = vadd.f32 %v9649, 1.0
      %v9718 = vadd.f32 %v9650, 1.0
      %v9719 = vadd.f32 %v9651, 1.0
      %v9720 = vadd.f32 %v9652, 1.0
      %v9721 = vadd.f32 %v9653, 1.0
      %v9722 = vadd.f32 %v9654, 1.0
      %v9723 = vadd.f32 %v9655, 1.0
      %v9724 = vadd.f32 %v9656, 1.0
      %v9725 = vadd.f32 %v9657, 1.0
      %v9726 = vadd.f32 %v9658, 1.0
      %v9727 = vadd.f32 %v9659, 1.0
      %v9728 = vadd.f32 %v9660, 1.0
      %v9729 = vadd.f32 %v9661, 1.0
      %v9730 = vadd.f32 %v9662, 1.0
      %v9731 = vadd.f32 %v9663, 1.0
      %v9732 = vadd.f32 %v9664, 1.0
      %v9733 = vadd.f32 %v9665, 1.0
      %v9734 = vadd.f32 %v9666, 1.0
      %v9735 = vadd.f32 %v9667, 1.0
      %v9736 = vadd.f32 %v9668, 1.0
      %v9737 = vadd.f32 %v9669, 1.0
      %v9738 = vadd.f32 %v9670, 1.0
      %v9739 = vadd.f32 %v9671, 1.0
      %v9740 = vadd.f32 %v9672, 1.0
      %v9741 = vadd.f32 %v9673, 1.0
      %v9742 = vadd.f32 %v9674, 1.0
      %v9743 = vadd.f32 %v9675, 1.0
      %v9744 = vadd.f32 %v9676, 1.0
      %v9745 = vadd.f32 %v9677, 1.0
      %v9746 = vadd.f32 %v9678, 1.0
      %v9747 = vadd.f32 %v9679, 1.0
      %v9748 = vadd.f32 %v9680, 1.0
      %v9749 = vadd.f32 %v9681, 1.0
      %v9750 = vadd.f32 %v9682, 1.0
      %v9751 = vadd.f32 %v9683, 1.0
      %v9752 = vadd.f32 %v9684, 1.0
      %v9753 = vadd.f32 %v9685, 1.0
      %v9754 = vadd.f32 %v9686, 1.0
      %v9755 = vadd.f32 %v9687, 1.0
      %v9756 = vadd.f32 %v9688, 1.0
      %v9757 = vadd.f32 %v9689, 1.0
      %v9758 = vadd.f32 %v9690, 1.0
      %v9759 = vadd.f32 %v9691, 1.0
      %v9760 = vadd.f32 %v9692, 1.0
      %v9761 = vadd.f32 %v9693, 1.0
      %v9762 = vadd.f32 %v9694, 1.0
      %v9763 = vadd.f32 %v9695, 1.0
      %v9764 = vadd.f32 %v9696, 1.0
      %v9765 = vadd.f32 %v9697, 1.0
      %v9766 = vadd.f32 %v9698, 1.0
      %v9767 = vadd.f32 %v9699, 1.0
      %v9768 = vadd.f32 %v9700, 1.0
      %v9769 = vadd.f32 %v9701, 1.0
      %v9770 = vadd.f32 %v9702, 1.0
      %v9771 = vadd.f32 %v9703, 1.0
      %v9772 = vadd.f32 %v9704, 1.0
      %v9773 = vadd.f32 %v9705, 1.0
      %v9774 = vadd.f32 %v9706, 1.0
      %v9775 = vadd.f32 %v9707, 1.0
      %v9776 = vadd.f32 %v9708, 1.0
      %v9777 = vadd.f32 %v9709, 1.0
      %v9778 = vadd.f32 %v9710, 1.0
      %v9779 = vadd.f32 %v9711, 1.0
      %v9780 = vmul.f32 %v9236, %v9712
      %v9781 = vmul.f32 %v9237, %v9713
      %v9782 = vmul.f32 %v9238, %v9714
      %v9783 = vmul.f32 %v9239, %v9715
      %v9784 = vmul.f32 %v9240, %v9716
      %v9785 = vmul.f32 %v9241, %v9717
      %v9786 = vmul.f32 %v9242, %v9718
      %v9787 = vmul.f32 %v9243, %v9719
      %v9788 = vmul.f32 %v9244, %v9720
      %v9789 = vmul.f32 %v9245, %v9721
      %v9790 = vmul.f32 %v9246, %v9722
      %v9791 = vmul.f32 %v9247, %v9723
      %v9792 = vmul.f32 %v9248, %v9724
      %v9793 = vmul.f32 %v9249, %v9725
      %v9794 = vmul.f32 %v9250, %v9726
      %v9795 = vmul.f32 %v9251, %v9727
      %v9796 = vmul.f32 %v9252, %v9728
      %v9797 = vmul.f32 %v9253, %v9729
      %v9798 = vmul.f32 %v9254, %v9730
      %v9799 = vmul.f32 %v9255, %v9731
      %v9800 = vmul.f32 %v9256, %v9732
      %v9801 = vmul.f32 %v9257, %v9733
      %v9802 = vmul.f32 %v9258, %v9734
      %v9803 = vmul.f32 %v9259, %v9735
      %v9804 = vmul.f32 %v9260, %v9736
      %v9805 = vmul.f32 %v9261, %v9737
      %v9806 = vmul.f32 %v9262, %v9738
      %v9807 = vmul.f32 %v9263, %v9739
      %v9808 = vmul.f32 %v9264, %v9740
      %v9809 = vmul.f32 %v9265, %v9741
      %v9810 = vmul.f32 %v9266, %v9742
      %v9811 = vmul.f32 %v9267, %v9743
      %v9812 = vmul.f32 %v9268, %v9744
      %v9813 = vmul.f32 %v9269, %v9745
      %v9814 = vmul.f32 %v9270, %v9746
      %v9815 = vmul.f32 %v9271, %v9747
      %v9816 = vmul.f32 %v9272, %v9748
      %v9817 = vmul.f32 %v9273, %v9749
      %v9818 = vmul.f32 %v9274, %v9750
      %v9819 = vmul.f32 %v9275, %v9751
      %v9820 = vmul.f32 %v9276, %v9752
      %v9821 = vmul.f32 %v9277, %v9753
      %v9822 = vmul.f32 %v9278, %v9754
      %v9823 = vmul.f32 %v9279, %v9755
      %v9824 = vmul.f32 %v9280, %v9756
      %v9825 = vmul.f32 %v9281, %v9757
      %v9826 = vmul.f32 %v9282, %v9758
      %v9827 = vmul.f32 %v9283, %v9759
      %v9828 = vmul.f32 %v9284, %v9760
      %v9829 = vmul.f32 %v9285, %v9761
      %v9830 = vmul.f32 %v9286, %v9762
      %v9831 = vmul.f32 %v9287, %v9763
      %v9832 = vmul.f32 %v9288, %v9764
      %v9833 = vmul.f32 %v9289, %v9765
      %v9834 = vmul.f32 %v9290, %v9766
      %v9835 = vmul.f32 %v9291, %v9767
      %v9836 = vmul.f32 %v9292, %v9768
      %v9837 = vmul.f32 %v9293, %v9769
      %v9838 = vmul.f32 %v9294, %v9770
      %v9839 = vmul.f32 %v9295, %v9771
      %v9840 = vmul.f32 %v9296, %v9772
      %v9841 = vmul.f32 %v9297, %v9773
      %v9842 = vmul.f32 %v9298, %v9774
      %v9843 = vmul.f32 %v9299, %v9775
      %v9844 = vmul.f32 %v9300, %v9776
      %v9845 = vmul.f32 %v9301, %v9777
      %v9846 = vmul.f32 %v9302, %v9778
      %v9847 = vmul.f32 %v9303, %v9779
      %v9848 = vpack.c.bf16 %v9782, %v9780
      %v9849 = vpack.c.bf16 %v9783, %v9781
      %v9850 = vpack.c.bf16 %v9786, %v9784
      %v9851 = vpack.c.bf16 %v9787, %v9785
      %v9852 = vpack.c.bf16 %v9790, %v9788
      %v9853 = vpack.c.bf16 %v9791, %v9789
      %v9854 = vpack.c.bf16 %v9794, %v9792
      %v9855 = vpack.c.bf16 %v9795, %v9793
      %v9856 = vpack.c.bf16 %v9798, %v9796
      %v9857 = vpack.c.bf16 %v9799, %v9797
      %v9858 = vpack.c.bf16 %v9802, %v9800
      %v9859 = vpack.c.bf16 %v9803, %v9801
      %v9860 = vpack.c.bf16 %v9806, %v9804
      %v9861 = vpack.c.bf16 %v9807, %v9805
      %v9862 = vpack.c.bf16 %v9810, %v9808
      %v9863 = vpack.c.bf16 %v9811, %v9809
      %v9864 = vpack.c.bf16 %v9814, %v9812
      %v9865 = vpack.c.bf16 %v9815, %v9813
      %v9866 = vpack.c.bf16 %v9818, %v9816
      %v9867 = vpack.c.bf16 %v9819, %v9817
      %v9868 = vpack.c.bf16 %v9822, %v9820
      %v9869 = vpack.c.bf16 %v9823, %v9821
      %v9870 = vpack.c.bf16 %v9826, %v9824
      %v9871 = vpack.c.bf16 %v9827, %v9825
      %v9872 = vpack.c.bf16 %v9830, %v9828
      %v9873 = vpack.c.bf16 %v9831, %v9829
      %v9874 = vpack.c.bf16 %v9834, %v9832
      %v9875 = vpack.c.bf16 %v9835, %v9833
      %v9876 = vpack.c.bf16 %v9838, %v9836
      %v9877 = vpack.c.bf16 %v9839, %v9837
      %v9878 = vpack.c.bf16 %v9842, %v9840
      %v9879 = vpack.c.bf16 %v9843, %v9841
      %v9880 = vpack.c.bf16 %v9846, %v9844
      %v9881 = vpack.c.bf16 %v9847, %v9845
      %v9882 = vld [vmem:[%s10] sm:$0xf]
      %v9883 = vld [vmem:[%s10 + $0x4] sm:$0xf]
      %v9884 = vld [vmem:[%s10 + $0x8] sm:$0xf]
      %v9885 = vld [vmem:[%s10 + $0xc] sm:$0xf]
      %v9886 = vld [vmem:[%s10 + $0x10] sm:$0xf]
      %v9887 = vld [vmem:[%s10 + $0x14] sm:$0xf]
      %v9888 = vld [vmem:[%s10 + $0x18] sm:$0xf]
      %v9889 = vld [vmem:[%s10 + $0x1c] sm:$0xf]
      %v9890 = vld [vmem:[%s10 + $0x20] sm:$0xf]
      %v9891 = vld [vmem:[%s10 + $0x24] sm:$0xf]
      %v9892 = vld [vmem:[%s10 + $0x28] sm:$0xf]
      %v9893 = vld [vmem:[%s10 + $0x2c] sm:$0xf]
      %v9894 = vld [vmem:[%s10 + $0x30] sm:$0xf]
      %v9895 = vld [vmem:[%s10 + $0x34] sm:$0xf]
      %v9896 = vld [vmem:[%s10 + $0x38] sm:$0xf]
      %v9897 = vld [vmem:[%s10 + $0x3c] sm:$0xf]
      %v9898 = vld [vmem:[%s10 + $0x40] sm:$0xf]
      %v9899 = vld [vmem:[%s10 + $0x44] sm:$0xf]
      %v9900 = vld [vmem:[%s10 + $0x48] sm:$0xf]
      %v9901 = vld [vmem:[%s10 + $0x4c] sm:$0xf]
      %v9902 = vld [vmem:[%s10 + $0x50] sm:$0xf]
      %v9903 = vld [vmem:[%s10 + $0x54] sm:$0xf]
      %v9904 = vld [vmem:[%s10 + $0x58] sm:$0xf]
      %v9905 = vld [vmem:[%s10 + $0x5c] sm:$0xf]
      %v9906 = vld [vmem:[%s10 + $0x60] sm:$0xf]
      %v9907 = vld [vmem:[%s10 + $0x64] sm:$0xf]
      %v9908 = vld [vmem:[%s10 + $0x68] sm:$0xf]
      %v9909 = vld [vmem:[%s10 + $0x6c] sm:$0xf]
      %v9910 = vld [vmem:[%s10 + $0x70] sm:$0xf]
      %v9911 = vld [vmem:[%s10 + $0x74] sm:$0xf]
      %v9912 = vld [vmem:[%s10 + $0x78] sm:$0xf]
      %v9913 = vld [vmem:[%s10 + $0x7c] sm:$0xf]
      %v9914 = vld [vmem:[%s11] sm:$0x1]
      %v9916 = vlaneseq
      %v9917 = vshrl.u32 %v9916, 7
      %v9918 = vsub.s32 0, %v9917
      %v9919 = vrot.slane %v9914, %v9918
      %v9953 = vunpack.c.l.b16 %v9882
      %v9954 = vunpack.c.l.b16 %v9883
      %v9955 = vunpack.c.l.b16 %v9884
      %v9956 = vunpack.c.l.b16 %v9885
      %v9957 = vunpack.c.l.b16 %v9886
      %v9958 = vunpack.c.l.b16 %v9887
      %v9959 = vunpack.c.l.b16 %v9888
      %v9960 = vunpack.c.l.b16 %v9889
      %v9961 = vunpack.c.l.b16 %v9890
      %v9962 = vunpack.c.l.b16 %v9891
      %v9963 = vunpack.c.l.b16 %v9892
      %v9964 = vunpack.c.l.b16 %v9893
      %v9965 = vunpack.c.l.b16 %v9894
      %v9966 = vunpack.c.l.b16 %v9895
      %v9967 = vunpack.c.l.b16 %v9896
      %v9968 = vunpack.c.l.b16 %v9897
      %v9969 = vunpack.c.l.b16 %v9898
      %v9970 = vunpack.c.l.b16 %v9899
      %v9971 = vunpack.c.l.b16 %v9900
      %v9972 = vunpack.c.l.b16 %v9901
      %v9973 = vunpack.c.l.b16 %v9902
      %v9974 = vunpack.c.l.b16 %v9903
      %v9975 = vunpack.c.l.b16 %v9904
      %v9976 = vunpack.c.l.b16 %v9905
      %v9977 = vunpack.c.l.b16 %v9906
      %v9978 = vunpack.c.l.b16 %v9907
      %v9979 = vunpack.c.l.b16 %v9908
      %v9980 = vunpack.c.l.b16 %v9909
      %v9981 = vunpack.c.l.b16 %v9910
      %v9982 = vunpack.c.l.b16 %v9911
      %v9983 = vunpack.c.l.b16 %v9912
      %v9984 = vunpack.c.l.b16 %v9913
      %v9985 = vpack.c.b16 %v9954, %v9953
      %v9986 = vpack.c.b16 %v9956, %v9955
      %v9987 = vpack.c.b16 %v9958, %v9957
      %v9988 = vpack.c.b16 %v9960, %v9959
      %v9989 = vpack.c.b16 %v9962, %v9961
      %v9990 = vpack.c.b16 %v9964, %v9963
      %v9991 = vpack.c.b16 %v9966, %v9965
      %v9992 = vpack.c.b16 %v9968, %v9967
      %v9993 = vpack.c.b16 %v9970, %v9969
      %v9994 = vpack.c.b16 %v9972, %v9971
      %v9995 = vpack.c.b16 %v9974, %v9973
      %v9996 = vpack.c.b16 %v9976, %v9975
      %v9997 = vpack.c.b16 %v9978, %v9977
      %v9998 = vpack.c.b16 %v9980, %v9979
      %v9999 = vpack.c.b16 %v9982, %v9981
      %v10000 = vpack.c.b16 %v9984, %v9983
      %10017 = vmatprep.subr.bf16.mxu0 0
      %10018 = vmatpush1.bf16.msra.mxu0 %v9985
      %10019 = vmatprep.subr.bf16.mxu0 0
      %10020 = vmatpush1.bf16.msra.mxu0 %v9986
      %10021 = vmatprep.subr.bf16.mxu0 0
      %10022 = vmatpush1.bf16.msra.mxu0 %v9987
      %10023 = vmatprep.subr.bf16.mxu0 0
      %10024 = vmatpush1.bf16.msra.mxu0 %v9988
      %10025 = vmatprep.subr.bf16.mxu0 0
      %10026 = vmatpush1.bf16.msra.mxu0 %v9989
      %10027 = vmatprep.subr.bf16.mxu0 0
      %10028 = vmatpush1.bf16.msra.mxu0 %v9990
      %10029 = vmatprep.subr.bf16.mxu0 0
      %10030 = vmatpush1.bf16.msra.mxu0 %v9991
      %10031 = vmatprep.subr.bf16.mxu0 0
      %10032 = vmatpush1.bf16.msra.mxu0 %v9992
      %10033 = vmatprep.subr.bf16.mxu0 0
      %10034 = vmatpush1.bf16.msra.mxu0 %v9993
      %10035 = vmatprep.subr.bf16.mxu0 0
      %10036 = vmatpush1.bf16.msra.mxu0 %v9994
      %10037 = vmatprep.subr.bf16.mxu0 0
      %10038 = vmatpush1.bf16.msra.mxu0 %v9995
      %10039 = vmatprep.subr.bf16.mxu0 0
      %10040 = vmatpush1.bf16.msra.mxu0 %v9996
      %10041 = vmatprep.subr.bf16.mxu0 0
      %10042 = vmatpush1.bf16.msra.mxu0 %v9997
      %10043 = vmatprep.subr.bf16.mxu0 0
      %10044 = vmatpush1.bf16.msra.mxu0 %v9998
      %10045 = vmatprep.subr.bf16.mxu0 0
      %10046 = vmatpush1.bf16.msra.mxu0 %v9999
      %10047 = vmatprep.subr.bf16.mxu0 0
      %10048 = vmatpush1.bf16.msra.mxu0 %v10000
      %10049 = vmatprep.mubr.bf16.mxu0 %v9849
      %10050 = vmatmul.mubr.bf16.gmra.mrb[0].mxu0 %v9848
      %v10051 = vpop.f32.mrb[0].mxu0
      %v10052 = vadd.f32 %v9919, %v10051
      %v10053 = vpop.f32.mrb[0].mxu0
      %v10054 = vpop.f32.mrb[0].mxu0
      %v10055 = vadd.f32 %v9919, %v10054
      %v10056 = vpop.f32.mrb[0].mxu0
      %10057 = vmatprep.mubr.bf16.mxu0 %v9851
      %10058 = vmatmul.mubr.bf16.gmra.mrb[0].mxu0 %v9850
      %v10059 = vpop.f32.mrb[0].mxu0
      %v10060 = vadd.f32 %v9919, %v10059
      %v10061 = vpop.f32.mrb[0].mxu0
      %v10062 = vpop.f32.mrb[0].mxu0
      %v10063 = vadd.f32 %v9919, %v10062
      %v10064 = vpop.f32.mrb[0].mxu0
      %10065 = vmatprep.mubr.bf16.mxu0 %v9853
      %10066 = vmatmul.mubr.bf16.gmra.mrb[0].mxu0 %v9852
      %v10067 = vpop.f32.mrb[0].mxu0
      %v10068 = vadd.f32 %v9919, %v10067
      %v10069 = vpop.f32.mrb[0].mxu0
      %v10070 = vpop.f32.mrb[0].mxu0
      %v10071 = vadd.f32 %v9919, %v10070
      %v10072 = vpop.f32.mrb[0].mxu0
      %10073 = vmatprep.mubr.bf16.mxu0 %v9855
      %10074 = vmatmul.mubr.bf16.gmra.mrb[0].mxu0 %v9854
      %v10075 = vpop.f32.mrb[0].mxu0
      %v10076 = vadd.f32 %v9919, %v10075
      %v10077 = vpop.f32.mrb[0].mxu0
      %v10078 = vpop.f32.mrb[0].mxu0
      %v10079 = vadd.f32 %v9919, %v10078
      %v10080 = vpop.f32.mrb[0].mxu0
      %10081 = vmatprep.mubr.bf16.mxu0 %v9857
      %10082 = vmatmul.mubr.bf16.gmra.mrb[0].mxu0 %v9856
      %v10083 = vpop.f32.mrb[0].mxu0
      %v10084 = vadd.f32 %v9919, %v10083
      %v10085 = vpop.f32.mrb[0].mxu0
      %v10086 = vpop.f32.mrb[0].mxu0
      %v10087 = vadd.f32 %v9919, %v10086
      %v10088 = vpop.f32.mrb[0].mxu0
      %10089 = vmatprep.mubr.bf16.mxu0 %v9859
      %10090 = vmatmul.mubr.bf16.gmra.mrb[0].mxu0 %v9858
      %v10091 = vpop.f32.mrb[0].mxu0
      %v10092 = vadd.f32 %v9919, %v10091
      %v10093 = vpop.f32.mrb[0].mxu0
      %v10094 = vpop.f32.mrb[0].mxu0
      %v10095 = vadd.f32 %v9919, %v10094
      %v10096 = vpop.f32.mrb[0].mxu0
      %10097 = vmatprep.mubr.bf16.mxu0 %v9861
      %10098 = vmatmul.mubr.bf16.gmra.mrb[0].mxu0 %v9860
      %v10099 = vpop.f32.mrb[0].mxu0
      %v10100 = vadd.f32 %v9919, %v10099
      %v10101 = vpop.f32.mrb[0].mxu0
      %v10102 = vpop.f32.mrb[0].mxu0
      %v10103 = vadd.f32 %v9919, %v10102
      %v10104 = vpop.f32.mrb[0].mxu0
      %10105 = vmatprep.mubr.bf16.mxu0 %v9863
      %10106 = vmatmul.mubr.bf16.gmra.mrb[0].mxu0 %v9862
      %v10107 = vpop.f32.mrb[0].mxu0
      %v10108 = vadd.f32 %v9919, %v10107
      %v10109 = vpop.f32.mrb[0].mxu0
      %v10110 = vpop.f32.mrb[0].mxu0
      %v10111 = vadd.f32 %v9919, %v10110
      %v10112 = vpop.f32.mrb[0].mxu0
      %10113 = vmatprep.mubr.bf16.mxu0 %v9865
      %10114 = vmatmul.mubr.bf16.gmra.mrb[0].mxu0 %v9864
      %v10115 = vpop.f32.mrb[0].mxu0
      %v10116 = vadd.f32 %v9919, %v10115
      %v10117 = vpop.f32.mrb[0].mxu0
      %v10118 = vpop.f32.mrb[0].mxu0
      %v10119 = vadd.f32 %v9919, %v10118
      %v10120 = vpop.f32.mrb[0].mxu0
      %10121 = vmatprep.mubr.bf16.mxu0 %v9867
      %10122 = vmatmul.mubr.bf16.gmra.mrb[0].mxu0 %v9866
      %v10123 = vpop.f32.mrb[0].mxu0
      %v10124 = vadd.f32 %v9919, %v10123
      %v10125 = vpop.f32.mrb[0].mxu0
      %v10126 = vpop.f32.mrb[0].mxu0
      %v10127 = vadd.f32 %v9919, %v10126
      %v10128 = vpop.f32.mrb[0].mxu0
      %10129 = vmatprep.mubr.bf16.mxu0 %v9869
      %10130 = vmatmul.mubr.bf16.gmra.mrb[0].mxu0 %v9868
      %v10131 = vpop.f32.mrb[0].mxu0
      %v10132 = vadd.f32 %v9919, %v10131
      %v10133 = vpop.f32.mrb[0].mxu0
      %v10134 = vpop.f32.mrb[0].mxu0
      %v10135 = vadd.f32 %v9919, %v10134
      %v10136 = vpop.f32.mrb[0].mxu0
      %10137 = vmatprep.mubr.bf16.mxu0 %v9871
      %10138 = vmatmul.mubr.bf16.gmra.mrb[0].mxu0 %v9870
      %v10139 = vpop.f32.mrb[0].mxu0
      %v10140 = vadd.f32 %v9919, %v10139
      %v10141 = vpop.f32.mrb[0].mxu0
      %v10142 = vpop.f32.mrb[0].mxu0
      %v10143 = vadd.f32 %v9919, %v10142
      %v10144 = vpop.f32.mrb[0].mxu0
      %10145 = vmatprep.mubr.bf16.mxu0 %v9873
      %10146 = vmatmul.mubr.bf16.gmra.mrb[0].mxu0 %v9872
      %v10147 = vpop.f32.mrb[0].mxu0
      %v10148 = vadd.f32 %v9919, %v10147
      %v10149 = vpop.f32.mrb[0].mxu0
      %v10150 = vpop.f32.mrb[0].mxu0
      %v10151 = vadd.f32 %v9919, %v10150
      %v10152 = vpop.f32.mrb[0].mxu0
      %10153 = vmatprep.mubr.bf16.mxu0 %v9875
      %10154 = vmatmul.mubr.bf16.gmra.mrb[0].mxu0 %v9874
      %v10155 = vpop.f32.mrb[0].mxu0
      %v10156 = vadd.f32 %v9919, %v10155
      %v10157 = vpop.f32.mrb[0].mxu0
      %v10158 = vpop.f32.mrb[0].mxu0
      %v10159 = vadd.f32 %v9919, %v10158
      %v10160 = vpop.f32.mrb[0].mxu0
      %10161 = vmatprep.mubr.bf16.mxu0 %v9877
      %10162 = vmatmul.mubr.bf16.gmra.mrb[0].mxu0 %v9876
      %v10163 = vpop.f32.mrb[0].mxu0
      %v10164 = vadd.f32 %v9919, %v10163
      %v10165 = vpop.f32.mrb[0].mxu0
      %v10166 = vpop.f32.mrb[0].mxu0
      %v10167 = vadd.f32 %v9919, %v10166
      %v10168 = vpop.f32.mrb[0].mxu0
      %10169 = vmatprep.mubr.bf16.mxu0 %v9879
      %10170 = vmatmul.mubr.bf16.gmra.mrb[0].mxu0 %v9878
      %v10171 = vpop.f32.mrb[0].mxu0
      %v10172 = vadd.f32 %v9919, %v10171
      %v10173 = vpop.f32.mrb[0].mxu0
      %v10174 = vpop.f32.mrb[0].mxu0
      %v10175 = vadd.f32 %v9919, %v10174
      %v10176 = vpop.f32.mrb[0].mxu0
      %10177 = vmatprep.mubr.bf16.mxu0 %v9881
      %10178 = vmatmul.mubr.bf16.gmra.mrb[0].mxu0 %v9880
      %v10179 = vpop.f32.mrb[0].mxu0
      %v10180 = vadd.f32 %v9919, %v10179
      %v10181 = vpop.f32.mrb[0].mxu0
      %v10182 = vpop.f32.mrb[0].mxu0
      %v10183 = vadd.f32 %v9919, %v10182
      %v10184 = vpop.f32.mrb[0].mxu0
      %10185 = vdwg.mxu0
      %v10186 = vadd.f32 %v8418, %v10052
      %v10187 = vadd.f32 %v8419, %v10055
      %v10188 = vadd.f32 %v8420, %v10060
      %v10189 = vadd.f32 %v8421, %v10063
      %v10190 = vadd.f32 %v8422, %v10068
      %v10191 = vadd.f32 %v8423, %v10071
      %v10192 = vadd.f32 %v8424, %v10076
      %v10193 = vadd.f32 %v8425, %v10079
      %v10194 = vadd.f32 %v8426, %v10084
      %v10195 = vadd.f32 %v8427, %v10087
      %v10196 = vadd.f32 %v8428, %v10092
      %v10197 = vadd.f32 %v8429, %v10095
      %v10198 = vadd.f32 %v8430, %v10100
      %v10199 = vadd.f32 %v8431, %v10103
      %v10200 = vadd.f32 %v8432, %v10108
      %v10201 = vadd.f32 %v8433, %v10111
      %v10202 = vadd.f32 %v8434, %v10116
      %v10203 = vadd.f32 %v8435, %v10119
      %v10204 = vadd.f32 %v8436, %v10124
      %v10205 = vadd.f32 %v8437, %v10127
      %v10206 = vadd.f32 %v8438, %v10132
      %v10207 = vadd.f32 %v8439, %v10135
      %v10208 = vadd.f32 %v8440, %v10140
      %v10209 = vadd.f32 %v8441, %v10143
      %v10210 = vadd.f32 %v8442, %v10148
      %v10211 = vadd.f32 %v8443, %v10151
      %v10212 = vadd.f32 %v8444, %v10156
      %v10213 = vadd.f32 %v8445, %v10159
      %v10214 = vadd.f32 %v8446, %v10164
      %v10215 = vadd.f32 %v8447, %v10167
      %v10216 = vadd.f32 %v8448, %v10172
      %v10217 = vadd.f32 %v8449, %v10175
      %v10218 = vadd.f32 %v8450, %v10180
      %v10219 = vadd.f32 %v8451, %v10183
      %v10220 = vpack.c.bf16 %v10187, %v10186
      %v10221 = vpack.c.bf16 %v10189, %v10188
      %v10222 = vpack.c.bf16 %v10191, %v10190
      %v10223 = vpack.c.bf16 %v10193, %v10192
      %v10224 = vpack.c.bf16 %v10195, %v10194
      %v10225 = vpack.c.bf16 %v10197, %v10196
      %v10226 = vpack.c.bf16 %v10199, %v10198
      %v10227 = vpack.c.bf16 %v10201, %v10200
      %v10228 = vpack.c.bf16 %v10203, %v10202
      %v10229 = vpack.c.bf16 %v10205, %v10204
      %v10230 = vpack.c.bf16 %v10207, %v10206
      %v10231 = vpack.c.bf16 %v10209, %v10208
      %v10232 = vpack.c.bf16 %v10211, %v10210
      %v10233 = vpack.c.bf16 %v10213, %v10212
      %v10234 = vpack.c.bf16 %v10215, %v10214
      %v10235 = vpack.c.bf16 %v10217, %v10216
      %v10236 = vpack.c.bf16 %v10219, %v10218
      %v10254 = vunpack.c.l.b16 %v10220
      %v10255 = vunpack.c.h.b16 %v10220
      %v10256 = vunpack.c.l.b16 %v10221
      %v10257 = vunpack.c.h.b16 %v10221
      %v10258 = vunpack.c.l.b16 %v10222
      %v10259 = vunpack.c.h.b16 %v10222
      %v10260 = vunpack.c.l.b16 %v10223
      %v10261 = vunpack.c.h.b16 %v10223
      %v10262 = vunpack.c.l.b16 %v10224
      %v10263 = vunpack.c.h.b16 %v10224
      %v10264 = vunpack.c.l.b16 %v10225
      %v10265 = vunpack.c.h.b16 %v10225
      %v10266 = vunpack.c.l.b16 %v10226
      %v10267 = vunpack.c.h.b16 %v10226
      %v10268 = vunpack.c.l.b16 %v10227
      %v10269 = vunpack.c.h.b16 %v10227
      %v10270 = vunpack.c.l.b16 %v10228
      %v10271 = vunpack.c.h.b16 %v10228
      %v10272 = vunpack.c.l.b16 %v10229
      %v10273 = vunpack.c.h.b16 %v10229
      %v10274 = vunpack.c.l.b16 %v10230
      %v10275 = vunpack.c.h.b16 %v10230
      %v10276 = vunpack.c.l.b16 %v10231
      %v10277 = vunpack.c.h.b16 %v10231
      %v10278 = vunpack.c.l.b16 %v10232
      %v10279 = vunpack.c.h.b16 %v10232
      %v10280 = vunpack.c.l.b16 %v10233
      %v10281 = vunpack.c.h.b16 %v10233
      %v10282 = vunpack.c.l.b16 %v10234
      %v10283 = vunpack.c.h.b16 %v10234
      %v10284 = vunpack.c.l.b16 %v10235
      %v10285 = vunpack.c.h.b16 %v10235
      %v10286 = vunpack.c.l.b16 %v10236
      %v10287 = vunpack.c.h.b16 %v10236
      %v10288 = vpack.c.b16 %v10254, %v10254
      %v10289 = vpack.c.b16 %v10255, %v10255
      %v10290 = vpack.c.b16 %v10256, %v10256
      %v10291 = vpack.c.b16 %v10257, %v10257
      %v10292 = vpack.c.b16 %v10258, %v10258
      %v10293 = vpack.c.b16 %v10259, %v10259
      %v10294 = vpack.c.b16 %v10260, %v10260
      %v10295 = vpack.c.b16 %v10261, %v10261
      %v10296 = vpack.c.b16 %v10262, %v10262
      %v10297 = vpack.c.b16 %v10263, %v10263
      %v10298 = vpack.c.b16 %v10264, %v10264
      %v10299 = vpack.c.b16 %v10265, %v10265
      %v10300 = vpack.c.b16 %v10266, %v10266
      %v10301 = vpack.c.b16 %v10267, %v10267
      %v10302 = vpack.c.b16 %v10268, %v10268
      %v10303 = vpack.c.b16 %v10269, %v10269
      %v10304 = vpack.c.b16 %v10270, %v10270
      %v10305 = vpack.c.b16 %v10271, %v10271
      %v10306 = vpack.c.b16 %v10272, %v10272
      %v10307 = vpack.c.b16 %v10273, %v10273
      %v10308 = vpack.c.b16 %v10274, %v10274
      %v10309 = vpack.c.b16 %v10275, %v10275
      %v10310 = vpack.c.b16 %v10276, %v10276
      %v10311 = vpack.c.b16 %v10277, %v10277
      %v10312 = vpack.c.b16 %v10278, %v10278
      %v10313 = vpack.c.b16 %v10279, %v10279
      %v10314 = vpack.c.b16 %v10280, %v10280
      %v10315 = vpack.c.b16 %v10281, %v10281
      %v10316 = vpack.c.b16 %v10282, %v10282
      %v10317 = vpack.c.b16 %v10283, %v10283
      %v10318 = vpack.c.b16 %v10284, %v10284
      %v10319 = vpack.c.b16 %v10285, %v10285
      %v10320 = vpack.c.b16 %v10286, %v10286
      %v10321 = vpack.c.b16 %v10287, %v10287
      %10356 = vst [vmem:[%s415] sm:$0xf] %v10288
      %10357 = vst [vmem:[%s415 + $0x4] sm:$0xf] %v10289
      %10358 = vst [vmem:[%s415 + $0x8] sm:$0xf] %v10290
      %10359 = vst [vmem:[%s415 + $0xc] sm:$0xf] %v10291
      %10360 = vst [vmem:[%s415 + $0x10] sm:$0xf] %v10292
      %10361 = vst [vmem:[%s415 + $0x14] sm:$0xf] %v10293
      %10362 = vst [vmem:[%s415 + $0x18] sm:$0xf] %v10294
      %10363 = vst [vmem:[%s415 + $0x1c] sm:$0xf] %v10295
      %10364 = vst [vmem:[%s415 + $0x20] sm:$0xf] %v10296
      %10365 = vst [vmem:[%s415 + $0x24] sm:$0xf] %v10297
      %10366 = vst [vmem:[%s415 + $0x28] sm:$0xf] %v10298
      %10367 = vst [vmem:[%s415 + $0x2c] sm:$0xf] %v10299
      %10368 = vst [vmem:[%s415 + $0x30] sm:$0xf] %v10300
      %10369 = vst [vmem:[%s415 + $0x34] sm:$0xf] %v10301
      %10370 = vst [vmem:[%s415 + $0x38] sm:$0xf] %v10302
      %10371 = vst [vmem:[%s415 + $0x3c] sm:$0xf] %v10303
      %10372 = vst [vmem:[%s415 + $0x40] sm:$0xf] %v10304
      %10373 = vst [vmem:[%s415 + $0x44] sm:$0xf] %v10305
      %10374 = vst [vmem:[%s415 + $0x48] sm:$0xf] %v10306
      %10375 = vst [vmem:[%s415 + $0x4c] sm:$0xf] %v10307
      %10376 = vst [vmem:[%s415 + $0x50] sm:$0xf] %v10308
      %10377 = vst [vmem:[%s415 + $0x54] sm:$0xf] %v10309
      %10378 = vst [vmem:[%s415 + $0x58] sm:$0xf] %v10310
      %10379 = vst [vmem:[%s415 + $0x5c] sm:$0xf] %v10311
      %10380 = vst [vmem:[%s415 + $0x60] sm:$0xf] %v10312
      %10381 = vst [vmem:[%s415 + $0x64] sm:$0xf] %v10313
      %10382 = vst [vmem:[%s415 + $0x68] sm:$0xf] %v10314
      %10383 = vst [vmem:[%s415 + $0x6c] sm:$0xf] %v10315
      %10384 = vst [vmem:[%s415 + $0x70] sm:$0xf] %v10316
      %10385 = vst [vmem:[%s415 + $0x74] sm:$0xf] %v10317
      %10386 = vst [vmem:[%s415 + $0x78] sm:$0xf] %v10318
      %10387 = vst [vmem:[%s415 + $0x7c] sm:$0xf] %v10319
      %10388 = vst [vmem:[%s415 + $0x80] sm:$0xf] %v10320
      %10389 = vst [vmem:[%s415 + $0x84] sm:$0xf] %v10321
      %s10390 = smul.u32 34, %s23
      %p10391 = scmp.lt.s32.totalorder %s10390, 67
      %s10392 = scalar_select %p10391, %s10390, 67
      %s10393 = smul.addr %s10392, 4
      %s10394 = scalar_lea.vmem %s12, %s10393
      // Predicated region
      $region69: #{separable_tr_forward.2} parent=67 // pred_check
        %p10395 = pneg %p298
      $region70: #{separable_tr_forward.2} parent=67 // pred_check_branch
        %10397 = sbr.rel (%p10395) target = $region72
      $region71: #{separable_tr_forward.2} parent=67 // pred_region
        %s10398 = smul.u32 34, %s23
      $region72: #{separable_tr_forward.2} parent=67 // pred_fallthru
        _
    $region68: #{separable_tr_forward.2} parent=5 // pred_fallthru
      _
    %p10399 = scmp.le.s32.totalorder 2, %s18
    // Predicated region
    $region73: #{separable_tr_forward.2} parent=5 // pred_check
      %p10400 = pneg %p10399
    $region74: #{separable_tr_forward.2} parent=5 // pred_check_branch
      %10402 = sbr.rel (%p10400) target = $region76
    $region75: #{separable_tr_forward.2} parent=5 // pred_region
      %s10403 = ssub.s32 %s18, 2
      // Predicated region
      $region77: #{separable_tr_forward.2} parent=75 // pred_check
        %p10404 = pneg %p304
      $region78: #{separable_tr_forward.2} parent=75 // pred_check_branch
        %10406 = sbr.rel (%p10404) target = $region80
      $region79: #{separable_tr_forward.2} parent=75 // pred_region
        %s10407 = smul.u32 34, %s24
        %p10408 = scmp.lt.s32.totalorder %s10407, 67
        %s10409 = scalar_select %p10408, %s10407, 67
        %s10410 = smul.addr %s10409, 4
        %s10411 = scalar_lea.vmem %s12, %s10410
      $region80: #{separable_tr_forward.2} parent=75 // pred_fallthru
        _
    $region76: #{separable_tr_forward.2} parent=5 // pred_fallthru
      _
  $region6: #{separable_tr_forward.2} parent=0 // loop_footer
    %s22 = sadd.s32 1, %s18
  $region7: #{separable_tr_forward.2} parent=0 // loop_footer_branch
    %17 = sbr.rel target = $region3
  $region8: #{separable_tr_forward.2} parent=0 // loop_exit
    _

</llo_original>
